<compile_context>
chip_gen: v6e
topology: v6e:2x2x1
jax: 0.10.0
libtpu: 0.0.40
codegen_flags: <defaults>
</compile_context>

<pallas_src>
import numpy as np

import jax
import jax.numpy as jnp
from jax import lax
from jax.experimental import pallas as pl
from jax.experimental.pallas import tpu as pltpu


# ----------------------------------------------------------------------------
# Fused kernel: per grid step = one sample.
# ----------------------------------------------------------------------------
def _dqn_fused_kernel(p1t_ref, w1t_ref, b1_ref, s2t_ref, w2t_ref, b2_ref,
                      wfc_ref, bfc_ref, whead_ref, bhead_ref, out_ref):
    # conv1 as a GEMM on pre-extracted patches, transposed orientation:
    #   act1t[c, q] = relu(sum_e w1t[c, e] * patches1T[e, q] + b1[c])
    p1t = p1t_ref[0]                                               # (64, 400)
    act1t = jnp.dot(w1t_ref[...], p1t,
                    preferred_element_type=jnp.float32)            # (16, 400)
    act1t = jnp.maximum(act1t + b1_ref[...], 0.0)

    # conv2: for each of the 16 kernel offsets, gather the needed spatial
    # positions with a constant 0/1 matrix (gather-as-matmul) and accumulate.
    acc2 = jnp.zeros((32, 81), jnp.float32)
    for k in range(16):
        gath = jnp.dot(act1t, s2t_ref[k],
                       preferred_element_type=jnp.float32)         # (16, 81)
        acc2 = acc2 + jnp.dot(w2t_ref[k], gath,
                              preferred_element_type=jnp.float32)  # (32, 81)
    act2t = jnp.maximum(acc2 + b2_ref[...], 0.0)                   # (32, 81)

    # fc: y[m] = sum_{c,p} act2t[c, p] * fc_w[m, c*81 + p]
    # -> one (1,81)@(81,256) GEMM per conv2 channel, accumulated in f32.
    accf = jnp.zeros((1, 256), jnp.float32)
    for c in range(32):
        accf = accf + jnp.dot(act2t[c:c + 1, :], wfc_ref[c],
                              preferred_element_type=jnp.float32)  # (1, 256)
    actf = jnp.maximum(accf + bfc_ref[...], 0.0)                   # (1, 256)

    # head (256 -> 1) folded into the epilogue: VPU multiply + lane reduction.
    out = jnp.sum(actf * whead_ref[...], axis=-1, keepdims=True) + bhead_ref[...]
    out_ref[0] = out                                               # (1, 1)


# ----------------------------------------------------------------------------
# Wrapper-side im2col for conv1 (reshape-based, no strided slices/transposes
# of activations).  Patch-element order along axis 1 is (rb, cb, i', j') with
# kernel offset (i, j) = (4*rb + i', 4*cb + j'); prepare_params() permutes the
# conv1 weight into the same order.
# ----------------------------------------------------------------------------
def _conv1_patches_t(x):
    """x: [B, 1, 84, 84] -> transposed conv1 patches [B, 64, 400]."""
    B = x.shape[0]
    x2 = x.reshape(B, 84, 84)
    # Split 84 = 21 * 4 on both axes; bring the within-block 4x4 to the front.
    xb = x2.reshape(B, 21, 4, 21, 4).transpose(0, 2, 4, 1, 3)      # (B,4,4,21,21)
    xb = xb.reshape(B, 16, 21, 21)
    # An 8x8 / stride-4 patch covers a 2x2 group of 4x4 blocks.
    p = jnp.concatenate(
        [xb[:, :, 0:20, 0:20], xb[:, :, 0:20, 1:21],
         xb[:, :, 1:21, 0:20], xb[:, :, 1:21, 1:21]], axis=1)      # (B,64,20,20)
    return p.reshape(B, 64, 400)


# ----------------------------------------------------------------------------
# One-time conversion of PyTorch-layout params into kernel-ready layout.
# ----------------------------------------------------------------------------
def prepare_params(params):
    f32 = jnp.float32
    w1 = params["conv1_w"].astype(f32)                 # (16, 1, 8, 8)
    # (o, i, j) -> (o, rb, cb, i', j'), i = 4*rb + i', j = 4*cb + j'
    w1t = w1.reshape(16, 2, 4, 2, 4).transpose(0, 1, 3, 2, 4).reshape(16, 64)

    w2 = params["conv2_w"].astype(f32)                 # (32, 16, 4, 4)
    w2t = w2.transpose(2, 3, 0, 1).reshape(16, 32, 16)  # [k = i*4+j, o, c]

    # fc weight regrouped to [c, p, m] so that it matches the kernel's (32, 81)
    # conv2 layout and PyTorch's NCHW .view(B, -1) flatten order n = c*81 + p.
    wfc3 = params["fc_w"].astype(f32).reshape(256, 32, 81).transpose(1, 2, 0)

    # Constant 0/1 gather matrices for conv2 patch extraction:
    #   s2t[k, q, p] = 1  iff  q = (2*oh + i)*20 + (2*ow + j),  p = oh*9 + ow
    s2t = np.zeros((16, 400, 81), np.float32)
    for i in range(4):
        for j in range(4):
            k = i * 4 + j
            for oh in range(9):
                for ow in range(9):
                    s2t[k, (2 * oh + i) * 20 + (2 * ow + j), oh * 9 + ow] = 1.0

    return {
        "w1t": w1t,
        "b1": params["conv1_b"].astype(f32).reshape(16, 1),
        "s2t": jnp.asarray(s2t),
        "w2t": w2t,
        "b2": params["conv2_b"].astype(f32).reshape(32, 1),
        "wfc3": wfc3,
        "bfc": params["fc_b"].astype(f32).reshape(1, 256),
        "whead": params["head_w"].astype(f32).reshape(1, 256),
        "bhead": params["head_b"].astype(f32).reshape(1, 1),
    }


# ----------------------------------------------------------------------------
# Forward pass: one pallas_call, grid over the batch.
# ----------------------------------------------------------------------------
def dqn_regressor_forward(kp, x):
    """x: [B, 1, 84, 84] NCHW -> [B, 1]."""
    B = x.shape[0]
    p1t = _conv1_patches_t(x.astype(jnp.float32))                  # (B, 64, 400)
    out = pl.pallas_call(
        _dqn_fused_kernel,
        out_shape=jax.ShapeDtypeStruct((B, 1, 1), jnp.float32),
        grid=(B,),
        in_specs=[
            pl.BlockSpec((1, 64, 400), lambda b: (b, 0, 0)),       # patches (per sample)
            pl.BlockSpec((16, 64), lambda b: (0, 0)),              # w1t
            pl.BlockSpec((16, 1), lambda b: (0, 0)),               # b1
            pl.BlockSpec((16, 400, 81), lambda b: (0, 0, 0)),      # conv2 gather mats
            pl.BlockSpec((16, 32, 16), lambda b: (0, 0, 0)),       # w2t
            pl.BlockSpec((32, 1), lambda b: (0, 0)),               # b2
            pl.BlockSpec((32, 81, 256), lambda b: (0, 0, 0)),      # fc weight [c,p,m]
            pl.BlockSpec((1, 256), lambda b: (0, 0)),              # fc bias
            pl.BlockSpec((1, 256), lambda b: (0, 0)),              # head weight row
            pl.BlockSpec((1, 1), lambda b: (0, 0)),                # head bias
        ],
        out_specs=pl.BlockSpec((1, 1, 1), lambda b: (b, 0, 0)),
        compiler_params=pltpu.CompilerParams(
            dimension_semantics=("parallel",),
            vmem_limit_bytes=32 * 1024 * 1024),
    )(p1t, kp["w1t"], kp["b1"], kp["s2t"], kp["w2t"], kp["b2"],
      kp["wfc3"], kp["bfc"], kp["whead"], kp["bhead"])
    return out.reshape(B, 1)


# ----------------------------------------------------------------------------
# Deterministic synthetic params + pure-JAX reference (for a sanity check).
# ----------------------------------------------------------------------------
def init_params(key):
    ks = jax.random.split(key, 8)
    s = 0.05
    return {
        "conv1_w": s * jax.random.normal(ks[0], (16, 1, 8, 8), jnp.float32),
        "conv1_b": s * jax.random.normal(ks[1], (16,), jnp.float32),
        "conv2_w": s * jax.random.normal(ks[2], (32, 16, 4, 4), jnp.float32),
        "conv2_b": s * jax.random.normal(ks[3], (32,), jnp.float32),
        "fc_w":    s * jax.random.normal(ks[4], (256, 2592), jnp.float32),
        "fc_b":    s * jax.random.normal(ks[5], (256,), jnp.float32),
        "head_w":  s * jax.random.normal(ks[6], (1, 256), jnp.float32),
        "head_b":  s * jax.random.normal(ks[7], (1,), jnp.float32),
    }


def reference_forward(params, x):
    out = lax.conv_general_dilated(x, params["conv1_w"], (4, 4), "VALID",
                                   dimension_numbers=("NCHW", "OIHW", "NCHW"))
    out = jax.nn.relu(out + params["conv1_b"].reshape(1, 16, 1, 1))
    out = lax.conv_general_dilated(out, params["conv2_w"], (2, 2), "VALID",
                                   dimension_numbers=("NCHW", "OIHW", "NCHW"))
    out = jax.nn.relu(out + params["conv2_b"].reshape(1, 32, 1, 1))
    flat = out.reshape(x.shape[0], -1)
    h = jax.nn.relu(flat @ params["fc_w"].T + params["fc_b"])
    return h @ params["head_w"].T + params["head_b"]


if __name__ == "__main__":
    key = jax.random.PRNGKey(0)
    pkey, xkey = jax.random.split(key)
    params = init_params(pkey)
    # Smallest shape consistent with the module: fc expects 2592 = 32*9*9,
    # which forces a 1x84x84 input.  Batch kept small (B=2).
    x = jax.random.normal(xkey, (2, 1, 84, 84), jnp.float32)

    kp = prepare_params(params)          # one-time weight layout conversion
    fwd = jax.jit(dqn_regressor_forward)
    y = fwd(kp, x)
    jax.block_until_ready(y)
    assert y.shape == (2, 1), y.shape

    y_ref = jax.jit(reference_forward)(params, x)
    err = float(jnp.max(jnp.abs(y - y_ref)))
    assert err < 2e-2, f"mismatch vs reference: {err}"

    print("KERNEL_OK")
</pallas_src>

<mosaic_0001>
module attributes {stable_mosaic.version = 11 : i64} {
  func.func @_dqn_fused_kernel(%arg0: i32, %arg1: memref<1x64x400xf32, #tpu.memory_space<vmem>>, %arg2: memref<16x64xf32, #tpu.memory_space<vmem>>, %arg3: memref<16x1xf32, #tpu.memory_space<vmem>>, %arg4: memref<16x400x81xf32, #tpu.memory_space<vmem>>, %arg5: memref<16x32x16xf32, #tpu.memory_space<vmem>>, %arg6: memref<32x1xf32, #tpu.memory_space<vmem>>, %arg7: memref<32x81x256xf32, #tpu.memory_space<vmem>>, %arg8: memref<1x256xf32, #tpu.memory_space<vmem>>, %arg9: memref<1x256xf32, #tpu.memory_space<vmem>>, %arg10: memref<1x1xf32, #tpu.memory_space<vmem>>, %arg11: memref<1x1x1xf32, #tpu.memory_space<vmem>>) attributes {dimension_semantics = [#tpu.dimension_semantics<parallel>], iteration_bounds = array<i64: 2>, scalar_prefetch = 0 : i64, scratch_operands = 0 : i64, tpu.core_type = #tpu.core_type<tc>, window_params = [{transform_indices = @transform_0, window_bounds = array<i64: 1, 64, 400>}, {pipeline_mode = #tpu.pipeline_mode<synchronous>, transform_indices = @transform_1, window_bounds = array<i64: 16, 64>}, {pipeline_mode = #tpu.pipeline_mode<synchronous>, transform_indices = @transform_2, window_bounds = array<i64: 16, 1>}, {pipeline_mode = #tpu.pipeline_mode<synchronous>, transform_indices = @transform_3, window_bounds = array<i64: 16, 400, 81>}, {pipeline_mode = #tpu.pipeline_mode<synchronous>, transform_indices = @transform_4, window_bounds = array<i64: 16, 32, 16>}, {pipeline_mode = #tpu.pipeline_mode<synchronous>, transform_indices = @transform_5, window_bounds = array<i64: 32, 1>}, {pipeline_mode = #tpu.pipeline_mode<synchronous>, transform_indices = @transform_6, window_bounds = array<i64: 32, 81, 256>}, {pipeline_mode = #tpu.pipeline_mode<synchronous>, transform_indices = @transform_7, window_bounds = array<i64: 1, 256>}, {pipeline_mode = #tpu.pipeline_mode<synchronous>, transform_indices = @transform_8, window_bounds = array<i64: 1, 256>}, {pipeline_mode = #tpu.pipeline_mode<synchronous>, transform_indices = @transform_9, window_bounds = array<i64: 1, 1>}, {transform_indices = @transform_10, window_bounds = array<i64: 1, 1, 1>}]} {
    %c0 = arith.constant 0 : index
    %c0_0 = arith.constant 0 : index
    %c0_1 = arith.constant 0 : index
    %0 = vector.load %arg1[%c0, %c0_0, %c0_1] : memref<1x64x400xf32, #tpu.memory_space<vmem>>, vector<1x64x400xf32>
    %1 = vector.shape_cast %0 : vector<1x64x400xf32> to vector<64x400xf32>
    %c0_2 = arith.constant 0 : index
    %c0_3 = arith.constant 0 : index
    %2 = vector.load %arg2[%c0_2, %c0_3] : memref<16x64xf32, #tpu.memory_space<vmem>>, vector<16x64xf32>
    %cst = arith.constant dense<0.000000e+00> : vector<16x400xf32>
    %3 = tpu.matmul %2, %1, %cst {dimension_numbers = #tpu.dot_dimension_numbers<[1], [0], [0], [1], [0, 0, 1, 1], [], []>} : vector<16x64xf32>, vector<64x400xf32>, vector<16x400xf32> -> vector<16x400xf32>
    %c0_4 = arith.constant 0 : index
    %c0_5 = arith.constant 0 : index
    %4 = vector.load %arg3[%c0_4, %c0_5] : memref<16x1xf32, #tpu.memory_space<vmem>>, vector<16x1xf32>
    %5 = vector.broadcast %4 : vector<16x1xf32> to vector<16x400xf32>
    %6 = arith.addf %3, %5 : vector<16x400xf32>
    %cst_6 = arith.constant 0.000000e+00 : f32
    %7 = vector.broadcast %cst_6 : f32 to vector<16x400xf32>
    %8 = arith.maximumf %6, %7 : vector<16x400xf32>
    %cst_7 = arith.constant 0.000000e+00 : f32
    %9 = vector.broadcast %cst_7 : f32 to vector<32x81xf32>
    %c0_8 = arith.constant 0 : index
    %c0_9 = arith.constant 0 : index
    %c0_10 = arith.constant 0 : index
    %10 = vector.load %arg4[%c0_8, %c0_9, %c0_10] : memref<16x400x81xf32, #tpu.memory_space<vmem>>, vector<1x400x81xf32>
    %11 = vector.shape_cast %10 : vector<1x400x81xf32> to vector<400x81xf32>
    %cst_11 = arith.constant dense<0.000000e+00> : vector<16x81xf32>
    %12 = tpu.matmul %8, %11, %cst_11 {dimension_numbers = #tpu.dot_dimension_numbers<[1], [0], [0], [1], [0, 0, 1, 1], [], []>} : vector<16x400xf32>, vector<400x81xf32>, vector<16x81xf32> -> vector<16x81xf32>
    %c0_12 = arith.constant 0 : index
    %c0_13 = arith.constant 0 : index
    %c0_14 = arith.constant 0 : index
    %13 = vector.load %arg5[%c0_12, %c0_13, %c0_14] : memref<16x32x16xf32, #tpu.memory_space<vmem>>, vector<1x32x16xf32>
    %14 = vector.shape_cast %13 : vector<1x32x16xf32> to vector<32x16xf32>
    %cst_15 = arith.constant dense<0.000000e+00> : vector<32x81xf32>
    %15 = tpu.matmul %14, %12, %cst_15 {dimension_numbers = #tpu.dot_dimension_numbers<[1], [0], [0], [1], [0, 0, 1, 1], [], []>} : vector<32x16xf32>, vector<16x81xf32>, vector<32x81xf32> -> vector<32x81xf32>
    %16 = arith.addf %9, %15 : vector<32x81xf32>
    %c1 = arith.constant 1 : index
    %c0_16 = arith.constant 0 : index
    %c0_17 = arith.constant 0 : index
    %17 = vector.load %arg4[%c1, %c0_16, %c0_17] : memref<16x400x81xf32, #tpu.memory_space<vmem>>, vector<1x400x81xf32>
    %18 = vector.shape_cast %17 : vector<1x400x81xf32> to vector<400x81xf32>
    %cst_18 = arith.constant dense<0.000000e+00> : vector<16x81xf32>
    %19 = tpu.matmul %8, %18, %cst_18 {dimension_numbers = #tpu.dot_dimension_numbers<[1], [0], [0], [1], [0, 0, 1, 1], [], []>} : vector<16x400xf32>, vector<400x81xf32>, vector<16x81xf32> -> vector<16x81xf32>
    %c1_19 = arith.constant 1 : index
    %c0_20 = arith.constant 0 : index
    %c0_21 = arith.constant 0 : index
    %20 = vector.load %arg5[%c1_19, %c0_20, %c0_21] : memref<16x32x16xf32, #tpu.memory_space<vmem>>, vector<1x32x16xf32>
    %21 = vector.shape_cast %20 : vector<1x32x16xf32> to vector<32x16xf32>
    %cst_22 = arith.constant dense<0.000000e+00> : vector<32x81xf32>
    %22 = tpu.matmul %21, %19, %cst_22 {dimension_numbers = #tpu.dot_dimension_numbers<[1], [0], [0], [1], [0, 0, 1, 1], [], []>} : vector<32x16xf32>, vector<16x81xf32>, vector<32x81xf32> -> vector<32x81xf32>
    %23 = arith.addf %16, %22 : vector<32x81xf32>
    %c2 = arith.constant 2 : index
    %c0_23 = arith.constant 0 : index
    %c0_24 = arith.constant 0 : index
    %24 = vector.load %arg4[%c2, %c0_23, %c0_24] : memref<16x400x81xf32, #tpu.memory_space<vmem>>, vector<1x400x81xf32>
    %25 = vector.shape_cast %24 : vector<1x400x81xf32> to vector<400x81xf32>
    %cst_25 = arith.constant dense<0.000000e+00> : vector<16x81xf32>
    %26 = tpu.matmul %8, %25, %cst_25 {dimension_numbers = #tpu.dot_dimension_numbers<[1], [0], [0], [1], [0, 0, 1, 1], [], []>} : vector<16x400xf32>, vector<400x81xf32>, vector<16x81xf32> -> vector<16x81xf32>
    %c2_26 = arith.constant 2 : index
    %c0_27 = arith.constant 0 : index
    %c0_28 = arith.constant 0 : index
    %27 = vector.load %arg5[%c2_26, %c0_27, %c0_28] : memref<16x32x16xf32, #tpu.memory_space<vmem>>, vector<1x32x16xf32>
    %28 = vector.shape_cast %27 : vector<1x32x16xf32> to vector<32x16xf32>
    %cst_29 = arith.constant dense<0.000000e+00> : vector<32x81xf32>
    %29 = tpu.matmul %28, %26, %cst_29 {dimension_numbers = #tpu.dot_dimension_numbers<[1], [0], [0], [1], [0, 0, 1, 1], [], []>} : vector<32x16xf32>, vector<16x81xf32>, vector<32x81xf32> -> vector<32x81xf32>
    %30 = arith.addf %23, %29 : vector<32x81xf32>
    %c3 = arith.constant 3 : index
    %c0_30 = arith.constant 0 : index
    %c0_31 = arith.constant 0 : index
    %31 = vector.load %arg4[%c3, %c0_30, %c0_31] : memref<16x400x81xf32, #tpu.memory_space<vmem>>, vector<1x400x81xf32>
    %32 = vector.shape_cast %31 : vector<1x400x81xf32> to vector<400x81xf32>
    %cst_32 = arith.constant dense<0.000000e+00> : vector<16x81xf32>
    %33 = tpu.matmul %8, %32, %cst_32 {dimension_numbers = #tpu.dot_dimension_numbers<[1], [0], [0], [1], [0, 0, 1, 1], [], []>} : vector<16x400xf32>, vector<400x81xf32>, vector<16x81xf32> -> vector<16x81xf32>
    %c3_33 = arith.constant 3 : index
    %c0_34 = arith.constant 0 : index
    %c0_35 = arith.constant 0 : index
    %34 = vector.load %arg5[%c3_33, %c0_34, %c0_35] : memref<16x32x16xf32, #tpu.memory_space<vmem>>, vector<1x32x16xf32>
    %35 = vector.shape_cast %34 : vector<1x32x16xf32> to vector<32x16xf32>
    %cst_36 = arith.constant dense<0.000000e+00> : vector<32x81xf32>
    %36 = tpu.matmul %35, %33, %cst_36 {dimension_numbers = #tpu.dot_dimension_numbers<[1], [0], [0], [1], [0, 0, 1, 1], [], []>} : vector<32x16xf32>, vector<16x81xf32>, vector<32x81xf32> -> vector<32x81xf32>
    %37 = arith.addf %30, %36 : vector<32x81xf32>
    %c4 = arith.constant 4 : index
    %c0_37 = arith.constant 0 : index
    %c0_38 = arith.constant 0 : index
    %38 = vector.load %arg4[%c4, %c0_37, %c0_38] : memref<16x400x81xf32, #tpu.memory_space<vmem>>, vector<1x400x81xf32>
    %39 = vector.shape_cast %38 : vector<1x400x81xf32> to vector<400x81xf32>
    %cst_39 = arith.constant dense<0.000000e+00> : vector<16x81xf32>
    %40 = tpu.matmul %8, %39, %cst_39 {dimension_numbers = #tpu.dot_dimension_numbers<[1], [0], [0], [1], [0, 0, 1, 1], [], []>} : vector<16x400xf32>, vector<400x81xf32>, vector<16x81xf32> -> vector<16x81xf32>
    %c4_40 = arith.constant 4 : index
    %c0_41 = arith.constant 0 : index
    %c0_42 = arith.constant 0 : index
    %41 = vector.load %arg5[%c4_40, %c0_41, %c0_42] : memref<16x32x16xf32, #tpu.memory_space<vmem>>, vector<1x32x16xf32>
    %42 = vector.shape_cast %41 : vector<1x32x16xf32> to vector<32x16xf32>
    %cst_43 = arith.constant dense<0.000000e+00> : vector<32x81xf32>
    %43 = tpu.matmul %42, %40, %cst_43 {dimension_numbers = #tpu.dot_dimension_numbers<[1], [0], [0], [1], [0, 0, 1, 1], [], []>} : vector<32x16xf32>, vector<16x81xf32>, vector<32x81xf32> -> vector<32x81xf32>
    %44 = arith.addf %37, %43 : vector<32x81xf32>
    %c5 = arith.constant 5 : index
    %c0_44 = arith.constant 0 : index
    %c0_45 = arith.constant 0 : index
    %45 = vector.load %arg4[%c5, %c0_44, %c0_45] : memref<16x400x81xf32, #tpu.memory_space<vmem>>, vector<1x400x81xf32>
    %46 = vector.shape_cast %45 : vector<1x400x81xf32> to vector<400x81xf32>
    %cst_46 = arith.constant dense<0.000000e+00> : vector<16x81xf32>
    %47 = tpu.matmul %8, %46, %cst_46 {dimension_numbers = #tpu.dot_dimension_numbers<[1], [0], [0], [1], [0, 0, 1, 1], [], []>} : vector<16x400xf32>, vector<400x81xf32>, vector<16x81xf32> -> vector<16x81xf32>
    %c5_47 = arith.constant 5 : index
    %c0_48 = arith.constant 0 : index
    %c0_49 = arith.constant 0 : index
    %48 = vector.load %arg5[%c5_47, %c0_48, %c0_49] : memref<16x32x16xf32, #tpu.memory_space<vmem>>, vector<1x32x16xf32>
    %49 = vector.shape_cast %48 : vector<1x32x16xf32> to vector<32x16xf32>
    %cst_50 = arith.constant dense<0.000000e+00> : vector<32x81xf32>
    %50 = tpu.matmul %49, %47, %cst_50 {dimension_numbers = #tpu.dot_dimension_numbers<[1], [0], [0], [1], [0, 0, 1, 1], [], []>} : vector<32x16xf32>, vector<16x81xf32>, vector<32x81xf32> -> vector<32x81xf32>
    %51 = arith.addf %44, %50 : vector<32x81xf32>
    %c6 = arith.constant 6 : index
    %c0_51 = arith.constant 0 : index
    %c0_52 = arith.constant 0 : index
    %52 = vector.load %arg4[%c6, %c0_51, %c0_52] : memref<16x400x81xf32, #tpu.memory_space<vmem>>, vector<1x400x81xf32>
    %53 = vector.shape_cast %52 : vector<1x400x81xf32> to vector<400x81xf32>
    %cst_53 = arith.constant dense<0.000000e+00> : vector<16x81xf32>
    %54 = tpu.matmul %8, %53, %cst_53 {dimension_numbers = #tpu.dot_dimension_numbers<[1], [0], [0], [1], [0, 0, 1, 1], [], []>} : vector<16x400xf32>, vector<400x81xf32>, vector<16x81xf32> -> vector<16x81xf32>
    %c6_54 = arith.constant 6 : index
    %c0_55 = arith.constant 0 : index
    %c0_56 = arith.constant 0 : index
    %55 = vector.load %arg5[%c6_54, %c0_55, %c0_56] : memref<16x32x16xf32, #tpu.memory_space<vmem>>, vector<1x32x16xf32>
    %56 = vector.shape_cast %55 : vector<1x32x16xf32> to vector<32x16xf32>
    %cst_57 = arith.constant dense<0.000000e+00> : vector<32x81xf32>
    %57 = tpu.matmul %56, %54, %cst_57 {dimension_numbers = #tpu.dot_dimension_numbers<[1], [0], [0], [1], [0, 0, 1, 1], [], []>} : vector<32x16xf32>, vector<16x81xf32>, vector<32x81xf32> -> vector<32x81xf32>
    %58 = arith.addf %51, %57 : vector<32x81xf32>
    %c7 = arith.constant 7 : index
    %c0_58 = arith.constant 0 : index
    %c0_59 = arith.constant 0 : index
    %59 = vector.load %arg4[%c7, %c0_58, %c0_59] : memref<16x400x81xf32, #tpu.memory_space<vmem>>, vector<1x400x81xf32>
    %60 = vector.shape_cast %59 : vector<1x400x81xf32> to vector<400x81xf32>
    %cst_60 = arith.constant dense<0.000000e+00> : vector<16x81xf32>
    %61 = tpu.matmul %8, %60, %cst_60 {dimension_numbers = #tpu.dot_dimension_numbers<[1], [0], [0], [1], [0, 0, 1, 1], [], []>} : vector<16x400xf32>, vector<400x81xf32>, vector<16x81xf32> -> vector<16x81xf32>
    %c7_61 = arith.constant 7 : index
    %c0_62 = arith.constant 0 : index
    %c0_63 = arith.constant 0 : index
    %62 = vector.load %arg5[%c7_61, %c0_62, %c0_63] : memref<16x32x16xf32, #tpu.memory_space<vmem>>, vector<1x32x16xf32>
    %63 = vector.shape_cast %62 : vector<1x32x16xf32> to vector<32x16xf32>
    %cst_64 = arith.constant dense<0.000000e+00> : vector<32x81xf32>
    %64 = tpu.matmul %63, %61, %cst_64 {dimension_numbers = #tpu.dot_dimension_numbers<[1], [0], [0], [1], [0, 0, 1, 1], [], []>} : vector<32x16xf32>, vector<16x81xf32>, vector<32x81xf32> -> vector<32x81xf32>
    %65 = arith.addf %58, %64 : vector<32x81xf32>
    %c8 = arith.constant 8 : index
    %c0_65 = arith.constant 0 : index
    %c0_66 = arith.constant 0 : index
    %66 = vector.load %arg4[%c8, %c0_65, %c0_66] : memref<16x400x81xf32, #tpu.memory_space<vmem>>, vector<1x400x81xf32>
    %67 = vector.shape_cast %66 : vector<1x400x81xf32> to vector<400x81xf32>
    %cst_67 = arith.constant dense<0.000000e+00> : vector<16x81xf32>
    %68 = tpu.matmul %8, %67, %cst_67 {dimension_numbers = #tpu.dot_dimension_numbers<[1], [0], [0], [1], [0, 0, 1, 1], [], []>} : vector<16x400xf32>, vector<400x81xf32>, vector<16x81xf32> -> vector<16x81xf32>
    %c8_68 = arith.constant 8 : index
    %c0_69 = arith.constant 0 : index
    %c0_70 = arith.constant 0 : index
    %69 = vector.load %arg5[%c8_68, %c0_69, %c0_70] : memref<16x32x16xf32, #tpu.memory_space<vmem>>, vector<1x32x16xf32>
    %70 = vector.shape_cast %69 : vector<1x32x16xf32> to vector<32x16xf32>
    %cst_71 = arith.constant dense<0.000000e+00> : vector<32x81xf32>
    %71 = tpu.matmul %70, %68, %cst_71 {dimension_numbers = #tpu.dot_dimension_numbers<[1], [0], [0], [1], [0, 0, 1, 1], [], []>} : vector<32x16xf32>, vector<16x81xf32>, vector<32x81xf32> -> vector<32x81xf32>
    %72 = arith.addf %65, %71 : vector<32x81xf32>
    %c9 = arith.constant 9 : index
    %c0_72 = arith.constant 0 : index
    %c0_73 = arith.constant 0 : index
    %73 = vector.load %arg4[%c9, %c0_72, %c0_73] : memref<16x400x81xf32, #tpu.memory_space<vmem>>, vector<1x400x81xf32>
    %74 = vector.shape_cast %73 : vector<1x400x81xf32> to vector<400x81xf32>
    %cst_74 = arith.constant dense<0.000000e+00> : vector<16x81xf32>
    %75 = tpu.matmul %8, %74, %cst_74 {dimension_numbers = #tpu.dot_dimension_numbers<[1], [0], [0], [1], [0, 0, 1, 1], [], []>} : vector<16x400xf32>, vector<400x81xf32>, vector<16x81xf32> -> vector<16x81xf32>
    %c9_75 = arith.constant 9 : index
    %c0_76 = arith.constant 0 : index
    %c0_77 = arith.constant 0 : index
    %76 = vector.load %arg5[%c9_75, %c0_76, %c0_77] : memref<16x32x16xf32, #tpu.memory_space<vmem>>, vector<1x32x16xf32>
    %77 = vector.shape_cast %76 : vector<1x32x16xf32> to vector<32x16xf32>
    %cst_78 = arith.constant dense<0.000000e+00> : vector<32x81xf32>
    %78 = tpu.matmul %77, %75, %cst_78 {dimension_numbers = #tpu.dot_dimension_numbers<[1], [0], [0], [1], [0, 0, 1, 1], [], []>} : vector<32x16xf32>, vector<16x81xf32>, vector<32x81xf32> -> vector<32x81xf32>
    %79 = arith.addf %72, %78 : vector<32x81xf32>
    %c10 = arith.constant 10 : index
    %c0_79 = arith.constant 0 : index
    %c0_80 = arith.constant 0 : index
    %80 = vector.load %arg4[%c10, %c0_79, %c0_80] : memref<16x400x81xf32, #tpu.memory_space<vmem>>, vector<1x400x81xf32>
    %81 = vector.shape_cast %80 : vector<1x400x81xf32> to vector<400x81xf32>
    %cst_81 = arith.constant dense<0.000000e+00> : vector<16x81xf32>
    %82 = tpu.matmul %8, %81, %cst_81 {dimension_numbers = #tpu.dot_dimension_numbers<[1], [0], [0], [1], [0, 0, 1, 1], [], []>} : vector<16x400xf32>, vector<400x81xf32>, vector<16x81xf32> -> vector<16x81xf32>
    %c10_82 = arith.constant 10 : index
    %c0_83 = arith.constant 0 : index
    %c0_84 = arith.constant 0 : index
    %83 = vector.load %arg5[%c10_82, %c0_83, %c0_84] : memref<16x32x16xf32, #tpu.memory_space<vmem>>, vector<1x32x16xf32>
    %84 = vector.shape_cast %83 : vector<1x32x16xf32> to vector<32x16xf32>
    %cst_85 = arith.constant dense<0.000000e+00> : vector<32x81xf32>
    %85 = tpu.matmul %84, %82, %cst_85 {dimension_numbers = #tpu.dot_dimension_numbers<[1], [0], [0], [1], [0, 0, 1, 1], [], []>} : vector<32x16xf32>, vector<16x81xf32>, vector<32x81xf32> -> vector<32x81xf32>
    %86 = arith.addf %79, %85 : vector<32x81xf32>
    %c11 = arith.constant 11 : index
    %c0_86 = arith.constant 0 : index
    %c0_87 = arith.constant 0 : index
    %87 = vector.load %arg4[%c11, %c0_86, %c0_87] : memref<16x400x81xf32, #tpu.memory_space<vmem>>, vector<1x400x81xf32>
    %88 = vector.shape_cast %87 : vector<1x400x81xf32> to vector<400x81xf32>
    %cst_88 = arith.constant dense<0.000000e+00> : vector<16x81xf32>
    %89 = tpu.matmul %8, %88, %cst_88 {dimension_numbers = #tpu.dot_dimension_numbers<[1], [0], [0], [1], [0, 0, 1, 1], [], []>} : vector<16x400xf32>, vector<400x81xf32>, vector<16x81xf32> -> vector<16x81xf32>
    %c11_89 = arith.constant 11 : index
    %c0_90 = arith.constant 0 : index
    %c0_91 = arith.constant 0 : index
    %90 = vector.load %arg5[%c11_89, %c0_90, %c0_91] : memref<16x32x16xf32, #tpu.memory_space<vmem>>, vector<1x32x16xf32>
    %91 = vector.shape_cast %90 : vector<1x32x16xf32> to vector<32x16xf32>
    %cst_92 = arith.constant dense<0.000000e+00> : vector<32x81xf32>
    %92 = tpu.matmul %91, %89, %cst_92 {dimension_numbers = #tpu.dot_dimension_numbers<[1], [0], [0], [1], [0, 0, 1, 1], [], []>} : vector<32x16xf32>, vector<16x81xf32>, vector<32x81xf32> -> vector<32x81xf32>
    %93 = arith.addf %86, %92 : vector<32x81xf32>
    %c12 = arith.constant 12 : index
    %c0_93 = arith.constant 0 : index
    %c0_94 = arith.constant 0 : index
    %94 = vector.load %arg4[%c12, %c0_93, %c0_94] : memref<16x400x81xf32, #tpu.memory_space<vmem>>, vector<1x400x81xf32>
    %95 = vector.shape_cast %94 : vector<1x400x81xf32> to vector<400x81xf32>
    %cst_95 = arith.constant dense<0.000000e+00> : vector<16x81xf32>
    %96 = tpu.matmul %8, %95, %cst_95 {dimension_numbers = #tpu.dot_dimension_numbers<[1], [0], [0], [1], [0, 0, 1, 1], [], []>} : vector<16x400xf32>, vector<400x81xf32>, vector<16x81xf32> -> vector<16x81xf32>
    %c12_96 = arith.constant 12 : index
    %c0_97 = arith.constant 0 : index
    %c0_98 = arith.constant 0 : index
    %97 = vector.load %arg5[%c12_96, %c0_97, %c0_98] : memref<16x32x16xf32, #tpu.memory_space<vmem>>, vector<1x32x16xf32>
    %98 = vector.shape_cast %97 : vector<1x32x16xf32> to vector<32x16xf32>
    %cst_99 = arith.constant dense<0.000000e+00> : vector<32x81xf32>
    %99 = tpu.matmul %98, %96, %cst_99 {dimension_numbers = #tpu.dot_dimension_numbers<[1], [0], [0], [1], [0, 0, 1, 1], [], []>} : vector<32x16xf32>, vector<16x81xf32>, vector<32x81xf32> -> vector<32x81xf32>
    %100 = arith.addf %93, %99 : vector<32x81xf32>
    %c13 = arith.constant 13 : index
    %c0_100 = arith.constant 0 : index
    %c0_101 = arith.constant 0 : index
    %101 = vector.load %arg4[%c13, %c0_100, %c0_101] : memref<16x400x81xf32, #tpu.memory_space<vmem>>, vector<1x400x81xf32>
    %102 = vector.shape_cast %101 : vector<1x400x81xf32> to vector<400x81xf32>
    %cst_102 = arith.constant dense<0.000000e+00> : vector<16x81xf32>
    %103 = tpu.matmul %8, %102, %cst_102 {dimension_numbers = #tpu.dot_dimension_numbers<[1], [0], [0], [1], [0, 0, 1, 1], [], []>} : vector<16x400xf32>, vector<400x81xf32>, vector<16x81xf32> -> vector<16x81xf32>
    %c13_103 = arith.constant 13 : index
    %c0_104 = arith.constant 0 : index
    %c0_105 = arith.constant 0 : index
    %104 = vector.load %arg5[%c13_103, %c0_104, %c0_105] : memref<16x32x16xf32, #tpu.memory_space<vmem>>, vector<1x32x16xf32>
    %105 = vector.shape_cast %104 : vector<1x32x16xf32> to vector<32x16xf32>
    %cst_106 = arith.constant dense<0.000000e+00> : vector<32x81xf32>
    %106 = tpu.matmul %105, %103, %cst_106 {dimension_numbers = #tpu.dot_dimension_numbers<[1], [0], [0], [1], [0, 0, 1, 1], [], []>} : vector<32x16xf32>, vector<16x81xf32>, vector<32x81xf32> -> vector<32x81xf32>
    %107 = arith.addf %100, %106 : vector<32x81xf32>
    %c14 = arith.constant 14 : index
    %c0_107 = arith.constant 0 : index
    %c0_108 = arith.constant 0 : index
    %108 = vector.load %arg4[%c14, %c0_107, %c0_108] : memref<16x400x81xf32, #tpu.memory_space<vmem>>, vector<1x400x81xf32>
    %109 = vector.shape_cast %108 : vector<1x400x81xf32> to vector<400x81xf32>
    %cst_109 = arith.constant dense<0.000000e+00> : vector<16x81xf32>
    %110 = tpu.matmul %8, %109, %cst_109 {dimension_numbers = #tpu.dot_dimension_numbers<[1], [0], [0], [1], [0, 0, 1, 1], [], []>} : vector<16x400xf32>, vector<400x81xf32>, vector<16x81xf32> -> vector<16x81xf32>
    %c14_110 = arith.constant 14 : index
    %c0_111 = arith.constant 0 : index
    %c0_112 = arith.constant 0 : index
    %111 = vector.load %arg5[%c14_110, %c0_111, %c0_112] : memref<16x32x16xf32, #tpu.memory_space<vmem>>, vector<1x32x16xf32>
    %112 = vector.shape_cast %111 : vector<1x32x16xf32> to vector<32x16xf32>
    %cst_113 = arith.constant dense<0.000000e+00> : vector<32x81xf32>
    %113 = tpu.matmul %112, %110, %cst_113 {dimension_numbers = #tpu.dot_dimension_numbers<[1], [0], [0], [1], [0, 0, 1, 1], [], []>} : vector<32x16xf32>, vector<16x81xf32>, vector<32x81xf32> -> vector<32x81xf32>
    %114 = arith.addf %107, %113 : vector<32x81xf32>
    %c15 = arith.constant 15 : index
    %c0_114 = arith.constant 0 : index
    %c0_115 = arith.constant 0 : index
    %115 = vector.load %arg4[%c15, %c0_114, %c0_115] : memref<16x400x81xf32, #tpu.memory_space<vmem>>, vector<1x400x81xf32>
    %116 = vector.shape_cast %115 : vector<1x400x81xf32> to vector<400x81xf32>
    %cst_116 = arith.constant dense<0.000000e+00> : vector<16x81xf32>
    %117 = tpu.matmul %8, %116, %cst_116 {dimension_numbers = #tpu.dot_dimension_numbers<[1], [0], [0], [1], [0, 0, 1, 1], [], []>} : vector<16x400xf32>, vector<400x81xf32>, vector<16x81xf32> -> vector<16x81xf32>
    %c15_117 = arith.constant 15 : index
    %c0_118 = arith.constant 0 : index
    %c0_119 = arith.constant 0 : index
    %118 = vector.load %arg5[%c15_117, %c0_118, %c0_119] : memref<16x32x16xf32, #tpu.memory_space<vmem>>, vector<1x32x16xf32>
    %119 = vector.shape_cast %118 : vector<1x32x16xf32> to vector<32x16xf32>
    %cst_120 = arith.constant dense<0.000000e+00> : vector<32x81xf32>
    %120 = tpu.matmul %119, %117, %cst_120 {dimension_numbers = #tpu.dot_dimension_numbers<[1], [0], [0], [1], [0, 0, 1, 1], [], []>} : vector<32x16xf32>, vector<16x81xf32>, vector<32x81xf32> -> vector<32x81xf32>
    %121 = arith.addf %114, %120 : vector<32x81xf32>
    %c0_121 = arith.constant 0 : index
    %c0_122 = arith.constant 0 : index
    %122 = vector.load %arg6[%c0_121, %c0_122] : memref<32x1xf32, #tpu.memory_space<vmem>>, vector<32x1xf32>
    %123 = vector.broadcast %122 : vector<32x1xf32> to vector<32x81xf32>
    %124 = arith.addf %121, %123 : vector<32x81xf32>
    %cst_123 = arith.constant 0.000000e+00 : f32
    %125 = vector.broadcast %cst_123 : f32 to vector<32x81xf32>
    %126 = arith.maximumf %124, %125 : vector<32x81xf32>
    %cst_124 = arith.constant 0.000000e+00 : f32
    %127 = vector.broadcast %cst_124 : f32 to vector<1x256xf32>
    %128 = vector.extract_strided_slice %126 {offsets = [0, 0], sizes = [1, 81], strides = [1, 1]} : vector<32x81xf32> to vector<1x81xf32>
    %c0_125 = arith.constant 0 : index
    %c0_126 = arith.constant 0 : index
    %c0_127 = arith.constant 0 : index
    %129 = vector.load %arg7[%c0_125, %c0_126, %c0_127] : memref<32x81x256xf32, #tpu.memory_space<vmem>>, vector<1x81x256xf32>
    %130 = vector.shape_cast %129 : vector<1x81x256xf32> to vector<81x256xf32>
    %cst_128 = arith.constant dense<0.000000e+00> : vector<1x256xf32>
    %131 = tpu.matmul %128, %130, %cst_128 {dimension_numbers = #tpu.dot_dimension_numbers<[1], [0], [0], [1], [0, 0, 1, 1], [], []>} : vector<1x81xf32>, vector<81x256xf32>, vector<1x256xf32> -> vector<1x256xf32>
    %132 = arith.addf %127, %131 : vector<1x256xf32>
    %133 = vector.extract_strided_slice %126 {offsets = [1, 0], sizes = [1, 81], strides = [1, 1]} : vector<32x81xf32> to vector<1x81xf32>
    %c1_129 = arith.constant 1 : index
    %c0_130 = arith.constant 0 : index
    %c0_131 = arith.constant 0 : index
    %134 = vector.load %arg7[%c1_129, %c0_130, %c0_131] : memref<32x81x256xf32, #tpu.memory_space<vmem>>, vector<1x81x256xf32>
    %135 = vector.shape_cast %134 : vector<1x81x256xf32> to vector<81x256xf32>
    %cst_132 = arith.constant dense<0.000000e+00> : vector<1x256xf32>
    %136 = tpu.matmul %133, %135, %cst_132 {dimension_numbers = #tpu.dot_dimension_numbers<[1], [0], [0], [1], [0, 0, 1, 1], [], []>} : vector<1x81xf32>, vector<81x256xf32>, vector<1x256xf32> -> vector<1x256xf32>
    %137 = arith.addf %132, %136 : vector<1x256xf32>
    %138 = vector.extract_strided_slice %126 {offsets = [2, 0], sizes = [1, 81], strides = [1, 1]} : vector<32x81xf32> to vector<1x81xf32>
    %c2_133 = arith.constant 2 : index
    %c0_134 = arith.constant 0 : index
    %c0_135 = arith.constant 0 : index
    %139 = vector.load %arg7[%c2_133, %c0_134, %c0_135] : memref<32x81x256xf32, #tpu.memory_space<vmem>>, vector<1x81x256xf32>
    %140 = vector.shape_cast %139 : vector<1x81x256xf32> to vector<81x256xf32>
    %cst_136 = arith.constant dense<0.000000e+00> : vector<1x256xf32>
    %141 = tpu.matmul %138, %140, %cst_136 {dimension_numbers = #tpu.dot_dimension_numbers<[1], [0], [0], [1], [0, 0, 1, 1], [], []>} : vector<1x81xf32>, vector<81x256xf32>, vector<1x256xf32> -> vector<1x256xf32>
    %142 = arith.addf %137, %141 : vector<1x256xf32>
    %143 = vector.extract_strided_slice %126 {offsets = [3, 0], sizes = [1, 81], strides = [1, 1]} : vector<32x81xf32> to vector<1x81xf32>
    %c3_137 = arith.constant 3 : index
    %c0_138 = arith.constant 0 : index
    %c0_139 = arith.constant 0 : index
    %144 = vector.load %arg7[%c3_137, %c0_138, %c0_139] : memref<32x81x256xf32, #tpu.memory_space<vmem>>, vector<1x81x256xf32>
    %145 = vector.shape_cast %144 : vector<1x81x256xf32> to vector<81x256xf32>
    %cst_140 = arith.constant dense<0.000000e+00> : vector<1x256xf32>
    %146 = tpu.matmul %143, %145, %cst_140 {dimension_numbers = #tpu.dot_dimension_numbers<[1], [0], [0], [1], [0, 0, 1, 1], [], []>} : vector<1x81xf32>, vector<81x256xf32>, vector<1x256xf32> -> vector<1x256xf32>
    %147 = arith.addf %142, %146 : vector<1x256xf32>
    %148 = vector.extract_strided_slice %126 {offsets = [4, 0], sizes = [1, 81], strides = [1, 1]} : vector<32x81xf32> to vector<1x81xf32>
    %c4_141 = arith.constant 4 : index
    %c0_142 = arith.constant 0 : index
    %c0_143 = arith.constant 0 : index
    %149 = vector.load %arg7[%c4_141, %c0_142, %c0_143] : memref<32x81x256xf32, #tpu.memory_space<vmem>>, vector<1x81x256xf32>
    %150 = vector.shape_cast %149 : vector<1x81x256xf32> to vector<81x256xf32>
    %cst_144 = arith.constant dense<0.000000e+00> : vector<1x256xf32>
    %151 = tpu.matmul %148, %150, %cst_144 {dimension_numbers = #tpu.dot_dimension_numbers<[1], [0], [0], [1], [0, 0, 1, 1], [], []>} : vector<1x81xf32>, vector<81x256xf32>, vector<1x256xf32> -> vector<1x256xf32>
    %152 = arith.addf %147, %151 : vector<1x256xf32>
    %153 = vector.extract_strided_slice %126 {offsets = [5, 0], sizes = [1, 81], strides = [1, 1]} : vector<32x81xf32> to vector<1x81xf32>
    %c5_145 = arith.constant 5 : index
    %c0_146 = arith.constant 0 : index
    %c0_147 = arith.constant 0 : index
    %154 = vector.load %arg7[%c5_145, %c0_146, %c0_147] : memref<32x81x256xf32, #tpu.memory_space<vmem>>, vector<1x81x256xf32>
    %155 = vector.shape_cast %154 : vector<1x81x256xf32> to vector<81x256xf32>
    %cst_148 = arith.constant dense<0.000000e+00> : vector<1x256xf32>
    %156 = tpu.matmul %153, %155, %cst_148 {dimension_numbers = #tpu.dot_dimension_numbers<[1], [0], [0], [1], [0, 0, 1, 1], [], []>} : vector<1x81xf32>, vector<81x256xf32>, vector<1x256xf32> -> vector<1x256xf32>
    %157 = arith.addf %152, %156 : vector<1x256xf32>
    %158 = vector.extract_strided_slice %126 {offsets = [6, 0], sizes = [1, 81], strides = [1, 1]} : vector<32x81xf32> to vector<1x81xf32>
    %c6_149 = arith.constant 6 : index
    %c0_150 = arith.constant 0 : index
    %c0_151 = arith.constant 0 : index
    %159 = vector.load %arg7[%c6_149, %c0_150, %c0_151] : memref<32x81x256xf32, #tpu.memory_space<vmem>>, vector<1x81x256xf32>
    %160 = vector.shape_cast %159 : vector<1x81x256xf32> to vector<81x256xf32>
    %cst_152 = arith.constant dense<0.000000e+00> : vector<1x256xf32>
    %161 = tpu.matmul %158, %160, %cst_152 {dimension_numbers = #tpu.dot_dimension_numbers<[1], [0], [0], [1], [0, 0, 1, 1], [], []>} : vector<1x81xf32>, vector<81x256xf32>, vector<1x256xf32> -> vector<1x256xf32>
    %162 = arith.addf %157, %161 : vector<1x256xf32>
    %163 = vector.extract_strided_slice %126 {offsets = [7, 0], sizes = [1, 81], strides = [1, 1]} : vector<32x81xf32> to vector<1x81xf32>
    %c7_153 = arith.constant 7 : index
    %c0_154 = arith.constant 0 : index
    %c0_155 = arith.constant 0 : index
    %164 = vector.load %arg7[%c7_153, %c0_154, %c0_155] : memref<32x81x256xf32, #tpu.memory_space<vmem>>, vector<1x81x256xf32>
    %165 = vector.shape_cast %164 : vector<1x81x256xf32> to vector<81x256xf32>
    %cst_156 = arith.constant dense<0.000000e+00> : vector<1x256xf32>
    %166 = tpu.matmul %163, %165, %cst_156 {dimension_numbers = #tpu.dot_dimension_numbers<[1], [0], [0], [1], [0, 0, 1, 1], [], []>} : vector<1x81xf32>, vector<81x256xf32>, vector<1x256xf32> -> vector<1x256xf32>
    %167 = arith.addf %162, %166 : vector<1x256xf32>
    %168 = vector.extract_strided_slice %126 {offsets = [8, 0], sizes = [1, 81], strides = [1, 1]} : vector<32x81xf32> to vector<1x81xf32>
    %c8_157 = arith.constant 8 : index
    %c0_158 = arith.constant 0 : index
    %c0_159 = arith.constant 0 : index
    %169 = vector.load %arg7[%c8_157, %c0_158, %c0_159] : memref<32x81x256xf32, #tpu.memory_space<vmem>>, vector<1x81x256xf32>
    %170 = vector.shape_cast %169 : vector<1x81x256xf32> to vector<81x256xf32>
    %cst_160 = arith.constant dense<0.000000e+00> : vector<1x256xf32>
    %171 = tpu.matmul %168, %170, %cst_160 {dimension_numbers = #tpu.dot_dimension_numbers<[1], [0], [0], [1], [0, 0, 1, 1], [], []>} : vector<1x81xf32>, vector<81x256xf32>, vector<1x256xf32> -> vector<1x256xf32>
    %172 = arith.addf %167, %171 : vector<1x256xf32>
    %173 = vector.extract_strided_slice %126 {offsets = [9, 0], sizes = [1, 81], strides = [1, 1]} : vector<32x81xf32> to vector<1x81xf32>
    %c9_161 = arith.constant 9 : index
    %c0_162 = arith.constant 0 : index
    %c0_163 = arith.constant 0 : index
    %174 = vector.load %arg7[%c9_161, %c0_162, %c0_163] : memref<32x81x256xf32, #tpu.memory_space<vmem>>, vector<1x81x256xf32>
    %175 = vector.shape_cast %174 : vector<1x81x256xf32> to vector<81x256xf32>
    %cst_164 = arith.constant dense<0.000000e+00> : vector<1x256xf32>
    %176 = tpu.matmul %173, %175, %cst_164 {dimension_numbers = #tpu.dot_dimension_numbers<[1], [0], [0], [1], [0, 0, 1, 1], [], []>} : vector<1x81xf32>, vector<81x256xf32>, vector<1x256xf32> -> vector<1x256xf32>
    %177 = arith.addf %172, %176 : vector<1x256xf32>
    %178 = vector.extract_strided_slice %126 {offsets = [10, 0], sizes = [1, 81], strides = [1, 1]} : vector<32x81xf32> to vector<1x81xf32>
    %c10_165 = arith.constant 10 : index
    %c0_166 = arith.constant 0 : index
    %c0_167 = arith.constant 0 : index
    %179 = vector.load %arg7[%c10_165, %c0_166, %c0_167] : memref<32x81x256xf32, #tpu.memory_space<vmem>>, vector<1x81x256xf32>
    %180 = vector.shape_cast %179 : vector<1x81x256xf32> to vector<81x256xf32>
    %cst_168 = arith.constant dense<0.000000e+00> : vector<1x256xf32>
    %181 = tpu.matmul %178, %180, %cst_168 {dimension_numbers = #tpu.dot_dimension_numbers<[1], [0], [0], [1], [0, 0, 1, 1], [], []>} : vector<1x81xf32>, vector<81x256xf32>, vector<1x256xf32> -> vector<1x256xf32>
    %182 = arith.addf %177, %181 : vector<1x256xf32>
    %183 = vector.extract_strided_slice %126 {offsets = [11, 0], sizes = [1, 81], strides = [1, 1]} : vector<32x81xf32> to vector<1x81xf32>
    %c11_169 = arith.constant 11 : index
    %c0_170 = arith.constant 0 : index
    %c0_171 = arith.constant 0 : index
    %184 = vector.load %arg7[%c11_169, %c0_170, %c0_171] : memref<32x81x256xf32, #tpu.memory_space<vmem>>, vector<1x81x256xf32>
    %185 = vector.shape_cast %184 : vector<1x81x256xf32> to vector<81x256xf32>
    %cst_172 = arith.constant dense<0.000000e+00> : vector<1x256xf32>
    %186 = tpu.matmul %183, %185, %cst_172 {dimension_numbers = #tpu.dot_dimension_numbers<[1], [0], [0], [1], [0, 0, 1, 1], [], []>} : vector<1x81xf32>, vector<81x256xf32>, vector<1x256xf32> -> vector<1x256xf32>
    %187 = arith.addf %182, %186 : vector<1x256xf32>
    %188 = vector.extract_strided_slice %126 {offsets = [12, 0], sizes = [1, 81], strides = [1, 1]} : vector<32x81xf32> to vector<1x81xf32>
    %c12_173 = arith.constant 12 : index
    %c0_174 = arith.constant 0 : index
    %c0_175 = arith.constant 0 : index
    %189 = vector.load %arg7[%c12_173, %c0_174, %c0_175] : memref<32x81x256xf32, #tpu.memory_space<vmem>>, vector<1x81x256xf32>
    %190 = vector.shape_cast %189 : vector<1x81x256xf32> to vector<81x256xf32>
    %cst_176 = arith.constant dense<0.000000e+00> : vector<1x256xf32>
    %191 = tpu.matmul %188, %190, %cst_176 {dimension_numbers = #tpu.dot_dimension_numbers<[1], [0], [0], [1], [0, 0, 1, 1], [], []>} : vector<1x81xf32>, vector<81x256xf32>, vector<1x256xf32> -> vector<1x256xf32>
    %192 = arith.addf %187, %191 : vector<1x256xf32>
    %193 = vector.extract_strided_slice %126 {offsets = [13, 0], sizes = [1, 81], strides = [1, 1]} : vector<32x81xf32> to vector<1x81xf32>
    %c13_177 = arith.constant 13 : index
    %c0_178 = arith.constant 0 : index
    %c0_179 = arith.constant 0 : index
    %194 = vector.load %arg7[%c13_177, %c0_178, %c0_179] : memref<32x81x256xf32, #tpu.memory_space<vmem>>, vector<1x81x256xf32>
    %195 = vector.shape_cast %194 : vector<1x81x256xf32> to vector<81x256xf32>
    %cst_180 = arith.constant dense<0.000000e+00> : vector<1x256xf32>
    %196 = tpu.matmul %193, %195, %cst_180 {dimension_numbers = #tpu.dot_dimension_numbers<[1], [0], [0], [1], [0, 0, 1, 1], [], []>} : vector<1x81xf32>, vector<81x256xf32>, vector<1x256xf32> -> vector<1x256xf32>
    %197 = arith.addf %192, %196 : vector<1x256xf32>
    %198 = vector.extract_strided_slice %126 {offsets = [14, 0], sizes = [1, 81], strides = [1, 1]} : vector<32x81xf32> to vector<1x81xf32>
    %c14_181 = arith.constant 14 : index
    %c0_182 = arith.constant 0 : index
    %c0_183 = arith.constant 0 : index
    %199 = vector.load %arg7[%c14_181, %c0_182, %c0_183] : memref<32x81x256xf32, #tpu.memory_space<vmem>>, vector<1x81x256xf32>
    %200 = vector.shape_cast %199 : vector<1x81x256xf32> to vector<81x256xf32>
    %cst_184 = arith.constant dense<0.000000e+00> : vector<1x256xf32>
    %201 = tpu.matmul %198, %200, %cst_184 {dimension_numbers = #tpu.dot_dimension_numbers<[1], [0], [0], [1], [0, 0, 1, 1], [], []>} : vector<1x81xf32>, vector<81x256xf32>, vector<1x256xf32> -> vector<1x256xf32>
    %202 = arith.addf %197, %201 : vector<1x256xf32>
    %203 = vector.extract_strided_slice %126 {offsets = [15, 0], sizes = [1, 81], strides = [1, 1]} : vector<32x81xf32> to vector<1x81xf32>
    %c15_185 = arith.constant 15 : index
    %c0_186 = arith.constant 0 : index
    %c0_187 = arith.constant 0 : index
    %204 = vector.load %arg7[%c15_185, %c0_186, %c0_187] : memref<32x81x256xf32, #tpu.memory_space<vmem>>, vector<1x81x256xf32>
    %205 = vector.shape_cast %204 : vector<1x81x256xf32> to vector<81x256xf32>
    %cst_188 = arith.constant dense<0.000000e+00> : vector<1x256xf32>
    %206 = tpu.matmul %203, %205, %cst_188 {dimension_numbers = #tpu.dot_dimension_numbers<[1], [0], [0], [1], [0, 0, 1, 1], [], []>} : vector<1x81xf32>, vector<81x256xf32>, vector<1x256xf32> -> vector<1x256xf32>
    %207 = arith.addf %202, %206 : vector<1x256xf32>
    %208 = vector.extract_strided_slice %126 {offsets = [16, 0], sizes = [1, 81], strides = [1, 1]} : vector<32x81xf32> to vector<1x81xf32>
    %c16 = arith.constant 16 : index
    %c0_189 = arith.constant 0 : index
    %c0_190 = arith.constant 0 : index
    %209 = vector.load %arg7[%c16, %c0_189, %c0_190] : memref<32x81x256xf32, #tpu.memory_space<vmem>>, vector<1x81x256xf32>
    %210 = vector.shape_cast %209 : vector<1x81x256xf32> to vector<81x256xf32>
    %cst_191 = arith.constant dense<0.000000e+00> : vector<1x256xf32>
    %211 = tpu.matmul %208, %210, %cst_191 {dimension_numbers = #tpu.dot_dimension_numbers<[1], [0], [0], [1], [0, 0, 1, 1], [], []>} : vector<1x81xf32>, vector<81x256xf32>, vector<1x256xf32> -> vector<1x256xf32>
    %212 = arith.addf %207, %211 : vector<1x256xf32>
    %213 = vector.extract_strided_slice %126 {offsets = [17, 0], sizes = [1, 81], strides = [1, 1]} : vector<32x81xf32> to vector<1x81xf32>
    %c17 = arith.constant 17 : index
    %c0_192 = arith.constant 0 : index
    %c0_193 = arith.constant 0 : index
    %214 = vector.load %arg7[%c17, %c0_192, %c0_193] : memref<32x81x256xf32, #tpu.memory_space<vmem>>, vector<1x81x256xf32>
    %215 = vector.shape_cast %214 : vector<1x81x256xf32> to vector<81x256xf32>
    %cst_194 = arith.constant dense<0.000000e+00> : vector<1x256xf32>
    %216 = tpu.matmul %213, %215, %cst_194 {dimension_numbers = #tpu.dot_dimension_numbers<[1], [0], [0], [1], [0, 0, 1, 1], [], []>} : vector<1x81xf32>, vector<81x256xf32>, vector<1x256xf32> -> vector<1x256xf32>
    %217 = arith.addf %212, %216 : vector<1x256xf32>
    %218 = vector.extract_strided_slice %126 {offsets = [18, 0], sizes = [1, 81], strides = [1, 1]} : vector<32x81xf32> to vector<1x81xf32>
    %c18 = arith.constant 18 : index
    %c0_195 = arith.constant 0 : index
    %c0_196 = arith.constant 0 : index
    %219 = vector.load %arg7[%c18, %c0_195, %c0_196] : memref<32x81x256xf32, #tpu.memory_space<vmem>>, vector<1x81x256xf32>
    %220 = vector.shape_cast %219 : vector<1x81x256xf32> to vector<81x256xf32>
    %cst_197 = arith.constant dense<0.000000e+00> : vector<1x256xf32>
    %221 = tpu.matmul %218, %220, %cst_197 {dimension_numbers = #tpu.dot_dimension_numbers<[1], [0], [0], [1], [0, 0, 1, 1], [], []>} : vector<1x81xf32>, vector<81x256xf32>, vector<1x256xf32> -> vector<1x256xf32>
    %222 = arith.addf %217, %221 : vector<1x256xf32>
    %223 = vector.extract_strided_slice %126 {offsets = [19, 0], sizes = [1, 81], strides = [1, 1]} : vector<32x81xf32> to vector<1x81xf32>
    %c19 = arith.constant 19 : index
    %c0_198 = arith.constant 0 : index
    %c0_199 = arith.constant 0 : index
    %224 = vector.load %arg7[%c19, %c0_198, %c0_199] : memref<32x81x256xf32, #tpu.memory_space<vmem>>, vector<1x81x256xf32>
    %225 = vector.shape_cast %224 : vector<1x81x256xf32> to vector<81x256xf32>
    %cst_200 = arith.constant dense<0.000000e+00> : vector<1x256xf32>
    %226 = tpu.matmul %223, %225, %cst_200 {dimension_numbers = #tpu.dot_dimension_numbers<[1], [0], [0], [1], [0, 0, 1, 1], [], []>} : vector<1x81xf32>, vector<81x256xf32>, vector<1x256xf32> -> vector<1x256xf32>
    %227 = arith.addf %222, %226 : vector<1x256xf32>
    %228 = vector.extract_strided_slice %126 {offsets = [20, 0], sizes = [1, 81], strides = [1, 1]} : vector<32x81xf32> to vector<1x81xf32>
    %c20 = arith.constant 20 : index
    %c0_201 = arith.constant 0 : index
    %c0_202 = arith.constant 0 : index
    %229 = vector.load %arg7[%c20, %c0_201, %c0_202] : memref<32x81x256xf32, #tpu.memory_space<vmem>>, vector<1x81x256xf32>
    %230 = vector.shape_cast %229 : vector<1x81x256xf32> to vector<81x256xf32>
    %cst_203 = arith.constant dense<0.000000e+00> : vector<1x256xf32>
    %231 = tpu.matmul %228, %230, %cst_203 {dimension_numbers = #tpu.dot_dimension_numbers<[1], [0], [0], [1], [0, 0, 1, 1], [], []>} : vector<1x81xf32>, vector<81x256xf32>, vector<1x256xf32> -> vector<1x256xf32>
    %232 = arith.addf %227, %231 : vector<1x256xf32>
    %233 = vector.extract_strided_slice %126 {offsets = [21, 0], sizes = [1, 81], strides = [1, 1]} : vector<32x81xf32> to vector<1x81xf32>
    %c21 = arith.constant 21 : index
    %c0_204 = arith.constant 0 : index
    %c0_205 = arith.constant 0 : index
    %234 = vector.load %arg7[%c21, %c0_204, %c0_205] : memref<32x81x256xf32, #tpu.memory_space<vmem>>, vector<1x81x256xf32>
    %235 = vector.shape_cast %234 : vector<1x81x256xf32> to vector<81x256xf32>
    %cst_206 = arith.constant dense<0.000000e+00> : vector<1x256xf32>
    %236 = tpu.matmul %233, %235, %cst_206 {dimension_numbers = #tpu.dot_dimension_numbers<[1], [0], [0], [1], [0, 0, 1, 1], [], []>} : vector<1x81xf32>, vector<81x256xf32>, vector<1x256xf32> -> vector<1x256xf32>
    %237 = arith.addf %232, %236 : vector<1x256xf32>
    %238 = vector.extract_strided_slice %126 {offsets = [22, 0], sizes = [1, 81], strides = [1, 1]} : vector<32x81xf32> to vector<1x81xf32>
    %c22 = arith.constant 22 : index
    %c0_207 = arith.constant 0 : index
    %c0_208 = arith.constant 0 : index
    %239 = vector.load %arg7[%c22, %c0_207, %c0_208] : memref<32x81x256xf32, #tpu.memory_space<vmem>>, vector<1x81x256xf32>
    %240 = vector.shape_cast %239 : vector<1x81x256xf32> to vector<81x256xf32>
    %cst_209 = arith.constant dense<0.000000e+00> : vector<1x256xf32>
    %241 = tpu.matmul %238, %240, %cst_209 {dimension_numbers = #tpu.dot_dimension_numbers<[1], [0], [0], [1], [0, 0, 1, 1], [], []>} : vector<1x81xf32>, vector<81x256xf32>, vector<1x256xf32> -> vector<1x256xf32>
    %242 = arith.addf %237, %241 : vector<1x256xf32>
    %243 = vector.extract_strided_slice %126 {offsets = [23, 0], sizes = [1, 81], strides = [1, 1]} : vector<32x81xf32> to vector<1x81xf32>
    %c23 = arith.constant 23 : index
    %c0_210 = arith.constant 0 : index
    %c0_211 = arith.constant 0 : index
    %244 = vector.load %arg7[%c23, %c0_210, %c0_211] : memref<32x81x256xf32, #tpu.memory_space<vmem>>, vector<1x81x256xf32>
    %245 = vector.shape_cast %244 : vector<1x81x256xf32> to vector<81x256xf32>
    %cst_212 = arith.constant dense<0.000000e+00> : vector<1x256xf32>
    %246 = tpu.matmul %243, %245, %cst_212 {dimension_numbers = #tpu.dot_dimension_numbers<[1], [0], [0], [1], [0, 0, 1, 1], [], []>} : vector<1x81xf32>, vector<81x256xf32>, vector<1x256xf32> -> vector<1x256xf32>
    %247 = arith.addf %242, %246 : vector<1x256xf32>
    %248 = vector.extract_strided_slice %126 {offsets = [24, 0], sizes = [1, 81], strides = [1, 1]} : vector<32x81xf32> to vector<1x81xf32>
    %c24 = arith.constant 24 : index
    %c0_213 = arith.constant 0 : index
    %c0_214 = arith.constant 0 : index
    %249 = vector.load %arg7[%c24, %c0_213, %c0_214] : memref<32x81x256xf32, #tpu.memory_space<vmem>>, vector<1x81x256xf32>
    %250 = vector.shape_cast %249 : vector<1x81x256xf32> to vector<81x256xf32>
    %cst_215 = arith.constant dense<0.000000e+00> : vector<1x256xf32>
    %251 = tpu.matmul %248, %250, %cst_215 {dimension_numbers = #tpu.dot_dimension_numbers<[1], [0], [0], [1], [0, 0, 1, 1], [], []>} : vector<1x81xf32>, vector<81x256xf32>, vector<1x256xf32> -> vector<1x256xf32>
    %252 = arith.addf %247, %251 : vector<1x256xf32>
    %253 = vector.extract_strided_slice %126 {offsets = [25, 0], sizes = [1, 81], strides = [1, 1]} : vector<32x81xf32> to vector<1x81xf32>
    %c25 = arith.constant 25 : index
    %c0_216 = arith.constant 0 : index
    %c0_217 = arith.constant 0 : index
    %254 = vector.load %arg7[%c25, %c0_216, %c0_217] : memref<32x81x256xf32, #tpu.memory_space<vmem>>, vector<1x81x256xf32>
    %255 = vector.shape_cast %254 : vector<1x81x256xf32> to vector<81x256xf32>
    %cst_218 = arith.constant dense<0.000000e+00> : vector<1x256xf32>
    %256 = tpu.matmul %253, %255, %cst_218 {dimension_numbers = #tpu.dot_dimension_numbers<[1], [0], [0], [1], [0, 0, 1, 1], [], []>} : vector<1x81xf32>, vector<81x256xf32>, vector<1x256xf32> -> vector<1x256xf32>
    %257 = arith.addf %252, %256 : vector<1x256xf32>
    %258 = vector.extract_strided_slice %126 {offsets = [26, 0], sizes = [1, 81], strides = [1, 1]} : vector<32x81xf32> to vector<1x81xf32>
    %c26 = arith.constant 26 : index
    %c0_219 = arith.constant 0 : index
    %c0_220 = arith.constant 0 : index
    %259 = vector.load %arg7[%c26, %c0_219, %c0_220] : memref<32x81x256xf32, #tpu.memory_space<vmem>>, vector<1x81x256xf32>
    %260 = vector.shape_cast %259 : vector<1x81x256xf32> to vector<81x256xf32>
    %cst_221 = arith.constant dense<0.000000e+00> : vector<1x256xf32>
    %261 = tpu.matmul %258, %260, %cst_221 {dimension_numbers = #tpu.dot_dimension_numbers<[1], [0], [0], [1], [0, 0, 1, 1], [], []>} : vector<1x81xf32>, vector<81x256xf32>, vector<1x256xf32> -> vector<1x256xf32>
    %262 = arith.addf %257, %261 : vector<1x256xf32>
    %263 = vector.extract_strided_slice %126 {offsets = [27, 0], sizes = [1, 81], strides = [1, 1]} : vector<32x81xf32> to vector<1x81xf32>
    %c27 = arith.constant 27 : index
    %c0_222 = arith.constant 0 : index
    %c0_223 = arith.constant 0 : index
    %264 = vector.load %arg7[%c27, %c0_222, %c0_223] : memref<32x81x256xf32, #tpu.memory_space<vmem>>, vector<1x81x256xf32>
    %265 = vector.shape_cast %264 : vector<1x81x256xf32> to vector<81x256xf32>
    %cst_224 = arith.constant dense<0.000000e+00> : vector<1x256xf32>
    %266 = tpu.matmul %263, %265, %cst_224 {dimension_numbers = #tpu.dot_dimension_numbers<[1], [0], [0], [1], [0, 0, 1, 1], [], []>} : vector<1x81xf32>, vector<81x256xf32>, vector<1x256xf32> -> vector<1x256xf32>
    %267 = arith.addf %262, %266 : vector<1x256xf32>
    %268 = vector.extract_strided_slice %126 {offsets = [28, 0], sizes = [1, 81], strides = [1, 1]} : vector<32x81xf32> to vector<1x81xf32>
    %c28 = arith.constant 28 : index
    %c0_225 = arith.constant 0 : index
    %c0_226 = arith.constant 0 : index
    %269 = vector.load %arg7[%c28, %c0_225, %c0_226] : memref<32x81x256xf32, #tpu.memory_space<vmem>>, vector<1x81x256xf32>
    %270 = vector.shape_cast %269 : vector<1x81x256xf32> to vector<81x256xf32>
    %cst_227 = arith.constant dense<0.000000e+00> : vector<1x256xf32>
    %271 = tpu.matmul %268, %270, %cst_227 {dimension_numbers = #tpu.dot_dimension_numbers<[1], [0], [0], [1], [0, 0, 1, 1], [], []>} : vector<1x81xf32>, vector<81x256xf32>, vector<1x256xf32> -> vector<1x256xf32>
    %272 = arith.addf %267, %271 : vector<1x256xf32>
    %273 = vector.extract_strided_slice %126 {offsets = [29, 0], sizes = [1, 81], strides = [1, 1]} : vector<32x81xf32> to vector<1x81xf32>
    %c29 = arith.constant 29 : index
    %c0_228 = arith.constant 0 : index
    %c0_229 = arith.constant 0 : index
    %274 = vector.load %arg7[%c29, %c0_228, %c0_229] : memref<32x81x256xf32, #tpu.memory_space<vmem>>, vector<1x81x256xf32>
    %275 = vector.shape_cast %274 : vector<1x81x256xf32> to vector<81x256xf32>
    %cst_230 = arith.constant dense<0.000000e+00> : vector<1x256xf32>
    %276 = tpu.matmul %273, %275, %cst_230 {dimension_numbers = #tpu.dot_dimension_numbers<[1], [0], [0], [1], [0, 0, 1, 1], [], []>} : vector<1x81xf32>, vector<81x256xf32>, vector<1x256xf32> -> vector<1x256xf32>
    %277 = arith.addf %272, %276 : vector<1x256xf32>
    %278 = vector.extract_strided_slice %126 {offsets = [30, 0], sizes = [1, 81], strides = [1, 1]} : vector<32x81xf32> to vector<1x81xf32>
    %c30 = arith.constant 30 : index
    %c0_231 = arith.constant 0 : index
    %c0_232 = arith.constant 0 : index
    %279 = vector.load %arg7[%c30, %c0_231, %c0_232] : memref<32x81x256xf32, #tpu.memory_space<vmem>>, vector<1x81x256xf32>
    %280 = vector.shape_cast %279 : vector<1x81x256xf32> to vector<81x256xf32>
    %cst_233 = arith.constant dense<0.000000e+00> : vector<1x256xf32>
    %281 = tpu.matmul %278, %280, %cst_233 {dimension_numbers = #tpu.dot_dimension_numbers<[1], [0], [0], [1], [0, 0, 1, 1], [], []>} : vector<1x81xf32>, vector<81x256xf32>, vector<1x256xf32> -> vector<1x256xf32>
    %282 = arith.addf %277, %281 : vector<1x256xf32>
    %283 = vector.extract_strided_slice %126 {offsets = [31, 0], sizes = [1, 81], strides = [1, 1]} : vector<32x81xf32> to vector<1x81xf32>
    %c31 = arith.constant 31 : index
    %c0_234 = arith.constant 0 : index
    %c0_235 = arith.constant 0 : index
    %284 = vector.load %arg7[%c31, %c0_234, %c0_235] : memref<32x81x256xf32, #tpu.memory_space<vmem>>, vector<1x81x256xf32>
    %285 = vector.shape_cast %284 : vector<1x81x256xf32> to vector<81x256xf32>
    %cst_236 = arith.constant dense<0.000000e+00> : vector<1x256xf32>
    %286 = tpu.matmul %283, %285, %cst_236 {dimension_numbers = #tpu.dot_dimension_numbers<[1], [0], [0], [1], [0, 0, 1, 1], [], []>} : vector<1x81xf32>, vector<81x256xf32>, vector<1x256xf32> -> vector<1x256xf32>
    %287 = arith.addf %282, %286 : vector<1x256xf32>
    %c0_237 = arith.constant 0 : index
    %c0_238 = arith.constant 0 : index
    %288 = vector.load %arg8[%c0_237, %c0_238] : memref<1x256xf32, #tpu.memory_space<vmem>>, vector<1x256xf32>
    %289 = arith.addf %287, %288 : vector<1x256xf32>
    %cst_239 = arith.constant 0.000000e+00 : f32
    %290 = vector.broadcast %cst_239 : f32 to vector<1x256xf32>
    %291 = arith.maximumf %289, %290 : vector<1x256xf32>
    %c0_240 = arith.constant 0 : index
    %c0_241 = arith.constant 0 : index
    %292 = vector.load %arg9[%c0_240, %c0_241] : memref<1x256xf32, #tpu.memory_space<vmem>>, vector<1x256xf32>
    %293 = arith.mulf %291, %292 : vector<1x256xf32>
    %cst_242 = arith.constant dense<0.000000e+00> : vector<1xf32>
    %294 = vector.multi_reduction <add>, %293, %cst_242 [1] : vector<1x256xf32> to vector<1xf32>
    %295 = vector.shape_cast %294 : vector<1xf32> to vector<1x1xf32>
    %c0_243 = arith.constant 0 : index
    %c0_244 = arith.constant 0 : index
    %296 = vector.load %arg10[%c0_243, %c0_244] : memref<1x1xf32, #tpu.memory_space<vmem>>, vector<1x1xf32>
    %297 = arith.addf %295, %296 : vector<1x1xf32>
    %c0_245 = arith.constant 0 : index
    %c0_246 = arith.constant 0 : index
    %c0_247 = arith.constant 0 : index
    %298 = vector.load %arg11[%c0_245, %c0_246, %c0_247] : memref<1x1x1xf32, #tpu.memory_space<vmem>>, vector<1x1x1xf32>
    %299 = vector.shape_cast %298 : vector<1x1x1xf32> to vector<1x1xf32>
    %300 = vector.shape_cast %297 : vector<1x1xf32> to vector<1x1x1xf32>
    tpu.vector_store %arg11[%c0_245, %c0_246, %c0_247], %300 {strides = array<i32>} : memref<1x1x1xf32, #tpu.memory_space<vmem>>, vector<1x1x1xf32>,
    return
  }
  func.func @transform_0(%arg0: i32) -> (i32, i32, i32) {
    %c0_i32 = arith.constant 0 : i32
    %c0_i32_0 = arith.constant 0 : i32
    %c0_i32_1 = arith.constant 0 : i32
    return %arg0, %c0_i32, %c0_i32_0 : i32, i32, i32
  }
  func.func @transform_1(%arg0: i32) -> (i32, i32) {
    %c0_i32 = arith.constant 0 : i32
    %c0_i32_0 = arith.constant 0 : i32
    %c0_i32_1 = arith.constant 0 : i32
    return %c0_i32, %c0_i32_0 : i32, i32
  }
  func.func @transform_2(%arg0: i32) -> (i32, i32) {
    %c0_i32 = arith.constant 0 : i32
    %c0_i32_0 = arith.constant 0 : i32
    %c0_i32_1 = arith.constant 0 : i32
    return %c0_i32, %c0_i32_0 : i32, i32
  }
  func.func @transform_3(%arg0: i32) -> (i32, i32, i32) {
    %c0_i32 = arith.constant 0 : i32
    %c0_i32_0 = arith.constant 0 : i32
    %c0_i32_1 = arith.constant 0 : i32
    %c0_i32_2 = arith.constant 0 : i32
    return %c0_i32, %c0_i32_0, %c0_i32_1 : i32, i32, i32
  }
  func.func @transform_4(%arg0: i32) -> (i32, i32, i32) {
    %c0_i32 = arith.constant 0 : i32
    %c0_i32_0 = arith.constant 0 : i32
    %c0_i32_1 = arith.constant 0 : i32
    %c0_i32_2 = arith.constant 0 : i32
    return %c0_i32, %c0_i32_0, %c0_i32_1 : i32, i32, i32
  }
  func.func @transform_5(%arg0: i32) -> (i32, i32) {
    %c0_i32 = arith.constant 0 : i32
    %c0_i32_0 = arith.constant 0 : i32
    %c0_i32_1 = arith.constant 0 : i32
    return %c0_i32, %c0_i32_0 : i32, i32
  }
  func.func @transform_6(%arg0: i32) -> (i32, i32, i32) {
    %c0_i32 = arith.constant 0 : i32
    %c0_i32_0 = arith.constant 0 : i32
    %c0_i32_1 = arith.constant 0 : i32
    %c0_i32_2 = arith.constant 0 : i32
    return %c0_i32, %c0_i32_0, %c0_i32_1 : i32, i32, i32
  }
  func.func @transform_7(%arg0: i32) -> (i32, i32) {
    %c0_i32 = arith.constant 0 : i32
    %c0_i32_0 = arith.constant 0 : i32
    %c0_i32_1 = arith.constant 0 : i32
    return %c0_i32, %c0_i32_0 : i32, i32
  }
  func.func @transform_8(%arg0: i32) -> (i32, i32) {
    %c0_i32 = arith.constant 0 : i32
    %c0_i32_0 = arith.constant 0 : i32
    %c0_i32_1 = arith.constant 0 : i32
    return %c0_i32, %c0_i32_0 : i32, i32
  }
  func.func @transform_9(%arg0: i32) -> (i32, i32) {
    %c0_i32 = arith.constant 0 : i32
    %c0_i32_0 = arith.constant 0 : i32
    %c0_i32_1 = arith.constant 0 : i32
    return %c0_i32, %c0_i32_0 : i32, i32
  }
  func.func @transform_10(%arg0: i32) -> (i32, i32, i32) {
    %c0_i32 = arith.constant 0 : i32
    %c0_i32_0 = arith.constant 0 : i32
    %c0_i32_1 = arith.constant 0 : i32
    return %arg0, %c0_i32, %c0_i32_0 : i32, i32, i32
  }
}

</mosaic_0001>

<llo_original>
// kernel: dqn_regressor_forward.1
$region0: #{dqn_regressor_forward.1}
  #allocation0 [shape = 'u32[]', space=smem, size = 0x4, offset = 0x4, fixed_abs, tag = 'smem constant byte address 0x4 - core index']
  #allocation1 [shape = 'u32[144,128]{1,0:T(1,128)}', space=vmem, size = 0x12000, scoped, tag = 'internal scratch']
  #allocation2 [shape = 'f32[1,1]{1,0:T(1,128)S(1)}', space=vmem, size = 0x200, scoped, tag = 'scoped memory for dqn_regressor_forward.1']
  %s0 = inlined_call_operand.vmem [shape: f32[2,64,400], index: 0, kind: input, shape index: {}]
  %s1 = inlined_call_operand.vmem [shape: f32[16,64], index: 1, kind: input, shape index: {}]
  %s2 = inlined_call_operand.vmem [shape: f32[16,1], index: 2, kind: input, shape index: {}]
  %s3 = inlined_call_operand.vmem [shape: f32[16,400,81], index: 3, kind: input, shape index: {}]
  %s4 = inlined_call_operand.vmem [shape: f32[16,32,16], index: 4, kind: input, shape index: {}]
  %s5 = inlined_call_operand.vmem [shape: f32[32,1], index: 5, kind: input, shape index: {}]
  %s6 = inlined_call_operand.vmem [shape: f32[32,81,256], index: 6, kind: input, shape index: {}]
  %s7 = inlined_call_operand.vmem [shape: f32[1,256], index: 7, kind: input, shape index: {}]
  %s8 = inlined_call_operand.vmem [shape: f32[1,256], index: 8, kind: input, shape index: {}]
  %s9 = inlined_call_operand.<no memory space> [shape: f32[1,1], index: 9, kind: input, shape index: {}]
  %s10 = inlined_call_operand.vmem [shape: f32[2,1,1], index: 10, kind: output, shape index: {}]
  %s11 = sld [smem:[#allocation0]]
  $region73: #{dqn_regressor_forward.1} parent=0
    _
  %s13 = ssub.s32 1, %s11
  %s14 = scalar_select 0, %s13, %s11
  %v15 = vstv %s9
  %16 = vst [vmem:[#allocation2] sm:$0x1] %v15
  loop: start=0, step=1, limit=4
  $region2: #{dqn_regressor_forward.1} parent=0 // loop_pre_header
    _
  $region3: #{dqn_regressor_forward.1} parent=0 // loop_header
    %s18 = sphi 0, %s22
    %p19 = scmp.ge.s32.totalorder %s18, 4
    %s28 = sphi 0, %s30
    %s31 = sphi 0, %s28
    %s32 = sphi 0, %s31
    %s48 = sphi 0, %s32
    %s52 = sphi 0, %s52
    %s54 = sphi 0, %s52
    %s55 = sphi 0, %s54
    %s69 = sphi 0, %s55
    %s73 = sphi 0, %s73
    %s75 = sphi 0, %s73
    %s76 = sphi 0, %s75
    %s90 = sphi 0, %s76
    %s94 = sphi 0, %s94
    %s96 = sphi 0, %s94
    %s97 = sphi 0, %s96
    %s111 = sphi 0, %s97
    %s115 = sphi 0, %s115
    %s117 = sphi 0, %s115
    %s118 = sphi 0, %s117
    %s132 = sphi 0, %s118
    %s136 = sphi 0, %s136
    %s138 = sphi 0, %s136
    %s139 = sphi 0, %s138
    %s153 = sphi 0, %s139
    %s157 = sphi 0, %s157
    %s159 = sphi 0, %s157
    %s160 = sphi 0, %s159
    %s174 = sphi 0, %s160
    %s178 = sphi 0, %s178
    %s180 = sphi 0, %s178
    %s181 = sphi 0, %s180
    %s195 = sphi 0, %s181
    %s199 = sphi 0, %s199
    %s201 = sphi 0, %s199
    %s202 = sphi 0, %s201
    %s216 = sphi 0, %s202
    %s220 = sphi 0, %s220
    %s222 = sphi 0, %s220
    %s223 = sphi 0, %s222
    %s237 = sphi 0, %s223
    %s243 = sphi 0, %s245
    %s246 = sphi 0, %s243
    %s247 = sphi 0, %s246
    %s263 = sphi 0, %s247
  $region4: #{dqn_regressor_forward.1} parent=0 // loop_header_branch
    %21 = sbr.rel (%p19) target = $region8
  $region5: #{dqn_regressor_forward.1} parent=0 // loop_body
    %s23 = ssub.s32 %s18, 1
    %s24 = ssub.s32 %s18, 2
    %s25 = sadd.s32 %s18, 1
    %s26 = ssub.s32 %s18, %s25
    %p27 = scmp.eq.s32.totalorder %s26, 0
    %s29 = sadd.s32 %s28, 1
    %s30 = scalar_select %p27, %s28, %s29
    %p33 = pneg %p27
    %p34 = scmp.eq.s32.totalorder %s18, 1
    %p35 = por %p33, %p34
    %p36 = scmp.ne.s32.totalorder %s28, %s31
    %p37 = scmp.eq.s32.totalorder %s18, 0
    %p38 = por %p36, %p37
    %p39 = scmp.ne.s32.totalorder %s28, %s31
    %p40 = scmp.eq.s32.totalorder %s23, 1
    %p41 = por %p39, %p40
    %p42 = scmp.ne.s32.totalorder %s31, %s32
    %p43 = scmp.eq.s32.totalorder %s23, 0
    %p44 = por %p42, %p43
    %p45 = scmp.ne.s32.totalorder %s31, %s32
    %p46 = scmp.eq.s32.totalorder %s24, 1
    %p47 = por %p45, %p46
    %p49 = scmp.ne.s32.totalorder %s32, %s48
    %p50 = scmp.eq.s32.totalorder %s24, 0
    %p51 = por %p49, %p50
    %s53 = sadd.s32 %s52, 1
    %p56 = scmp.eq.s32.totalorder %s18, 1
    %p57 = scmp.ne.s32.totalorder %s52, %s54
    %p58 = scmp.eq.s32.totalorder %s18, 0
    %p59 = por %p57, %p58
    %p60 = scmp.ne.s32.totalorder %s52, %s54
    %p61 = scmp.eq.s32.totalorder %s23, 1
    %p62 = por %p60, %p61
    %p63 = scmp.ne.s32.totalorder %s54, %s55
    %p64 = scmp.eq.s32.totalorder %s23, 0
    %p65 = por %p63, %p64
    %p66 = scmp.ne.s32.totalorder %s54, %s55
    %p67 = scmp.eq.s32.totalorder %s24, 1
    %p68 = por %p66, %p67
    %p70 = scmp.ne.s32.totalorder %s55, %s69
    %p71 = scmp.eq.s32.totalorder %s24, 0
    %p72 = por %p70, %p71
    %s74 = sadd.s32 %s73, 1
    %p77 = scmp.eq.s32.totalorder %s18, 1
    %p78 = scmp.ne.s32.totalorder %s73, %s75
    %p79 = scmp.eq.s32.totalorder %s18, 0
    %p80 = por %p78, %p79
    %p81 = scmp.ne.s32.totalorder %s73, %s75
    %p82 = scmp.eq.s32.totalorder %s23, 1
    %p83 = por %p81, %p82
    %p84 = scmp.ne.s32.totalorder %s75, %s76
    %p85 = scmp.eq.s32.totalorder %s23, 0
    %p86 = por %p84, %p85
    %p87 = scmp.ne.s32.totalorder %s75, %s76
    %p88 = scmp.eq.s32.totalorder %s24, 1
    %p89 = por %p87, %p88
    %p91 = scmp.ne.s32.totalorder %s76, %s90
    %p92 = scmp.eq.s32.totalorder %s24, 0
    %p93 = por %p91, %p92
    %s95 = sadd.s32 %s94, 1
    %p98 = scmp.eq.s32.totalorder %s18, 1
    %p99 = scmp.ne.s32.totalorder %s94, %s96
    %p100 = scmp.eq.s32.totalorder %s18, 0
    %p101 = por %p99, %p100
    %p102 = scmp.ne.s32.totalorder %s94, %s96
    %p103 = scmp.eq.s32.totalorder %s23, 1
    %p104 = por %p102, %p103
    %p105 = scmp.ne.s32.totalorder %s96, %s97
    %p106 = scmp.eq.s32.totalorder %s23, 0
    %p107 = por %p105, %p106
    %p108 = scmp.ne.s32.totalorder %s96, %s97
    %p109 = scmp.eq.s32.totalorder %s24, 1
    %p110 = por %p108, %p109
    %p112 = scmp.ne.s32.totalorder %s97, %s111
    %p113 = scmp.eq.s32.totalorder %s24, 0
    %p114 = por %p112, %p113
    %s116 = sadd.s32 %s115, 1
    %p119 = scmp.eq.s32.totalorder %s18, 1
    %p120 = scmp.ne.s32.totalorder %s115, %s117
    %p121 = scmp.eq.s32.totalorder %s18, 0
    %p122 = por %p120, %p121
    %p123 = scmp.ne.s32.totalorder %s115, %s117
    %p124 = scmp.eq.s32.totalorder %s23, 1
    %p125 = por %p123, %p124
    %p126 = scmp.ne.s32.totalorder %s117, %s118
    %p127 = scmp.eq.s32.totalorder %s23, 0
    %p128 = por %p126, %p127
    %p129 = scmp.ne.s32.totalorder %s117, %s118
    %p130 = scmp.eq.s32.totalorder %s24, 1
    %p131 = por %p129, %p130
    %p133 = scmp.ne.s32.totalorder %s118, %s132
    %p134 = scmp.eq.s32.totalorder %s24, 0
    %p135 = por %p133, %p134
    %s137 = sadd.s32 %s136, 1
    %p140 = scmp.eq.s32.totalorder %s18, 1
    %p141 = scmp.ne.s32.totalorder %s136, %s138
    %p142 = scmp.eq.s32.totalorder %s18, 0
    %p143 = por %p141, %p142
    %p144 = scmp.ne.s32.totalorder %s136, %s138
    %p145 = scmp.eq.s32.totalorder %s23, 1
    %p146 = por %p144, %p145
    %p147 = scmp.ne.s32.totalorder %s138, %s139
    %p148 = scmp.eq.s32.totalorder %s23, 0
    %p149 = por %p147, %p148
    %p150 = scmp.ne.s32.totalorder %s138, %s139
    %p151 = scmp.eq.s32.totalorder %s24, 1
    %p152 = por %p150, %p151
    %p154 = scmp.ne.s32.totalorder %s139, %s153
    %p155 = scmp.eq.s32.totalorder %s24, 0
    %p156 = por %p154, %p155
    %s158 = sadd.s32 %s157, 1
    %p161 = scmp.eq.s32.totalorder %s18, 1
    %p162 = scmp.ne.s32.totalorder %s157, %s159
    %p163 = scmp.eq.s32.totalorder %s18, 0
    %p164 = por %p162, %p163
    %p165 = scmp.ne.s32.totalorder %s157, %s159
    %p166 = scmp.eq.s32.totalorder %s23, 1
    %p167 = por %p165, %p166
    %p168 = scmp.ne.s32.totalorder %s159, %s160
    %p169 = scmp.eq.s32.totalorder %s23, 0
    %p170 = por %p168, %p169
    %p171 = scmp.ne.s32.totalorder %s159, %s160
    %p172 = scmp.eq.s32.totalorder %s24, 1
    %p173 = por %p171, %p172
    %p175 = scmp.ne.s32.totalorder %s160, %s174
    %p176 = scmp.eq.s32.totalorder %s24, 0
    %p177 = por %p175, %p176
    %s179 = sadd.s32 %s178, 1
    %p182 = scmp.eq.s32.totalorder %s18, 1
    %p183 = scmp.ne.s32.totalorder %s178, %s180
    %p184 = scmp.eq.s32.totalorder %s18, 0
    %p185 = por %p183, %p184
    %p186 = scmp.ne.s32.totalorder %s178, %s180
    %p187 = scmp.eq.s32.totalorder %s23, 1
    %p188 = por %p186, %p187
    %p189 = scmp.ne.s32.totalorder %s180, %s181
    %p190 = scmp.eq.s32.totalorder %s23, 0
    %p191 = por %p189, %p190
    %p192 = scmp.ne.s32.totalorder %s180, %s181
    %p193 = scmp.eq.s32.totalorder %s24, 1
    %p194 = por %p192, %p193
    %p196 = scmp.ne.s32.totalorder %s181, %s195
    %p197 = scmp.eq.s32.totalorder %s24, 0
    %p198 = por %p196, %p197
    %s200 = sadd.s32 %s199, 1
    %p203 = scmp.eq.s32.totalorder %s18, 1
    %p204 = scmp.ne.s32.totalorder %s199, %s201
    %p205 = scmp.eq.s32.totalorder %s18, 0
    %p206 = por %p204, %p205
    %p207 = scmp.ne.s32.totalorder %s199, %s201
    %p208 = scmp.eq.s32.totalorder %s23, 1
    %p209 = por %p207, %p208
    %p210 = scmp.ne.s32.totalorder %s201, %s202
    %p211 = scmp.eq.s32.totalorder %s23, 0
    %p212 = por %p210, %p211
    %p213 = scmp.ne.s32.totalorder %s201, %s202
    %p214 = scmp.eq.s32.totalorder %s24, 1
    %p215 = por %p213, %p214
    %p217 = scmp.ne.s32.totalorder %s202, %s216
    %p218 = scmp.eq.s32.totalorder %s24, 0
    %p219 = por %p217, %p218
    %s221 = sadd.s32 %s220, 1
    %p224 = scmp.eq.s32.totalorder %s18, 1
    %p225 = scmp.ne.s32.totalorder %s220, %s222
    %p226 = scmp.eq.s32.totalorder %s18, 0
    %p227 = por %p225, %p226
    %p228 = scmp.ne.s32.totalorder %s220, %s222
    %p229 = scmp.eq.s32.totalorder %s23, 1
    %p230 = por %p228, %p229
    %p231 = scmp.ne.s32.totalorder %s222, %s223
    %p232 = scmp.eq.s32.totalorder %s23, 0
    %p233 = por %p231, %p232
    %p234 = scmp.ne.s32.totalorder %s222, %s223
    %p235 = scmp.eq.s32.totalorder %s24, 1
    %p236 = por %p234, %p235
    %p238 = scmp.ne.s32.totalorder %s223, %s237
    %p239 = scmp.eq.s32.totalorder %s24, 0
    %p240 = por %p238, %p239
    %s241 = ssub.s32 %s18, %s25
    %p242 = scmp.eq.s32.totalorder %s241, 0
    %s244 = sadd.s32 %s243, 1
    %s245 = scalar_select %p242, %s243, %s244
    %p248 = pneg %p242
    %p249 = scmp.eq.s32.totalorder %s18, 1
    %p250 = por %p248, %p249
    %p251 = scmp.ne.s32.totalorder %s243, %s246
    %p252 = scmp.eq.s32.totalorder %s18, 0
    %p253 = por %p251, %p252
    %p254 = scmp.ne.s32.totalorder %s243, %s246
    %p255 = scmp.eq.s32.totalorder %s23, 1
    %p256 = por %p254, %p255
    %p257 = scmp.ne.s32.totalorder %s246, %s247
    %p258 = scmp.eq.s32.totalorder %s23, 0
    %p259 = por %p257, %p258
    %p260 = scmp.ne.s32.totalorder %s246, %s247
    %p261 = scmp.eq.s32.totalorder %s24, 1
    %p262 = por %p260, %p261
    %p264 = scmp.ne.s32.totalorder %s247, %s263
    %p265 = scmp.eq.s32.totalorder %s24, 0
    %p266 = por %p264, %p265
    %p267 = scmp.le.s32.totalorder 1, %s18
    %p268 = scmp.lt.s32.totalorder %s18, 3
    %p269 = pnand %p267, %p268
    %p270 = pneg %p269
    // Predicated region
    $region9: #{dqn_regressor_forward.1} parent=5 // pred_check
      _
    $region10: #{dqn_regressor_forward.1} parent=5 // pred_check_branch
      %272 = sbr.rel (%p269) target = $region12
    $region11: #{dqn_regressor_forward.1} parent=5 // pred_region
      %s273 = ssub.s32 %s18, 1
      // Predicated region
      $region13: #{dqn_regressor_forward.1} parent=11 // pred_check
        %p274 = pneg %p65
      $region14: #{dqn_regressor_forward.1} parent=11 // pred_check_branch
        %276 = sbr.rel (%p274) target = $region16
      $region15: #{dqn_regressor_forward.1} parent=11 // pred_region
        _
      $region16: #{dqn_regressor_forward.1} parent=11 // pred_fallthru
        _
      // Predicated region
      $region17: #{dqn_regressor_forward.1} parent=11 // pred_check
        %p277 = pneg %p86
      $region18: #{dqn_regressor_forward.1} parent=11 // pred_check_branch
        %279 = sbr.rel (%p277) target = $region20
      $region19: #{dqn_regressor_forward.1} parent=11 // pred_region
        _
      $region20: #{dqn_regressor_forward.1} parent=11 // pred_fallthru
        _
      // Predicated region
      $region21: #{dqn_regressor_forward.1} parent=11 // pred_check
        %p280 = pneg %p107
      $region22: #{dqn_regressor_forward.1} parent=11 // pred_check_branch
        %282 = sbr.rel (%p280) target = $region24
      $region23: #{dqn_regressor_forward.1} parent=11 // pred_region
        _
      $region24: #{dqn_regressor_forward.1} parent=11 // pred_fallthru
        _
      // Predicated region
      $region25: #{dqn_regressor_forward.1} parent=11 // pred_check
        %p283 = pneg %p128
      $region26: #{dqn_regressor_forward.1} parent=11 // pred_check_branch
        %285 = sbr.rel (%p283) target = $region28
      $region27: #{dqn_regressor_forward.1} parent=11 // pred_region
        _
      $region28: #{dqn_regressor_forward.1} parent=11 // pred_fallthru
        _
      // Predicated region
      $region29: #{dqn_regressor_forward.1} parent=11 // pred_check
        %p286 = pneg %p149
      $region30: #{dqn_regressor_forward.1} parent=11 // pred_check_branch
        %288 = sbr.rel (%p286) target = $region32
      $region31: #{dqn_regressor_forward.1} parent=11 // pred_region
        _
      $region32: #{dqn_regressor_forward.1} parent=11 // pred_fallthru
        _
      // Predicated region
      $region33: #{dqn_regressor_forward.1} parent=11 // pred_check
        %p289 = pneg %p170
      $region34: #{dqn_regressor_forward.1} parent=11 // pred_check_branch
        %291 = sbr.rel (%p289) target = $region36
      $region35: #{dqn_regressor_forward.1} parent=11 // pred_region
        _
      $region36: #{dqn_regressor_forward.1} parent=11 // pred_fallthru
        _
      // Predicated region
      $region37: #{dqn_regressor_forward.1} parent=11 // pred_check
        %p292 = pneg %p191
      $region38: #{dqn_regressor_forward.1} parent=11 // pred_check_branch
        %294 = sbr.rel (%p292) target = $region40
      $region39: #{dqn_regressor_forward.1} parent=11 // pred_region
        _
      $region40: #{dqn_regressor_forward.1} parent=11 // pred_fallthru
        _
      // Predicated region
      $region41: #{dqn_regressor_forward.1} parent=11 // pred_check
        %p295 = pneg %p212
      $region42: #{dqn_regressor_forward.1} parent=11 // pred_check_branch
        %297 = sbr.rel (%p295) target = $region44
      $region43: #{dqn_regressor_forward.1} parent=11 // pred_region
        _
      $region44: #{dqn_regressor_forward.1} parent=11 // pred_fallthru
        _
      // Predicated region
      $region45: #{dqn_regressor_forward.1} parent=11 // pred_check
        %p298 = pneg %p233
      $region46: #{dqn_regressor_forward.1} parent=11 // pred_check_branch
        %300 = sbr.rel (%p298) target = $region48
      $region47: #{dqn_regressor_forward.1} parent=11 // pred_region
        _
      $region48: #{dqn_regressor_forward.1} parent=11 // pred_fallthru
        _
    $region12: #{dqn_regressor_forward.1} parent=5 // pred_fallthru
      _
    %p301 = scmp.lt.s32.totalorder %s18, 2
    // Predicated region
    $region49: #{dqn_regressor_forward.1} parent=5 // pred_check
      %p302 = pneg %p301
    $region50: #{dqn_regressor_forward.1} parent=5 // pred_check_branch
      %304 = sbr.rel (%p302) target = $region52
    $region51: #{dqn_regressor_forward.1} parent=5 // pred_region
      // Predicated region
      $region53: #{dqn_regressor_forward.1} parent=51 // pred_check
        %p305 = pneg %p38
      $region54: #{dqn_regressor_forward.1} parent=51 // pred_check_branch
        %307 = sbr.rel (%p305) target = $region56
      $region55: #{dqn_regressor_forward.1} parent=51 // pred_region
        %p308 = scmp.lt.s32.totalorder %s18, 1
        %s309 = scalar_select %p308, %s18, 1
        %s310 = smul.addr %s309, 32
        %s311 = smul.addr %s310, 8
        %s312 = scalar_lea.vmem %s0, %s311
      $region56: #{dqn_regressor_forward.1} parent=51 // pred_fallthru
        _
    $region52: #{dqn_regressor_forward.1} parent=5 // pred_fallthru
      _
    %p313 = scmp.le.s32.totalorder 1, %s18
    %p314 = scmp.lt.s32.totalorder %s18, 3
    %p315 = pnand %p313, %p314
    %p316 = pneg %p315
    // Predicated region
    $region57: #{dqn_regressor_forward.1} parent=5 // pred_check
      _
    $region58: #{dqn_regressor_forward.1} parent=5 // pred_check_branch
      %318 = sbr.rel (%p315) target = $region60
    $region59: #{dqn_regressor_forward.1} parent=5 // pred_region
      %s319 = ssub.s32 %s18, 1
      %p320 = scmp.lt.s32.totalorder %s23, 1
      %s321 = scalar_select %p320, %s23, 1
      %s322 = smul.addr %s321, 32
      %s323 = smul.addr %s322, 8
      %s324 = scalar_lea.vmem %s0, %s323
      %p325 = pneg %p44
      %p326 = pneg %p41
      %p327 = pneg %p65
      %p328 = pneg %p62
      %p329 = pneg %p86
      %p330 = pneg %p83
      %p331 = pneg %p107
      %p332 = pneg %p104
      %p333 = pneg %p128
      %p334 = pneg %p125
      %p335 = pneg %p149
      %p336 = pneg %p146
      %p337 = pneg %p170
      %p338 = pneg %p167
      %p339 = pneg %p191
      %p340 = pneg %p188
      %p341 = pneg %p212
      %p342 = pneg %p209
      %p343 = pneg %p233
      %p344 = pneg %p230
      %p345 = pneg %p259
      %p346 = pneg %p256
      %p347 = scmp.lt.s32.totalorder %s23, 1
      %s348 = scalar_select %p347, %s23, 1
      %s349 = scalar_lea.vmem %s10, %s348
      %p350 = scmp.lt.s32.totalorder %s23, 1
      %s351 = scalar_select %p350, %s23, 1
      %s352 = smul.addr %s351, 32
      %s353 = smul.addr %s352, 8
      %s354 = scalar_lea.vmem %s0, %s353
      %p355 = scmp.lt.s32.totalorder %s23, 1
      %s356 = scalar_select %p355, %s23, 1
      %s357 = scalar_lea.vmem %s10, %s356
      %v358 = vld [vmem:[%s354] sm:$0xff]
      %v359 = vld [vmem:[%s354 + $0x8] sm:$0xff]
      %v360 = vld [vmem:[%s354 + $0x10] sm:$0xff]
      %v361 = vld [vmem:[%s354 + $0x18] sm:$0xff]
      %v362 = vld [vmem:[%s354 + $0x20] sm:$0xff]
      %v363 = vld [vmem:[%s354 + $0x28] sm:$0xff]
      %v364 = vld [vmem:[%s354 + $0x30] sm:$0xff]
      %v365 = vld [vmem:[%s354 + $0x38] sm:$0xff]
      %v366 = vld [vmem:[%s354 + $0x40] sm:$0xff]
      %v367 = vld [vmem:[%s354 + $0x48] sm:$0xff]
      %v368 = vld [vmem:[%s354 + $0x50] sm:$0xff]
      %v369 = vld [vmem:[%s354 + $0x58] sm:$0xff]
      %v370 = vld [vmem:[%s354 + $0x60] sm:$0xff]
      %v371 = vld [vmem:[%s354 + $0x68] sm:$0xff]
      %v372 = vld [vmem:[%s354 + $0x70] sm:$0xff]
      %v373 = vld [vmem:[%s354 + $0x78] sm:$0xff]
      %v374 = vld [vmem:[%s354 + $0x80] sm:$0xff]
      %v375 = vld [vmem:[%s354 + $0x88] sm:$0xff]
      %v376 = vld [vmem:[%s354 + $0x90] sm:$0xff]
      %v377 = vld [vmem:[%s354 + $0x98] sm:$0xff]
      %v378 = vld [vmem:[%s354 + $0xa0] sm:$0xff]
      %v379 = vld [vmem:[%s354 + $0xa8] sm:$0xff]
      %v380 = vld [vmem:[%s354 + $0xb0] sm:$0xff]
      %v381 = vld [vmem:[%s354 + $0xb8] sm:$0xff]
      %v382 = vld [vmem:[%s354 + $0xc0] sm:$0xff]
      %v383 = vld [vmem:[%s354 + $0xc8] sm:$0xff]
      %v384 = vld [vmem:[%s354 + $0xd0] sm:$0xff]
      %v385 = vld [vmem:[%s354 + $0xd8] sm:$0xff]
      %v386 = vld [vmem:[%s354 + $0xe0] sm:$0xff]
      %v387 = vld [vmem:[%s354 + $0xe8] sm:$0xff]
      %v388 = vld [vmem:[%s354 + $0xf0] sm:$0xff]
      %v389 = vld [vmem:[%s354 + $0xf8] sm:$0xff]
      %v390 = vld [vmem:[%s1] sm:$0xff]
      %v391 = vld [vmem:[%s1 + $0x8] sm:$0xff]
      %v392 = vld [vmem:[%s2] sm:$0xff]
      %v393 = vld [vmem:[%s2 + $0x8] sm:$0xff]
      %395 = vset.pattern.permute.xlu0 0
      %396 = vperm.xlu0 %395, %v392
      %v397 = vpop.permute.xlu0 %396
      %400 = vset.pattern.permute.xlu0 0
      %401 = vperm.xlu0 %400, %v393
      %v402 = vpop.permute.xlu0 %401
      %vm404 = vcmask 523264
      %v406 = vsel %vm404, %v390, 0
      %v409 = vsel %vm404, %v391, 0
      %411 = vmatprep.subr.mxu0 0.0
      %412 = vmatpush1.msra.mxu0 0.0
      %413 = vmatprep.subr.mxu0 0.0
      %414 = vmatpush1.msra.mxu0 0.0
      %415 = vmatprep.subr.mxu0 0.0
      %416 = vmatpush1.msra.mxu0 0.0
      %417 = vmatprep.subr.mxu0 0.0
      %418 = vmatpush1.msra.mxu0 0.0
      %419 = vmatprep.subr.mxu0 0.0
      %420 = vmatpush1.msra.mxu0 0.0
      %421 = vmatprep.subr.mxu0 0.0
      %422 = vmatpush1.msra.mxu0 0.0
      %423 = vmatprep.subr.mxu0 0.0
      %424 = vmatpush1.msra.mxu0 0.0
      %425 = vmatprep.subr.mxu0 0.0
      %426 = vmatpush1.msra.mxu0 0.0
      %427 = vmatprep.subr.mxu0 %v387
      %428 = vmatpush1.msra.mxu0 %v386
      %429 = vmatprep.subr.mxu0 %v383
      %430 = vmatpush1.msra.mxu0 %v382
      %431 = vmatprep.subr.mxu0 %v379
      %432 = vmatpush1.msra.mxu0 %v378
      %433 = vmatprep.subr.mxu0 %v375
      %434 = vmatpush1.msra.mxu0 %v374
      %435 = vmatprep.subr.mxu0 %v371
      %436 = vmatpush1.msra.mxu0 %v370
      %437 = vmatprep.subr.mxu0 %v367
      %438 = vmatpush1.msra.mxu0 %v366
      %439 = vmatprep.subr.mxu0 %v363
      %440 = vmatpush1.msra.mxu0 %v362
      %441 = vmatprep.subr.mxu0 %v359
      %442 = vmatpush1.msra.mxu0 %v358
      %443 = vmatprep.subr.mxu0 0.0
      %444 = vmatpush2.msra.mxu0 0.0
      %445 = vmatprep.subr.mxu0 0.0
      %446 = vmatpush2.msra.mxu0 0.0
      %447 = vmatprep.subr.mxu0 0.0
      %448 = vmatpush2.msra.mxu0 0.0
      %449 = vmatprep.subr.mxu0 0.0
      %450 = vmatpush2.msra.mxu0 0.0
      %451 = vmatprep.subr.mxu0 0.0
      %452 = vmatpush2.msra.mxu0 0.0
      %453 = vmatprep.subr.mxu0 0.0
      %454 = vmatpush2.msra.mxu0 0.0
      %455 = vmatprep.subr.mxu0 0.0
      %456 = vmatpush2.msra.mxu0 0.0
      %457 = vmatprep.subr.mxu0 0.0
      %458 = vmatpush2.msra.mxu0 0.0
      %459 = vmatprep.subr.mxu0 0.0
      %460 = vmatpush2.msra.mxu0 0.0
      %461 = vmatprep.subr.mxu0 0.0
      %462 = vmatpush2.msra.mxu0 0.0
      %463 = vmatprep.subr.mxu0 0.0
      %464 = vmatpush2.msra.mxu0 0.0
      %465 = vmatprep.subr.mxu0 0.0
      %466 = vmatpush2.msra.mxu0 0.0
      %467 = vmatprep.subr.mxu0 0.0
      %468 = vmatpush2.msra.mxu0 0.0
      %469 = vmatprep.subr.mxu0 0.0
      %470 = vmatpush2.msra.mxu0 0.0
      %471 = vmatprep.subr.mxu0 0.0
      %472 = vmatpush2.msra.mxu0 0.0
      %473 = vmatprep.subr.mxu0 0.0
      %474 = vmatpush2.msra.mxu0 0.0
      %475 = vmatprep.mubr.f32.mxu0 0.0
      %476 = vmatmul.mubr.f32.gmra.mxu0 %v406
      %v477 = vpop.f32.mrf.mxu0
      %v478 = vadd.f32 %v397, %v477
      %v479 = vpop.f32.mrf.mxu0
      %v480 = vadd.f32 %v397, %v479
      %481 = vmatprep.mubr.f32.mxu0 0.0
      %482 = vmatmul.mubr.f32.gmra.mxu0 %v409
      %v483 = vpop.f32.mrf.mxu0
      %v484 = vadd.f32 %v402, %v483
      %v485 = vpop.f32.mrf.mxu0
      %v486 = vadd.f32 %v402, %v485
      %487 = vdwg.mxu0
      %488 = vmatprep.subr.mxu0 0.0
      %489 = vmatpush1.msra.mxu0 0.0
      %490 = vmatprep.subr.mxu0 0.0
      %491 = vmatpush1.msra.mxu0 0.0
      %492 = vmatprep.subr.mxu0 0.0
      %493 = vmatpush1.msra.mxu0 0.0
      %494 = vmatprep.subr.mxu0 0.0
      %495 = vmatpush1.msra.mxu0 0.0
      %496 = vmatprep.subr.mxu0 0.0
      %497 = vmatpush1.msra.mxu0 0.0
      %498 = vmatprep.subr.mxu0 0.0
      %499 = vmatpush1.msra.mxu0 0.0
      %500 = vmatprep.subr.mxu0 0.0
      %501 = vmatpush1.msra.mxu0 0.0
      %502 = vmatprep.subr.mxu0 0.0
      %503 = vmatpush1.msra.mxu0 0.0
      %504 = vmatprep.subr.mxu0 %v389
      %505 = vmatpush1.msra.mxu0 %v388
      %506 = vmatprep.subr.mxu0 %v385
      %507 = vmatpush1.msra.mxu0 %v384
      %508 = vmatprep.subr.mxu0 %v381
      %509 = vmatpush1.msra.mxu0 %v380
      %510 = vmatprep.subr.mxu0 %v377
      %511 = vmatpush1.msra.mxu0 %v376
      %512 = vmatprep.subr.mxu0 %v373
      %513 = vmatpush1.msra.mxu0 %v372
      %514 = vmatprep.subr.mxu0 %v369
      %515 = vmatpush1.msra.mxu0 %v368
      %516 = vmatprep.subr.mxu0 %v365
      %517 = vmatpush1.msra.mxu0 %v364
      %518 = vmatprep.subr.mxu0 %v361
      %519 = vmatpush1.msra.mxu0 %v360
      %520 = vmatprep.subr.mxu0 0.0
      %521 = vmatpush2.msra.mxu0 0.0
      %522 = vmatprep.subr.mxu0 0.0
      %523 = vmatpush2.msra.mxu0 0.0
      %524 = vmatprep.subr.mxu0 0.0
      %525 = vmatpush2.msra.mxu0 0.0
      %526 = vmatprep.subr.mxu0 0.0
      %527 = vmatpush2.msra.mxu0 0.0
      %528 = vmatprep.subr.mxu0 0.0
      %529 = vmatpush2.msra.mxu0 0.0
      %530 = vmatprep.subr.mxu0 0.0
      %531 = vmatpush2.msra.mxu0 0.0
      %532 = vmatprep.subr.mxu0 0.0
      %533 = vmatpush2.msra.mxu0 0.0
      %534 = vmatprep.subr.mxu0 0.0
      %535 = vmatpush2.msra.mxu0 0.0
      %536 = vmatprep.subr.mxu0 0.0
      %537 = vmatpush2.msra.mxu0 0.0
      %538 = vmatprep.subr.mxu0 0.0
      %539 = vmatpush2.msra.mxu0 0.0
      %540 = vmatprep.subr.mxu0 0.0
      %541 = vmatpush2.msra.mxu0 0.0
      %542 = vmatprep.subr.mxu0 0.0
      %543 = vmatpush2.msra.mxu0 0.0
      %544 = vmatprep.subr.mxu0 0.0
      %545 = vmatpush2.msra.mxu0 0.0
      %546 = vmatprep.subr.mxu0 0.0
      %547 = vmatpush2.msra.mxu0 0.0
      %548 = vmatprep.subr.mxu0 0.0
      %549 = vmatpush2.msra.mxu0 0.0
      %550 = vmatprep.subr.mxu0 0.0
      %551 = vmatpush2.msra.mxu0 0.0
      %552 = vmatprep.mubr.f32.mxu0 0.0
      %553 = vmatmul.mubr.f32.gmra.mxu0 %v406
      %v554 = vpop.f32.mrf.mxu0
      %v555 = vadd.f32 %v397, %v554
      %v556 = vpop.f32.mrf.mxu0
      %v557 = vadd.f32 %v397, %v556
      %558 = vmatprep.mubr.f32.mxu0 0.0
      %559 = vmatmul.mubr.f32.gmra.mxu0 %v409
      %v560 = vpop.f32.mrf.mxu0
      %v561 = vadd.f32 %v402, %v560
      %v562 = vpop.f32.mrf.mxu0
      %v563 = vadd.f32 %v402, %v562
      %564 = vdwg.mxu0
      %v565 = vmax.f32 %v478, 0.0
      %v566 = vmax.f32 %v480, 0.0
      %v567 = vmax.f32 %v555, 0.0
      %v568 = vmax.f32 %v557, 0.0
      %v569 = vmax.f32 %v484, 0.0
      %v570 = vmax.f32 %v486, 0.0
      %v571 = vmax.f32 %v561, 0.0
      %v572 = vmax.f32 %v563, 0.0
      %v573 = vld [vmem:[%s3] sm:$0xff]
      %v574 = vld [vmem:[%s3 + $0x8] sm:$0xff]
      %v575 = vld [vmem:[%s3 + $0x10] sm:$0xff]
      %v576 = vld [vmem:[%s3 + $0x18] sm:$0xff]
      %v577 = vld [vmem:[%s3 + $0x20] sm:$0xff]
      %v578 = vld [vmem:[%s3 + $0x28] sm:$0xff]
      %v579 = vld [vmem:[%s3 + $0x30] sm:$0xff]
      %v580 = vld [vmem:[%s3 + $0x38] sm:$0xff]
      %v581 = vld [vmem:[%s3 + $0x40] sm:$0xff]
      %v582 = vld [vmem:[%s3 + $0x48] sm:$0xff]
      %v583 = vld [vmem:[%s3 + $0x50] sm:$0xff]
      %v584 = vld [vmem:[%s3 + $0x58] sm:$0xff]
      %v585 = vld [vmem:[%s3 + $0x60] sm:$0xff]
      %v586 = vld [vmem:[%s3 + $0x68] sm:$0xff]
      %v587 = vld [vmem:[%s3 + $0x70] sm:$0xff]
      %v588 = vld [vmem:[%s3 + $0x78] sm:$0xff]
      %v589 = vld [vmem:[%s3 + $0x80] sm:$0xff]
      %v590 = vld [vmem:[%s3 + $0x88] sm:$0xff]
      %v591 = vld [vmem:[%s3 + $0x90] sm:$0xff]
      %v592 = vld [vmem:[%s3 + $0x98] sm:$0xff]
      %v593 = vld [vmem:[%s3 + $0xa0] sm:$0xff]
      %v594 = vld [vmem:[%s3 + $0xa8] sm:$0xff]
      %v595 = vld [vmem:[%s3 + $0xb0] sm:$0xff]
      %v596 = vld [vmem:[%s3 + $0xb8] sm:$0xff]
      %v597 = vld [vmem:[%s3 + $0xc0] sm:$0xff]
      %v598 = vld [vmem:[%s3 + $0xc8] sm:$0xff]
      %v599 = vld [vmem:[%s3 + $0xd0] sm:$0xff]
      %v600 = vld [vmem:[%s3 + $0xd8] sm:$0xff]
      %v601 = vld [vmem:[%s3 + $0xe0] sm:$0xff]
      %v602 = vld [vmem:[%s3 + $0xe8] sm:$0xff]
      %v603 = vld [vmem:[%s3 + $0xf0] sm:$0xff]
      %v604 = vld [vmem:[%s3 + $0xf8] sm:$0xff]
      %v605 = vld [vmem:[%s3 + $0x100] sm:$0xff]
      %v606 = vld [vmem:[%s3 + $0x108] sm:$0xff]
      %v607 = vld [vmem:[%s3 + $0x110] sm:$0xff]
      %v608 = vld [vmem:[%s3 + $0x118] sm:$0xff]
      %v609 = vld [vmem:[%s3 + $0x120] sm:$0xff]
      %v610 = vld [vmem:[%s3 + $0x128] sm:$0xff]
      %v611 = vld [vmem:[%s3 + $0x130] sm:$0xff]
      %v612 = vld [vmem:[%s3 + $0x138] sm:$0xff]
      %v613 = vld [vmem:[%s3 + $0x140] sm:$0xff]
      %v614 = vld [vmem:[%s3 + $0x148] sm:$0xff]
      %v615 = vld [vmem:[%s3 + $0x150] sm:$0xff]
      %v616 = vld [vmem:[%s3 + $0x158] sm:$0xff]
      %v617 = vld [vmem:[%s3 + $0x160] sm:$0xff]
      %v618 = vld [vmem:[%s3 + $0x168] sm:$0xff]
      %v619 = vld [vmem:[%s3 + $0x170] sm:$0xff]
      %v620 = vld [vmem:[%s3 + $0x178] sm:$0xff]
      %v621 = vld [vmem:[%s3 + $0x180] sm:$0xff]
      %v622 = vld [vmem:[%s3 + $0x188] sm:$0xff]
      %vm623 = vcmask 130048
      %v625 = vsel %vm623, %v568, 0
      %v628 = vsel %vm623, %v572, 0
      %630 = vmatprep.subr.mxu0 0.0
      %631 = vmatpush1.msra.mxu0 %v588
      %632 = vmatprep.subr.mxu0 0.0
      %633 = vmatpush1.msra.mxu0 %v587
      %634 = vmatprep.subr.mxu0 0.0
      %635 = vmatpush1.msra.mxu0 %v586
      %636 = vmatprep.subr.mxu0 0.0
      %637 = vmatpush1.msra.mxu0 %v585
      %638 = vmatprep.subr.mxu0 0.0
      %639 = vmatpush1.msra.mxu0 %v584
      %640 = vmatprep.subr.mxu0 0.0
      %641 = vmatpush1.msra.mxu0 %v583
      %642 = vmatprep.subr.mxu0 0.0
      %643 = vmatpush1.msra.mxu0 %v582
      %644 = vmatprep.subr.mxu0 0.0
      %645 = vmatpush1.msra.mxu0 %v581
      %646 = vmatprep.subr.mxu0 0.0
      %647 = vmatpush1.msra.mxu0 %v580
      %648 = vmatprep.subr.mxu0 0.0
      %649 = vmatpush1.msra.mxu0 %v579
      %650 = vmatprep.subr.mxu0 0.0
      %651 = vmatpush1.msra.mxu0 %v578
      %652 = vmatprep.subr.mxu0 0.0
      %653 = vmatpush1.msra.mxu0 %v577
      %654 = vmatprep.subr.mxu0 0.0
      %655 = vmatpush1.msra.mxu0 %v576
      %656 = vmatprep.subr.mxu0 0.0
      %657 = vmatpush1.msra.mxu0 %v575
      %658 = vmatprep.subr.mxu0 0.0
      %659 = vmatpush1.msra.mxu0 %v574
      %660 = vmatprep.subr.mxu0 0.0
      %661 = vmatpush1.msra.mxu0 %v573
      %662 = vmatprep.subr.mxu0 0.0
      %663 = vmatpush2.msra.mxu0 %v604
      %664 = vmatprep.subr.mxu0 0.0
      %665 = vmatpush2.msra.mxu0 %v603
      %666 = vmatprep.subr.mxu0 0.0
      %667 = vmatpush2.msra.mxu0 %v602
      %668 = vmatprep.subr.mxu0 0.0
      %669 = vmatpush2.msra.mxu0 %v601
      %670 = vmatprep.subr.mxu0 0.0
      %671 = vmatpush2.msra.mxu0 %v600
      %672 = vmatprep.subr.mxu0 0.0
      %673 = vmatpush2.msra.mxu0 %v599
      %674 = vmatprep.subr.mxu0 0.0
      %675 = vmatpush2.msra.mxu0 %v598
      %676 = vmatprep.subr.mxu0 0.0
      %677 = vmatpush2.msra.mxu0 %v597
      %678 = vmatprep.subr.mxu0 0.0
      %679 = vmatpush2.msra.mxu0 %v596
      %680 = vmatprep.subr.mxu0 0.0
      %681 = vmatpush2.msra.mxu0 %v595
      %682 = vmatprep.subr.mxu0 0.0
      %683 = vmatpush2.msra.mxu0 %v594
      %684 = vmatprep.subr.mxu0 0.0
      %685 = vmatpush2.msra.mxu0 %v593
      %686 = vmatprep.subr.mxu0 0.0
      %687 = vmatpush2.msra.mxu0 %v592
      %688 = vmatprep.subr.mxu0 0.0
      %689 = vmatpush2.msra.mxu0 %v591
      %690 = vmatprep.subr.mxu0 0.0
      %691 = vmatpush2.msra.mxu0 %v590
      %692 = vmatprep.subr.mxu0 0.0
      %693 = vmatpush2.msra.mxu0 %v589
      %694 = vmatprep.mubr.f32.mxu0 %v566
      %695 = vmatmul.mubr.f32.gmra.mxu0 %v565
      %v696 = vpop.f32.mrf.mxu0
      %v697 = vadd.f32 0.0, %v696
      %v698 = vpop.f32.mrf.mxu0
      %699 = vmatprep.mubr.f32.mxu0 %v570
      %700 = vmatmul.mubr.f32.gmra.mxu0 %v569
      %v701 = vpop.f32.mrf.mxu0
      %v702 = vadd.f32 0.0, %v701
      %v703 = vpop.f32.mrf.mxu0
      %704 = vdwg.mxu0
      %705 = vmatprep.subr.mxu0 0.0
      %706 = vmatpush1.msra.mxu0 %v620
      %707 = vmatprep.subr.mxu0 0.0
      %708 = vmatpush1.msra.mxu0 %v619
      %709 = vmatprep.subr.mxu0 0.0
      %710 = vmatpush1.msra.mxu0 %v618
      %711 = vmatprep.subr.mxu0 0.0
      %712 = vmatpush1.msra.mxu0 %v617
      %713 = vmatprep.subr.mxu0 0.0
      %714 = vmatpush1.msra.mxu0 %v616
      %715 = vmatprep.subr.mxu0 0.0
      %716 = vmatpush1.msra.mxu0 %v615
      %717 = vmatprep.subr.mxu0 0.0
      %718 = vmatpush1.msra.mxu0 %v614
      %719 = vmatprep.subr.mxu0 0.0
      %720 = vmatpush1.msra.mxu0 %v613
      %721 = vmatprep.subr.mxu0 0.0
      %722 = vmatpush1.msra.mxu0 %v612
      %723 = vmatprep.subr.mxu0 0.0
      %724 = vmatpush1.msra.mxu0 %v611
      %725 = vmatprep.subr.mxu0 0.0
      %726 = vmatpush1.msra.mxu0 %v610
      %727 = vmatprep.subr.mxu0 0.0
      %728 = vmatpush1.msra.mxu0 %v609
      %729 = vmatprep.subr.mxu0 0.0
      %730 = vmatpush1.msra.mxu0 %v608
      %731 = vmatprep.subr.mxu0 0.0
      %732 = vmatpush1.msra.mxu0 %v607
      %733 = vmatprep.subr.mxu0 0.0
      %734 = vmatpush1.msra.mxu0 %v606
      %735 = vmatprep.subr.mxu0 0.0
      %736 = vmatpush1.msra.mxu0 %v605
      %737 = vmatprep.subr.mxu0 0.0
      %738 = vmatpush2.msra.mxu0 0.0
      %739 = vmatprep.subr.mxu0 0.0
      %740 = vmatpush2.msra.mxu0 0.0
      %741 = vmatprep.subr.mxu0 0.0
      %742 = vmatpush2.msra.mxu0 0.0
      %743 = vmatprep.subr.mxu0 0.0
      %744 = vmatpush2.msra.mxu0 0.0
      %745 = vmatprep.subr.mxu0 0.0
      %746 = vmatpush2.msra.mxu0 0.0
      %747 = vmatprep.subr.mxu0 0.0
      %748 = vmatpush2.msra.mxu0 0.0
      %749 = vmatprep.subr.mxu0 0.0
      %750 = vmatpush2.msra.mxu0 0.0
      %751 = vmatprep.subr.mxu0 0.0
      %752 = vmatpush2.msra.mxu0 0.0
      %753 = vmatprep.subr.mxu0 0.0
      %754 = vmatpush2.msra.mxu0 0.0
      %755 = vmatprep.subr.mxu0 0.0
      %756 = vmatpush2.msra.mxu0 0.0
      %757 = vmatprep.subr.mxu0 0.0
      %758 = vmatpush2.msra.mxu0 0.0
      %759 = vmatprep.subr.mxu0 0.0
      %760 = vmatpush2.msra.mxu0 0.0
      %761 = vmatprep.subr.mxu0 0.0
      %762 = vmatpush2.msra.mxu0 0.0
      %763 = vmatprep.subr.mxu0 0.0
      %764 = vmatpush2.msra.mxu0 0.0
      %765 = vmatprep.subr.mxu0 0.0
      %766 = vmatpush2.msra.mxu0 %v622
      %767 = vmatprep.subr.mxu0 0.0
      %768 = vmatpush2.msra.mxu0 %v621
      %769 = vmatprep.mubr.f32.mxu0 %v625
      %770 = vmatmul.mubr.f32.gmra.mxu0 %v567
      %v771 = vpop.f32.mrf.mxu0
      %v772 = vadd.f32 %v697, %v771
      %v773 = vpop.f32.mrf.mxu0
      %774 = vmatprep.mubr.f32.mxu0 %v628
      %775 = vmatmul.mubr.f32.gmra.mxu0 %v571
      %v776 = vpop.f32.mrf.mxu0
      %v777 = vadd.f32 %v702, %v776
      %v778 = vpop.f32.mrf.mxu0
      %779 = vdwg.mxu0
      %v780 = vld [vmem:[%s4] sm:$0xff]
      %v781 = vld [vmem:[%s4 + $0x8] sm:$0xff]
      %v782 = vld [vmem:[%s4 + $0x10] sm:$0xff]
      %v783 = vld [vmem:[%s4 + $0x18] sm:$0xff]
      %s784 = scalar_lea.vmem %s3, 400
      %v785 = vld [vmem:[%s784] sm:$0xff]
      %v786 = vld [vmem:[%s784 + $0x8] sm:$0xff]
      %v787 = vld [vmem:[%s784 + $0x10] sm:$0xff]
      %v788 = vld [vmem:[%s784 + $0x18] sm:$0xff]
      %v789 = vld [vmem:[%s784 + $0x20] sm:$0xff]
      %v790 = vld [vmem:[%s784 + $0x28] sm:$0xff]
      %v791 = vld [vmem:[%s784 + $0x30] sm:$0xff]
      %v792 = vld [vmem:[%s784 + $0x38] sm:$0xff]
      %v793 = vld [vmem:[%s784 + $0x40] sm:$0xff]
      %v794 = vld [vmem:[%s784 + $0x48] sm:$0xff]
      %v795 = vld [vmem:[%s784 + $0x50] sm:$0xff]
      %v796 = vld [vmem:[%s784 + $0x58] sm:$0xff]
      %v797 = vld [vmem:[%s784 + $0x60] sm:$0xff]
      %v798 = vld [vmem:[%s784 + $0x68] sm:$0xff]
      %v799 = vld [vmem:[%s784 + $0x70] sm:$0xff]
      %v800 = vld [vmem:[%s784 + $0x78] sm:$0xff]
      %v801 = vld [vmem:[%s784 + $0x80] sm:$0xff]
      %v802 = vld [vmem:[%s784 + $0x88] sm:$0xff]
      %v803 = vld [vmem:[%s784 + $0x90] sm:$0xff]
      %v804 = vld [vmem:[%s784 + $0x98] sm:$0xff]
      %v805 = vld [vmem:[%s784 + $0xa0] sm:$0xff]
      %v806 = vld [vmem:[%s784 + $0xa8] sm:$0xff]
      %v807 = vld [vmem:[%s784 + $0xb0] sm:$0xff]
      %v808 = vld [vmem:[%s784 + $0xb8] sm:$0xff]
      %v809 = vld [vmem:[%s784 + $0xc0] sm:$0xff]
      %v810 = vld [vmem:[%s784 + $0xc8] sm:$0xff]
      %v811 = vld [vmem:[%s784 + $0xd0] sm:$0xff]
      %v812 = vld [vmem:[%s784 + $0xd8] sm:$0xff]
      %v813 = vld [vmem:[%s784 + $0xe0] sm:$0xff]
      %v814 = vld [vmem:[%s784 + $0xe8] sm:$0xff]
      %v815 = vld [vmem:[%s784 + $0xf0] sm:$0xff]
      %v816 = vld [vmem:[%s784 + $0xf8] sm:$0xff]
      %v817 = vld [vmem:[%s784 + $0x100] sm:$0xff]
      %v818 = vld [vmem:[%s784 + $0x108] sm:$0xff]
      %v819 = vld [vmem:[%s784 + $0x110] sm:$0xff]
      %v820 = vld [vmem:[%s784 + $0x118] sm:$0xff]
      %v821 = vld [vmem:[%s784 + $0x120] sm:$0xff]
      %v822 = vld [vmem:[%s784 + $0x128] sm:$0xff]
      %v823 = vld [vmem:[%s784 + $0x130] sm:$0xff]
      %v824 = vld [vmem:[%s784 + $0x138] sm:$0xff]
      %v825 = vld [vmem:[%s784 + $0x140] sm:$0xff]
      %v826 = vld [vmem:[%s784 + $0x148] sm:$0xff]
      %v827 = vld [vmem:[%s784 + $0x150] sm:$0xff]
      %v828 = vld [vmem:[%s784 + $0x158] sm:$0xff]
      %v829 = vld [vmem:[%s784 + $0x160] sm:$0xff]
      %v830 = vld [vmem:[%s784 + $0x168] sm:$0xff]
      %v831 = vld [vmem:[%s784 + $0x170] sm:$0xff]
      %v832 = vld [vmem:[%s784 + $0x178] sm:$0xff]
      %v833 = vld [vmem:[%s784 + $0x180] sm:$0xff]
      %v834 = vld [vmem:[%s784 + $0x188] sm:$0xff]
      %835 = vmatprep.subr.mxu0 0.0
      %836 = vmatpush1.msra.mxu0 %v800
      %837 = vmatprep.subr.mxu0 0.0
      %838 = vmatpush1.msra.mxu0 %v799
      %839 = vmatprep.subr.mxu0 0.0
      %840 = vmatpush1.msra.mxu0 %v798
      %841 = vmatprep.subr.mxu0 0.0
      %842 = vmatpush1.msra.mxu0 %v797
      %843 = vmatprep.subr.mxu0 0.0
      %844 = vmatpush1.msra.mxu0 %v796
      %845 = vmatprep.subr.mxu0 0.0
      %846 = vmatpush1.msra.mxu0 %v795
      %847 = vmatprep.subr.mxu0 0.0
      %848 = vmatpush1.msra.mxu0 %v794
      %849 = vmatprep.subr.mxu0 0.0
      %850 = vmatpush1.msra.mxu0 %v793
      %851 = vmatprep.subr.mxu0 0.0
      %852 = vmatpush1.msra.mxu0 %v792
      %853 = vmatprep.subr.mxu0 0.0
      %854 = vmatpush1.msra.mxu0 %v791
      %855 = vmatprep.subr.mxu0 0.0
      %856 = vmatpush1.msra.mxu0 %v790
      %857 = vmatprep.subr.mxu0 0.0
      %858 = vmatpush1.msra.mxu0 %v789
      %859 = vmatprep.subr.mxu0 0.0
      %860 = vmatpush1.msra.mxu0 %v788
      %861 = vmatprep.subr.mxu0 0.0
      %862 = vmatpush1.msra.mxu0 %v787
      %863 = vmatprep.subr.mxu0 0.0
      %864 = vmatpush1.msra.mxu0 %v786
      %865 = vmatprep.subr.mxu0 0.0
      %866 = vmatpush1.msra.mxu0 %v785
      %867 = vmatprep.subr.mxu0 0.0
      %868 = vmatpush2.msra.mxu0 %v816
      %869 = vmatprep.subr.mxu0 0.0
      %870 = vmatpush2.msra.mxu0 %v815
      %871 = vmatprep.subr.mxu0 0.0
      %872 = vmatpush2.msra.mxu0 %v814
      %873 = vmatprep.subr.mxu0 0.0
      %874 = vmatpush2.msra.mxu0 %v813
      %875 = vmatprep.subr.mxu0 0.0
      %876 = vmatpush2.msra.mxu0 %v812
      %877 = vmatprep.subr.mxu0 0.0
      %878 = vmatpush2.msra.mxu0 %v811
      %879 = vmatprep.subr.mxu0 0.0
      %880 = vmatpush2.msra.mxu0 %v810
      %881 = vmatprep.subr.mxu0 0.0
      %882 = vmatpush2.msra.mxu0 %v809
      %883 = vmatprep.subr.mxu0 0.0
      %884 = vmatpush2.msra.mxu0 %v808
      %885 = vmatprep.subr.mxu0 0.0
      %886 = vmatpush2.msra.mxu0 %v807
      %887 = vmatprep.subr.mxu0 0.0
      %888 = vmatpush2.msra.mxu0 %v806
      %889 = vmatprep.subr.mxu0 0.0
      %890 = vmatpush2.msra.mxu0 %v805
      %891 = vmatprep.subr.mxu0 0.0
      %892 = vmatpush2.msra.mxu0 %v804
      %893 = vmatprep.subr.mxu0 0.0
      %894 = vmatpush2.msra.mxu0 %v803
      %895 = vmatprep.subr.mxu0 0.0
      %896 = vmatpush2.msra.mxu0 %v802
      %897 = vmatprep.subr.mxu0 0.0
      %898 = vmatpush2.msra.mxu0 %v801
      %899 = vmatprep.mubr.f32.mxu0 %v566
      %900 = vmatmul.mubr.f32.gmra.mxu0 %v565
      %v901 = vpop.f32.mrf.mxu0
      %v902 = vadd.f32 0.0, %v901
      %v903 = vpop.f32.mrf.mxu0
      %904 = vmatprep.mubr.f32.mxu0 %v570
      %905 = vmatmul.mubr.f32.gmra.mxu0 %v569
      %v906 = vpop.f32.mrf.mxu0
      %v907 = vadd.f32 0.0, %v906
      %v908 = vpop.f32.mrf.mxu0
      %909 = vdwg.mxu0
      %910 = vmatprep.subr.mxu0 0.0
      %911 = vmatpush1.msra.mxu0 %v832
      %912 = vmatprep.subr.mxu0 0.0
      %913 = vmatpush1.msra.mxu0 %v831
      %914 = vmatprep.subr.mxu0 0.0
      %915 = vmatpush1.msra.mxu0 %v830
      %916 = vmatprep.subr.mxu0 0.0
      %917 = vmatpush1.msra.mxu0 %v829
      %918 = vmatprep.subr.mxu0 0.0
      %919 = vmatpush1.msra.mxu0 %v828
      %920 = vmatprep.subr.mxu0 0.0
      %921 = vmatpush1.msra.mxu0 %v827
      %922 = vmatprep.subr.mxu0 0.0
      %923 = vmatpush1.msra.mxu0 %v826
      %924 = vmatprep.subr.mxu0 0.0
      %925 = vmatpush1.msra.mxu0 %v825
      %926 = vmatprep.subr.mxu0 0.0
      %927 = vmatpush1.msra.mxu0 %v824
      %928 = vmatprep.subr.mxu0 0.0
      %929 = vmatpush1.msra.mxu0 %v823
      %930 = vmatprep.subr.mxu0 0.0
      %931 = vmatpush1.msra.mxu0 %v822
      %932 = vmatprep.subr.mxu0 0.0
      %933 = vmatpush1.msra.mxu0 %v821
      %934 = vmatprep.subr.mxu0 0.0
      %935 = vmatpush1.msra.mxu0 %v820
      %936 = vmatprep.subr.mxu0 0.0
      %937 = vmatpush1.msra.mxu0 %v819
      %938 = vmatprep.subr.mxu0 0.0
      %939 = vmatpush1.msra.mxu0 %v818
      %940 = vmatprep.subr.mxu0 0.0
      %941 = vmatpush1.msra.mxu0 %v817
      %942 = vmatprep.subr.mxu0 0.0
      %943 = vmatpush2.msra.mxu0 0.0
      %944 = vmatprep.subr.mxu0 0.0
      %945 = vmatpush2.msra.mxu0 0.0
      %946 = vmatprep.subr.mxu0 0.0
      %947 = vmatpush2.msra.mxu0 0.0
      %948 = vmatprep.subr.mxu0 0.0
      %949 = vmatpush2.msra.mxu0 0.0
      %950 = vmatprep.subr.mxu0 0.0
      %951 = vmatpush2.msra.mxu0 0.0
      %952 = vmatprep.subr.mxu0 0.0
      %953 = vmatpush2.msra.mxu0 0.0
      %954 = vmatprep.subr.mxu0 0.0
      %955 = vmatpush2.msra.mxu0 0.0
      %956 = vmatprep.subr.mxu0 0.0
      %957 = vmatpush2.msra.mxu0 0.0
      %958 = vmatprep.subr.mxu0 0.0
      %959 = vmatpush2.msra.mxu0 0.0
      %960 = vmatprep.subr.mxu0 0.0
      %961 = vmatpush2.msra.mxu0 0.0
      %962 = vmatprep.subr.mxu0 0.0
      %963 = vmatpush2.msra.mxu0 0.0
      %964 = vmatprep.subr.mxu0 0.0
      %965 = vmatpush2.msra.mxu0 0.0
      %966 = vmatprep.subr.mxu0 0.0
      %967 = vmatpush2.msra.mxu0 0.0
      %968 = vmatprep.subr.mxu0 0.0
      %969 = vmatpush2.msra.mxu0 0.0
      %970 = vmatprep.subr.mxu0 0.0
      %971 = vmatpush2.msra.mxu0 %v834
      %972 = vmatprep.subr.mxu0 0.0
      %973 = vmatpush2.msra.mxu0 %v833
      %974 = vmatprep.mubr.f32.mxu0 %v625
      %975 = vmatmul.mubr.f32.gmra.mxu0 %v567
      %v976 = vpop.f32.mrf.mxu0
      %v977 = vadd.f32 %v902, %v976
      %v978 = vpop.f32.mrf.mxu0
      %979 = vmatprep.mubr.f32.mxu0 %v628
      %980 = vmatmul.mubr.f32.gmra.mxu0 %v571
      %v981 = vpop.f32.mrf.mxu0
      %v982 = vadd.f32 %v907, %v981
      %v983 = vpop.f32.mrf.mxu0
      %984 = vdwg.mxu0
      %s985 = scalar_lea.vmem %s4, 32
      %v986 = vld [vmem:[%s985] sm:$0xff]
      %v987 = vld [vmem:[%s985 + $0x8] sm:$0xff]
      %v988 = vld [vmem:[%s985 + $0x10] sm:$0xff]
      %v989 = vld [vmem:[%s985 + $0x18] sm:$0xff]
      %v991 = vsel %vm623, %v986, 0
      %v994 = vsel %vm623, %v987, 0
      %v997 = vsel %vm623, %v988, 0
      %v1000 = vsel %vm623, %v989, 0
      %1002 = vmatprep.subr.mxu0 0.0
      %1003 = vmatpush1.msra.mxu0 0.0
      %1004 = vmatprep.subr.mxu0 0.0
      %1005 = vmatpush1.msra.mxu0 0.0
      %1006 = vmatprep.subr.mxu0 0.0
      %1007 = vmatpush1.msra.mxu0 0.0
      %1008 = vmatprep.subr.mxu0 0.0
      %1009 = vmatpush1.msra.mxu0 0.0
      %1010 = vmatprep.subr.mxu0 0.0
      %1011 = vmatpush1.msra.mxu0 0.0
      %1012 = vmatprep.subr.mxu0 0.0
      %1013 = vmatpush1.msra.mxu0 0.0
      %1014 = vmatprep.subr.mxu0 0.0
      %1015 = vmatpush1.msra.mxu0 0.0
      %1016 = vmatprep.subr.mxu0 0.0
      %1017 = vmatpush1.msra.mxu0 0.0
      %1018 = vmatprep.subr.mxu0 0.0
      %1019 = vmatpush1.msra.mxu0 0.0
      %1020 = vmatprep.subr.mxu0 0.0
      %1021 = vmatpush1.msra.mxu0 0.0
      %1022 = vmatprep.subr.mxu0 0.0
      %1023 = vmatpush1.msra.mxu0 0.0
      %1024 = vmatprep.subr.mxu0 0.0
      %1025 = vmatpush1.msra.mxu0 0.0
      %1026 = vmatprep.subr.mxu0 0.0
      %1027 = vmatpush1.msra.mxu0 0.0
      %1028 = vmatprep.subr.mxu0 0.0
      %1029 = vmatpush1.msra.mxu0 0.0
      %1030 = vmatprep.subr.mxu0 0.0
      %1031 = vmatpush1.msra.mxu0 %v982
      %1032 = vmatprep.subr.mxu0 0.0
      %1033 = vmatpush1.msra.mxu0 %v977
      %1034 = vmatprep.subr.mxu0 0.0
      %1035 = vmatpush2.msra.mxu0 0.0
      %1036 = vmatprep.subr.mxu0 0.0
      %1037 = vmatpush2.msra.mxu0 0.0
      %1038 = vmatprep.subr.mxu0 0.0
      %1039 = vmatpush2.msra.mxu0 0.0
      %1040 = vmatprep.subr.mxu0 0.0
      %1041 = vmatpush2.msra.mxu0 0.0
      %1042 = vmatprep.subr.mxu0 0.0
      %1043 = vmatpush2.msra.mxu0 0.0
      %1044 = vmatprep.subr.mxu0 0.0
      %1045 = vmatpush2.msra.mxu0 0.0
      %1046 = vmatprep.subr.mxu0 0.0
      %1047 = vmatpush2.msra.mxu0 0.0
      %1048 = vmatprep.subr.mxu0 0.0
      %1049 = vmatpush2.msra.mxu0 0.0
      %1050 = vmatprep.subr.mxu0 0.0
      %1051 = vmatpush2.msra.mxu0 0.0
      %1052 = vmatprep.subr.mxu0 0.0
      %1053 = vmatpush2.msra.mxu0 0.0
      %1054 = vmatprep.subr.mxu0 0.0
      %1055 = vmatpush2.msra.mxu0 0.0
      %1056 = vmatprep.subr.mxu0 0.0
      %1057 = vmatpush2.msra.mxu0 0.0
      %1058 = vmatprep.subr.mxu0 0.0
      %1059 = vmatpush2.msra.mxu0 0.0
      %1060 = vmatprep.subr.mxu0 0.0
      %1061 = vmatpush2.msra.mxu0 0.0
      %1062 = vmatprep.subr.mxu0 0.0
      %1063 = vmatpush2.msra.mxu0 0.0
      %1064 = vmatprep.subr.mxu0 0.0
      %1065 = vmatpush2.msra.mxu0 0.0
      %1066 = vmatprep.mubr.f32.mxu0 0.0
      %1067 = vmatmul.mubr.f32.gmra.mxu0 %v991
      %v1068 = vpop.f32.mrf.mxu0
      %v1069 = vadd.f32 0.0, %v1068
      %v1070 = vpop.f32.mrf.mxu0
      %1071 = vmatprep.mubr.f32.mxu0 0.0
      %1072 = vmatmul.mubr.f32.gmra.mxu0 %v994
      %v1073 = vpop.f32.mrf.mxu0
      %v1074 = vadd.f32 0.0, %v1073
      %v1075 = vpop.f32.mrf.mxu0
      %1076 = vmatprep.mubr.f32.mxu0 0.0
      %1077 = vmatmul.mubr.f32.gmra.mxu0 %v997
      %v1078 = vpop.f32.mrf.mxu0
      %v1079 = vadd.f32 0.0, %v1078
      %v1080 = vpop.f32.mrf.mxu0
      %1081 = vmatprep.mubr.f32.mxu0 0.0
      %1082 = vmatmul.mubr.f32.gmra.mxu0 %v1000
      %v1083 = vpop.f32.mrf.mxu0
      %v1084 = vadd.f32 0.0, %v1083
      %v1085 = vpop.f32.mrf.mxu0
      %1086 = vdwg.mxu0
      %v1088 = vsel %vm623, %v780, 0
      %v1091 = vsel %vm623, %v781, 0
      %v1094 = vsel %vm623, %v782, 0
      %v1097 = vsel %vm623, %v783, 0
      %1099 = vmatprep.subr.mxu0 0.0
      %1100 = vmatpush1.msra.mxu0 0.0
      %1101 = vmatprep.subr.mxu0 0.0
      %1102 = vmatpush1.msra.mxu0 0.0
      %1103 = vmatprep.subr.mxu0 0.0
      %1104 = vmatpush1.msra.mxu0 0.0
      %1105 = vmatprep.subr.mxu0 0.0
      %1106 = vmatpush1.msra.mxu0 0.0
      %1107 = vmatprep.subr.mxu0 0.0
      %1108 = vmatpush1.msra.mxu0 0.0
      %1109 = vmatprep.subr.mxu0 0.0
      %1110 = vmatpush1.msra.mxu0 0.0
      %1111 = vmatprep.subr.mxu0 0.0
      %1112 = vmatpush1.msra.mxu0 0.0
      %1113 = vmatprep.subr.mxu0 0.0
      %1114 = vmatpush1.msra.mxu0 0.0
      %1115 = vmatprep.subr.mxu0 0.0
      %1116 = vmatpush1.msra.mxu0 0.0
      %1117 = vmatprep.subr.mxu0 0.0
      %1118 = vmatpush1.msra.mxu0 0.0
      %1119 = vmatprep.subr.mxu0 0.0
      %1120 = vmatpush1.msra.mxu0 0.0
      %1121 = vmatprep.subr.mxu0 0.0
      %1122 = vmatpush1.msra.mxu0 0.0
      %1123 = vmatprep.subr.mxu0 0.0
      %1124 = vmatpush1.msra.mxu0 0.0
      %1125 = vmatprep.subr.mxu0 0.0
      %1126 = vmatpush1.msra.mxu0 0.0
      %1127 = vmatprep.subr.mxu0 0.0
      %1128 = vmatpush1.msra.mxu0 %v777
      %1129 = vmatprep.subr.mxu0 0.0
      %1130 = vmatpush1.msra.mxu0 %v772
      %1131 = vmatprep.subr.mxu0 0.0
      %1132 = vmatpush2.msra.mxu0 0.0
      %1133 = vmatprep.subr.mxu0 0.0
      %1134 = vmatpush2.msra.mxu0 0.0
      %1135 = vmatprep.subr.mxu0 0.0
      %1136 = vmatpush2.msra.mxu0 0.0
      %1137 = vmatprep.subr.mxu0 0.0
      %1138 = vmatpush2.msra.mxu0 0.0
      %1139 = vmatprep.subr.mxu0 0.0
      %1140 = vmatpush2.msra.mxu0 0.0
      %1141 = vmatprep.subr.mxu0 0.0
      %1142 = vmatpush2.msra.mxu0 0.0
      %1143 = vmatprep.subr.mxu0 0.0
      %1144 = vmatpush2.msra.mxu0 0.0
      %1145 = vmatprep.subr.mxu0 0.0
      %1146 = vmatpush2.msra.mxu0 0.0
      %1147 = vmatprep.subr.mxu0 0.0
      %1148 = vmatpush2.msra.mxu0 0.0
      %1149 = vmatprep.subr.mxu0 0.0
      %1150 = vmatpush2.msra.mxu0 0.0
      %1151 = vmatprep.subr.mxu0 0.0
      %1152 = vmatpush2.msra.mxu0 0.0
      %1153 = vmatprep.subr.mxu0 0.0
      %1154 = vmatpush2.msra.mxu0 0.0
      %1155 = vmatprep.subr.mxu0 0.0
      %1156 = vmatpush2.msra.mxu0 0.0
      %1157 = vmatprep.subr.mxu0 0.0
      %1158 = vmatpush2.msra.mxu0 0.0
      %1159 = vmatprep.subr.mxu0 0.0
      %1160 = vmatpush2.msra.mxu0 0.0
      %1161 = vmatprep.subr.mxu0 0.0
      %1162 = vmatpush2.msra.mxu0 0.0
      %1163 = vmatprep.mubr.f32.mxu0 0.0
      %1164 = vmatmul.mubr.f32.gmra.mxu0 %v1088
      %v1165 = vpop.f32.mrf.mxu0
      %v1166 = vadd.f32 %v1069, %v1165
      %v1167 = vpop.f32.mrf.mxu0
      %1168 = vmatprep.mubr.f32.mxu0 0.0
      %1169 = vmatmul.mubr.f32.gmra.mxu0 %v1091
      %v1170 = vpop.f32.mrf.mxu0
      %v1171 = vadd.f32 %v1074, %v1170
      %v1172 = vpop.f32.mrf.mxu0
      %1173 = vmatprep.mubr.f32.mxu0 0.0
      %1174 = vmatmul.mubr.f32.gmra.mxu0 %v1094
      %v1175 = vpop.f32.mrf.mxu0
      %v1176 = vadd.f32 %v1079, %v1175
      %v1177 = vpop.f32.mrf.mxu0
      %1178 = vmatprep.mubr.f32.mxu0 0.0
      %1179 = vmatmul.mubr.f32.gmra.mxu0 %v1097
      %v1180 = vpop.f32.mrf.mxu0
      %v1181 = vadd.f32 %v1084, %v1180
      %v1182 = vpop.f32.mrf.mxu0
      %1183 = vdwg.mxu0
      %s1184 = scalar_lea.vmem %s3, 800
      %v1185 = vld [vmem:[%s1184] sm:$0xff]
      %v1186 = vld [vmem:[%s1184 + $0x8] sm:$0xff]
      %v1187 = vld [vmem:[%s1184 + $0x10] sm:$0xff]
      %v1188 = vld [vmem:[%s1184 + $0x18] sm:$0xff]
      %v1189 = vld [vmem:[%s1184 + $0x20] sm:$0xff]
      %v1190 = vld [vmem:[%s1184 + $0x28] sm:$0xff]
      %v1191 = vld [vmem:[%s1184 + $0x30] sm:$0xff]
      %v1192 = vld [vmem:[%s1184 + $0x38] sm:$0xff]
      %v1193 = vld [vmem:[%s1184 + $0x40] sm:$0xff]
      %v1194 = vld [vmem:[%s1184 + $0x48] sm:$0xff]
      %v1195 = vld [vmem:[%s1184 + $0x50] sm:$0xff]
      %v1196 = vld [vmem:[%s1184 + $0x58] sm:$0xff]
      %v1197 = vld [vmem:[%s1184 + $0x60] sm:$0xff]
      %v1198 = vld [vmem:[%s1184 + $0x68] sm:$0xff]
      %v1199 = vld [vmem:[%s1184 + $0x70] sm:$0xff]
      %v1200 = vld [vmem:[%s1184 + $0x78] sm:$0xff]
      %v1201 = vld [vmem:[%s1184 + $0x80] sm:$0xff]
      %v1202 = vld [vmem:[%s1184 + $0x88] sm:$0xff]
      %v1203 = vld [vmem:[%s1184 + $0x90] sm:$0xff]
      %v1204 = vld [vmem:[%s1184 + $0x98] sm:$0xff]
      %v1205 = vld [vmem:[%s1184 + $0xa0] sm:$0xff]
      %v1206 = vld [vmem:[%s1184 + $0xa8] sm:$0xff]
      %v1207 = vld [vmem:[%s1184 + $0xb0] sm:$0xff]
      %v1208 = vld [vmem:[%s1184 + $0xb8] sm:$0xff]
      %v1209 = vld [vmem:[%s1184 + $0xc0] sm:$0xff]
      %v1210 = vld [vmem:[%s1184 + $0xc8] sm:$0xff]
      %v1211 = vld [vmem:[%s1184 + $0xd0] sm:$0xff]
      %v1212 = vld [vmem:[%s1184 + $0xd8] sm:$0xff]
      %v1213 = vld [vmem:[%s1184 + $0xe0] sm:$0xff]
      %v1214 = vld [vmem:[%s1184 + $0xe8] sm:$0xff]
      %v1215 = vld [vmem:[%s1184 + $0xf0] sm:$0xff]
      %v1216 = vld [vmem:[%s1184 + $0xf8] sm:$0xff]
      %v1217 = vld [vmem:[%s1184 + $0x100] sm:$0xff]
      %v1218 = vld [vmem:[%s1184 + $0x108] sm:$0xff]
      %v1219 = vld [vmem:[%s1184 + $0x110] sm:$0xff]
      %v1220 = vld [vmem:[%s1184 + $0x118] sm:$0xff]
      %v1221 = vld [vmem:[%s1184 + $0x120] sm:$0xff]
      %v1222 = vld [vmem:[%s1184 + $0x128] sm:$0xff]
      %v1223 = vld [vmem:[%s1184 + $0x130] sm:$0xff]
      %v1224 = vld [vmem:[%s1184 + $0x138] sm:$0xff]
      %v1225 = vld [vmem:[%s1184 + $0x140] sm:$0xff]
      %v1226 = vld [vmem:[%s1184 + $0x148] sm:$0xff]
      %v1227 = vld [vmem:[%s1184 + $0x150] sm:$0xff]
      %v1228 = vld [vmem:[%s1184 + $0x158] sm:$0xff]
      %v1229 = vld [vmem:[%s1184 + $0x160] sm:$0xff]
      %v1230 = vld [vmem:[%s1184 + $0x168] sm:$0xff]
      %v1231 = vld [vmem:[%s1184 + $0x170] sm:$0xff]
      %v1232 = vld [vmem:[%s1184 + $0x178] sm:$0xff]
      %v1233 = vld [vmem:[%s1184 + $0x180] sm:$0xff]
      %v1234 = vld [vmem:[%s1184 + $0x188] sm:$0xff]
      %1235 = vmatprep.subr.mxu0 0.0
      %1236 = vmatpush1.msra.mxu0 %v1200
      %1237 = vmatprep.subr.mxu0 0.0
      %1238 = vmatpush1.msra.mxu0 %v1199
      %1239 = vmatprep.subr.mxu0 0.0
      %1240 = vmatpush1.msra.mxu0 %v1198
      %1241 = vmatprep.subr.mxu0 0.0
      %1242 = vmatpush1.msra.mxu0 %v1197
      %1243 = vmatprep.subr.mxu0 0.0
      %1244 = vmatpush1.msra.mxu0 %v1196
      %1245 = vmatprep.subr.mxu0 0.0
      %1246 = vmatpush1.msra.mxu0 %v1195
      %1247 = vmatprep.subr.mxu0 0.0
      %1248 = vmatpush1.msra.mxu0 %v1194
      %1249 = vmatprep.subr.mxu0 0.0
      %1250 = vmatpush1.msra.mxu0 %v1193
      %1251 = vmatprep.subr.mxu0 0.0
      %1252 = vmatpush1.msra.mxu0 %v1192
      %1253 = vmatprep.subr.mxu0 0.0
      %1254 = vmatpush1.msra.mxu0 %v1191
      %1255 = vmatprep.subr.mxu0 0.0
      %1256 = vmatpush1.msra.mxu0 %v1190
      %1257 = vmatprep.subr.mxu0 0.0
      %1258 = vmatpush1.msra.mxu0 %v1189
      %1259 = vmatprep.subr.mxu0 0.0
      %1260 = vmatpush1.msra.mxu0 %v1188
      %1261 = vmatprep.subr.mxu0 0.0
      %1262 = vmatpush1.msra.mxu0 %v1187
      %1263 = vmatprep.subr.mxu0 0.0
      %1264 = vmatpush1.msra.mxu0 %v1186
      %1265 = vmatprep.subr.mxu0 0.0
      %1266 = vmatpush1.msra.mxu0 %v1185
      %1267 = vmatprep.subr.mxu0 0.0
      %1268 = vmatpush2.msra.mxu0 %v1216
      %1269 = vmatprep.subr.mxu0 0.0
      %1270 = vmatpush2.msra.mxu0 %v1215
      %1271 = vmatprep.subr.mxu0 0.0
      %1272 = vmatpush2.msra.mxu0 %v1214
      %1273 = vmatprep.subr.mxu0 0.0
      %1274 = vmatpush2.msra.mxu0 %v1213
      %1275 = vmatprep.subr.mxu0 0.0
      %1276 = vmatpush2.msra.mxu0 %v1212
      %1277 = vmatprep.subr.mxu0 0.0
      %1278 = vmatpush2.msra.mxu0 %v1211
      %1279 = vmatprep.subr.mxu0 0.0
      %1280 = vmatpush2.msra.mxu0 %v1210
      %1281 = vmatprep.subr.mxu0 0.0
      %1282 = vmatpush2.msra.mxu0 %v1209
      %1283 = vmatprep.subr.mxu0 0.0
      %1284 = vmatpush2.msra.mxu0 %v1208
      %1285 = vmatprep.subr.mxu0 0.0
      %1286 = vmatpush2.msra.mxu0 %v1207
      %1287 = vmatprep.subr.mxu0 0.0
      %1288 = vmatpush2.msra.mxu0 %v1206
      %1289 = vmatprep.subr.mxu0 0.0
      %1290 = vmatpush2.msra.mxu0 %v1205
      %1291 = vmatprep.subr.mxu0 0.0
      %1292 = vmatpush2.msra.mxu0 %v1204
      %1293 = vmatprep.subr.mxu0 0.0
      %1294 = vmatpush2.msra.mxu0 %v1203
      %1295 = vmatprep.subr.mxu0 0.0
      %1296 = vmatpush2.msra.mxu0 %v1202
      %1297 = vmatprep.subr.mxu0 0.0
      %1298 = vmatpush2.msra.mxu0 %v1201
      %1299 = vmatprep.mubr.f32.mxu0 %v566
      %1300 = vmatmul.mubr.f32.gmra.mxu0 %v565
      %v1301 = vpop.f32.mrf.mxu0
      %v1302 = vadd.f32 0.0, %v1301
      %v1303 = vpop.f32.mrf.mxu0
      %1304 = vmatprep.mubr.f32.mxu0 %v570
      %1305 = vmatmul.mubr.f32.gmra.mxu0 %v569
      %v1306 = vpop.f32.mrf.mxu0
      %v1307 = vadd.f32 0.0, %v1306
      %v1308 = vpop.f32.mrf.mxu0
      %1309 = vdwg.mxu0
      %1310 = vmatprep.subr.mxu0 0.0
      %1311 = vmatpush1.msra.mxu0 %v1232
      %1312 = vmatprep.subr.mxu0 0.0
      %1313 = vmatpush1.msra.mxu0 %v1231
      %1314 = vmatprep.subr.mxu0 0.0
      %1315 = vmatpush1.msra.mxu0 %v1230
      %1316 = vmatprep.subr.mxu0 0.0
      %1317 = vmatpush1.msra.mxu0 %v1229
      %1318 = vmatprep.subr.mxu0 0.0
      %1319 = vmatpush1.msra.mxu0 %v1228
      %1320 = vmatprep.subr.mxu0 0.0
      %1321 = vmatpush1.msra.mxu0 %v1227
      %1322 = vmatprep.subr.mxu0 0.0
      %1323 = vmatpush1.msra.mxu0 %v1226
      %1324 = vmatprep.subr.mxu0 0.0
      %1325 = vmatpush1.msra.mxu0 %v1225
      %1326 = vmatprep.subr.mxu0 0.0
      %1327 = vmatpush1.msra.mxu0 %v1224
      %1328 = vmatprep.subr.mxu0 0.0
      %1329 = vmatpush1.msra.mxu0 %v1223
      %1330 = vmatprep.subr.mxu0 0.0
      %1331 = vmatpush1.msra.mxu0 %v1222
      %1332 = vmatprep.subr.mxu0 0.0
      %1333 = vmatpush1.msra.mxu0 %v1221
      %1334 = vmatprep.subr.mxu0 0.0
      %1335 = vmatpush1.msra.mxu0 %v1220
      %1336 = vmatprep.subr.mxu0 0.0
      %1337 = vmatpush1.msra.mxu0 %v1219
      %1338 = vmatprep.subr.mxu0 0.0
      %1339 = vmatpush1.msra.mxu0 %v1218
      %1340 = vmatprep.subr.mxu0 0.0
      %1341 = vmatpush1.msra.mxu0 %v1217
      %1342 = vmatprep.subr.mxu0 0.0
      %1343 = vmatpush2.msra.mxu0 0.0
      %1344 = vmatprep.subr.mxu0 0.0
      %1345 = vmatpush2.msra.mxu0 0.0
      %1346 = vmatprep.subr.mxu0 0.0
      %1347 = vmatpush2.msra.mxu0 0.0
      %1348 = vmatprep.subr.mxu0 0.0
      %1349 = vmatpush2.msra.mxu0 0.0
      %1350 = vmatprep.subr.mxu0 0.0
      %1351 = vmatpush2.msra.mxu0 0.0
      %1352 = vmatprep.subr.mxu0 0.0
      %1353 = vmatpush2.msra.mxu0 0.0
      %1354 = vmatprep.subr.mxu0 0.0
      %1355 = vmatpush2.msra.mxu0 0.0
      %1356 = vmatprep.subr.mxu0 0.0
      %1357 = vmatpush2.msra.mxu0 0.0
      %1358 = vmatprep.subr.mxu0 0.0
      %1359 = vmatpush2.msra.mxu0 0.0
      %1360 = vmatprep.subr.mxu0 0.0
      %1361 = vmatpush2.msra.mxu0 0.0
      %1362 = vmatprep.subr.mxu0 0.0
      %1363 = vmatpush2.msra.mxu0 0.0
      %1364 = vmatprep.subr.mxu0 0.0
      %1365 = vmatpush2.msra.mxu0 0.0
      %1366 = vmatprep.subr.mxu0 0.0
      %1367 = vmatpush2.msra.mxu0 0.0
      %1368 = vmatprep.subr.mxu0 0.0
      %1369 = vmatpush2.msra.mxu0 0.0
      %1370 = vmatprep.subr.mxu0 0.0
      %1371 = vmatpush2.msra.mxu0 %v1234
      %1372 = vmatprep.subr.mxu0 0.0
      %1373 = vmatpush2.msra.mxu0 %v1233
      %1374 = vmatprep.mubr.f32.mxu0 %v625
      %1375 = vmatmul.mubr.f32.gmra.mxu0 %v567
      %v1376 = vpop.f32.mrf.mxu0
      %v1377 = vadd.f32 %v1302, %v1376
      %v1378 = vpop.f32.mrf.mxu0
      %1379 = vmatprep.mubr.f32.mxu0 %v628
      %1380 = vmatmul.mubr.f32.gmra.mxu0 %v571
      %v1381 = vpop.f32.mrf.mxu0
      %v1382 = vadd.f32 %v1307, %v1381
      %v1383 = vpop.f32.mrf.mxu0
      %1384 = vdwg.mxu0
      %s1385 = scalar_lea.vmem %s4, 64
      %v1386 = vld [vmem:[%s1385] sm:$0xff]
      %v1387 = vld [vmem:[%s1385 + $0x8] sm:$0xff]
      %v1388 = vld [vmem:[%s1385 + $0x10] sm:$0xff]
      %v1389 = vld [vmem:[%s1385 + $0x18] sm:$0xff]
      %v1391 = vsel %vm623, %v1386, 0
      %v1394 = vsel %vm623, %v1387, 0
      %v1397 = vsel %vm623, %v1388, 0
      %v1400 = vsel %vm623, %v1389, 0
      %1402 = vmatprep.subr.mxu0 0.0
      %1403 = vmatpush1.msra.mxu0 0.0
      %1404 = vmatprep.subr.mxu0 0.0
      %1405 = vmatpush1.msra.mxu0 0.0
      %1406 = vmatprep.subr.mxu0 0.0
      %1407 = vmatpush1.msra.mxu0 0.0
      %1408 = vmatprep.subr.mxu0 0.0
      %1409 = vmatpush1.msra.mxu0 0.0
      %1410 = vmatprep.subr.mxu0 0.0
      %1411 = vmatpush1.msra.mxu0 0.0
      %1412 = vmatprep.subr.mxu0 0.0
      %1413 = vmatpush1.msra.mxu0 0.0
      %1414 = vmatprep.subr.mxu0 0.0
      %1415 = vmatpush1.msra.mxu0 0.0
      %1416 = vmatprep.subr.mxu0 0.0
      %1417 = vmatpush1.msra.mxu0 0.0
      %1418 = vmatprep.subr.mxu0 0.0
      %1419 = vmatpush1.msra.mxu0 0.0
      %1420 = vmatprep.subr.mxu0 0.0
      %1421 = vmatpush1.msra.mxu0 0.0
      %1422 = vmatprep.subr.mxu0 0.0
      %1423 = vmatpush1.msra.mxu0 0.0
      %1424 = vmatprep.subr.mxu0 0.0
      %1425 = vmatpush1.msra.mxu0 0.0
      %1426 = vmatprep.subr.mxu0 0.0
      %1427 = vmatpush1.msra.mxu0 0.0
      %1428 = vmatprep.subr.mxu0 0.0
      %1429 = vmatpush1.msra.mxu0 0.0
      %1430 = vmatprep.subr.mxu0 0.0
      %1431 = vmatpush1.msra.mxu0 %v1382
      %1432 = vmatprep.subr.mxu0 0.0
      %1433 = vmatpush1.msra.mxu0 %v1377
      %1434 = vmatprep.subr.mxu0 0.0
      %1435 = vmatpush2.msra.mxu0 0.0
      %1436 = vmatprep.subr.mxu0 0.0
      %1437 = vmatpush2.msra.mxu0 0.0
      %1438 = vmatprep.subr.mxu0 0.0
      %1439 = vmatpush2.msra.mxu0 0.0
      %1440 = vmatprep.subr.mxu0 0.0
      %1441 = vmatpush2.msra.mxu0 0.0
      %1442 = vmatprep.subr.mxu0 0.0
      %1443 = vmatpush2.msra.mxu0 0.0
      %1444 = vmatprep.subr.mxu0 0.0
      %1445 = vmatpush2.msra.mxu0 0.0
      %1446 = vmatprep.subr.mxu0 0.0
      %1447 = vmatpush2.msra.mxu0 0.0
      %1448 = vmatprep.subr.mxu0 0.0
      %1449 = vmatpush2.msra.mxu0 0.0
      %1450 = vmatprep.subr.mxu0 0.0
      %1451 = vmatpush2.msra.mxu0 0.0
      %1452 = vmatprep.subr.mxu0 0.0
      %1453 = vmatpush2.msra.mxu0 0.0
      %1454 = vmatprep.subr.mxu0 0.0
      %1455 = vmatpush2.msra.mxu0 0.0
      %1456 = vmatprep.subr.mxu0 0.0
      %1457 = vmatpush2.msra.mxu0 0.0
      %1458 = vmatprep.subr.mxu0 0.0
      %1459 = vmatpush2.msra.mxu0 0.0
      %1460 = vmatprep.subr.mxu0 0.0
      %1461 = vmatpush2.msra.mxu0 0.0
      %1462 = vmatprep.subr.mxu0 0.0
      %1463 = vmatpush2.msra.mxu0 0.0
      %1464 = vmatprep.subr.mxu0 0.0
      %1465 = vmatpush2.msra.mxu0 0.0
      %1466 = vmatprep.mubr.f32.mxu0 0.0
      %1467 = vmatmul.mubr.f32.gmra.mxu0 %v1391
      %v1468 = vpop.f32.mrf.mxu0
      %v1469 = vadd.f32 0.0, %v1468
      %v1470 = vpop.f32.mrf.mxu0
      %1471 = vmatprep.mubr.f32.mxu0 0.0
      %1472 = vmatmul.mubr.f32.gmra.mxu0 %v1394
      %v1473 = vpop.f32.mrf.mxu0
      %v1474 = vadd.f32 0.0, %v1473
      %v1475 = vpop.f32.mrf.mxu0
      %1476 = vmatprep.mubr.f32.mxu0 0.0
      %1477 = vmatmul.mubr.f32.gmra.mxu0 %v1397
      %v1478 = vpop.f32.mrf.mxu0
      %v1479 = vadd.f32 0.0, %v1478
      %v1480 = vpop.f32.mrf.mxu0
      %1481 = vmatprep.mubr.f32.mxu0 0.0
      %1482 = vmatmul.mubr.f32.gmra.mxu0 %v1400
      %v1483 = vpop.f32.mrf.mxu0
      %v1484 = vadd.f32 0.0, %v1483
      %v1485 = vpop.f32.mrf.mxu0
      %1486 = vdwg.mxu0
      %v1487 = vadd.f32 %v1166, %v1469
      %v1488 = vadd.f32 %v1171, %v1474
      %v1489 = vadd.f32 %v1176, %v1479
      %v1490 = vadd.f32 %v1181, %v1484
      %s1491 = scalar_lea.vmem %s3, 1200
      %v1492 = vld [vmem:[%s1491] sm:$0xff]
      %v1493 = vld [vmem:[%s1491 + $0x8] sm:$0xff]
      %v1494 = vld [vmem:[%s1491 + $0x10] sm:$0xff]
      %v1495 = vld [vmem:[%s1491 + $0x18] sm:$0xff]
      %v1496 = vld [vmem:[%s1491 + $0x20] sm:$0xff]
      %v1497 = vld [vmem:[%s1491 + $0x28] sm:$0xff]
      %v1498 = vld [vmem:[%s1491 + $0x30] sm:$0xff]
      %v1499 = vld [vmem:[%s1491 + $0x38] sm:$0xff]
      %v1500 = vld [vmem:[%s1491 + $0x40] sm:$0xff]
      %v1501 = vld [vmem:[%s1491 + $0x48] sm:$0xff]
      %v1502 = vld [vmem:[%s1491 + $0x50] sm:$0xff]
      %v1503 = vld [vmem:[%s1491 + $0x58] sm:$0xff]
      %v1504 = vld [vmem:[%s1491 + $0x60] sm:$0xff]
      %v1505 = vld [vmem:[%s1491 + $0x68] sm:$0xff]
      %v1506 = vld [vmem:[%s1491 + $0x70] sm:$0xff]
      %v1507 = vld [vmem:[%s1491 + $0x78] sm:$0xff]
      %v1508 = vld [vmem:[%s1491 + $0x80] sm:$0xff]
      %v1509 = vld [vmem:[%s1491 + $0x88] sm:$0xff]
      %v1510 = vld [vmem:[%s1491 + $0x90] sm:$0xff]
      %v1511 = vld [vmem:[%s1491 + $0x98] sm:$0xff]
      %v1512 = vld [vmem:[%s1491 + $0xa0] sm:$0xff]
      %v1513 = vld [vmem:[%s1491 + $0xa8] sm:$0xff]
      %v1514 = vld [vmem:[%s1491 + $0xb0] sm:$0xff]
      %v1515 = vld [vmem:[%s1491 + $0xb8] sm:$0xff]
      %v1516 = vld [vmem:[%s1491 + $0xc0] sm:$0xff]
      %v1517 = vld [vmem:[%s1491 + $0xc8] sm:$0xff]
      %v1518 = vld [vmem:[%s1491 + $0xd0] sm:$0xff]
      %v1519 = vld [vmem:[%s1491 + $0xd8] sm:$0xff]
      %v1520 = vld [vmem:[%s1491 + $0xe0] sm:$0xff]
      %v1521 = vld [vmem:[%s1491 + $0xe8] sm:$0xff]
      %v1522 = vld [vmem:[%s1491 + $0xf0] sm:$0xff]
      %v1523 = vld [vmem:[%s1491 + $0xf8] sm:$0xff]
      %v1524 = vld [vmem:[%s1491 + $0x100] sm:$0xff]
      %v1525 = vld [vmem:[%s1491 + $0x108] sm:$0xff]
      %v1526 = vld [vmem:[%s1491 + $0x110] sm:$0xff]
      %v1527 = vld [vmem:[%s1491 + $0x118] sm:$0xff]
      %v1528 = vld [vmem:[%s1491 + $0x120] sm:$0xff]
      %v1529 = vld [vmem:[%s1491 + $0x128] sm:$0xff]
      %v1530 = vld [vmem:[%s1491 + $0x130] sm:$0xff]
      %v1531 = vld [vmem:[%s1491 + $0x138] sm:$0xff]
      %v1532 = vld [vmem:[%s1491 + $0x140] sm:$0xff]
      %v1533 = vld [vmem:[%s1491 + $0x148] sm:$0xff]
      %v1534 = vld [vmem:[%s1491 + $0x150] sm:$0xff]
      %v1535 = vld [vmem:[%s1491 + $0x158] sm:$0xff]
      %v1536 = vld [vmem:[%s1491 + $0x160] sm:$0xff]
      %v1537 = vld [vmem:[%s1491 + $0x168] sm:$0xff]
      %v1538 = vld [vmem:[%s1491 + $0x170] sm:$0xff]
      %v1539 = vld [vmem:[%s1491 + $0x178] sm:$0xff]
      %v1540 = vld [vmem:[%s1491 + $0x180] sm:$0xff]
      %v1541 = vld [vmem:[%s1491 + $0x188] sm:$0xff]
      %1542 = vmatprep.subr.mxu0 0.0
      %1543 = vmatpush1.msra.mxu0 %v1507
      %1544 = vmatprep.subr.mxu0 0.0
      %1545 = vmatpush1.msra.mxu0 %v1506
      %1546 = vmatprep.subr.mxu0 0.0
      %1547 = vmatpush1.msra.mxu0 %v1505
      %1548 = vmatprep.subr.mxu0 0.0
      %1549 = vmatpush1.msra.mxu0 %v1504
      %1550 = vmatprep.subr.mxu0 0.0
      %1551 = vmatpush1.msra.mxu0 %v1503
      %1552 = vmatprep.subr.mxu0 0.0
      %1553 = vmatpush1.msra.mxu0 %v1502
      %1554 = vmatprep.subr.mxu0 0.0
      %1555 = vmatpush1.msra.mxu0 %v1501
      %1556 = vmatprep.subr.mxu0 0.0
      %1557 = vmatpush1.msra.mxu0 %v1500
      %1558 = vmatprep.subr.mxu0 0.0
      %1559 = vmatpush1.msra.mxu0 %v1499
      %1560 = vmatprep.subr.mxu0 0.0
      %1561 = vmatpush1.msra.mxu0 %v1498
      %1562 = vmatprep.subr.mxu0 0.0
      %1563 = vmatpush1.msra.mxu0 %v1497
      %1564 = vmatprep.subr.mxu0 0.0
      %1565 = vmatpush1.msra.mxu0 %v1496
      %1566 = vmatprep.subr.mxu0 0.0
      %1567 = vmatpush1.msra.mxu0 %v1495
      %1568 = vmatprep.subr.mxu0 0.0
      %1569 = vmatpush1.msra.mxu0 %v1494
      %1570 = vmatprep.subr.mxu0 0.0
      %1571 = vmatpush1.msra.mxu0 %v1493
      %1572 = vmatprep.subr.mxu0 0.0
      %1573 = vmatpush1.msra.mxu0 %v1492
      %1574 = vmatprep.subr.mxu0 0.0
      %1575 = vmatpush2.msra.mxu0 %v1523
      %1576 = vmatprep.subr.mxu0 0.0
      %1577 = vmatpush2.msra.mxu0 %v1522
      %1578 = vmatprep.subr.mxu0 0.0
      %1579 = vmatpush2.msra.mxu0 %v1521
      %1580 = vmatprep.subr.mxu0 0.0
      %1581 = vmatpush2.msra.mxu0 %v1520
      %1582 = vmatprep.subr.mxu0 0.0
      %1583 = vmatpush2.msra.mxu0 %v1519
      %1584 = vmatprep.subr.mxu0 0.0
      %1585 = vmatpush2.msra.mxu0 %v1518
      %1586 = vmatprep.subr.mxu0 0.0
      %1587 = vmatpush2.msra.mxu0 %v1517
      %1588 = vmatprep.subr.mxu0 0.0
      %1589 = vmatpush2.msra.mxu0 %v1516
      %1590 = vmatprep.subr.mxu0 0.0
      %1591 = vmatpush2.msra.mxu0 %v1515
      %1592 = vmatprep.subr.mxu0 0.0
      %1593 = vmatpush2.msra.mxu0 %v1514
      %1594 = vmatprep.subr.mxu0 0.0
      %1595 = vmatpush2.msra.mxu0 %v1513
      %1596 = vmatprep.subr.mxu0 0.0
      %1597 = vmatpush2.msra.mxu0 %v1512
      %1598 = vmatprep.subr.mxu0 0.0
      %1599 = vmatpush2.msra.mxu0 %v1511
      %1600 = vmatprep.subr.mxu0 0.0
      %1601 = vmatpush2.msra.mxu0 %v1510
      %1602 = vmatprep.subr.mxu0 0.0
      %1603 = vmatpush2.msra.mxu0 %v1509
      %1604 = vmatprep.subr.mxu0 0.0
      %1605 = vmatpush2.msra.mxu0 %v1508
      %1606 = vmatprep.mubr.f32.mxu0 %v566
      %1607 = vmatmul.mubr.f32.gmra.mxu0 %v565
      %v1608 = vpop.f32.mrf.mxu0
      %v1609 = vadd.f32 0.0, %v1608
      %v1610 = vpop.f32.mrf.mxu0
      %1611 = vmatprep.mubr.f32.mxu0 %v570
      %1612 = vmatmul.mubr.f32.gmra.mxu0 %v569
      %v1613 = vpop.f32.mrf.mxu0
      %v1614 = vadd.f32 0.0, %v1613
      %v1615 = vpop.f32.mrf.mxu0
      %1616 = vdwg.mxu0
      %1617 = vmatprep.subr.mxu0 0.0
      %1618 = vmatpush1.msra.mxu0 %v1539
      %1619 = vmatprep.subr.mxu0 0.0
      %1620 = vmatpush1.msra.mxu0 %v1538
      %1621 = vmatprep.subr.mxu0 0.0
      %1622 = vmatpush1.msra.mxu0 %v1537
      %1623 = vmatprep.subr.mxu0 0.0
      %1624 = vmatpush1.msra.mxu0 %v1536
      %1625 = vmatprep.subr.mxu0 0.0
      %1626 = vmatpush1.msra.mxu0 %v1535
      %1627 = vmatprep.subr.mxu0 0.0
      %1628 = vmatpush1.msra.mxu0 %v1534
      %1629 = vmatprep.subr.mxu0 0.0
      %1630 = vmatpush1.msra.mxu0 %v1533
      %1631 = vmatprep.subr.mxu0 0.0
      %1632 = vmatpush1.msra.mxu0 %v1532
      %1633 = vmatprep.subr.mxu0 0.0
      %1634 = vmatpush1.msra.mxu0 %v1531
      %1635 = vmatprep.subr.mxu0 0.0
      %1636 = vmatpush1.msra.mxu0 %v1530
      %1637 = vmatprep.subr.mxu0 0.0
      %1638 = vmatpush1.msra.mxu0 %v1529
      %1639 = vmatprep.subr.mxu0 0.0
      %1640 = vmatpush1.msra.mxu0 %v1528
      %1641 = vmatprep.subr.mxu0 0.0
      %1642 = vmatpush1.msra.mxu0 %v1527
      %1643 = vmatprep.subr.mxu0 0.0
      %1644 = vmatpush1.msra.mxu0 %v1526
      %1645 = vmatprep.subr.mxu0 0.0
      %1646 = vmatpush1.msra.mxu0 %v1525
      %1647 = vmatprep.subr.mxu0 0.0
      %1648 = vmatpush1.msra.mxu0 %v1524
      %1649 = vmatprep.subr.mxu0 0.0
      %1650 = vmatpush2.msra.mxu0 0.0
      %1651 = vmatprep.subr.mxu0 0.0
      %1652 = vmatpush2.msra.mxu0 0.0
      %1653 = vmatprep.subr.mxu0 0.0
      %1654 = vmatpush2.msra.mxu0 0.0
      %1655 = vmatprep.subr.mxu0 0.0
      %1656 = vmatpush2.msra.mxu0 0.0
      %1657 = vmatprep.subr.mxu0 0.0
      %1658 = vmatpush2.msra.mxu0 0.0
      %1659 = vmatprep.subr.mxu0 0.0
      %1660 = vmatpush2.msra.mxu0 0.0
      %1661 = vmatprep.subr.mxu0 0.0
      %1662 = vmatpush2.msra.mxu0 0.0
      %1663 = vmatprep.subr.mxu0 0.0
      %1664 = vmatpush2.msra.mxu0 0.0
      %1665 = vmatprep.subr.mxu0 0.0
      %1666 = vmatpush2.msra.mxu0 0.0
      %1667 = vmatprep.subr.mxu0 0.0
      %1668 = vmatpush2.msra.mxu0 0.0
      %1669 = vmatprep.subr.mxu0 0.0
      %1670 = vmatpush2.msra.mxu0 0.0
      %1671 = vmatprep.subr.mxu0 0.0
      %1672 = vmatpush2.msra.mxu0 0.0
      %1673 = vmatprep.subr.mxu0 0.0
      %1674 = vmatpush2.msra.mxu0 0.0
      %1675 = vmatprep.subr.mxu0 0.0
      %1676 = vmatpush2.msra.mxu0 0.0
      %1677 = vmatprep.subr.mxu0 0.0
      %1678 = vmatpush2.msra.mxu0 %v1541
      %1679 = vmatprep.subr.mxu0 0.0
      %1680 = vmatpush2.msra.mxu0 %v1540
      %1681 = vmatprep.mubr.f32.mxu0 %v625
      %1682 = vmatmul.mubr.f32.gmra.mxu0 %v567
      %v1683 = vpop.f32.mrf.mxu0
      %v1684 = vadd.f32 %v1609, %v1683
      %v1685 = vpop.f32.mrf.mxu0
      %1686 = vmatprep.mubr.f32.mxu0 %v628
      %1687 = vmatmul.mubr.f32.gmra.mxu0 %v571
      %v1688 = vpop.f32.mrf.mxu0
      %v1689 = vadd.f32 %v1614, %v1688
      %v1690 = vpop.f32.mrf.mxu0
      %1691 = vdwg.mxu0
      %s1692 = scalar_lea.vmem %s4, 96
      %v1693 = vld [vmem:[%s1692] sm:$0xff]
      %v1694 = vld [vmem:[%s1692 + $0x8] sm:$0xff]
      %v1695 = vld [vmem:[%s1692 + $0x10] sm:$0xff]
      %v1696 = vld [vmem:[%s1692 + $0x18] sm:$0xff]
      %v1698 = vsel %vm623, %v1693, 0
      %v1701 = vsel %vm623, %v1694, 0
      %v1704 = vsel %vm623, %v1695, 0
      %v1707 = vsel %vm623, %v1696, 0
      %1709 = vmatprep.subr.mxu0 0.0
      %1710 = vmatpush1.msra.mxu0 0.0
      %1711 = vmatprep.subr.mxu0 0.0
      %1712 = vmatpush1.msra.mxu0 0.0
      %1713 = vmatprep.subr.mxu0 0.0
      %1714 = vmatpush1.msra.mxu0 0.0
      %1715 = vmatprep.subr.mxu0 0.0
      %1716 = vmatpush1.msra.mxu0 0.0
      %1717 = vmatprep.subr.mxu0 0.0
      %1718 = vmatpush1.msra.mxu0 0.0
      %1719 = vmatprep.subr.mxu0 0.0
      %1720 = vmatpush1.msra.mxu0 0.0
      %1721 = vmatprep.subr.mxu0 0.0
      %1722 = vmatpush1.msra.mxu0 0.0
      %1723 = vmatprep.subr.mxu0 0.0
      %1724 = vmatpush1.msra.mxu0 0.0
      %1725 = vmatprep.subr.mxu0 0.0
      %1726 = vmatpush1.msra.mxu0 0.0
      %1727 = vmatprep.subr.mxu0 0.0
      %1728 = vmatpush1.msra.mxu0 0.0
      %1729 = vmatprep.subr.mxu0 0.0
      %1730 = vmatpush1.msra.mxu0 0.0
      %1731 = vmatprep.subr.mxu0 0.0
      %1732 = vmatpush1.msra.mxu0 0.0
      %1733 = vmatprep.subr.mxu0 0.0
      %1734 = vmatpush1.msra.mxu0 0.0
      %1735 = vmatprep.subr.mxu0 0.0
      %1736 = vmatpush1.msra.mxu0 0.0
      %1737 = vmatprep.subr.mxu0 0.0
      %1738 = vmatpush1.msra.mxu0 %v1689
      %1739 = vmatprep.subr.mxu0 0.0
      %1740 = vmatpush1.msra.mxu0 %v1684
      %1741 = vmatprep.subr.mxu0 0.0
      %1742 = vmatpush2.msra.mxu0 0.0
      %1743 = vmatprep.subr.mxu0 0.0
      %1744 = vmatpush2.msra.mxu0 0.0
      %1745 = vmatprep.subr.mxu0 0.0
      %1746 = vmatpush2.msra.mxu0 0.0
      %1747 = vmatprep.subr.mxu0 0.0
      %1748 = vmatpush2.msra.mxu0 0.0
      %1749 = vmatprep.subr.mxu0 0.0
      %1750 = vmatpush2.msra.mxu0 0.0
      %1751 = vmatprep.subr.mxu0 0.0
      %1752 = vmatpush2.msra.mxu0 0.0
      %1753 = vmatprep.subr.mxu0 0.0
      %1754 = vmatpush2.msra.mxu0 0.0
      %1755 = vmatprep.subr.mxu0 0.0
      %1756 = vmatpush2.msra.mxu0 0.0
      %1757 = vmatprep.subr.mxu0 0.0
      %1758 = vmatpush2.msra.mxu0 0.0
      %1759 = vmatprep.subr.mxu0 0.0
      %1760 = vmatpush2.msra.mxu0 0.0
      %1761 = vmatprep.subr.mxu0 0.0
      %1762 = vmatpush2.msra.mxu0 0.0
      %1763 = vmatprep.subr.mxu0 0.0
      %1764 = vmatpush2.msra.mxu0 0.0
      %1765 = vmatprep.subr.mxu0 0.0
      %1766 = vmatpush2.msra.mxu0 0.0
      %1767 = vmatprep.subr.mxu0 0.0
      %1768 = vmatpush2.msra.mxu0 0.0
      %1769 = vmatprep.subr.mxu0 0.0
      %1770 = vmatpush2.msra.mxu0 0.0
      %1771 = vmatprep.subr.mxu0 0.0
      %1772 = vmatpush2.msra.mxu0 0.0
      %1773 = vmatprep.mubr.f32.mxu0 0.0
      %1774 = vmatmul.mubr.f32.gmra.mxu0 %v1698
      %v1775 = vpop.f32.mrf.mxu0
      %v1776 = vadd.f32 0.0, %v1775
      %v1777 = vpop.f32.mrf.mxu0
      %1778 = vmatprep.mubr.f32.mxu0 0.0
      %1779 = vmatmul.mubr.f32.gmra.mxu0 %v1701
      %v1780 = vpop.f32.mrf.mxu0
      %v1781 = vadd.f32 0.0, %v1780
      %v1782 = vpop.f32.mrf.mxu0
      %1783 = vmatprep.mubr.f32.mxu0 0.0
      %1784 = vmatmul.mubr.f32.gmra.mxu0 %v1704
      %v1785 = vpop.f32.mrf.mxu0
      %v1786 = vadd.f32 0.0, %v1785
      %v1787 = vpop.f32.mrf.mxu0
      %1788 = vmatprep.mubr.f32.mxu0 0.0
      %1789 = vmatmul.mubr.f32.gmra.mxu0 %v1707
      %v1790 = vpop.f32.mrf.mxu0
      %v1791 = vadd.f32 0.0, %v1790
      %v1792 = vpop.f32.mrf.mxu0
      %1793 = vdwg.mxu0
      %v1794 = vadd.f32 %v1487, %v1776
      %v1795 = vadd.f32 %v1488, %v1781
      %v1796 = vadd.f32 %v1489, %v1786
      %v1797 = vadd.f32 %v1490, %v1791
      %s1798 = scalar_lea.vmem %s3, 1600
      %v1799 = vld [vmem:[%s1798] sm:$0xff]
      %v1800 = vld [vmem:[%s1798 + $0x8] sm:$0xff]
      %v1801 = vld [vmem:[%s1798 + $0x10] sm:$0xff]
      %v1802 = vld [vmem:[%s1798 + $0x18] sm:$0xff]
      %v1803 = vld [vmem:[%s1798 + $0x20] sm:$0xff]
      %v1804 = vld [vmem:[%s1798 + $0x28] sm:$0xff]
      %v1805 = vld [vmem:[%s1798 + $0x30] sm:$0xff]
      %v1806 = vld [vmem:[%s1798 + $0x38] sm:$0xff]
      %v1807 = vld [vmem:[%s1798 + $0x40] sm:$0xff]
      %v1808 = vld [vmem:[%s1798 + $0x48] sm:$0xff]
      %v1809 = vld [vmem:[%s1798 + $0x50] sm:$0xff]
      %v1810 = vld [vmem:[%s1798 + $0x58] sm:$0xff]
      %v1811 = vld [vmem:[%s1798 + $0x60] sm:$0xff]
      %v1812 = vld [vmem:[%s1798 + $0x68] sm:$0xff]
      %v1813 = vld [vmem:[%s1798 + $0x70] sm:$0xff]
      %v1814 = vld [vmem:[%s1798 + $0x78] sm:$0xff]
      %v1815 = vld [vmem:[%s1798 + $0x80] sm:$0xff]
      %v1816 = vld [vmem:[%s1798 + $0x88] sm:$0xff]
      %v1817 = vld [vmem:[%s1798 + $0x90] sm:$0xff]
      %v1818 = vld [vmem:[%s1798 + $0x98] sm:$0xff]
      %v1819 = vld [vmem:[%s1798 + $0xa0] sm:$0xff]
      %v1820 = vld [vmem:[%s1798 + $0xa8] sm:$0xff]
      %v1821 = vld [vmem:[%s1798 + $0xb0] sm:$0xff]
      %v1822 = vld [vmem:[%s1798 + $0xb8] sm:$0xff]
      %v1823 = vld [vmem:[%s1798 + $0xc0] sm:$0xff]
      %v1824 = vld [vmem:[%s1798 + $0xc8] sm:$0xff]
      %v1825 = vld [vmem:[%s1798 + $0xd0] sm:$0xff]
      %v1826 = vld [vmem:[%s1798 + $0xd8] sm:$0xff]
      %v1827 = vld [vmem:[%s1798 + $0xe0] sm:$0xff]
      %v1828 = vld [vmem:[%s1798 + $0xe8] sm:$0xff]
      %v1829 = vld [vmem:[%s1798 + $0xf0] sm:$0xff]
      %v1830 = vld [vmem:[%s1798 + $0xf8] sm:$0xff]
      %v1831 = vld [vmem:[%s1798 + $0x100] sm:$0xff]
      %v1832 = vld [vmem:[%s1798 + $0x108] sm:$0xff]
      %v1833 = vld [vmem:[%s1798 + $0x110] sm:$0xff]
      %v1834 = vld [vmem:[%s1798 + $0x118] sm:$0xff]
      %v1835 = vld [vmem:[%s1798 + $0x120] sm:$0xff]
      %v1836 = vld [vmem:[%s1798 + $0x128] sm:$0xff]
      %v1837 = vld [vmem:[%s1798 + $0x130] sm:$0xff]
      %v1838 = vld [vmem:[%s1798 + $0x138] sm:$0xff]
      %v1839 = vld [vmem:[%s1798 + $0x140] sm:$0xff]
      %v1840 = vld [vmem:[%s1798 + $0x148] sm:$0xff]
      %v1841 = vld [vmem:[%s1798 + $0x150] sm:$0xff]
      %v1842 = vld [vmem:[%s1798 + $0x158] sm:$0xff]
      %v1843 = vld [vmem:[%s1798 + $0x160] sm:$0xff]
      %v1844 = vld [vmem:[%s1798 + $0x168] sm:$0xff]
      %v1845 = vld [vmem:[%s1798 + $0x170] sm:$0xff]
      %v1846 = vld [vmem:[%s1798 + $0x178] sm:$0xff]
      %v1847 = vld [vmem:[%s1798 + $0x180] sm:$0xff]
      %v1848 = vld [vmem:[%s1798 + $0x188] sm:$0xff]
      %1849 = vmatprep.subr.mxu0 0.0
      %1850 = vmatpush1.msra.mxu0 %v1814
      %1851 = vmatprep.subr.mxu0 0.0
      %1852 = vmatpush1.msra.mxu0 %v1813
      %1853 = vmatprep.subr.mxu0 0.0
      %1854 = vmatpush1.msra.mxu0 %v1812
      %1855 = vmatprep.subr.mxu0 0.0
      %1856 = vmatpush1.msra.mxu0 %v1811
      %1857 = vmatprep.subr.mxu0 0.0
      %1858 = vmatpush1.msra.mxu0 %v1810
      %1859 = vmatprep.subr.mxu0 0.0
      %1860 = vmatpush1.msra.mxu0 %v1809
      %1861 = vmatprep.subr.mxu0 0.0
      %1862 = vmatpush1.msra.mxu0 %v1808
      %1863 = vmatprep.subr.mxu0 0.0
      %1864 = vmatpush1.msra.mxu0 %v1807
      %1865 = vmatprep.subr.mxu0 0.0
      %1866 = vmatpush1.msra.mxu0 %v1806
      %1867 = vmatprep.subr.mxu0 0.0
      %1868 = vmatpush1.msra.mxu0 %v1805
      %1869 = vmatprep.subr.mxu0 0.0
      %1870 = vmatpush1.msra.mxu0 %v1804
      %1871 = vmatprep.subr.mxu0 0.0
      %1872 = vmatpush1.msra.mxu0 %v1803
      %1873 = vmatprep.subr.mxu0 0.0
      %1874 = vmatpush1.msra.mxu0 %v1802
      %1875 = vmatprep.subr.mxu0 0.0
      %1876 = vmatpush1.msra.mxu0 %v1801
      %1877 = vmatprep.subr.mxu0 0.0
      %1878 = vmatpush1.msra.mxu0 %v1800
      %1879 = vmatprep.subr.mxu0 0.0
      %1880 = vmatpush1.msra.mxu0 %v1799
      %1881 = vmatprep.subr.mxu0 0.0
      %1882 = vmatpush2.msra.mxu0 %v1830
      %1883 = vmatprep.subr.mxu0 0.0
      %1884 = vmatpush2.msra.mxu0 %v1829
      %1885 = vmatprep.subr.mxu0 0.0
      %1886 = vmatpush2.msra.mxu0 %v1828
      %1887 = vmatprep.subr.mxu0 0.0
      %1888 = vmatpush2.msra.mxu0 %v1827
      %1889 = vmatprep.subr.mxu0 0.0
      %1890 = vmatpush2.msra.mxu0 %v1826
      %1891 = vmatprep.subr.mxu0 0.0
      %1892 = vmatpush2.msra.mxu0 %v1825
      %1893 = vmatprep.subr.mxu0 0.0
      %1894 = vmatpush2.msra.mxu0 %v1824
      %1895 = vmatprep.subr.mxu0 0.0
      %1896 = vmatpush2.msra.mxu0 %v1823
      %1897 = vmatprep.subr.mxu0 0.0
      %1898 = vmatpush2.msra.mxu0 %v1822
      %1899 = vmatprep.subr.mxu0 0.0
      %1900 = vmatpush2.msra.mxu0 %v1821
      %1901 = vmatprep.subr.mxu0 0.0
      %1902 = vmatpush2.msra.mxu0 %v1820
      %1903 = vmatprep.subr.mxu0 0.0
      %1904 = vmatpush2.msra.mxu0 %v1819
      %1905 = vmatprep.subr.mxu0 0.0
      %1906 = vmatpush2.msra.mxu0 %v1818
      %1907 = vmatprep.subr.mxu0 0.0
      %1908 = vmatpush2.msra.mxu0 %v1817
      %1909 = vmatprep.subr.mxu0 0.0
      %1910 = vmatpush2.msra.mxu0 %v1816
      %1911 = vmatprep.subr.mxu0 0.0
      %1912 = vmatpush2.msra.mxu0 %v1815
      %1913 = vmatprep.mubr.f32.mxu0 %v566
      %1914 = vmatmul.mubr.f32.gmra.mxu0 %v565
      %v1915 = vpop.f32.mrf.mxu0
      %v1916 = vadd.f32 0.0, %v1915
      %v1917 = vpop.f32.mrf.mxu0
      %1918 = vmatprep.mubr.f32.mxu0 %v570
      %1919 = vmatmul.mubr.f32.gmra.mxu0 %v569
      %v1920 = vpop.f32.mrf.mxu0
      %v1921 = vadd.f32 0.0, %v1920
      %v1922 = vpop.f32.mrf.mxu0
      %1923 = vdwg.mxu0
      %1924 = vmatprep.subr.mxu0 0.0
      %1925 = vmatpush1.msra.mxu0 %v1846
      %1926 = vmatprep.subr.mxu0 0.0
      %1927 = vmatpush1.msra.mxu0 %v1845
      %1928 = vmatprep.subr.mxu0 0.0
      %1929 = vmatpush1.msra.mxu0 %v1844
      %1930 = vmatprep.subr.mxu0 0.0
      %1931 = vmatpush1.msra.mxu0 %v1843
      %1932 = vmatprep.subr.mxu0 0.0
      %1933 = vmatpush1.msra.mxu0 %v1842
      %1934 = vmatprep.subr.mxu0 0.0
      %1935 = vmatpush1.msra.mxu0 %v1841
      %1936 = vmatprep.subr.mxu0 0.0
      %1937 = vmatpush1.msra.mxu0 %v1840
      %1938 = vmatprep.subr.mxu0 0.0
      %1939 = vmatpush1.msra.mxu0 %v1839
      %1940 = vmatprep.subr.mxu0 0.0
      %1941 = vmatpush1.msra.mxu0 %v1838
      %1942 = vmatprep.subr.mxu0 0.0
      %1943 = vmatpush1.msra.mxu0 %v1837
      %1944 = vmatprep.subr.mxu0 0.0
      %1945 = vmatpush1.msra.mxu0 %v1836
      %1946 = vmatprep.subr.mxu0 0.0
      %1947 = vmatpush1.msra.mxu0 %v1835
      %1948 = vmatprep.subr.mxu0 0.0
      %1949 = vmatpush1.msra.mxu0 %v1834
      %1950 = vmatprep.subr.mxu0 0.0
      %1951 = vmatpush1.msra.mxu0 %v1833
      %1952 = vmatprep.subr.mxu0 0.0
      %1953 = vmatpush1.msra.mxu0 %v1832
      %1954 = vmatprep.subr.mxu0 0.0
      %1955 = vmatpush1.msra.mxu0 %v1831
      %1956 = vmatprep.subr.mxu0 0.0
      %1957 = vmatpush2.msra.mxu0 0.0
      %1958 = vmatprep.subr.mxu0 0.0
      %1959 = vmatpush2.msra.mxu0 0.0
      %1960 = vmatprep.subr.mxu0 0.0
      %1961 = vmatpush2.msra.mxu0 0.0
      %1962 = vmatprep.subr.mxu0 0.0
      %1963 = vmatpush2.msra.mxu0 0.0
      %1964 = vmatprep.subr.mxu0 0.0
      %1965 = vmatpush2.msra.mxu0 0.0
      %1966 = vmatprep.subr.mxu0 0.0
      %1967 = vmatpush2.msra.mxu0 0.0
      %1968 = vmatprep.subr.mxu0 0.0
      %1969 = vmatpush2.msra.mxu0 0.0
      %1970 = vmatprep.subr.mxu0 0.0
      %1971 = vmatpush2.msra.mxu0 0.0
      %1972 = vmatprep.subr.mxu0 0.0
      %1973 = vmatpush2.msra.mxu0 0.0
      %1974 = vmatprep.subr.mxu0 0.0
      %1975 = vmatpush2.msra.mxu0 0.0
      %1976 = vmatprep.subr.mxu0 0.0
      %1977 = vmatpush2.msra.mxu0 0.0
      %1978 = vmatprep.subr.mxu0 0.0
      %1979 = vmatpush2.msra.mxu0 0.0
      %1980 = vmatprep.subr.mxu0 0.0
      %1981 = vmatpush2.msra.mxu0 0.0
      %1982 = vmatprep.subr.mxu0 0.0
      %1983 = vmatpush2.msra.mxu0 0.0
      %1984 = vmatprep.subr.mxu0 0.0
      %1985 = vmatpush2.msra.mxu0 %v1848
      %1986 = vmatprep.subr.mxu0 0.0
      %1987 = vmatpush2.msra.mxu0 %v1847
      %1988 = vmatprep.mubr.f32.mxu0 %v625
      %1989 = vmatmul.mubr.f32.gmra.mxu0 %v567
      %v1990 = vpop.f32.mrf.mxu0
      %v1991 = vadd.f32 %v1916, %v1990
      %v1992 = vpop.f32.mrf.mxu0
      %1993 = vmatprep.mubr.f32.mxu0 %v628
      %1994 = vmatmul.mubr.f32.gmra.mxu0 %v571
      %v1995 = vpop.f32.mrf.mxu0
      %v1996 = vadd.f32 %v1921, %v1995
      %v1997 = vpop.f32.mrf.mxu0
      %1998 = vdwg.mxu0
      %s1999 = scalar_lea.vmem %s4, 128
      %v2000 = vld [vmem:[%s1999] sm:$0xff]
      %v2001 = vld [vmem:[%s1999 + $0x8] sm:$0xff]
      %v2002 = vld [vmem:[%s1999 + $0x10] sm:$0xff]
      %v2003 = vld [vmem:[%s1999 + $0x18] sm:$0xff]
      %v2005 = vsel %vm623, %v2000, 0
      %v2008 = vsel %vm623, %v2001, 0
      %v2011 = vsel %vm623, %v2002, 0
      %v2014 = vsel %vm623, %v2003, 0
      %2016 = vmatprep.subr.mxu0 0.0
      %2017 = vmatpush1.msra.mxu0 0.0
      %2018 = vmatprep.subr.mxu0 0.0
      %2019 = vmatpush1.msra.mxu0 0.0
      %2020 = vmatprep.subr.mxu0 0.0
      %2021 = vmatpush1.msra.mxu0 0.0
      %2022 = vmatprep.subr.mxu0 0.0
      %2023 = vmatpush1.msra.mxu0 0.0
      %2024 = vmatprep.subr.mxu0 0.0
      %2025 = vmatpush1.msra.mxu0 0.0
      %2026 = vmatprep.subr.mxu0 0.0
      %2027 = vmatpush1.msra.mxu0 0.0
      %2028 = vmatprep.subr.mxu0 0.0
      %2029 = vmatpush1.msra.mxu0 0.0
      %2030 = vmatprep.subr.mxu0 0.0
      %2031 = vmatpush1.msra.mxu0 0.0
      %2032 = vmatprep.subr.mxu0 0.0
      %2033 = vmatpush1.msra.mxu0 0.0
      %2034 = vmatprep.subr.mxu0 0.0
      %2035 = vmatpush1.msra.mxu0 0.0
      %2036 = vmatprep.subr.mxu0 0.0
      %2037 = vmatpush1.msra.mxu0 0.0
      %2038 = vmatprep.subr.mxu0 0.0
      %2039 = vmatpush1.msra.mxu0 0.0
      %2040 = vmatprep.subr.mxu0 0.0
      %2041 = vmatpush1.msra.mxu0 0.0
      %2042 = vmatprep.subr.mxu0 0.0
      %2043 = vmatpush1.msra.mxu0 0.0
      %2044 = vmatprep.subr.mxu0 0.0
      %2045 = vmatpush1.msra.mxu0 %v1996
      %2046 = vmatprep.subr.mxu0 0.0
      %2047 = vmatpush1.msra.mxu0 %v1991
      %2048 = vmatprep.subr.mxu0 0.0
      %2049 = vmatpush2.msra.mxu0 0.0
      %2050 = vmatprep.subr.mxu0 0.0
      %2051 = vmatpush2.msra.mxu0 0.0
      %2052 = vmatprep.subr.mxu0 0.0
      %2053 = vmatpush2.msra.mxu0 0.0
      %2054 = vmatprep.subr.mxu0 0.0
      %2055 = vmatpush2.msra.mxu0 0.0
      %2056 = vmatprep.subr.mxu0 0.0
      %2057 = vmatpush2.msra.mxu0 0.0
      %2058 = vmatprep.subr.mxu0 0.0
      %2059 = vmatpush2.msra.mxu0 0.0
      %2060 = vmatprep.subr.mxu0 0.0
      %2061 = vmatpush2.msra.mxu0 0.0
      %2062 = vmatprep.subr.mxu0 0.0
      %2063 = vmatpush2.msra.mxu0 0.0
      %2064 = vmatprep.subr.mxu0 0.0
      %2065 = vmatpush2.msra.mxu0 0.0
      %2066 = vmatprep.subr.mxu0 0.0
      %2067 = vmatpush2.msra.mxu0 0.0
      %2068 = vmatprep.subr.mxu0 0.0
      %2069 = vmatpush2.msra.mxu0 0.0
      %2070 = vmatprep.subr.mxu0 0.0
      %2071 = vmatpush2.msra.mxu0 0.0
      %2072 = vmatprep.subr.mxu0 0.0
      %2073 = vmatpush2.msra.mxu0 0.0
      %2074 = vmatprep.subr.mxu0 0.0
      %2075 = vmatpush2.msra.mxu0 0.0
      %2076 = vmatprep.subr.mxu0 0.0
      %2077 = vmatpush2.msra.mxu0 0.0
      %2078 = vmatprep.subr.mxu0 0.0
      %2079 = vmatpush2.msra.mxu0 0.0
      %2080 = vmatprep.mubr.f32.mxu0 0.0
      %2081 = vmatmul.mubr.f32.gmra.mxu0 %v2005
      %v2082 = vpop.f32.mrf.mxu0
      %v2083 = vadd.f32 0.0, %v2082
      %v2084 = vpop.f32.mrf.mxu0
      %2085 = vmatprep.mubr.f32.mxu0 0.0
      %2086 = vmatmul.mubr.f32.gmra.mxu0 %v2008
      %v2087 = vpop.f32.mrf.mxu0
      %v2088 = vadd.f32 0.0, %v2087
      %v2089 = vpop.f32.mrf.mxu0
      %2090 = vmatprep.mubr.f32.mxu0 0.0
      %2091 = vmatmul.mubr.f32.gmra.mxu0 %v2011
      %v2092 = vpop.f32.mrf.mxu0
      %v2093 = vadd.f32 0.0, %v2092
      %v2094 = vpop.f32.mrf.mxu0
      %2095 = vmatprep.mubr.f32.mxu0 0.0
      %2096 = vmatmul.mubr.f32.gmra.mxu0 %v2014
      %v2097 = vpop.f32.mrf.mxu0
      %v2098 = vadd.f32 0.0, %v2097
      %v2099 = vpop.f32.mrf.mxu0
      %2100 = vdwg.mxu0
      %v2101 = vadd.f32 %v1794, %v2083
      %v2102 = vadd.f32 %v1795, %v2088
      %v2103 = vadd.f32 %v1796, %v2093
      %v2104 = vadd.f32 %v1797, %v2098
      %s2105 = scalar_lea.vmem %s3, 2000
      %v2106 = vld [vmem:[%s2105] sm:$0xff]
      %v2107 = vld [vmem:[%s2105 + $0x8] sm:$0xff]
      %v2108 = vld [vmem:[%s2105 + $0x10] sm:$0xff]
      %v2109 = vld [vmem:[%s2105 + $0x18] sm:$0xff]
      %v2110 = vld [vmem:[%s2105 + $0x20] sm:$0xff]
      %v2111 = vld [vmem:[%s2105 + $0x28] sm:$0xff]
      %v2112 = vld [vmem:[%s2105 + $0x30] sm:$0xff]
      %v2113 = vld [vmem:[%s2105 + $0x38] sm:$0xff]
      %v2114 = vld [vmem:[%s2105 + $0x40] sm:$0xff]
      %v2115 = vld [vmem:[%s2105 + $0x48] sm:$0xff]
      %v2116 = vld [vmem:[%s2105 + $0x50] sm:$0xff]
      %v2117 = vld [vmem:[%s2105 + $0x58] sm:$0xff]
      %v2118 = vld [vmem:[%s2105 + $0x60] sm:$0xff]
      %v2119 = vld [vmem:[%s2105 + $0x68] sm:$0xff]
      %v2120 = vld [vmem:[%s2105 + $0x70] sm:$0xff]
      %v2121 = vld [vmem:[%s2105 + $0x78] sm:$0xff]
      %v2122 = vld [vmem:[%s2105 + $0x80] sm:$0xff]
      %v2123 = vld [vmem:[%s2105 + $0x88] sm:$0xff]
      %v2124 = vld [vmem:[%s2105 + $0x90] sm:$0xff]
      %v2125 = vld [vmem:[%s2105 + $0x98] sm:$0xff]
      %v2126 = vld [vmem:[%s2105 + $0xa0] sm:$0xff]
      %v2127 = vld [vmem:[%s2105 + $0xa8] sm:$0xff]
      %v2128 = vld [vmem:[%s2105 + $0xb0] sm:$0xff]
      %v2129 = vld [vmem:[%s2105 + $0xb8] sm:$0xff]
      %v2130 = vld [vmem:[%s2105 + $0xc0] sm:$0xff]
      %v2131 = vld [vmem:[%s2105 + $0xc8] sm:$0xff]
      %v2132 = vld [vmem:[%s2105 + $0xd0] sm:$0xff]
      %v2133 = vld [vmem:[%s2105 + $0xd8] sm:$0xff]
      %v2134 = vld [vmem:[%s2105 + $0xe0] sm:$0xff]
      %v2135 = vld [vmem:[%s2105 + $0xe8] sm:$0xff]
      %v2136 = vld [vmem:[%s2105 + $0xf0] sm:$0xff]
      %v2137 = vld [vmem:[%s2105 + $0xf8] sm:$0xff]
      %v2138 = vld [vmem:[%s2105 + $0x100] sm:$0xff]
      %v2139 = vld [vmem:[%s2105 + $0x108] sm:$0xff]
      %v2140 = vld [vmem:[%s2105 + $0x110] sm:$0xff]
      %v2141 = vld [vmem:[%s2105 + $0x118] sm:$0xff]
      %v2142 = vld [vmem:[%s2105 + $0x120] sm:$0xff]
      %v2143 = vld [vmem:[%s2105 + $0x128] sm:$0xff]
      %v2144 = vld [vmem:[%s2105 + $0x130] sm:$0xff]
      %v2145 = vld [vmem:[%s2105 + $0x138] sm:$0xff]
      %v2146 = vld [vmem:[%s2105 + $0x140] sm:$0xff]
      %v2147 = vld [vmem:[%s2105 + $0x148] sm:$0xff]
      %v2148 = vld [vmem:[%s2105 + $0x150] sm:$0xff]
      %v2149 = vld [vmem:[%s2105 + $0x158] sm:$0xff]
      %v2150 = vld [vmem:[%s2105 + $0x160] sm:$0xff]
      %v2151 = vld [vmem:[%s2105 + $0x168] sm:$0xff]
      %v2152 = vld [vmem:[%s2105 + $0x170] sm:$0xff]
      %v2153 = vld [vmem:[%s2105 + $0x178] sm:$0xff]
      %v2154 = vld [vmem:[%s2105 + $0x180] sm:$0xff]
      %v2155 = vld [vmem:[%s2105 + $0x188] sm:$0xff]
      %2156 = vmatprep.subr.mxu0 0.0
      %2157 = vmatpush1.msra.mxu0 %v2121
      %2158 = vmatprep.subr.mxu0 0.0
      %2159 = vmatpush1.msra.mxu0 %v2120
      %2160 = vmatprep.subr.mxu0 0.0
      %2161 = vmatpush1.msra.mxu0 %v2119
      %2162 = vmatprep.subr.mxu0 0.0
      %2163 = vmatpush1.msra.mxu0 %v2118
      %2164 = vmatprep.subr.mxu0 0.0
      %2165 = vmatpush1.msra.mxu0 %v2117
      %2166 = vmatprep.subr.mxu0 0.0
      %2167 = vmatpush1.msra.mxu0 %v2116
      %2168 = vmatprep.subr.mxu0 0.0
      %2169 = vmatpush1.msra.mxu0 %v2115
      %2170 = vmatprep.subr.mxu0 0.0
      %2171 = vmatpush1.msra.mxu0 %v2114
      %2172 = vmatprep.subr.mxu0 0.0
      %2173 = vmatpush1.msra.mxu0 %v2113
      %2174 = vmatprep.subr.mxu0 0.0
      %2175 = vmatpush1.msra.mxu0 %v2112
      %2176 = vmatprep.subr.mxu0 0.0
      %2177 = vmatpush1.msra.mxu0 %v2111
      %2178 = vmatprep.subr.mxu0 0.0
      %2179 = vmatpush1.msra.mxu0 %v2110
      %2180 = vmatprep.subr.mxu0 0.0
      %2181 = vmatpush1.msra.mxu0 %v2109
      %2182 = vmatprep.subr.mxu0 0.0
      %2183 = vmatpush1.msra.mxu0 %v2108
      %2184 = vmatprep.subr.mxu0 0.0
      %2185 = vmatpush1.msra.mxu0 %v2107
      %2186 = vmatprep.subr.mxu0 0.0
      %2187 = vmatpush1.msra.mxu0 %v2106
      %2188 = vmatprep.subr.mxu0 0.0
      %2189 = vmatpush2.msra.mxu0 %v2137
      %2190 = vmatprep.subr.mxu0 0.0
      %2191 = vmatpush2.msra.mxu0 %v2136
      %2192 = vmatprep.subr.mxu0 0.0
      %2193 = vmatpush2.msra.mxu0 %v2135
      %2194 = vmatprep.subr.mxu0 0.0
      %2195 = vmatpush2.msra.mxu0 %v2134
      %2196 = vmatprep.subr.mxu0 0.0
      %2197 = vmatpush2.msra.mxu0 %v2133
      %2198 = vmatprep.subr.mxu0 0.0
      %2199 = vmatpush2.msra.mxu0 %v2132
      %2200 = vmatprep.subr.mxu0 0.0
      %2201 = vmatpush2.msra.mxu0 %v2131
      %2202 = vmatprep.subr.mxu0 0.0
      %2203 = vmatpush2.msra.mxu0 %v2130
      %2204 = vmatprep.subr.mxu0 0.0
      %2205 = vmatpush2.msra.mxu0 %v2129
      %2206 = vmatprep.subr.mxu0 0.0
      %2207 = vmatpush2.msra.mxu0 %v2128
      %2208 = vmatprep.subr.mxu0 0.0
      %2209 = vmatpush2.msra.mxu0 %v2127
      %2210 = vmatprep.subr.mxu0 0.0
      %2211 = vmatpush2.msra.mxu0 %v2126
      %2212 = vmatprep.subr.mxu0 0.0
      %2213 = vmatpush2.msra.mxu0 %v2125
      %2214 = vmatprep.subr.mxu0 0.0
      %2215 = vmatpush2.msra.mxu0 %v2124
      %2216 = vmatprep.subr.mxu0 0.0
      %2217 = vmatpush2.msra.mxu0 %v2123
      %2218 = vmatprep.subr.mxu0 0.0
      %2219 = vmatpush2.msra.mxu0 %v2122
      %2220 = vmatprep.mubr.f32.mxu0 %v566
      %2221 = vmatmul.mubr.f32.gmra.mxu0 %v565
      %v2222 = vpop.f32.mrf.mxu0
      %v2223 = vadd.f32 0.0, %v2222
      %v2224 = vpop.f32.mrf.mxu0
      %2225 = vmatprep.mubr.f32.mxu0 %v570
      %2226 = vmatmul.mubr.f32.gmra.mxu0 %v569
      %v2227 = vpop.f32.mrf.mxu0
      %v2228 = vadd.f32 0.0, %v2227
      %v2229 = vpop.f32.mrf.mxu0
      %2230 = vdwg.mxu0
      %2231 = vmatprep.subr.mxu0 0.0
      %2232 = vmatpush1.msra.mxu0 %v2153
      %2233 = vmatprep.subr.mxu0 0.0
      %2234 = vmatpush1.msra.mxu0 %v2152
      %2235 = vmatprep.subr.mxu0 0.0
      %2236 = vmatpush1.msra.mxu0 %v2151
      %2237 = vmatprep.subr.mxu0 0.0
      %2238 = vmatpush1.msra.mxu0 %v2150
      %2239 = vmatprep.subr.mxu0 0.0
      %2240 = vmatpush1.msra.mxu0 %v2149
      %2241 = vmatprep.subr.mxu0 0.0
      %2242 = vmatpush1.msra.mxu0 %v2148
      %2243 = vmatprep.subr.mxu0 0.0
      %2244 = vmatpush1.msra.mxu0 %v2147
      %2245 = vmatprep.subr.mxu0 0.0
      %2246 = vmatpush1.msra.mxu0 %v2146
      %2247 = vmatprep.subr.mxu0 0.0
      %2248 = vmatpush1.msra.mxu0 %v2145
      %2249 = vmatprep.subr.mxu0 0.0
      %2250 = vmatpush1.msra.mxu0 %v2144
      %2251 = vmatprep.subr.mxu0 0.0
      %2252 = vmatpush1.msra.mxu0 %v2143
      %2253 = vmatprep.subr.mxu0 0.0
      %2254 = vmatpush1.msra.mxu0 %v2142
      %2255 = vmatprep.subr.mxu0 0.0
      %2256 = vmatpush1.msra.mxu0 %v2141
      %2257 = vmatprep.subr.mxu0 0.0
      %2258 = vmatpush1.msra.mxu0 %v2140
      %2259 = vmatprep.subr.mxu0 0.0
      %2260 = vmatpush1.msra.mxu0 %v2139
      %2261 = vmatprep.subr.mxu0 0.0
      %2262 = vmatpush1.msra.mxu0 %v2138
      %2263 = vmatprep.subr.mxu0 0.0
      %2264 = vmatpush2.msra.mxu0 0.0
      %2265 = vmatprep.subr.mxu0 0.0
      %2266 = vmatpush2.msra.mxu0 0.0
      %2267 = vmatprep.subr.mxu0 0.0
      %2268 = vmatpush2.msra.mxu0 0.0
      %2269 = vmatprep.subr.mxu0 0.0
      %2270 = vmatpush2.msra.mxu0 0.0
      %2271 = vmatprep.subr.mxu0 0.0
      %2272 = vmatpush2.msra.mxu0 0.0
      %2273 = vmatprep.subr.mxu0 0.0
      %2274 = vmatpush2.msra.mxu0 0.0
      %2275 = vmatprep.subr.mxu0 0.0
      %2276 = vmatpush2.msra.mxu0 0.0
      %2277 = vmatprep.subr.mxu0 0.0
      %2278 = vmatpush2.msra.mxu0 0.0
      %2279 = vmatprep.subr.mxu0 0.0
      %2280 = vmatpush2.msra.mxu0 0.0
      %2281 = vmatprep.subr.mxu0 0.0
      %2282 = vmatpush2.msra.mxu0 0.0
      %2283 = vmatprep.subr.mxu0 0.0
      %2284 = vmatpush2.msra.mxu0 0.0
      %2285 = vmatprep.subr.mxu0 0.0
      %2286 = vmatpush2.msra.mxu0 0.0
      %2287 = vmatprep.subr.mxu0 0.0
      %2288 = vmatpush2.msra.mxu0 0.0
      %2289 = vmatprep.subr.mxu0 0.0
      %2290 = vmatpush2.msra.mxu0 0.0
      %2291 = vmatprep.subr.mxu0 0.0
      %2292 = vmatpush2.msra.mxu0 %v2155
      %2293 = vmatprep.subr.mxu0 0.0
      %2294 = vmatpush2.msra.mxu0 %v2154
      %2295 = vmatprep.mubr.f32.mxu0 %v625
      %2296 = vmatmul.mubr.f32.gmra.mxu0 %v567
      %v2297 = vpop.f32.mrf.mxu0
      %v2298 = vadd.f32 %v2223, %v2297
      %v2299 = vpop.f32.mrf.mxu0
      %2300 = vmatprep.mubr.f32.mxu0 %v628
      %2301 = vmatmul.mubr.f32.gmra.mxu0 %v571
      %v2302 = vpop.f32.mrf.mxu0
      %v2303 = vadd.f32 %v2228, %v2302
      %v2304 = vpop.f32.mrf.mxu0
      %2305 = vdwg.mxu0
      %s2306 = scalar_lea.vmem %s4, 160
      %v2307 = vld [vmem:[%s2306] sm:$0xff]
      %v2308 = vld [vmem:[%s2306 + $0x8] sm:$0xff]
      %v2309 = vld [vmem:[%s2306 + $0x10] sm:$0xff]
      %v2310 = vld [vmem:[%s2306 + $0x18] sm:$0xff]
      %v2312 = vsel %vm623, %v2307, 0
      %v2315 = vsel %vm623, %v2308, 0
      %v2318 = vsel %vm623, %v2309, 0
      %v2321 = vsel %vm623, %v2310, 0
      %2323 = vmatprep.subr.mxu0 0.0
      %2324 = vmatpush1.msra.mxu0 0.0
      %2325 = vmatprep.subr.mxu0 0.0
      %2326 = vmatpush1.msra.mxu0 0.0
      %2327 = vmatprep.subr.mxu0 0.0
      %2328 = vmatpush1.msra.mxu0 0.0
      %2329 = vmatprep.subr.mxu0 0.0
      %2330 = vmatpush1.msra.mxu0 0.0
      %2331 = vmatprep.subr.mxu0 0.0
      %2332 = vmatpush1.msra.mxu0 0.0
      %2333 = vmatprep.subr.mxu0 0.0
      %2334 = vmatpush1.msra.mxu0 0.0
      %2335 = vmatprep.subr.mxu0 0.0
      %2336 = vmatpush1.msra.mxu0 0.0
      %2337 = vmatprep.subr.mxu0 0.0
      %2338 = vmatpush1.msra.mxu0 0.0
      %2339 = vmatprep.subr.mxu0 0.0
      %2340 = vmatpush1.msra.mxu0 0.0
      %2341 = vmatprep.subr.mxu0 0.0
      %2342 = vmatpush1.msra.mxu0 0.0
      %2343 = vmatprep.subr.mxu0 0.0
      %2344 = vmatpush1.msra.mxu0 0.0
      %2345 = vmatprep.subr.mxu0 0.0
      %2346 = vmatpush1.msra.mxu0 0.0
      %2347 = vmatprep.subr.mxu0 0.0
      %2348 = vmatpush1.msra.mxu0 0.0
      %2349 = vmatprep.subr.mxu0 0.0
      %2350 = vmatpush1.msra.mxu0 0.0
      %2351 = vmatprep.subr.mxu0 0.0
      %2352 = vmatpush1.msra.mxu0 %v2303
      %2353 = vmatprep.subr.mxu0 0.0
      %2354 = vmatpush1.msra.mxu0 %v2298
      %2355 = vmatprep.subr.mxu0 0.0
      %2356 = vmatpush2.msra.mxu0 0.0
      %2357 = vmatprep.subr.mxu0 0.0
      %2358 = vmatpush2.msra.mxu0 0.0
      %2359 = vmatprep.subr.mxu0 0.0
      %2360 = vmatpush2.msra.mxu0 0.0
      %2361 = vmatprep.subr.mxu0 0.0
      %2362 = vmatpush2.msra.mxu0 0.0
      %2363 = vmatprep.subr.mxu0 0.0
      %2364 = vmatpush2.msra.mxu0 0.0
      %2365 = vmatprep.subr.mxu0 0.0
      %2366 = vmatpush2.msra.mxu0 0.0
      %2367 = vmatprep.subr.mxu0 0.0
      %2368 = vmatpush2.msra.mxu0 0.0
      %2369 = vmatprep.subr.mxu0 0.0
      %2370 = vmatpush2.msra.mxu0 0.0
      %2371 = vmatprep.subr.mxu0 0.0
      %2372 = vmatpush2.msra.mxu0 0.0
      %2373 = vmatprep.subr.mxu0 0.0
      %2374 = vmatpush2.msra.mxu0 0.0
      %2375 = vmatprep.subr.mxu0 0.0
      %2376 = vmatpush2.msra.mxu0 0.0
      %2377 = vmatprep.subr.mxu0 0.0
      %2378 = vmatpush2.msra.mxu0 0.0
      %2379 = vmatprep.subr.mxu0 0.0
      %2380 = vmatpush2.msra.mxu0 0.0
      %2381 = vmatprep.subr.mxu0 0.0
      %2382 = vmatpush2.msra.mxu0 0.0
      %2383 = vmatprep.subr.mxu0 0.0
      %2384 = vmatpush2.msra.mxu0 0.0
      %2385 = vmatprep.subr.mxu0 0.0
      %2386 = vmatpush2.msra.mxu0 0.0
      %2387 = vmatprep.mubr.f32.mxu0 0.0
      %2388 = vmatmul.mubr.f32.gmra.mxu0 %v2312
      %v2389 = vpop.f32.mrf.mxu0
      %v2390 = vadd.f32 0.0, %v2389
      %v2391 = vpop.f32.mrf.mxu0
      %2392 = vmatprep.mubr.f32.mxu0 0.0
      %2393 = vmatmul.mubr.f32.gmra.mxu0 %v2315
      %v2394 = vpop.f32.mrf.mxu0
      %v2395 = vadd.f32 0.0, %v2394
      %v2396 = vpop.f32.mrf.mxu0
      %2397 = vmatprep.mubr.f32.mxu0 0.0
      %2398 = vmatmul.mubr.f32.gmra.mxu0 %v2318
      %v2399 = vpop.f32.mrf.mxu0
      %v2400 = vadd.f32 0.0, %v2399
      %v2401 = vpop.f32.mrf.mxu0
      %2402 = vmatprep.mubr.f32.mxu0 0.0
      %2403 = vmatmul.mubr.f32.gmra.mxu0 %v2321
      %v2404 = vpop.f32.mrf.mxu0
      %v2405 = vadd.f32 0.0, %v2404
      %v2406 = vpop.f32.mrf.mxu0
      %2407 = vdwg.mxu0
      %v2408 = vadd.f32 %v2101, %v2390
      %v2409 = vadd.f32 %v2102, %v2395
      %v2410 = vadd.f32 %v2103, %v2400
      %v2411 = vadd.f32 %v2104, %v2405
      %s2412 = scalar_lea.vmem %s3, 2400
      %v2413 = vld [vmem:[%s2412] sm:$0xff]
      %v2414 = vld [vmem:[%s2412 + $0x8] sm:$0xff]
      %v2415 = vld [vmem:[%s2412 + $0x10] sm:$0xff]
      %v2416 = vld [vmem:[%s2412 + $0x18] sm:$0xff]
      %v2417 = vld [vmem:[%s2412 + $0x20] sm:$0xff]
      %v2418 = vld [vmem:[%s2412 + $0x28] sm:$0xff]
      %v2419 = vld [vmem:[%s2412 + $0x30] sm:$0xff]
      %v2420 = vld [vmem:[%s2412 + $0x38] sm:$0xff]
      %v2421 = vld [vmem:[%s2412 + $0x40] sm:$0xff]
      %v2422 = vld [vmem:[%s2412 + $0x48] sm:$0xff]
      %v2423 = vld [vmem:[%s2412 + $0x50] sm:$0xff]
      %v2424 = vld [vmem:[%s2412 + $0x58] sm:$0xff]
      %v2425 = vld [vmem:[%s2412 + $0x60] sm:$0xff]
      %v2426 = vld [vmem:[%s2412 + $0x68] sm:$0xff]
      %v2427 = vld [vmem:[%s2412 + $0x70] sm:$0xff]
      %v2428 = vld [vmem:[%s2412 + $0x78] sm:$0xff]
      %v2429 = vld [vmem:[%s2412 + $0x80] sm:$0xff]
      %v2430 = vld [vmem:[%s2412 + $0x88] sm:$0xff]
      %v2431 = vld [vmem:[%s2412 + $0x90] sm:$0xff]
      %v2432 = vld [vmem:[%s2412 + $0x98] sm:$0xff]
      %v2433 = vld [vmem:[%s2412 + $0xa0] sm:$0xff]
      %v2434 = vld [vmem:[%s2412 + $0xa8] sm:$0xff]
      %v2435 = vld [vmem:[%s2412 + $0xb0] sm:$0xff]
      %v2436 = vld [vmem:[%s2412 + $0xb8] sm:$0xff]
      %v2437 = vld [vmem:[%s2412 + $0xc0] sm:$0xff]
      %v2438 = vld [vmem:[%s2412 + $0xc8] sm:$0xff]
      %v2439 = vld [vmem:[%s2412 + $0xd0] sm:$0xff]
      %v2440 = vld [vmem:[%s2412 + $0xd8] sm:$0xff]
      %v2441 = vld [vmem:[%s2412 + $0xe0] sm:$0xff]
      %v2442 = vld [vmem:[%s2412 + $0xe8] sm:$0xff]
      %v2443 = vld [vmem:[%s2412 + $0xf0] sm:$0xff]
      %v2444 = vld [vmem:[%s2412 + $0xf8] sm:$0xff]
      %v2445 = vld [vmem:[%s2412 + $0x100] sm:$0xff]
      %v2446 = vld [vmem:[%s2412 + $0x108] sm:$0xff]
      %v2447 = vld [vmem:[%s2412 + $0x110] sm:$0xff]
      %v2448 = vld [vmem:[%s2412 + $0x118] sm:$0xff]
      %v2449 = vld [vmem:[%s2412 + $0x120] sm:$0xff]
      %v2450 = vld [vmem:[%s2412 + $0x128] sm:$0xff]
      %v2451 = vld [vmem:[%s2412 + $0x130] sm:$0xff]
      %v2452 = vld [vmem:[%s2412 + $0x138] sm:$0xff]
      %v2453 = vld [vmem:[%s2412 + $0x140] sm:$0xff]
      %v2454 = vld [vmem:[%s2412 + $0x148] sm:$0xff]
      %v2455 = vld [vmem:[%s2412 + $0x150] sm:$0xff]
      %v2456 = vld [vmem:[%s2412 + $0x158] sm:$0xff]
      %v2457 = vld [vmem:[%s2412 + $0x160] sm:$0xff]
      %v2458 = vld [vmem:[%s2412 + $0x168] sm:$0xff]
      %v2459 = vld [vmem:[%s2412 + $0x170] sm:$0xff]
      %v2460 = vld [vmem:[%s2412 + $0x178] sm:$0xff]
      %v2461 = vld [vmem:[%s2412 + $0x180] sm:$0xff]
      %v2462 = vld [vmem:[%s2412 + $0x188] sm:$0xff]
      %2463 = vmatprep.subr.mxu0 0.0
      %2464 = vmatpush1.msra.mxu0 %v2428
      %2465 = vmatprep.subr.mxu0 0.0
      %2466 = vmatpush1.msra.mxu0 %v2427
      %2467 = vmatprep.subr.mxu0 0.0
      %2468 = vmatpush1.msra.mxu0 %v2426
      %2469 = vmatprep.subr.mxu0 0.0
      %2470 = vmatpush1.msra.mxu0 %v2425
      %2471 = vmatprep.subr.mxu0 0.0
      %2472 = vmatpush1.msra.mxu0 %v2424
      %2473 = vmatprep.subr.mxu0 0.0
      %2474 = vmatpush1.msra.mxu0 %v2423
      %2475 = vmatprep.subr.mxu0 0.0
      %2476 = vmatpush1.msra.mxu0 %v2422
      %2477 = vmatprep.subr.mxu0 0.0
      %2478 = vmatpush1.msra.mxu0 %v2421
      %2479 = vmatprep.subr.mxu0 0.0
      %2480 = vmatpush1.msra.mxu0 %v2420
      %2481 = vmatprep.subr.mxu0 0.0
      %2482 = vmatpush1.msra.mxu0 %v2419
      %2483 = vmatprep.subr.mxu0 0.0
      %2484 = vmatpush1.msra.mxu0 %v2418
      %2485 = vmatprep.subr.mxu0 0.0
      %2486 = vmatpush1.msra.mxu0 %v2417
      %2487 = vmatprep.subr.mxu0 0.0
      %2488 = vmatpush1.msra.mxu0 %v2416
      %2489 = vmatprep.subr.mxu0 0.0
      %2490 = vmatpush1.msra.mxu0 %v2415
      %2491 = vmatprep.subr.mxu0 0.0
      %2492 = vmatpush1.msra.mxu0 %v2414
      %2493 = vmatprep.subr.mxu0 0.0
      %2494 = vmatpush1.msra.mxu0 %v2413
      %2495 = vmatprep.subr.mxu0 0.0
      %2496 = vmatpush2.msra.mxu0 %v2444
      %2497 = vmatprep.subr.mxu0 0.0
      %2498 = vmatpush2.msra.mxu0 %v2443
      %2499 = vmatprep.subr.mxu0 0.0
      %2500 = vmatpush2.msra.mxu0 %v2442
      %2501 = vmatprep.subr.mxu0 0.0
      %2502 = vmatpush2.msra.mxu0 %v2441
      %2503 = vmatprep.subr.mxu0 0.0
      %2504 = vmatpush2.msra.mxu0 %v2440
      %2505 = vmatprep.subr.mxu0 0.0
      %2506 = vmatpush2.msra.mxu0 %v2439
      %2507 = vmatprep.subr.mxu0 0.0
      %2508 = vmatpush2.msra.mxu0 %v2438
      %2509 = vmatprep.subr.mxu0 0.0
      %2510 = vmatpush2.msra.mxu0 %v2437
      %2511 = vmatprep.subr.mxu0 0.0
      %2512 = vmatpush2.msra.mxu0 %v2436
      %2513 = vmatprep.subr.mxu0 0.0
      %2514 = vmatpush2.msra.mxu0 %v2435
      %2515 = vmatprep.subr.mxu0 0.0
      %2516 = vmatpush2.msra.mxu0 %v2434
      %2517 = vmatprep.subr.mxu0 0.0
      %2518 = vmatpush2.msra.mxu0 %v2433
      %2519 = vmatprep.subr.mxu0 0.0
      %2520 = vmatpush2.msra.mxu0 %v2432
      %2521 = vmatprep.subr.mxu0 0.0
      %2522 = vmatpush2.msra.mxu0 %v2431
      %2523 = vmatprep.subr.mxu0 0.0
      %2524 = vmatpush2.msra.mxu0 %v2430
      %2525 = vmatprep.subr.mxu0 0.0
      %2526 = vmatpush2.msra.mxu0 %v2429
      %2527 = vmatprep.mubr.f32.mxu0 %v566
      %2528 = vmatmul.mubr.f32.gmra.mxu0 %v565
      %v2529 = vpop.f32.mrf.mxu0
      %v2530 = vadd.f32 0.0, %v2529
      %v2531 = vpop.f32.mrf.mxu0
      %2532 = vmatprep.mubr.f32.mxu0 %v570
      %2533 = vmatmul.mubr.f32.gmra.mxu0 %v569
      %v2534 = vpop.f32.mrf.mxu0
      %v2535 = vadd.f32 0.0, %v2534
      %v2536 = vpop.f32.mrf.mxu0
      %2537 = vdwg.mxu0
      %2538 = vmatprep.subr.mxu0 0.0
      %2539 = vmatpush1.msra.mxu0 %v2460
      %2540 = vmatprep.subr.mxu0 0.0
      %2541 = vmatpush1.msra.mxu0 %v2459
      %2542 = vmatprep.subr.mxu0 0.0
      %2543 = vmatpush1.msra.mxu0 %v2458
      %2544 = vmatprep.subr.mxu0 0.0
      %2545 = vmatpush1.msra.mxu0 %v2457
      %2546 = vmatprep.subr.mxu0 0.0
      %2547 = vmatpush1.msra.mxu0 %v2456
      %2548 = vmatprep.subr.mxu0 0.0
      %2549 = vmatpush1.msra.mxu0 %v2455
      %2550 = vmatprep.subr.mxu0 0.0
      %2551 = vmatpush1.msra.mxu0 %v2454
      %2552 = vmatprep.subr.mxu0 0.0
      %2553 = vmatpush1.msra.mxu0 %v2453
      %2554 = vmatprep.subr.mxu0 0.0
      %2555 = vmatpush1.msra.mxu0 %v2452
      %2556 = vmatprep.subr.mxu0 0.0
      %2557 = vmatpush1.msra.mxu0 %v2451
      %2558 = vmatprep.subr.mxu0 0.0
      %2559 = vmatpush1.msra.mxu0 %v2450
      %2560 = vmatprep.subr.mxu0 0.0
      %2561 = vmatpush1.msra.mxu0 %v2449
      %2562 = vmatprep.subr.mxu0 0.0
      %2563 = vmatpush1.msra.mxu0 %v2448
      %2564 = vmatprep.subr.mxu0 0.0
      %2565 = vmatpush1.msra.mxu0 %v2447
      %2566 = vmatprep.subr.mxu0 0.0
      %2567 = vmatpush1.msra.mxu0 %v2446
      %2568 = vmatprep.subr.mxu0 0.0
      %2569 = vmatpush1.msra.mxu0 %v2445
      %2570 = vmatprep.subr.mxu0 0.0
      %2571 = vmatpush2.msra.mxu0 0.0
      %2572 = vmatprep.subr.mxu0 0.0
      %2573 = vmatpush2.msra.mxu0 0.0
      %2574 = vmatprep.subr.mxu0 0.0
      %2575 = vmatpush2.msra.mxu0 0.0
      %2576 = vmatprep.subr.mxu0 0.0
      %2577 = vmatpush2.msra.mxu0 0.0
      %2578 = vmatprep.subr.mxu0 0.0
      %2579 = vmatpush2.msra.mxu0 0.0
      %2580 = vmatprep.subr.mxu0 0.0
      %2581 = vmatpush2.msra.mxu0 0.0
      %2582 = vmatprep.subr.mxu0 0.0
      %2583 = vmatpush2.msra.mxu0 0.0
      %2584 = vmatprep.subr.mxu0 0.0
      %2585 = vmatpush2.msra.mxu0 0.0
      %2586 = vmatprep.subr.mxu0 0.0
      %2587 = vmatpush2.msra.mxu0 0.0
      %2588 = vmatprep.subr.mxu0 0.0
      %2589 = vmatpush2.msra.mxu0 0.0
      %2590 = vmatprep.subr.mxu0 0.0
      %2591 = vmatpush2.msra.mxu0 0.0
      %2592 = vmatprep.subr.mxu0 0.0
      %2593 = vmatpush2.msra.mxu0 0.0
      %2594 = vmatprep.subr.mxu0 0.0
      %2595 = vmatpush2.msra.mxu0 0.0
      %2596 = vmatprep.subr.mxu0 0.0
      %2597 = vmatpush2.msra.mxu0 0.0
      %2598 = vmatprep.subr.mxu0 0.0
      %2599 = vmatpush2.msra.mxu0 %v2462
      %2600 = vmatprep.subr.mxu0 0.0
      %2601 = vmatpush2.msra.mxu0 %v2461
      %2602 = vmatprep.mubr.f32.mxu0 %v625
      %2603 = vmatmul.mubr.f32.gmra.mxu0 %v567
      %v2604 = vpop.f32.mrf.mxu0
      %v2605 = vadd.f32 %v2530, %v2604
      %v2606 = vpop.f32.mrf.mxu0
      %2607 = vmatprep.mubr.f32.mxu0 %v628
      %2608 = vmatmul.mubr.f32.gmra.mxu0 %v571
      %v2609 = vpop.f32.mrf.mxu0
      %v2610 = vadd.f32 %v2535, %v2609
      %v2611 = vpop.f32.mrf.mxu0
      %2612 = vdwg.mxu0
      %s2613 = scalar_lea.vmem %s4, 192
      %v2614 = vld [vmem:[%s2613] sm:$0xff]
      %v2615 = vld [vmem:[%s2613 + $0x8] sm:$0xff]
      %v2616 = vld [vmem:[%s2613 + $0x10] sm:$0xff]
      %v2617 = vld [vmem:[%s2613 + $0x18] sm:$0xff]
      %v2619 = vsel %vm623, %v2614, 0
      %v2622 = vsel %vm623, %v2615, 0
      %v2625 = vsel %vm623, %v2616, 0
      %v2628 = vsel %vm623, %v2617, 0
      %2630 = vmatprep.subr.mxu0 0.0
      %2631 = vmatpush1.msra.mxu0 0.0
      %2632 = vmatprep.subr.mxu0 0.0
      %2633 = vmatpush1.msra.mxu0 0.0
      %2634 = vmatprep.subr.mxu0 0.0
      %2635 = vmatpush1.msra.mxu0 0.0
      %2636 = vmatprep.subr.mxu0 0.0
      %2637 = vmatpush1.msra.mxu0 0.0
      %2638 = vmatprep.subr.mxu0 0.0
      %2639 = vmatpush1.msra.mxu0 0.0
      %2640 = vmatprep.subr.mxu0 0.0
      %2641 = vmatpush1.msra.mxu0 0.0
      %2642 = vmatprep.subr.mxu0 0.0
      %2643 = vmatpush1.msra.mxu0 0.0
      %2644 = vmatprep.subr.mxu0 0.0
      %2645 = vmatpush1.msra.mxu0 0.0
      %2646 = vmatprep.subr.mxu0 0.0
      %2647 = vmatpush1.msra.mxu0 0.0
      %2648 = vmatprep.subr.mxu0 0.0
      %2649 = vmatpush1.msra.mxu0 0.0
      %2650 = vmatprep.subr.mxu0 0.0
      %2651 = vmatpush1.msra.mxu0 0.0
      %2652 = vmatprep.subr.mxu0 0.0
      %2653 = vmatpush1.msra.mxu0 0.0
      %2654 = vmatprep.subr.mxu0 0.0
      %2655 = vmatpush1.msra.mxu0 0.0
      %2656 = vmatprep.subr.mxu0 0.0
      %2657 = vmatpush1.msra.mxu0 0.0
      %2658 = vmatprep.subr.mxu0 0.0
      %2659 = vmatpush1.msra.mxu0 %v2610
      %2660 = vmatprep.subr.mxu0 0.0
      %2661 = vmatpush1.msra.mxu0 %v2605
      %2662 = vmatprep.subr.mxu0 0.0
      %2663 = vmatpush2.msra.mxu0 0.0
      %2664 = vmatprep.subr.mxu0 0.0
      %2665 = vmatpush2.msra.mxu0 0.0
      %2666 = vmatprep.subr.mxu0 0.0
      %2667 = vmatpush2.msra.mxu0 0.0
      %2668 = vmatprep.subr.mxu0 0.0
      %2669 = vmatpush2.msra.mxu0 0.0
      %2670 = vmatprep.subr.mxu0 0.0
      %2671 = vmatpush2.msra.mxu0 0.0
      %2672 = vmatprep.subr.mxu0 0.0
      %2673 = vmatpush2.msra.mxu0 0.0
      %2674 = vmatprep.subr.mxu0 0.0
      %2675 = vmatpush2.msra.mxu0 0.0
      %2676 = vmatprep.subr.mxu0 0.0
      %2677 = vmatpush2.msra.mxu0 0.0
      %2678 = vmatprep.subr.mxu0 0.0
      %2679 = vmatpush2.msra.mxu0 0.0
      %2680 = vmatprep.subr.mxu0 0.0
      %2681 = vmatpush2.msra.mxu0 0.0
      %2682 = vmatprep.subr.mxu0 0.0
      %2683 = vmatpush2.msra.mxu0 0.0
      %2684 = vmatprep.subr.mxu0 0.0
      %2685 = vmatpush2.msra.mxu0 0.0
      %2686 = vmatprep.subr.mxu0 0.0
      %2687 = vmatpush2.msra.mxu0 0.0
      %2688 = vmatprep.subr.mxu0 0.0
      %2689 = vmatpush2.msra.mxu0 0.0
      %2690 = vmatprep.subr.mxu0 0.0
      %2691 = vmatpush2.msra.mxu0 0.0
      %2692 = vmatprep.subr.mxu0 0.0
      %2693 = vmatpush2.msra.mxu0 0.0
      %2694 = vmatprep.mubr.f32.mxu0 0.0
      %2695 = vmatmul.mubr.f32.gmra.mxu0 %v2619
      %v2696 = vpop.f32.mrf.mxu0
      %v2697 = vadd.f32 0.0, %v2696
      %v2698 = vpop.f32.mrf.mxu0
      %2699 = vmatprep.mubr.f32.mxu0 0.0
      %2700 = vmatmul.mubr.f32.gmra.mxu0 %v2622
      %v2701 = vpop.f32.mrf.mxu0
      %v2702 = vadd.f32 0.0, %v2701
      %v2703 = vpop.f32.mrf.mxu0
      %2704 = vmatprep.mubr.f32.mxu0 0.0
      %2705 = vmatmul.mubr.f32.gmra.mxu0 %v2625
      %v2706 = vpop.f32.mrf.mxu0
      %v2707 = vadd.f32 0.0, %v2706
      %v2708 = vpop.f32.mrf.mxu0
      %2709 = vmatprep.mubr.f32.mxu0 0.0
      %2710 = vmatmul.mubr.f32.gmra.mxu0 %v2628
      %v2711 = vpop.f32.mrf.mxu0
      %v2712 = vadd.f32 0.0, %v2711
      %v2713 = vpop.f32.mrf.mxu0
      %2714 = vdwg.mxu0
      %v2715 = vadd.f32 %v2408, %v2697
      %v2716 = vadd.f32 %v2409, %v2702
      %v2717 = vadd.f32 %v2410, %v2707
      %v2718 = vadd.f32 %v2411, %v2712
      %s2719 = scalar_lea.vmem %s3, 2800
      %v2720 = vld [vmem:[%s2719] sm:$0xff]
      %v2721 = vld [vmem:[%s2719 + $0x8] sm:$0xff]
      %v2722 = vld [vmem:[%s2719 + $0x10] sm:$0xff]
      %v2723 = vld [vmem:[%s2719 + $0x18] sm:$0xff]
      %v2724 = vld [vmem:[%s2719 + $0x20] sm:$0xff]
      %v2725 = vld [vmem:[%s2719 + $0x28] sm:$0xff]
      %v2726 = vld [vmem:[%s2719 + $0x30] sm:$0xff]
      %v2727 = vld [vmem:[%s2719 + $0x38] sm:$0xff]
      %v2728 = vld [vmem:[%s2719 + $0x40] sm:$0xff]
      %v2729 = vld [vmem:[%s2719 + $0x48] sm:$0xff]
      %v2730 = vld [vmem:[%s2719 + $0x50] sm:$0xff]
      %v2731 = vld [vmem:[%s2719 + $0x58] sm:$0xff]
      %v2732 = vld [vmem:[%s2719 + $0x60] sm:$0xff]
      %v2733 = vld [vmem:[%s2719 + $0x68] sm:$0xff]
      %v2734 = vld [vmem:[%s2719 + $0x70] sm:$0xff]
      %v2735 = vld [vmem:[%s2719 + $0x78] sm:$0xff]
      %v2736 = vld [vmem:[%s2719 + $0x80] sm:$0xff]
      %v2737 = vld [vmem:[%s2719 + $0x88] sm:$0xff]
      %v2738 = vld [vmem:[%s2719 + $0x90] sm:$0xff]
      %v2739 = vld [vmem:[%s2719 + $0x98] sm:$0xff]
      %v2740 = vld [vmem:[%s2719 + $0xa0] sm:$0xff]
      %v2741 = vld [vmem:[%s2719 + $0xa8] sm:$0xff]
      %v2742 = vld [vmem:[%s2719 + $0xb0] sm:$0xff]
      %v2743 = vld [vmem:[%s2719 + $0xb8] sm:$0xff]
      %v2744 = vld [vmem:[%s2719 + $0xc0] sm:$0xff]
      %v2745 = vld [vmem:[%s2719 + $0xc8] sm:$0xff]
      %v2746 = vld [vmem:[%s2719 + $0xd0] sm:$0xff]
      %v2747 = vld [vmem:[%s2719 + $0xd8] sm:$0xff]
      %v2748 = vld [vmem:[%s2719 + $0xe0] sm:$0xff]
      %v2749 = vld [vmem:[%s2719 + $0xe8] sm:$0xff]
      %v2750 = vld [vmem:[%s2719 + $0xf0] sm:$0xff]
      %v2751 = vld [vmem:[%s2719 + $0xf8] sm:$0xff]
      %v2752 = vld [vmem:[%s2719 + $0x100] sm:$0xff]
      %v2753 = vld [vmem:[%s2719 + $0x108] sm:$0xff]
      %v2754 = vld [vmem:[%s2719 + $0x110] sm:$0xff]
      %v2755 = vld [vmem:[%s2719 + $0x118] sm:$0xff]
      %v2756 = vld [vmem:[%s2719 + $0x120] sm:$0xff]
      %v2757 = vld [vmem:[%s2719 + $0x128] sm:$0xff]
      %v2758 = vld [vmem:[%s2719 + $0x130] sm:$0xff]
      %v2759 = vld [vmem:[%s2719 + $0x138] sm:$0xff]
      %v2760 = vld [vmem:[%s2719 + $0x140] sm:$0xff]
      %v2761 = vld [vmem:[%s2719 + $0x148] sm:$0xff]
      %v2762 = vld [vmem:[%s2719 + $0x150] sm:$0xff]
      %v2763 = vld [vmem:[%s2719 + $0x158] sm:$0xff]
      %v2764 = vld [vmem:[%s2719 + $0x160] sm:$0xff]
      %v2765 = vld [vmem:[%s2719 + $0x168] sm:$0xff]
      %v2766 = vld [vmem:[%s2719 + $0x170] sm:$0xff]
      %v2767 = vld [vmem:[%s2719 + $0x178] sm:$0xff]
      %v2768 = vld [vmem:[%s2719 + $0x180] sm:$0xff]
      %v2769 = vld [vmem:[%s2719 + $0x188] sm:$0xff]
      %2770 = vmatprep.subr.mxu0 0.0
      %2771 = vmatpush1.msra.mxu0 %v2735
      %2772 = vmatprep.subr.mxu0 0.0
      %2773 = vmatpush1.msra.mxu0 %v2734
      %2774 = vmatprep.subr.mxu0 0.0
      %2775 = vmatpush1.msra.mxu0 %v2733
      %2776 = vmatprep.subr.mxu0 0.0
      %2777 = vmatpush1.msra.mxu0 %v2732
      %2778 = vmatprep.subr.mxu0 0.0
      %2779 = vmatpush1.msra.mxu0 %v2731
      %2780 = vmatprep.subr.mxu0 0.0
      %2781 = vmatpush1.msra.mxu0 %v2730
      %2782 = vmatprep.subr.mxu0 0.0
      %2783 = vmatpush1.msra.mxu0 %v2729
      %2784 = vmatprep.subr.mxu0 0.0
      %2785 = vmatpush1.msra.mxu0 %v2728
      %2786 = vmatprep.subr.mxu0 0.0
      %2787 = vmatpush1.msra.mxu0 %v2727
      %2788 = vmatprep.subr.mxu0 0.0
      %2789 = vmatpush1.msra.mxu0 %v2726
      %2790 = vmatprep.subr.mxu0 0.0
      %2791 = vmatpush1.msra.mxu0 %v2725
      %2792 = vmatprep.subr.mxu0 0.0
      %2793 = vmatpush1.msra.mxu0 %v2724
      %2794 = vmatprep.subr.mxu0 0.0
      %2795 = vmatpush1.msra.mxu0 %v2723
      %2796 = vmatprep.subr.mxu0 0.0
      %2797 = vmatpush1.msra.mxu0 %v2722
      %2798 = vmatprep.subr.mxu0 0.0
      %2799 = vmatpush1.msra.mxu0 %v2721
      %2800 = vmatprep.subr.mxu0 0.0
      %2801 = vmatpush1.msra.mxu0 %v2720
      %2802 = vmatprep.subr.mxu0 0.0
      %2803 = vmatpush2.msra.mxu0 %v2751
      %2804 = vmatprep.subr.mxu0 0.0
      %2805 = vmatpush2.msra.mxu0 %v2750
      %2806 = vmatprep.subr.mxu0 0.0
      %2807 = vmatpush2.msra.mxu0 %v2749
      %2808 = vmatprep.subr.mxu0 0.0
      %2809 = vmatpush2.msra.mxu0 %v2748
      %2810 = vmatprep.subr.mxu0 0.0
      %2811 = vmatpush2.msra.mxu0 %v2747
      %2812 = vmatprep.subr.mxu0 0.0
      %2813 = vmatpush2.msra.mxu0 %v2746
      %2814 = vmatprep.subr.mxu0 0.0
      %2815 = vmatpush2.msra.mxu0 %v2745
      %2816 = vmatprep.subr.mxu0 0.0
      %2817 = vmatpush2.msra.mxu0 %v2744
      %2818 = vmatprep.subr.mxu0 0.0
      %2819 = vmatpush2.msra.mxu0 %v2743
      %2820 = vmatprep.subr.mxu0 0.0
      %2821 = vmatpush2.msra.mxu0 %v2742
      %2822 = vmatprep.subr.mxu0 0.0
      %2823 = vmatpush2.msra.mxu0 %v2741
      %2824 = vmatprep.subr.mxu0 0.0
      %2825 = vmatpush2.msra.mxu0 %v2740
      %2826 = vmatprep.subr.mxu0 0.0
      %2827 = vmatpush2.msra.mxu0 %v2739
      %2828 = vmatprep.subr.mxu0 0.0
      %2829 = vmatpush2.msra.mxu0 %v2738
      %2830 = vmatprep.subr.mxu0 0.0
      %2831 = vmatpush2.msra.mxu0 %v2737
      %2832 = vmatprep.subr.mxu0 0.0
      %2833 = vmatpush2.msra.mxu0 %v2736
      %2834 = vmatprep.mubr.f32.mxu0 %v566
      %2835 = vmatmul.mubr.f32.gmra.mxu0 %v565
      %v2836 = vpop.f32.mrf.mxu0
      %v2837 = vadd.f32 0.0, %v2836
      %v2838 = vpop.f32.mrf.mxu0
      %2839 = vmatprep.mubr.f32.mxu0 %v570
      %2840 = vmatmul.mubr.f32.gmra.mxu0 %v569
      %v2841 = vpop.f32.mrf.mxu0
      %v2842 = vadd.f32 0.0, %v2841
      %v2843 = vpop.f32.mrf.mxu0
      %2844 = vdwg.mxu0
      %2845 = vmatprep.subr.mxu0 0.0
      %2846 = vmatpush1.msra.mxu0 %v2767
      %2847 = vmatprep.subr.mxu0 0.0
      %2848 = vmatpush1.msra.mxu0 %v2766
      %2849 = vmatprep.subr.mxu0 0.0
      %2850 = vmatpush1.msra.mxu0 %v2765
      %2851 = vmatprep.subr.mxu0 0.0
      %2852 = vmatpush1.msra.mxu0 %v2764
      %2853 = vmatprep.subr.mxu0 0.0
      %2854 = vmatpush1.msra.mxu0 %v2763
      %2855 = vmatprep.subr.mxu0 0.0
      %2856 = vmatpush1.msra.mxu0 %v2762
      %2857 = vmatprep.subr.mxu0 0.0
      %2858 = vmatpush1.msra.mxu0 %v2761
      %2859 = vmatprep.subr.mxu0 0.0
      %2860 = vmatpush1.msra.mxu0 %v2760
      %2861 = vmatprep.subr.mxu0 0.0
      %2862 = vmatpush1.msra.mxu0 %v2759
      %2863 = vmatprep.subr.mxu0 0.0
      %2864 = vmatpush1.msra.mxu0 %v2758
      %2865 = vmatprep.subr.mxu0 0.0
      %2866 = vmatpush1.msra.mxu0 %v2757
      %2867 = vmatprep.subr.mxu0 0.0
      %2868 = vmatpush1.msra.mxu0 %v2756
      %2869 = vmatprep.subr.mxu0 0.0
      %2870 = vmatpush1.msra.mxu0 %v2755
      %2871 = vmatprep.subr.mxu0 0.0
      %2872 = vmatpush1.msra.mxu0 %v2754
      %2873 = vmatprep.subr.mxu0 0.0
      %2874 = vmatpush1.msra.mxu0 %v2753
      %2875 = vmatprep.subr.mxu0 0.0
      %2876 = vmatpush1.msra.mxu0 %v2752
      %2877 = vmatprep.subr.mxu0 0.0
      %2878 = vmatpush2.msra.mxu0 0.0
      %2879 = vmatprep.subr.mxu0 0.0
      %2880 = vmatpush2.msra.mxu0 0.0
      %2881 = vmatprep.subr.mxu0 0.0
      %2882 = vmatpush2.msra.mxu0 0.0
      %2883 = vmatprep.subr.mxu0 0.0
      %2884 = vmatpush2.msra.mxu0 0.0
      %2885 = vmatprep.subr.mxu0 0.0
      %2886 = vmatpush2.msra.mxu0 0.0
      %2887 = vmatprep.subr.mxu0 0.0
      %2888 = vmatpush2.msra.mxu0 0.0
      %2889 = vmatprep.subr.mxu0 0.0
      %2890 = vmatpush2.msra.mxu0 0.0
      %2891 = vmatprep.subr.mxu0 0.0
      %2892 = vmatpush2.msra.mxu0 0.0
      %2893 = vmatprep.subr.mxu0 0.0
      %2894 = vmatpush2.msra.mxu0 0.0
      %2895 = vmatprep.subr.mxu0 0.0
      %2896 = vmatpush2.msra.mxu0 0.0
      %2897 = vmatprep.subr.mxu0 0.0
      %2898 = vmatpush2.msra.mxu0 0.0
      %2899 = vmatprep.subr.mxu0 0.0
      %2900 = vmatpush2.msra.mxu0 0.0
      %2901 = vmatprep.subr.mxu0 0.0
      %2902 = vmatpush2.msra.mxu0 0.0
      %2903 = vmatprep.subr.mxu0 0.0
      %2904 = vmatpush2.msra.mxu0 0.0
      %2905 = vmatprep.subr.mxu0 0.0
      %2906 = vmatpush2.msra.mxu0 %v2769
      %2907 = vmatprep.subr.mxu0 0.0
      %2908 = vmatpush2.msra.mxu0 %v2768
      %2909 = vmatprep.mubr.f32.mxu0 %v625
      %2910 = vmatmul.mubr.f32.gmra.mxu0 %v567
      %v2911 = vpop.f32.mrf.mxu0
      %v2912 = vadd.f32 %v2837, %v2911
      %v2913 = vpop.f32.mrf.mxu0
      %2914 = vmatprep.mubr.f32.mxu0 %v628
      %2915 = vmatmul.mubr.f32.gmra.mxu0 %v571
      %v2916 = vpop.f32.mrf.mxu0
      %v2917 = vadd.f32 %v2842, %v2916
      %v2918 = vpop.f32.mrf.mxu0
      %2919 = vdwg.mxu0
      %s2920 = scalar_lea.vmem %s4, 224
      %v2921 = vld [vmem:[%s2920] sm:$0xff]
      %v2922 = vld [vmem:[%s2920 + $0x8] sm:$0xff]
      %v2923 = vld [vmem:[%s2920 + $0x10] sm:$0xff]
      %v2924 = vld [vmem:[%s2920 + $0x18] sm:$0xff]
      %v2926 = vsel %vm623, %v2921, 0
      %v2929 = vsel %vm623, %v2922, 0
      %v2932 = vsel %vm623, %v2923, 0
      %v2935 = vsel %vm623, %v2924, 0
      %2937 = vmatprep.subr.mxu0 0.0
      %2938 = vmatpush1.msra.mxu0 0.0
      %2939 = vmatprep.subr.mxu0 0.0
      %2940 = vmatpush1.msra.mxu0 0.0
      %2941 = vmatprep.subr.mxu0 0.0
      %2942 = vmatpush1.msra.mxu0 0.0
      %2943 = vmatprep.subr.mxu0 0.0
      %2944 = vmatpush1.msra.mxu0 0.0
      %2945 = vmatprep.subr.mxu0 0.0
      %2946 = vmatpush1.msra.mxu0 0.0
      %2947 = vmatprep.subr.mxu0 0.0
      %2948 = vmatpush1.msra.mxu0 0.0
      %2949 = vmatprep.subr.mxu0 0.0
      %2950 = vmatpush1.msra.mxu0 0.0
      %2951 = vmatprep.subr.mxu0 0.0
      %2952 = vmatpush1.msra.mxu0 0.0
      %2953 = vmatprep.subr.mxu0 0.0
      %2954 = vmatpush1.msra.mxu0 0.0
      %2955 = vmatprep.subr.mxu0 0.0
      %2956 = vmatpush1.msra.mxu0 0.0
      %2957 = vmatprep.subr.mxu0 0.0
      %2958 = vmatpush1.msra.mxu0 0.0
      %2959 = vmatprep.subr.mxu0 0.0
      %2960 = vmatpush1.msra.mxu0 0.0
      %2961 = vmatprep.subr.mxu0 0.0
      %2962 = vmatpush1.msra.mxu0 0.0
      %2963 = vmatprep.subr.mxu0 0.0
      %2964 = vmatpush1.msra.mxu0 0.0
      %2965 = vmatprep.subr.mxu0 0.0
      %2966 = vmatpush1.msra.mxu0 %v2917
      %2967 = vmatprep.subr.mxu0 0.0
      %2968 = vmatpush1.msra.mxu0 %v2912
      %2969 = vmatprep.subr.mxu0 0.0
      %2970 = vmatpush2.msra.mxu0 0.0
      %2971 = vmatprep.subr.mxu0 0.0
      %2972 = vmatpush2.msra.mxu0 0.0
      %2973 = vmatprep.subr.mxu0 0.0
      %2974 = vmatpush2.msra.mxu0 0.0
      %2975 = vmatprep.subr.mxu0 0.0
      %2976 = vmatpush2.msra.mxu0 0.0
      %2977 = vmatprep.subr.mxu0 0.0
      %2978 = vmatpush2.msra.mxu0 0.0
      %2979 = vmatprep.subr.mxu0 0.0
      %2980 = vmatpush2.msra.mxu0 0.0
      %2981 = vmatprep.subr.mxu0 0.0
      %2982 = vmatpush2.msra.mxu0 0.0
      %2983 = vmatprep.subr.mxu0 0.0
      %2984 = vmatpush2.msra.mxu0 0.0
      %2985 = vmatprep.subr.mxu0 0.0
      %2986 = vmatpush2.msra.mxu0 0.0
      %2987 = vmatprep.subr.mxu0 0.0
      %2988 = vmatpush2.msra.mxu0 0.0
      %2989 = vmatprep.subr.mxu0 0.0
      %2990 = vmatpush2.msra.mxu0 0.0
      %2991 = vmatprep.subr.mxu0 0.0
      %2992 = vmatpush2.msra.mxu0 0.0
      %2993 = vmatprep.subr.mxu0 0.0
      %2994 = vmatpush2.msra.mxu0 0.0
      %2995 = vmatprep.subr.mxu0 0.0
      %2996 = vmatpush2.msra.mxu0 0.0
      %2997 = vmatprep.subr.mxu0 0.0
      %2998 = vmatpush2.msra.mxu0 0.0
      %2999 = vmatprep.subr.mxu0 0.0
      %3000 = vmatpush2.msra.mxu0 0.0
      %3001 = vmatprep.mubr.f32.mxu0 0.0
      %3002 = vmatmul.mubr.f32.gmra.mxu0 %v2926
      %v3003 = vpop.f32.mrf.mxu0
      %v3004 = vadd.f32 0.0, %v3003
      %v3005 = vpop.f32.mrf.mxu0
      %3006 = vmatprep.mubr.f32.mxu0 0.0
      %3007 = vmatmul.mubr.f32.gmra.mxu0 %v2929
      %v3008 = vpop.f32.mrf.mxu0
      %v3009 = vadd.f32 0.0, %v3008
      %v3010 = vpop.f32.mrf.mxu0
      %3011 = vmatprep.mubr.f32.mxu0 0.0
      %3012 = vmatmul.mubr.f32.gmra.mxu0 %v2932
      %v3013 = vpop.f32.mrf.mxu0
      %v3014 = vadd.f32 0.0, %v3013
      %v3015 = vpop.f32.mrf.mxu0
      %3016 = vmatprep.mubr.f32.mxu0 0.0
      %3017 = vmatmul.mubr.f32.gmra.mxu0 %v2935
      %v3018 = vpop.f32.mrf.mxu0
      %v3019 = vadd.f32 0.0, %v3018
      %v3020 = vpop.f32.mrf.mxu0
      %3021 = vdwg.mxu0
      %v3022 = vadd.f32 %v2715, %v3004
      %v3023 = vadd.f32 %v2716, %v3009
      %v3024 = vadd.f32 %v2717, %v3014
      %v3025 = vadd.f32 %v2718, %v3019
      %s3026 = scalar_lea.vmem %s3, 3200
      %v3027 = vld [vmem:[%s3026] sm:$0xff]
      %v3028 = vld [vmem:[%s3026 + $0x8] sm:$0xff]
      %v3029 = vld [vmem:[%s3026 + $0x10] sm:$0xff]
      %v3030 = vld [vmem:[%s3026 + $0x18] sm:$0xff]
      %v3031 = vld [vmem:[%s3026 + $0x20] sm:$0xff]
      %v3032 = vld [vmem:[%s3026 + $0x28] sm:$0xff]
      %v3033 = vld [vmem:[%s3026 + $0x30] sm:$0xff]
      %v3034 = vld [vmem:[%s3026 + $0x38] sm:$0xff]
      %v3035 = vld [vmem:[%s3026 + $0x40] sm:$0xff]
      %v3036 = vld [vmem:[%s3026 + $0x48] sm:$0xff]
      %v3037 = vld [vmem:[%s3026 + $0x50] sm:$0xff]
      %v3038 = vld [vmem:[%s3026 + $0x58] sm:$0xff]
      %v3039 = vld [vmem:[%s3026 + $0x60] sm:$0xff]
      %v3040 = vld [vmem:[%s3026 + $0x68] sm:$0xff]
      %v3041 = vld [vmem:[%s3026 + $0x70] sm:$0xff]
      %v3042 = vld [vmem:[%s3026 + $0x78] sm:$0xff]
      %v3043 = vld [vmem:[%s3026 + $0x80] sm:$0xff]
      %v3044 = vld [vmem:[%s3026 + $0x88] sm:$0xff]
      %v3045 = vld [vmem:[%s3026 + $0x90] sm:$0xff]
      %v3046 = vld [vmem:[%s3026 + $0x98] sm:$0xff]
      %v3047 = vld [vmem:[%s3026 + $0xa0] sm:$0xff]
      %v3048 = vld [vmem:[%s3026 + $0xa8] sm:$0xff]
      %v3049 = vld [vmem:[%s3026 + $0xb0] sm:$0xff]
      %v3050 = vld [vmem:[%s3026 + $0xb8] sm:$0xff]
      %v3051 = vld [vmem:[%s3026 + $0xc0] sm:$0xff]
      %v3052 = vld [vmem:[%s3026 + $0xc8] sm:$0xff]
      %v3053 = vld [vmem:[%s3026 + $0xd0] sm:$0xff]
      %v3054 = vld [vmem:[%s3026 + $0xd8] sm:$0xff]
      %v3055 = vld [vmem:[%s3026 + $0xe0] sm:$0xff]
      %v3056 = vld [vmem:[%s3026 + $0xe8] sm:$0xff]
      %v3057 = vld [vmem:[%s3026 + $0xf0] sm:$0xff]
      %v3058 = vld [vmem:[%s3026 + $0xf8] sm:$0xff]
      %v3059 = vld [vmem:[%s3026 + $0x100] sm:$0xff]
      %v3060 = vld [vmem:[%s3026 + $0x108] sm:$0xff]
      %v3061 = vld [vmem:[%s3026 + $0x110] sm:$0xff]
      %v3062 = vld [vmem:[%s3026 + $0x118] sm:$0xff]
      %v3063 = vld [vmem:[%s3026 + $0x120] sm:$0xff]
      %v3064 = vld [vmem:[%s3026 + $0x128] sm:$0xff]
      %v3065 = vld [vmem:[%s3026 + $0x130] sm:$0xff]
      %v3066 = vld [vmem:[%s3026 + $0x138] sm:$0xff]
      %v3067 = vld [vmem:[%s3026 + $0x140] sm:$0xff]
      %v3068 = vld [vmem:[%s3026 + $0x148] sm:$0xff]
      %v3069 = vld [vmem:[%s3026 + $0x150] sm:$0xff]
      %v3070 = vld [vmem:[%s3026 + $0x158] sm:$0xff]
      %v3071 = vld [vmem:[%s3026 + $0x160] sm:$0xff]
      %v3072 = vld [vmem:[%s3026 + $0x168] sm:$0xff]
      %v3073 = vld [vmem:[%s3026 + $0x170] sm:$0xff]
      %v3074 = vld [vmem:[%s3026 + $0x178] sm:$0xff]
      %v3075 = vld [vmem:[%s3026 + $0x180] sm:$0xff]
      %v3076 = vld [vmem:[%s3026 + $0x188] sm:$0xff]
      %3077 = vmatprep.subr.mxu0 0.0
      %3078 = vmatpush1.msra.mxu0 %v3042
      %3079 = vmatprep.subr.mxu0 0.0
      %3080 = vmatpush1.msra.mxu0 %v3041
      %3081 = vmatprep.subr.mxu0 0.0
      %3082 = vmatpush1.msra.mxu0 %v3040
      %3083 = vmatprep.subr.mxu0 0.0
      %3084 = vmatpush1.msra.mxu0 %v3039
      %3085 = vmatprep.subr.mxu0 0.0
      %3086 = vmatpush1.msra.mxu0 %v3038
      %3087 = vmatprep.subr.mxu0 0.0
      %3088 = vmatpush1.msra.mxu0 %v3037
      %3089 = vmatprep.subr.mxu0 0.0
      %3090 = vmatpush1.msra.mxu0 %v3036
      %3091 = vmatprep.subr.mxu0 0.0
      %3092 = vmatpush1.msra.mxu0 %v3035
      %3093 = vmatprep.subr.mxu0 0.0
      %3094 = vmatpush1.msra.mxu0 %v3034
      %3095 = vmatprep.subr.mxu0 0.0
      %3096 = vmatpush1.msra.mxu0 %v3033
      %3097 = vmatprep.subr.mxu0 0.0
      %3098 = vmatpush1.msra.mxu0 %v3032
      %3099 = vmatprep.subr.mxu0 0.0
      %3100 = vmatpush1.msra.mxu0 %v3031
      %3101 = vmatprep.subr.mxu0 0.0
      %3102 = vmatpush1.msra.mxu0 %v3030
      %3103 = vmatprep.subr.mxu0 0.0
      %3104 = vmatpush1.msra.mxu0 %v3029
      %3105 = vmatprep.subr.mxu0 0.0
      %3106 = vmatpush1.msra.mxu0 %v3028
      %3107 = vmatprep.subr.mxu0 0.0
      %3108 = vmatpush1.msra.mxu0 %v3027
      %3109 = vmatprep.subr.mxu0 0.0
      %3110 = vmatpush2.msra.mxu0 %v3058
      %3111 = vmatprep.subr.mxu0 0.0
      %3112 = vmatpush2.msra.mxu0 %v3057
      %3113 = vmatprep.subr.mxu0 0.0
      %3114 = vmatpush2.msra.mxu0 %v3056
      %3115 = vmatprep.subr.mxu0 0.0
      %3116 = vmatpush2.msra.mxu0 %v3055
      %3117 = vmatprep.subr.mxu0 0.0
      %3118 = vmatpush2.msra.mxu0 %v3054
      %3119 = vmatprep.subr.mxu0 0.0
      %3120 = vmatpush2.msra.mxu0 %v3053
      %3121 = vmatprep.subr.mxu0 0.0
      %3122 = vmatpush2.msra.mxu0 %v3052
      %3123 = vmatprep.subr.mxu0 0.0
      %3124 = vmatpush2.msra.mxu0 %v3051
      %3125 = vmatprep.subr.mxu0 0.0
      %3126 = vmatpush2.msra.mxu0 %v3050
      %3127 = vmatprep.subr.mxu0 0.0
      %3128 = vmatpush2.msra.mxu0 %v3049
      %3129 = vmatprep.subr.mxu0 0.0
      %3130 = vmatpush2.msra.mxu0 %v3048
      %3131 = vmatprep.subr.mxu0 0.0
      %3132 = vmatpush2.msra.mxu0 %v3047
      %3133 = vmatprep.subr.mxu0 0.0
      %3134 = vmatpush2.msra.mxu0 %v3046
      %3135 = vmatprep.subr.mxu0 0.0
      %3136 = vmatpush2.msra.mxu0 %v3045
      %3137 = vmatprep.subr.mxu0 0.0
      %3138 = vmatpush2.msra.mxu0 %v3044
      %3139 = vmatprep.subr.mxu0 0.0
      %3140 = vmatpush2.msra.mxu0 %v3043
      %3141 = vmatprep.mubr.f32.mxu0 %v566
      %3142 = vmatmul.mubr.f32.gmra.mxu0 %v565
      %v3143 = vpop.f32.mrf.mxu0
      %v3144 = vadd.f32 0.0, %v3143
      %v3145 = vpop.f32.mrf.mxu0
      %3146 = vmatprep.mubr.f32.mxu0 %v570
      %3147 = vmatmul.mubr.f32.gmra.mxu0 %v569
      %v3148 = vpop.f32.mrf.mxu0
      %v3149 = vadd.f32 0.0, %v3148
      %v3150 = vpop.f32.mrf.mxu0
      %3151 = vdwg.mxu0
      %3152 = vmatprep.subr.mxu0 0.0
      %3153 = vmatpush1.msra.mxu0 %v3074
      %3154 = vmatprep.subr.mxu0 0.0
      %3155 = vmatpush1.msra.mxu0 %v3073
      %3156 = vmatprep.subr.mxu0 0.0
      %3157 = vmatpush1.msra.mxu0 %v3072
      %3158 = vmatprep.subr.mxu0 0.0
      %3159 = vmatpush1.msra.mxu0 %v3071
      %3160 = vmatprep.subr.mxu0 0.0
      %3161 = vmatpush1.msra.mxu0 %v3070
      %3162 = vmatprep.subr.mxu0 0.0
      %3163 = vmatpush1.msra.mxu0 %v3069
      %3164 = vmatprep.subr.mxu0 0.0
      %3165 = vmatpush1.msra.mxu0 %v3068
      %3166 = vmatprep.subr.mxu0 0.0
      %3167 = vmatpush1.msra.mxu0 %v3067
      %3168 = vmatprep.subr.mxu0 0.0
      %3169 = vmatpush1.msra.mxu0 %v3066
      %3170 = vmatprep.subr.mxu0 0.0
      %3171 = vmatpush1.msra.mxu0 %v3065
      %3172 = vmatprep.subr.mxu0 0.0
      %3173 = vmatpush1.msra.mxu0 %v3064
      %3174 = vmatprep.subr.mxu0 0.0
      %3175 = vmatpush1.msra.mxu0 %v3063
      %3176 = vmatprep.subr.mxu0 0.0
      %3177 = vmatpush1.msra.mxu0 %v3062
      %3178 = vmatprep.subr.mxu0 0.0
      %3179 = vmatpush1.msra.mxu0 %v3061
      %3180 = vmatprep.subr.mxu0 0.0
      %3181 = vmatpush1.msra.mxu0 %v3060
      %3182 = vmatprep.subr.mxu0 0.0
      %3183 = vmatpush1.msra.mxu0 %v3059
      %3184 = vmatprep.subr.mxu0 0.0
      %3185 = vmatpush2.msra.mxu0 0.0
      %3186 = vmatprep.subr.mxu0 0.0
      %3187 = vmatpush2.msra.mxu0 0.0
      %3188 = vmatprep.subr.mxu0 0.0
      %3189 = vmatpush2.msra.mxu0 0.0
      %3190 = vmatprep.subr.mxu0 0.0
      %3191 = vmatpush2.msra.mxu0 0.0
      %3192 = vmatprep.subr.mxu0 0.0
      %3193 = vmatpush2.msra.mxu0 0.0
      %3194 = vmatprep.subr.mxu0 0.0
      %3195 = vmatpush2.msra.mxu0 0.0
      %3196 = vmatprep.subr.mxu0 0.0
      %3197 = vmatpush2.msra.mxu0 0.0
      %3198 = vmatprep.subr.mxu0 0.0
      %3199 = vmatpush2.msra.mxu0 0.0
      %3200 = vmatprep.subr.mxu0 0.0
      %3201 = vmatpush2.msra.mxu0 0.0
      %3202 = vmatprep.subr.mxu0 0.0
      %3203 = vmatpush2.msra.mxu0 0.0
      %3204 = vmatprep.subr.mxu0 0.0
      %3205 = vmatpush2.msra.mxu0 0.0
      %3206 = vmatprep.subr.mxu0 0.0
      %3207 = vmatpush2.msra.mxu0 0.0
      %3208 = vmatprep.subr.mxu0 0.0
      %3209 = vmatpush2.msra.mxu0 0.0
      %3210 = vmatprep.subr.mxu0 0.0
      %3211 = vmatpush2.msra.mxu0 0.0
      %3212 = vmatprep.subr.mxu0 0.0
      %3213 = vmatpush2.msra.mxu0 %v3076
      %3214 = vmatprep.subr.mxu0 0.0
      %3215 = vmatpush2.msra.mxu0 %v3075
      %3216 = vmatprep.mubr.f32.mxu0 %v625
      %3217 = vmatmul.mubr.f32.gmra.mxu0 %v567
      %v3218 = vpop.f32.mrf.mxu0
      %v3219 = vadd.f32 %v3144, %v3218
      %v3220 = vpop.f32.mrf.mxu0
      %3221 = vmatprep.mubr.f32.mxu0 %v628
      %3222 = vmatmul.mubr.f32.gmra.mxu0 %v571
      %v3223 = vpop.f32.mrf.mxu0
      %v3224 = vadd.f32 %v3149, %v3223
      %v3225 = vpop.f32.mrf.mxu0
      %3226 = vdwg.mxu0
      %s3227 = scalar_lea.vmem %s4, 256
      %v3228 = vld [vmem:[%s3227] sm:$0xff]
      %v3229 = vld [vmem:[%s3227 + $0x8] sm:$0xff]
      %v3230 = vld [vmem:[%s3227 + $0x10] sm:$0xff]
      %v3231 = vld [vmem:[%s3227 + $0x18] sm:$0xff]
      %v3233 = vsel %vm623, %v3228, 0
      %v3236 = vsel %vm623, %v3229, 0
      %v3239 = vsel %vm623, %v3230, 0
      %v3242 = vsel %vm623, %v3231, 0
      %3244 = vmatprep.subr.mxu0 0.0
      %3245 = vmatpush1.msra.mxu0 0.0
      %3246 = vmatprep.subr.mxu0 0.0
      %3247 = vmatpush1.msra.mxu0 0.0
      %3248 = vmatprep.subr.mxu0 0.0
      %3249 = vmatpush1.msra.mxu0 0.0
      %3250 = vmatprep.subr.mxu0 0.0
      %3251 = vmatpush1.msra.mxu0 0.0
      %3252 = vmatprep.subr.mxu0 0.0
      %3253 = vmatpush1.msra.mxu0 0.0
      %3254 = vmatprep.subr.mxu0 0.0
      %3255 = vmatpush1.msra.mxu0 0.0
      %3256 = vmatprep.subr.mxu0 0.0
      %3257 = vmatpush1.msra.mxu0 0.0
      %3258 = vmatprep.subr.mxu0 0.0
      %3259 = vmatpush1.msra.mxu0 0.0
      %3260 = vmatprep.subr.mxu0 0.0
      %3261 = vmatpush1.msra.mxu0 0.0
      %3262 = vmatprep.subr.mxu0 0.0
      %3263 = vmatpush1.msra.mxu0 0.0
      %3264 = vmatprep.subr.mxu0 0.0
      %3265 = vmatpush1.msra.mxu0 0.0
      %3266 = vmatprep.subr.mxu0 0.0
      %3267 = vmatpush1.msra.mxu0 0.0
      %3268 = vmatprep.subr.mxu0 0.0
      %3269 = vmatpush1.msra.mxu0 0.0
      %3270 = vmatprep.subr.mxu0 0.0
      %3271 = vmatpush1.msra.mxu0 0.0
      %3272 = vmatprep.subr.mxu0 0.0
      %3273 = vmatpush1.msra.mxu0 %v3224
      %3274 = vmatprep.subr.mxu0 0.0
      %3275 = vmatpush1.msra.mxu0 %v3219
      %3276 = vmatprep.subr.mxu0 0.0
      %3277 = vmatpush2.msra.mxu0 0.0
      %3278 = vmatprep.subr.mxu0 0.0
      %3279 = vmatpush2.msra.mxu0 0.0
      %3280 = vmatprep.subr.mxu0 0.0
      %3281 = vmatpush2.msra.mxu0 0.0
      %3282 = vmatprep.subr.mxu0 0.0
      %3283 = vmatpush2.msra.mxu0 0.0
      %3284 = vmatprep.subr.mxu0 0.0
      %3285 = vmatpush2.msra.mxu0 0.0
      %3286 = vmatprep.subr.mxu0 0.0
      %3287 = vmatpush2.msra.mxu0 0.0
      %3288 = vmatprep.subr.mxu0 0.0
      %3289 = vmatpush2.msra.mxu0 0.0
      %3290 = vmatprep.subr.mxu0 0.0
      %3291 = vmatpush2.msra.mxu0 0.0
      %3292 = vmatprep.subr.mxu0 0.0
      %3293 = vmatpush2.msra.mxu0 0.0
      %3294 = vmatprep.subr.mxu0 0.0
      %3295 = vmatpush2.msra.mxu0 0.0
      %3296 = vmatprep.subr.mxu0 0.0
      %3297 = vmatpush2.msra.mxu0 0.0
      %3298 = vmatprep.subr.mxu0 0.0
      %3299 = vmatpush2.msra.mxu0 0.0
      %3300 = vmatprep.subr.mxu0 0.0
      %3301 = vmatpush2.msra.mxu0 0.0
      %3302 = vmatprep.subr.mxu0 0.0
      %3303 = vmatpush2.msra.mxu0 0.0
      %3304 = vmatprep.subr.mxu0 0.0
      %3305 = vmatpush2.msra.mxu0 0.0
      %3306 = vmatprep.subr.mxu0 0.0
      %3307 = vmatpush2.msra.mxu0 0.0
      %3308 = vmatprep.mubr.f32.mxu0 0.0
      %3309 = vmatmul.mubr.f32.gmra.mxu0 %v3233
      %v3310 = vpop.f32.mrf.mxu0
      %v3311 = vadd.f32 0.0, %v3310
      %v3312 = vpop.f32.mrf.mxu0
      %3313 = vmatprep.mubr.f32.mxu0 0.0
      %3314 = vmatmul.mubr.f32.gmra.mxu0 %v3236
      %v3315 = vpop.f32.mrf.mxu0
      %v3316 = vadd.f32 0.0, %v3315
      %v3317 = vpop.f32.mrf.mxu0
      %3318 = vmatprep.mubr.f32.mxu0 0.0
      %3319 = vmatmul.mubr.f32.gmra.mxu0 %v3239
      %v3320 = vpop.f32.mrf.mxu0
      %v3321 = vadd.f32 0.0, %v3320
      %v3322 = vpop.f32.mrf.mxu0
      %3323 = vmatprep.mubr.f32.mxu0 0.0
      %3324 = vmatmul.mubr.f32.gmra.mxu0 %v3242
      %v3325 = vpop.f32.mrf.mxu0
      %v3326 = vadd.f32 0.0, %v3325
      %v3327 = vpop.f32.mrf.mxu0
      %3328 = vdwg.mxu0
      %v3329 = vadd.f32 %v3022, %v3311
      %v3330 = vadd.f32 %v3023, %v3316
      %v3331 = vadd.f32 %v3024, %v3321
      %v3332 = vadd.f32 %v3025, %v3326
      %s3333 = scalar_lea.vmem %s3, 3600
      %v3334 = vld [vmem:[%s3333] sm:$0xff]
      %v3335 = vld [vmem:[%s3333 + $0x8] sm:$0xff]
      %v3336 = vld [vmem:[%s3333 + $0x10] sm:$0xff]
      %v3337 = vld [vmem:[%s3333 + $0x18] sm:$0xff]
      %v3338 = vld [vmem:[%s3333 + $0x20] sm:$0xff]
      %v3339 = vld [vmem:[%s3333 + $0x28] sm:$0xff]
      %v3340 = vld [vmem:[%s3333 + $0x30] sm:$0xff]
      %v3341 = vld [vmem:[%s3333 + $0x38] sm:$0xff]
      %v3342 = vld [vmem:[%s3333 + $0x40] sm:$0xff]
      %v3343 = vld [vmem:[%s3333 + $0x48] sm:$0xff]
      %v3344 = vld [vmem:[%s3333 + $0x50] sm:$0xff]
      %v3345 = vld [vmem:[%s3333 + $0x58] sm:$0xff]
      %v3346 = vld [vmem:[%s3333 + $0x60] sm:$0xff]
      %v3347 = vld [vmem:[%s3333 + $0x68] sm:$0xff]
      %v3348 = vld [vmem:[%s3333 + $0x70] sm:$0xff]
      %v3349 = vld [vmem:[%s3333 + $0x78] sm:$0xff]
      %v3350 = vld [vmem:[%s3333 + $0x80] sm:$0xff]
      %v3351 = vld [vmem:[%s3333 + $0x88] sm:$0xff]
      %v3352 = vld [vmem:[%s3333 + $0x90] sm:$0xff]
      %v3353 = vld [vmem:[%s3333 + $0x98] sm:$0xff]
      %v3354 = vld [vmem:[%s3333 + $0xa0] sm:$0xff]
      %v3355 = vld [vmem:[%s3333 + $0xa8] sm:$0xff]
      %v3356 = vld [vmem:[%s3333 + $0xb0] sm:$0xff]
      %v3357 = vld [vmem:[%s3333 + $0xb8] sm:$0xff]
      %v3358 = vld [vmem:[%s3333 + $0xc0] sm:$0xff]
      %v3359 = vld [vmem:[%s3333 + $0xc8] sm:$0xff]
      %v3360 = vld [vmem:[%s3333 + $0xd0] sm:$0xff]
      %v3361 = vld [vmem:[%s3333 + $0xd8] sm:$0xff]
      %v3362 = vld [vmem:[%s3333 + $0xe0] sm:$0xff]
      %v3363 = vld [vmem:[%s3333 + $0xe8] sm:$0xff]
      %v3364 = vld [vmem:[%s3333 + $0xf0] sm:$0xff]
      %v3365 = vld [vmem:[%s3333 + $0xf8] sm:$0xff]
      %v3366 = vld [vmem:[%s3333 + $0x100] sm:$0xff]
      %v3367 = vld [vmem:[%s3333 + $0x108] sm:$0xff]
      %v3368 = vld [vmem:[%s3333 + $0x110] sm:$0xff]
      %v3369 = vld [vmem:[%s3333 + $0x118] sm:$0xff]
      %v3370 = vld [vmem:[%s3333 + $0x120] sm:$0xff]
      %v3371 = vld [vmem:[%s3333 + $0x128] sm:$0xff]
      %v3372 = vld [vmem:[%s3333 + $0x130] sm:$0xff]
      %v3373 = vld [vmem:[%s3333 + $0x138] sm:$0xff]
      %v3374 = vld [vmem:[%s3333 + $0x140] sm:$0xff]
      %v3375 = vld [vmem:[%s3333 + $0x148] sm:$0xff]
      %v3376 = vld [vmem:[%s3333 + $0x150] sm:$0xff]
      %v3377 = vld [vmem:[%s3333 + $0x158] sm:$0xff]
      %v3378 = vld [vmem:[%s3333 + $0x160] sm:$0xff]
      %v3379 = vld [vmem:[%s3333 + $0x168] sm:$0xff]
      %v3380 = vld [vmem:[%s3333 + $0x170] sm:$0xff]
      %v3381 = vld [vmem:[%s3333 + $0x178] sm:$0xff]
      %v3382 = vld [vmem:[%s3333 + $0x180] sm:$0xff]
      %v3383 = vld [vmem:[%s3333 + $0x188] sm:$0xff]
      %3384 = vmatprep.subr.mxu0 0.0
      %3385 = vmatpush1.msra.mxu0 %v3349
      %3386 = vmatprep.subr.mxu0 0.0
      %3387 = vmatpush1.msra.mxu0 %v3348
      %3388 = vmatprep.subr.mxu0 0.0
      %3389 = vmatpush1.msra.mxu0 %v3347
      %3390 = vmatprep.subr.mxu0 0.0
      %3391 = vmatpush1.msra.mxu0 %v3346
      %3392 = vmatprep.subr.mxu0 0.0
      %3393 = vmatpush1.msra.mxu0 %v3345
      %3394 = vmatprep.subr.mxu0 0.0
      %3395 = vmatpush1.msra.mxu0 %v3344
      %3396 = vmatprep.subr.mxu0 0.0
      %3397 = vmatpush1.msra.mxu0 %v3343
      %3398 = vmatprep.subr.mxu0 0.0
      %3399 = vmatpush1.msra.mxu0 %v3342
      %3400 = vmatprep.subr.mxu0 0.0
      %3401 = vmatpush1.msra.mxu0 %v3341
      %3402 = vmatprep.subr.mxu0 0.0
      %3403 = vmatpush1.msra.mxu0 %v3340
      %3404 = vmatprep.subr.mxu0 0.0
      %3405 = vmatpush1.msra.mxu0 %v3339
      %3406 = vmatprep.subr.mxu0 0.0
      %3407 = vmatpush1.msra.mxu0 %v3338
      %3408 = vmatprep.subr.mxu0 0.0
      %3409 = vmatpush1.msra.mxu0 %v3337
      %3410 = vmatprep.subr.mxu0 0.0
      %3411 = vmatpush1.msra.mxu0 %v3336
      %3412 = vmatprep.subr.mxu0 0.0
      %3413 = vmatpush1.msra.mxu0 %v3335
      %3414 = vmatprep.subr.mxu0 0.0
      %3415 = vmatpush1.msra.mxu0 %v3334
      %3416 = vmatprep.subr.mxu0 0.0
      %3417 = vmatpush2.msra.mxu0 %v3365
      %3418 = vmatprep.subr.mxu0 0.0
      %3419 = vmatpush2.msra.mxu0 %v3364
      %3420 = vmatprep.subr.mxu0 0.0
      %3421 = vmatpush2.msra.mxu0 %v3363
      %3422 = vmatprep.subr.mxu0 0.0
      %3423 = vmatpush2.msra.mxu0 %v3362
      %3424 = vmatprep.subr.mxu0 0.0
      %3425 = vmatpush2.msra.mxu0 %v3361
      %3426 = vmatprep.subr.mxu0 0.0
      %3427 = vmatpush2.msra.mxu0 %v3360
      %3428 = vmatprep.subr.mxu0 0.0
      %3429 = vmatpush2.msra.mxu0 %v3359
      %3430 = vmatprep.subr.mxu0 0.0
      %3431 = vmatpush2.msra.mxu0 %v3358
      %3432 = vmatprep.subr.mxu0 0.0
      %3433 = vmatpush2.msra.mxu0 %v3357
      %3434 = vmatprep.subr.mxu0 0.0
      %3435 = vmatpush2.msra.mxu0 %v3356
      %3436 = vmatprep.subr.mxu0 0.0
      %3437 = vmatpush2.msra.mxu0 %v3355
      %3438 = vmatprep.subr.mxu0 0.0
      %3439 = vmatpush2.msra.mxu0 %v3354
      %3440 = vmatprep.subr.mxu0 0.0
      %3441 = vmatpush2.msra.mxu0 %v3353
      %3442 = vmatprep.subr.mxu0 0.0
      %3443 = vmatpush2.msra.mxu0 %v3352
      %3444 = vmatprep.subr.mxu0 0.0
      %3445 = vmatpush2.msra.mxu0 %v3351
      %3446 = vmatprep.subr.mxu0 0.0
      %3447 = vmatpush2.msra.mxu0 %v3350
      %3448 = vmatprep.mubr.f32.mxu0 %v566
      %3449 = vmatmul.mubr.f32.gmra.mxu0 %v565
      %v3450 = vpop.f32.mrf.mxu0
      %v3451 = vadd.f32 0.0, %v3450
      %v3452 = vpop.f32.mrf.mxu0
      %3453 = vmatprep.mubr.f32.mxu0 %v570
      %3454 = vmatmul.mubr.f32.gmra.mxu0 %v569
      %v3455 = vpop.f32.mrf.mxu0
      %v3456 = vadd.f32 0.0, %v3455
      %v3457 = vpop.f32.mrf.mxu0
      %3458 = vdwg.mxu0
      %3459 = vmatprep.subr.mxu0 0.0
      %3460 = vmatpush1.msra.mxu0 %v3381
      %3461 = vmatprep.subr.mxu0 0.0
      %3462 = vmatpush1.msra.mxu0 %v3380
      %3463 = vmatprep.subr.mxu0 0.0
      %3464 = vmatpush1.msra.mxu0 %v3379
      %3465 = vmatprep.subr.mxu0 0.0
      %3466 = vmatpush1.msra.mxu0 %v3378
      %3467 = vmatprep.subr.mxu0 0.0
      %3468 = vmatpush1.msra.mxu0 %v3377
      %3469 = vmatprep.subr.mxu0 0.0
      %3470 = vmatpush1.msra.mxu0 %v3376
      %3471 = vmatprep.subr.mxu0 0.0
      %3472 = vmatpush1.msra.mxu0 %v3375
      %3473 = vmatprep.subr.mxu0 0.0
      %3474 = vmatpush1.msra.mxu0 %v3374
      %3475 = vmatprep.subr.mxu0 0.0
      %3476 = vmatpush1.msra.mxu0 %v3373
      %3477 = vmatprep.subr.mxu0 0.0
      %3478 = vmatpush1.msra.mxu0 %v3372
      %3479 = vmatprep.subr.mxu0 0.0
      %3480 = vmatpush1.msra.mxu0 %v3371
      %3481 = vmatprep.subr.mxu0 0.0
      %3482 = vmatpush1.msra.mxu0 %v3370
      %3483 = vmatprep.subr.mxu0 0.0
      %3484 = vmatpush1.msra.mxu0 %v3369
      %3485 = vmatprep.subr.mxu0 0.0
      %3486 = vmatpush1.msra.mxu0 %v3368
      %3487 = vmatprep.subr.mxu0 0.0
      %3488 = vmatpush1.msra.mxu0 %v3367
      %3489 = vmatprep.subr.mxu0 0.0
      %3490 = vmatpush1.msra.mxu0 %v3366
      %3491 = vmatprep.subr.mxu0 0.0
      %3492 = vmatpush2.msra.mxu0 0.0
      %3493 = vmatprep.subr.mxu0 0.0
      %3494 = vmatpush2.msra.mxu0 0.0
      %3495 = vmatprep.subr.mxu0 0.0
      %3496 = vmatpush2.msra.mxu0 0.0
      %3497 = vmatprep.subr.mxu0 0.0
      %3498 = vmatpush2.msra.mxu0 0.0
      %3499 = vmatprep.subr.mxu0 0.0
      %3500 = vmatpush2.msra.mxu0 0.0
      %3501 = vmatprep.subr.mxu0 0.0
      %3502 = vmatpush2.msra.mxu0 0.0
      %3503 = vmatprep.subr.mxu0 0.0
      %3504 = vmatpush2.msra.mxu0 0.0
      %3505 = vmatprep.subr.mxu0 0.0
      %3506 = vmatpush2.msra.mxu0 0.0
      %3507 = vmatprep.subr.mxu0 0.0
      %3508 = vmatpush2.msra.mxu0 0.0
      %3509 = vmatprep.subr.mxu0 0.0
      %3510 = vmatpush2.msra.mxu0 0.0
      %3511 = vmatprep.subr.mxu0 0.0
      %3512 = vmatpush2.msra.mxu0 0.0
      %3513 = vmatprep.subr.mxu0 0.0
      %3514 = vmatpush2.msra.mxu0 0.0
      %3515 = vmatprep.subr.mxu0 0.0
      %3516 = vmatpush2.msra.mxu0 0.0
      %3517 = vmatprep.subr.mxu0 0.0
      %3518 = vmatpush2.msra.mxu0 0.0
      %3519 = vmatprep.subr.mxu0 0.0
      %3520 = vmatpush2.msra.mxu0 %v3383
      %3521 = vmatprep.subr.mxu0 0.0
      %3522 = vmatpush2.msra.mxu0 %v3382
      %3523 = vmatprep.mubr.f32.mxu0 %v625
      %3524 = vmatmul.mubr.f32.gmra.mxu0 %v567
      %v3525 = vpop.f32.mrf.mxu0
      %v3526 = vadd.f32 %v3451, %v3525
      %v3527 = vpop.f32.mrf.mxu0
      %3528 = vmatprep.mubr.f32.mxu0 %v628
      %3529 = vmatmul.mubr.f32.gmra.mxu0 %v571
      %v3530 = vpop.f32.mrf.mxu0
      %v3531 = vadd.f32 %v3456, %v3530
      %v3532 = vpop.f32.mrf.mxu0
      %3533 = vdwg.mxu0
      %s3534 = scalar_lea.vmem %s4, 288
      %v3535 = vld [vmem:[%s3534] sm:$0xff]
      %v3536 = vld [vmem:[%s3534 + $0x8] sm:$0xff]
      %v3537 = vld [vmem:[%s3534 + $0x10] sm:$0xff]
      %v3538 = vld [vmem:[%s3534 + $0x18] sm:$0xff]
      %v3540 = vsel %vm623, %v3535, 0
      %v3543 = vsel %vm623, %v3536, 0
      %v3546 = vsel %vm623, %v3537, 0
      %v3549 = vsel %vm623, %v3538, 0
      %3551 = vmatprep.subr.mxu0 0.0
      %3552 = vmatpush1.msra.mxu0 0.0
      %3553 = vmatprep.subr.mxu0 0.0
      %3554 = vmatpush1.msra.mxu0 0.0
      %3555 = vmatprep.subr.mxu0 0.0
      %3556 = vmatpush1.msra.mxu0 0.0
      %3557 = vmatprep.subr.mxu0 0.0
      %3558 = vmatpush1.msra.mxu0 0.0
      %3559 = vmatprep.subr.mxu0 0.0
      %3560 = vmatpush1.msra.mxu0 0.0
      %3561 = vmatprep.subr.mxu0 0.0
      %3562 = vmatpush1.msra.mxu0 0.0
      %3563 = vmatprep.subr.mxu0 0.0
      %3564 = vmatpush1.msra.mxu0 0.0
      %3565 = vmatprep.subr.mxu0 0.0
      %3566 = vmatpush1.msra.mxu0 0.0
      %3567 = vmatprep.subr.mxu0 0.0
      %3568 = vmatpush1.msra.mxu0 0.0
      %3569 = vmatprep.subr.mxu0 0.0
      %3570 = vmatpush1.msra.mxu0 0.0
      %3571 = vmatprep.subr.mxu0 0.0
      %3572 = vmatpush1.msra.mxu0 0.0
      %3573 = vmatprep.subr.mxu0 0.0
      %3574 = vmatpush1.msra.mxu0 0.0
      %3575 = vmatprep.subr.mxu0 0.0
      %3576 = vmatpush1.msra.mxu0 0.0
      %3577 = vmatprep.subr.mxu0 0.0
      %3578 = vmatpush1.msra.mxu0 0.0
      %3579 = vmatprep.subr.mxu0 0.0
      %3580 = vmatpush1.msra.mxu0 %v3531
      %3581 = vmatprep.subr.mxu0 0.0
      %3582 = vmatpush1.msra.mxu0 %v3526
      %3583 = vmatprep.subr.mxu0 0.0
      %3584 = vmatpush2.msra.mxu0 0.0
      %3585 = vmatprep.subr.mxu0 0.0
      %3586 = vmatpush2.msra.mxu0 0.0
      %3587 = vmatprep.subr.mxu0 0.0
      %3588 = vmatpush2.msra.mxu0 0.0
      %3589 = vmatprep.subr.mxu0 0.0
      %3590 = vmatpush2.msra.mxu0 0.0
      %3591 = vmatprep.subr.mxu0 0.0
      %3592 = vmatpush2.msra.mxu0 0.0
      %3593 = vmatprep.subr.mxu0 0.0
      %3594 = vmatpush2.msra.mxu0 0.0
      %3595 = vmatprep.subr.mxu0 0.0
      %3596 = vmatpush2.msra.mxu0 0.0
      %3597 = vmatprep.subr.mxu0 0.0
      %3598 = vmatpush2.msra.mxu0 0.0
      %3599 = vmatprep.subr.mxu0 0.0
      %3600 = vmatpush2.msra.mxu0 0.0
      %3601 = vmatprep.subr.mxu0 0.0
      %3602 = vmatpush2.msra.mxu0 0.0
      %3603 = vmatprep.subr.mxu0 0.0
      %3604 = vmatpush2.msra.mxu0 0.0
      %3605 = vmatprep.subr.mxu0 0.0
      %3606 = vmatpush2.msra.mxu0 0.0
      %3607 = vmatprep.subr.mxu0 0.0
      %3608 = vmatpush2.msra.mxu0 0.0
      %3609 = vmatprep.subr.mxu0 0.0
      %3610 = vmatpush2.msra.mxu0 0.0
      %3611 = vmatprep.subr.mxu0 0.0
      %3612 = vmatpush2.msra.mxu0 0.0
      %3613 = vmatprep.subr.mxu0 0.0
      %3614 = vmatpush2.msra.mxu0 0.0
      %3615 = vmatprep.mubr.f32.mxu0 0.0
      %3616 = vmatmul.mubr.f32.gmra.mxu0 %v3540
      %v3617 = vpop.f32.mrf.mxu0
      %v3618 = vadd.f32 0.0, %v3617
      %v3619 = vpop.f32.mrf.mxu0
      %3620 = vmatprep.mubr.f32.mxu0 0.0
      %3621 = vmatmul.mubr.f32.gmra.mxu0 %v3543
      %v3622 = vpop.f32.mrf.mxu0
      %v3623 = vadd.f32 0.0, %v3622
      %v3624 = vpop.f32.mrf.mxu0
      %3625 = vmatprep.mubr.f32.mxu0 0.0
      %3626 = vmatmul.mubr.f32.gmra.mxu0 %v3546
      %v3627 = vpop.f32.mrf.mxu0
      %v3628 = vadd.f32 0.0, %v3627
      %v3629 = vpop.f32.mrf.mxu0
      %3630 = vmatprep.mubr.f32.mxu0 0.0
      %3631 = vmatmul.mubr.f32.gmra.mxu0 %v3549
      %v3632 = vpop.f32.mrf.mxu0
      %v3633 = vadd.f32 0.0, %v3632
      %v3634 = vpop.f32.mrf.mxu0
      %3635 = vdwg.mxu0
      %v3636 = vadd.f32 %v3329, %v3618
      %v3637 = vadd.f32 %v3330, %v3623
      %v3638 = vadd.f32 %v3331, %v3628
      %v3639 = vadd.f32 %v3332, %v3633
      %s3640 = scalar_lea.vmem %s3, 4000
      %v3641 = vld [vmem:[%s3640] sm:$0xff]
      %v3642 = vld [vmem:[%s3640 + $0x8] sm:$0xff]
      %v3643 = vld [vmem:[%s3640 + $0x10] sm:$0xff]
      %v3644 = vld [vmem:[%s3640 + $0x18] sm:$0xff]
      %v3645 = vld [vmem:[%s3640 + $0x20] sm:$0xff]
      %v3646 = vld [vmem:[%s3640 + $0x28] sm:$0xff]
      %v3647 = vld [vmem:[%s3640 + $0x30] sm:$0xff]
      %v3648 = vld [vmem:[%s3640 + $0x38] sm:$0xff]
      %v3649 = vld [vmem:[%s3640 + $0x40] sm:$0xff]
      %v3650 = vld [vmem:[%s3640 + $0x48] sm:$0xff]
      %v3651 = vld [vmem:[%s3640 + $0x50] sm:$0xff]
      %v3652 = vld [vmem:[%s3640 + $0x58] sm:$0xff]
      %v3653 = vld [vmem:[%s3640 + $0x60] sm:$0xff]
      %v3654 = vld [vmem:[%s3640 + $0x68] sm:$0xff]
      %v3655 = vld [vmem:[%s3640 + $0x70] sm:$0xff]
      %v3656 = vld [vmem:[%s3640 + $0x78] sm:$0xff]
      %v3657 = vld [vmem:[%s3640 + $0x80] sm:$0xff]
      %v3658 = vld [vmem:[%s3640 + $0x88] sm:$0xff]
      %v3659 = vld [vmem:[%s3640 + $0x90] sm:$0xff]
      %v3660 = vld [vmem:[%s3640 + $0x98] sm:$0xff]
      %v3661 = vld [vmem:[%s3640 + $0xa0] sm:$0xff]
      %v3662 = vld [vmem:[%s3640 + $0xa8] sm:$0xff]
      %v3663 = vld [vmem:[%s3640 + $0xb0] sm:$0xff]
      %v3664 = vld [vmem:[%s3640 + $0xb8] sm:$0xff]
      %v3665 = vld [vmem:[%s3640 + $0xc0] sm:$0xff]
      %v3666 = vld [vmem:[%s3640 + $0xc8] sm:$0xff]
      %v3667 = vld [vmem:[%s3640 + $0xd0] sm:$0xff]
      %v3668 = vld [vmem:[%s3640 + $0xd8] sm:$0xff]
      %v3669 = vld [vmem:[%s3640 + $0xe0] sm:$0xff]
      %v3670 = vld [vmem:[%s3640 + $0xe8] sm:$0xff]
      %v3671 = vld [vmem:[%s3640 + $0xf0] sm:$0xff]
      %v3672 = vld [vmem:[%s3640 + $0xf8] sm:$0xff]
      %v3673 = vld [vmem:[%s3640 + $0x100] sm:$0xff]
      %v3674 = vld [vmem:[%s3640 + $0x108] sm:$0xff]
      %v3675 = vld [vmem:[%s3640 + $0x110] sm:$0xff]
      %v3676 = vld [vmem:[%s3640 + $0x118] sm:$0xff]
      %v3677 = vld [vmem:[%s3640 + $0x120] sm:$0xff]
      %v3678 = vld [vmem:[%s3640 + $0x128] sm:$0xff]
      %v3679 = vld [vmem:[%s3640 + $0x130] sm:$0xff]
      %v3680 = vld [vmem:[%s3640 + $0x138] sm:$0xff]
      %v3681 = vld [vmem:[%s3640 + $0x140] sm:$0xff]
      %v3682 = vld [vmem:[%s3640 + $0x148] sm:$0xff]
      %v3683 = vld [vmem:[%s3640 + $0x150] sm:$0xff]
      %v3684 = vld [vmem:[%s3640 + $0x158] sm:$0xff]
      %v3685 = vld [vmem:[%s3640 + $0x160] sm:$0xff]
      %v3686 = vld [vmem:[%s3640 + $0x168] sm:$0xff]
      %v3687 = vld [vmem:[%s3640 + $0x170] sm:$0xff]
      %v3688 = vld [vmem:[%s3640 + $0x178] sm:$0xff]
      %v3689 = vld [vmem:[%s3640 + $0x180] sm:$0xff]
      %v3690 = vld [vmem:[%s3640 + $0x188] sm:$0xff]
      %3691 = vmatprep.subr.mxu0 0.0
      %3692 = vmatpush1.msra.mxu0 %v3656
      %3693 = vmatprep.subr.mxu0 0.0
      %3694 = vmatpush1.msra.mxu0 %v3655
      %3695 = vmatprep.subr.mxu0 0.0
      %3696 = vmatpush1.msra.mxu0 %v3654
      %3697 = vmatprep.subr.mxu0 0.0
      %3698 = vmatpush1.msra.mxu0 %v3653
      %3699 = vmatprep.subr.mxu0 0.0
      %3700 = vmatpush1.msra.mxu0 %v3652
      %3701 = vmatprep.subr.mxu0 0.0
      %3702 = vmatpush1.msra.mxu0 %v3651
      %3703 = vmatprep.subr.mxu0 0.0
      %3704 = vmatpush1.msra.mxu0 %v3650
      %3705 = vmatprep.subr.mxu0 0.0
      %3706 = vmatpush1.msra.mxu0 %v3649
      %3707 = vmatprep.subr.mxu0 0.0
      %3708 = vmatpush1.msra.mxu0 %v3648
      %3709 = vmatprep.subr.mxu0 0.0
      %3710 = vmatpush1.msra.mxu0 %v3647
      %3711 = vmatprep.subr.mxu0 0.0
      %3712 = vmatpush1.msra.mxu0 %v3646
      %3713 = vmatprep.subr.mxu0 0.0
      %3714 = vmatpush1.msra.mxu0 %v3645
      %3715 = vmatprep.subr.mxu0 0.0
      %3716 = vmatpush1.msra.mxu0 %v3644
      %3717 = vmatprep.subr.mxu0 0.0
      %3718 = vmatpush1.msra.mxu0 %v3643
      %3719 = vmatprep.subr.mxu0 0.0
      %3720 = vmatpush1.msra.mxu0 %v3642
      %3721 = vmatprep.subr.mxu0 0.0
      %3722 = vmatpush1.msra.mxu0 %v3641
      %3723 = vmatprep.subr.mxu0 0.0
      %3724 = vmatpush2.msra.mxu0 %v3672
      %3725 = vmatprep.subr.mxu0 0.0
      %3726 = vmatpush2.msra.mxu0 %v3671
      %3727 = vmatprep.subr.mxu0 0.0
      %3728 = vmatpush2.msra.mxu0 %v3670
      %3729 = vmatprep.subr.mxu0 0.0
      %3730 = vmatpush2.msra.mxu0 %v3669
      %3731 = vmatprep.subr.mxu0 0.0
      %3732 = vmatpush2.msra.mxu0 %v3668
      %3733 = vmatprep.subr.mxu0 0.0
      %3734 = vmatpush2.msra.mxu0 %v3667
      %3735 = vmatprep.subr.mxu0 0.0
      %3736 = vmatpush2.msra.mxu0 %v3666
      %3737 = vmatprep.subr.mxu0 0.0
      %3738 = vmatpush2.msra.mxu0 %v3665
      %3739 = vmatprep.subr.mxu0 0.0
      %3740 = vmatpush2.msra.mxu0 %v3664
      %3741 = vmatprep.subr.mxu0 0.0
      %3742 = vmatpush2.msra.mxu0 %v3663
      %3743 = vmatprep.subr.mxu0 0.0
      %3744 = vmatpush2.msra.mxu0 %v3662
      %3745 = vmatprep.subr.mxu0 0.0
      %3746 = vmatpush2.msra.mxu0 %v3661
      %3747 = vmatprep.subr.mxu0 0.0
      %3748 = vmatpush2.msra.mxu0 %v3660
      %3749 = vmatprep.subr.mxu0 0.0
      %3750 = vmatpush2.msra.mxu0 %v3659
      %3751 = vmatprep.subr.mxu0 0.0
      %3752 = vmatpush2.msra.mxu0 %v3658
      %3753 = vmatprep.subr.mxu0 0.0
      %3754 = vmatpush2.msra.mxu0 %v3657
      %3755 = vmatprep.mubr.f32.mxu0 %v566
      %3756 = vmatmul.mubr.f32.gmra.mxu0 %v565
      %v3757 = vpop.f32.mrf.mxu0
      %v3758 = vadd.f32 0.0, %v3757
      %v3759 = vpop.f32.mrf.mxu0
      %3760 = vmatprep.mubr.f32.mxu0 %v570
      %3761 = vmatmul.mubr.f32.gmra.mxu0 %v569
      %v3762 = vpop.f32.mrf.mxu0
      %v3763 = vadd.f32 0.0, %v3762
      %v3764 = vpop.f32.mrf.mxu0
      %3765 = vdwg.mxu0
      %3766 = vmatprep.subr.mxu0 0.0
      %3767 = vmatpush1.msra.mxu0 %v3688
      %3768 = vmatprep.subr.mxu0 0.0
      %3769 = vmatpush1.msra.mxu0 %v3687
      %3770 = vmatprep.subr.mxu0 0.0
      %3771 = vmatpush1.msra.mxu0 %v3686
      %3772 = vmatprep.subr.mxu0 0.0
      %3773 = vmatpush1.msra.mxu0 %v3685
      %3774 = vmatprep.subr.mxu0 0.0
      %3775 = vmatpush1.msra.mxu0 %v3684
      %3776 = vmatprep.subr.mxu0 0.0
      %3777 = vmatpush1.msra.mxu0 %v3683
      %3778 = vmatprep.subr.mxu0 0.0
      %3779 = vmatpush1.msra.mxu0 %v3682
      %3780 = vmatprep.subr.mxu0 0.0
      %3781 = vmatpush1.msra.mxu0 %v3681
      %3782 = vmatprep.subr.mxu0 0.0
      %3783 = vmatpush1.msra.mxu0 %v3680
      %3784 = vmatprep.subr.mxu0 0.0
      %3785 = vmatpush1.msra.mxu0 %v3679
      %3786 = vmatprep.subr.mxu0 0.0
      %3787 = vmatpush1.msra.mxu0 %v3678
      %3788 = vmatprep.subr.mxu0 0.0
      %3789 = vmatpush1.msra.mxu0 %v3677
      %3790 = vmatprep.subr.mxu0 0.0
      %3791 = vmatpush1.msra.mxu0 %v3676
      %3792 = vmatprep.subr.mxu0 0.0
      %3793 = vmatpush1.msra.mxu0 %v3675
      %3794 = vmatprep.subr.mxu0 0.0
      %3795 = vmatpush1.msra.mxu0 %v3674
      %3796 = vmatprep.subr.mxu0 0.0
      %3797 = vmatpush1.msra.mxu0 %v3673
      %3798 = vmatprep.subr.mxu0 0.0
      %3799 = vmatpush2.msra.mxu0 0.0
      %3800 = vmatprep.subr.mxu0 0.0
      %3801 = vmatpush2.msra.mxu0 0.0
      %3802 = vmatprep.subr.mxu0 0.0
      %3803 = vmatpush2.msra.mxu0 0.0
      %3804 = vmatprep.subr.mxu0 0.0
      %3805 = vmatpush2.msra.mxu0 0.0
      %3806 = vmatprep.subr.mxu0 0.0
      %3807 = vmatpush2.msra.mxu0 0.0
      %3808 = vmatprep.subr.mxu0 0.0
      %3809 = vmatpush2.msra.mxu0 0.0
      %3810 = vmatprep.subr.mxu0 0.0
      %3811 = vmatpush2.msra.mxu0 0.0
      %3812 = vmatprep.subr.mxu0 0.0
      %3813 = vmatpush2.msra.mxu0 0.0
      %3814 = vmatprep.subr.mxu0 0.0
      %3815 = vmatpush2.msra.mxu0 0.0
      %3816 = vmatprep.subr.mxu0 0.0
      %3817 = vmatpush2.msra.mxu0 0.0
      %3818 = vmatprep.subr.mxu0 0.0
      %3819 = vmatpush2.msra.mxu0 0.0
      %3820 = vmatprep.subr.mxu0 0.0
      %3821 = vmatpush2.msra.mxu0 0.0
      %3822 = vmatprep.subr.mxu0 0.0
      %3823 = vmatpush2.msra.mxu0 0.0
      %3824 = vmatprep.subr.mxu0 0.0
      %3825 = vmatpush2.msra.mxu0 0.0
      %3826 = vmatprep.subr.mxu0 0.0
      %3827 = vmatpush2.msra.mxu0 %v3690
      %3828 = vmatprep.subr.mxu0 0.0
      %3829 = vmatpush2.msra.mxu0 %v3689
      %3830 = vmatprep.mubr.f32.mxu0 %v625
      %3831 = vmatmul.mubr.f32.gmra.mxu0 %v567
      %v3832 = vpop.f32.mrf.mxu0
      %v3833 = vadd.f32 %v3758, %v3832
      %v3834 = vpop.f32.mrf.mxu0
      %3835 = vmatprep.mubr.f32.mxu0 %v628
      %3836 = vmatmul.mubr.f32.gmra.mxu0 %v571
      %v3837 = vpop.f32.mrf.mxu0
      %v3838 = vadd.f32 %v3763, %v3837
      %v3839 = vpop.f32.mrf.mxu0
      %3840 = vdwg.mxu0
      %s3841 = scalar_lea.vmem %s4, 320
      %v3842 = vld [vmem:[%s3841] sm:$0xff]
      %v3843 = vld [vmem:[%s3841 + $0x8] sm:$0xff]
      %v3844 = vld [vmem:[%s3841 + $0x10] sm:$0xff]
      %v3845 = vld [vmem:[%s3841 + $0x18] sm:$0xff]
      %v3847 = vsel %vm623, %v3842, 0
      %v3850 = vsel %vm623, %v3843, 0
      %v3853 = vsel %vm623, %v3844, 0
      %v3856 = vsel %vm623, %v3845, 0
      %3858 = vmatprep.subr.mxu0 0.0
      %3859 = vmatpush1.msra.mxu0 0.0
      %3860 = vmatprep.subr.mxu0 0.0
      %3861 = vmatpush1.msra.mxu0 0.0
      %3862 = vmatprep.subr.mxu0 0.0
      %3863 = vmatpush1.msra.mxu0 0.0
      %3864 = vmatprep.subr.mxu0 0.0
      %3865 = vmatpush1.msra.mxu0 0.0
      %3866 = vmatprep.subr.mxu0 0.0
      %3867 = vmatpush1.msra.mxu0 0.0
      %3868 = vmatprep.subr.mxu0 0.0
      %3869 = vmatpush1.msra.mxu0 0.0
      %3870 = vmatprep.subr.mxu0 0.0
      %3871 = vmatpush1.msra.mxu0 0.0
      %3872 = vmatprep.subr.mxu0 0.0
      %3873 = vmatpush1.msra.mxu0 0.0
      %3874 = vmatprep.subr.mxu0 0.0
      %3875 = vmatpush1.msra.mxu0 0.0
      %3876 = vmatprep.subr.mxu0 0.0
      %3877 = vmatpush1.msra.mxu0 0.0
      %3878 = vmatprep.subr.mxu0 0.0
      %3879 = vmatpush1.msra.mxu0 0.0
      %3880 = vmatprep.subr.mxu0 0.0
      %3881 = vmatpush1.msra.mxu0 0.0
      %3882 = vmatprep.subr.mxu0 0.0
      %3883 = vmatpush1.msra.mxu0 0.0
      %3884 = vmatprep.subr.mxu0 0.0
      %3885 = vmatpush1.msra.mxu0 0.0
      %3886 = vmatprep.subr.mxu0 0.0
      %3887 = vmatpush1.msra.mxu0 %v3838
      %3888 = vmatprep.subr.mxu0 0.0
      %3889 = vmatpush1.msra.mxu0 %v3833
      %3890 = vmatprep.subr.mxu0 0.0
      %3891 = vmatpush2.msra.mxu0 0.0
      %3892 = vmatprep.subr.mxu0 0.0
      %3893 = vmatpush2.msra.mxu0 0.0
      %3894 = vmatprep.subr.mxu0 0.0
      %3895 = vmatpush2.msra.mxu0 0.0
      %3896 = vmatprep.subr.mxu0 0.0
      %3897 = vmatpush2.msra.mxu0 0.0
      %3898 = vmatprep.subr.mxu0 0.0
      %3899 = vmatpush2.msra.mxu0 0.0
      %3900 = vmatprep.subr.mxu0 0.0
      %3901 = vmatpush2.msra.mxu0 0.0
      %3902 = vmatprep.subr.mxu0 0.0
      %3903 = vmatpush2.msra.mxu0 0.0
      %3904 = vmatprep.subr.mxu0 0.0
      %3905 = vmatpush2.msra.mxu0 0.0
      %3906 = vmatprep.subr.mxu0 0.0
      %3907 = vmatpush2.msra.mxu0 0.0
      %3908 = vmatprep.subr.mxu0 0.0
      %3909 = vmatpush2.msra.mxu0 0.0
      %3910 = vmatprep.subr.mxu0 0.0
      %3911 = vmatpush2.msra.mxu0 0.0
      %3912 = vmatprep.subr.mxu0 0.0
      %3913 = vmatpush2.msra.mxu0 0.0
      %3914 = vmatprep.subr.mxu0 0.0
      %3915 = vmatpush2.msra.mxu0 0.0
      %3916 = vmatprep.subr.mxu0 0.0
      %3917 = vmatpush2.msra.mxu0 0.0
      %3918 = vmatprep.subr.mxu0 0.0
      %3919 = vmatpush2.msra.mxu0 0.0
      %3920 = vmatprep.subr.mxu0 0.0
      %3921 = vmatpush2.msra.mxu0 0.0
      %3922 = vmatprep.mubr.f32.mxu0 0.0
      %3923 = vmatmul.mubr.f32.gmra.mxu0 %v3847
      %v3924 = vpop.f32.mrf.mxu0
      %v3925 = vadd.f32 0.0, %v3924
      %v3926 = vpop.f32.mrf.mxu0
      %3927 = vmatprep.mubr.f32.mxu0 0.0
      %3928 = vmatmul.mubr.f32.gmra.mxu0 %v3850
      %v3929 = vpop.f32.mrf.mxu0
      %v3930 = vadd.f32 0.0, %v3929
      %v3931 = vpop.f32.mrf.mxu0
      %3932 = vmatprep.mubr.f32.mxu0 0.0
      %3933 = vmatmul.mubr.f32.gmra.mxu0 %v3853
      %v3934 = vpop.f32.mrf.mxu0
      %v3935 = vadd.f32 0.0, %v3934
      %v3936 = vpop.f32.mrf.mxu0
      %3937 = vmatprep.mubr.f32.mxu0 0.0
      %3938 = vmatmul.mubr.f32.gmra.mxu0 %v3856
      %v3939 = vpop.f32.mrf.mxu0
      %v3940 = vadd.f32 0.0, %v3939
      %v3941 = vpop.f32.mrf.mxu0
      %3942 = vdwg.mxu0
      %v3943 = vadd.f32 %v3636, %v3925
      %v3944 = vadd.f32 %v3637, %v3930
      %v3945 = vadd.f32 %v3638, %v3935
      %v3946 = vadd.f32 %v3639, %v3940
      %s3947 = scalar_lea.vmem %s3, 4400
      %v3948 = vld [vmem:[%s3947] sm:$0xff]
      %v3949 = vld [vmem:[%s3947 + $0x8] sm:$0xff]
      %v3950 = vld [vmem:[%s3947 + $0x10] sm:$0xff]
      %v3951 = vld [vmem:[%s3947 + $0x18] sm:$0xff]
      %v3952 = vld [vmem:[%s3947 + $0x20] sm:$0xff]
      %v3953 = vld [vmem:[%s3947 + $0x28] sm:$0xff]
      %v3954 = vld [vmem:[%s3947 + $0x30] sm:$0xff]
      %v3955 = vld [vmem:[%s3947 + $0x38] sm:$0xff]
      %v3956 = vld [vmem:[%s3947 + $0x40] sm:$0xff]
      %v3957 = vld [vmem:[%s3947 + $0x48] sm:$0xff]
      %v3958 = vld [vmem:[%s3947 + $0x50] sm:$0xff]
      %v3959 = vld [vmem:[%s3947 + $0x58] sm:$0xff]
      %v3960 = vld [vmem:[%s3947 + $0x60] sm:$0xff]
      %v3961 = vld [vmem:[%s3947 + $0x68] sm:$0xff]
      %v3962 = vld [vmem:[%s3947 + $0x70] sm:$0xff]
      %v3963 = vld [vmem:[%s3947 + $0x78] sm:$0xff]
      %v3964 = vld [vmem:[%s3947 + $0x80] sm:$0xff]
      %v3965 = vld [vmem:[%s3947 + $0x88] sm:$0xff]
      %v3966 = vld [vmem:[%s3947 + $0x90] sm:$0xff]
      %v3967 = vld [vmem:[%s3947 + $0x98] sm:$0xff]
      %v3968 = vld [vmem:[%s3947 + $0xa0] sm:$0xff]
      %v3969 = vld [vmem:[%s3947 + $0xa8] sm:$0xff]
      %v3970 = vld [vmem:[%s3947 + $0xb0] sm:$0xff]
      %v3971 = vld [vmem:[%s3947 + $0xb8] sm:$0xff]
      %v3972 = vld [vmem:[%s3947 + $0xc0] sm:$0xff]
      %v3973 = vld [vmem:[%s3947 + $0xc8] sm:$0xff]
      %v3974 = vld [vmem:[%s3947 + $0xd0] sm:$0xff]
      %v3975 = vld [vmem:[%s3947 + $0xd8] sm:$0xff]
      %v3976 = vld [vmem:[%s3947 + $0xe0] sm:$0xff]
      %v3977 = vld [vmem:[%s3947 + $0xe8] sm:$0xff]
      %v3978 = vld [vmem:[%s3947 + $0xf0] sm:$0xff]
      %v3979 = vld [vmem:[%s3947 + $0xf8] sm:$0xff]
      %v3980 = vld [vmem:[%s3947 + $0x100] sm:$0xff]
      %v3981 = vld [vmem:[%s3947 + $0x108] sm:$0xff]
      %v3982 = vld [vmem:[%s3947 + $0x110] sm:$0xff]
      %v3983 = vld [vmem:[%s3947 + $0x118] sm:$0xff]
      %v3984 = vld [vmem:[%s3947 + $0x120] sm:$0xff]
      %v3985 = vld [vmem:[%s3947 + $0x128] sm:$0xff]
      %v3986 = vld [vmem:[%s3947 + $0x130] sm:$0xff]
      %v3987 = vld [vmem:[%s3947 + $0x138] sm:$0xff]
      %v3988 = vld [vmem:[%s3947 + $0x140] sm:$0xff]
      %v3989 = vld [vmem:[%s3947 + $0x148] sm:$0xff]
      %v3990 = vld [vmem:[%s3947 + $0x150] sm:$0xff]
      %v3991 = vld [vmem:[%s3947 + $0x158] sm:$0xff]
      %v3992 = vld [vmem:[%s3947 + $0x160] sm:$0xff]
      %v3993 = vld [vmem:[%s3947 + $0x168] sm:$0xff]
      %v3994 = vld [vmem:[%s3947 + $0x170] sm:$0xff]
      %v3995 = vld [vmem:[%s3947 + $0x178] sm:$0xff]
      %v3996 = vld [vmem:[%s3947 + $0x180] sm:$0xff]
      %v3997 = vld [vmem:[%s3947 + $0x188] sm:$0xff]
      %3998 = vmatprep.subr.mxu0 0.0
      %3999 = vmatpush1.msra.mxu0 %v3963
      %4000 = vmatprep.subr.mxu0 0.0
      %4001 = vmatpush1.msra.mxu0 %v3962
      %4002 = vmatprep.subr.mxu0 0.0
      %4003 = vmatpush1.msra.mxu0 %v3961
      %4004 = vmatprep.subr.mxu0 0.0
      %4005 = vmatpush1.msra.mxu0 %v3960
      %4006 = vmatprep.subr.mxu0 0.0
      %4007 = vmatpush1.msra.mxu0 %v3959
      %4008 = vmatprep.subr.mxu0 0.0
      %4009 = vmatpush1.msra.mxu0 %v3958
      %4010 = vmatprep.subr.mxu0 0.0
      %4011 = vmatpush1.msra.mxu0 %v3957
      %4012 = vmatprep.subr.mxu0 0.0
      %4013 = vmatpush1.msra.mxu0 %v3956
      %4014 = vmatprep.subr.mxu0 0.0
      %4015 = vmatpush1.msra.mxu0 %v3955
      %4016 = vmatprep.subr.mxu0 0.0
      %4017 = vmatpush1.msra.mxu0 %v3954
      %4018 = vmatprep.subr.mxu0 0.0
      %4019 = vmatpush1.msra.mxu0 %v3953
      %4020 = vmatprep.subr.mxu0 0.0
      %4021 = vmatpush1.msra.mxu0 %v3952
      %4022 = vmatprep.subr.mxu0 0.0
      %4023 = vmatpush1.msra.mxu0 %v3951
      %4024 = vmatprep.subr.mxu0 0.0
      %4025 = vmatpush1.msra.mxu0 %v3950
      %4026 = vmatprep.subr.mxu0 0.0
      %4027 = vmatpush1.msra.mxu0 %v3949
      %4028 = vmatprep.subr.mxu0 0.0
      %4029 = vmatpush1.msra.mxu0 %v3948
      %4030 = vmatprep.subr.mxu0 0.0
      %4031 = vmatpush2.msra.mxu0 %v3979
      %4032 = vmatprep.subr.mxu0 0.0
      %4033 = vmatpush2.msra.mxu0 %v3978
      %4034 = vmatprep.subr.mxu0 0.0
      %4035 = vmatpush2.msra.mxu0 %v3977
      %4036 = vmatprep.subr.mxu0 0.0
      %4037 = vmatpush2.msra.mxu0 %v3976
      %4038 = vmatprep.subr.mxu0 0.0
      %4039 = vmatpush2.msra.mxu0 %v3975
      %4040 = vmatprep.subr.mxu0 0.0
      %4041 = vmatpush2.msra.mxu0 %v3974
      %4042 = vmatprep.subr.mxu0 0.0
      %4043 = vmatpush2.msra.mxu0 %v3973
      %4044 = vmatprep.subr.mxu0 0.0
      %4045 = vmatpush2.msra.mxu0 %v3972
      %4046 = vmatprep.subr.mxu0 0.0
      %4047 = vmatpush2.msra.mxu0 %v3971
      %4048 = vmatprep.subr.mxu0 0.0
      %4049 = vmatpush2.msra.mxu0 %v3970
      %4050 = vmatprep.subr.mxu0 0.0
      %4051 = vmatpush2.msra.mxu0 %v3969
      %4052 = vmatprep.subr.mxu0 0.0
      %4053 = vmatpush2.msra.mxu0 %v3968
      %4054 = vmatprep.subr.mxu0 0.0
      %4055 = vmatpush2.msra.mxu0 %v3967
      %4056 = vmatprep.subr.mxu0 0.0
      %4057 = vmatpush2.msra.mxu0 %v3966
      %4058 = vmatprep.subr.mxu0 0.0
      %4059 = vmatpush2.msra.mxu0 %v3965
      %4060 = vmatprep.subr.mxu0 0.0
      %4061 = vmatpush2.msra.mxu0 %v3964
      %4062 = vmatprep.mubr.f32.mxu0 %v566
      %4063 = vmatmul.mubr.f32.gmra.mxu0 %v565
      %v4064 = vpop.f32.mrf.mxu0
      %v4065 = vadd.f32 0.0, %v4064
      %v4066 = vpop.f32.mrf.mxu0
      %4067 = vmatprep.mubr.f32.mxu0 %v570
      %4068 = vmatmul.mubr.f32.gmra.mxu0 %v569
      %v4069 = vpop.f32.mrf.mxu0
      %v4070 = vadd.f32 0.0, %v4069
      %v4071 = vpop.f32.mrf.mxu0
      %4072 = vdwg.mxu0
      %4073 = vmatprep.subr.mxu0 0.0
      %4074 = vmatpush1.msra.mxu0 %v3995
      %4075 = vmatprep.subr.mxu0 0.0
      %4076 = vmatpush1.msra.mxu0 %v3994
      %4077 = vmatprep.subr.mxu0 0.0
      %4078 = vmatpush1.msra.mxu0 %v3993
      %4079 = vmatprep.subr.mxu0 0.0
      %4080 = vmatpush1.msra.mxu0 %v3992
      %4081 = vmatprep.subr.mxu0 0.0
      %4082 = vmatpush1.msra.mxu0 %v3991
      %4083 = vmatprep.subr.mxu0 0.0
      %4084 = vmatpush1.msra.mxu0 %v3990
      %4085 = vmatprep.subr.mxu0 0.0
      %4086 = vmatpush1.msra.mxu0 %v3989
      %4087 = vmatprep.subr.mxu0 0.0
      %4088 = vmatpush1.msra.mxu0 %v3988
      %4089 = vmatprep.subr.mxu0 0.0
      %4090 = vmatpush1.msra.mxu0 %v3987
      %4091 = vmatprep.subr.mxu0 0.0
      %4092 = vmatpush1.msra.mxu0 %v3986
      %4093 = vmatprep.subr.mxu0 0.0
      %4094 = vmatpush1.msra.mxu0 %v3985
      %4095 = vmatprep.subr.mxu0 0.0
      %4096 = vmatpush1.msra.mxu0 %v3984
      %4097 = vmatprep.subr.mxu0 0.0
      %4098 = vmatpush1.msra.mxu0 %v3983
      %4099 = vmatprep.subr.mxu0 0.0
      %4100 = vmatpush1.msra.mxu0 %v3982
      %4101 = vmatprep.subr.mxu0 0.0
      %4102 = vmatpush1.msra.mxu0 %v3981
      %4103 = vmatprep.subr.mxu0 0.0
      %4104 = vmatpush1.msra.mxu0 %v3980
      %4105 = vmatprep.subr.mxu0 0.0
      %4106 = vmatpush2.msra.mxu0 0.0
      %4107 = vmatprep.subr.mxu0 0.0
      %4108 = vmatpush2.msra.mxu0 0.0
      %4109 = vmatprep.subr.mxu0 0.0
      %4110 = vmatpush2.msra.mxu0 0.0
      %4111 = vmatprep.subr.mxu0 0.0
      %4112 = vmatpush2.msra.mxu0 0.0
      %4113 = vmatprep.subr.mxu0 0.0
      %4114 = vmatpush2.msra.mxu0 0.0
      %4115 = vmatprep.subr.mxu0 0.0
      %4116 = vmatpush2.msra.mxu0 0.0
      %4117 = vmatprep.subr.mxu0 0.0
      %4118 = vmatpush2.msra.mxu0 0.0
      %4119 = vmatprep.subr.mxu0 0.0
      %4120 = vmatpush2.msra.mxu0 0.0
      %4121 = vmatprep.subr.mxu0 0.0
      %4122 = vmatpush2.msra.mxu0 0.0
      %4123 = vmatprep.subr.mxu0 0.0
      %4124 = vmatpush2.msra.mxu0 0.0
      %4125 = vmatprep.subr.mxu0 0.0
      %4126 = vmatpush2.msra.mxu0 0.0
      %4127 = vmatprep.subr.mxu0 0.0
      %4128 = vmatpush2.msra.mxu0 0.0
      %4129 = vmatprep.subr.mxu0 0.0
      %4130 = vmatpush2.msra.mxu0 0.0
      %4131 = vmatprep.subr.mxu0 0.0
      %4132 = vmatpush2.msra.mxu0 0.0
      %4133 = vmatprep.subr.mxu0 0.0
      %4134 = vmatpush2.msra.mxu0 %v3997
      %4135 = vmatprep.subr.mxu0 0.0
      %4136 = vmatpush2.msra.mxu0 %v3996
      %4137 = vmatprep.mubr.f32.mxu0 %v625
      %4138 = vmatmul.mubr.f32.gmra.mxu0 %v567
      %v4139 = vpop.f32.mrf.mxu0
      %v4140 = vadd.f32 %v4065, %v4139
      %v4141 = vpop.f32.mrf.mxu0
      %4142 = vmatprep.mubr.f32.mxu0 %v628
      %4143 = vmatmul.mubr.f32.gmra.mxu0 %v571
      %v4144 = vpop.f32.mrf.mxu0
      %v4145 = vadd.f32 %v4070, %v4144
      %v4146 = vpop.f32.mrf.mxu0
      %4147 = vdwg.mxu0
      %s4148 = scalar_lea.vmem %s4, 352
      %v4149 = vld [vmem:[%s4148] sm:$0xff]
      %v4150 = vld [vmem:[%s4148 + $0x8] sm:$0xff]
      %v4151 = vld [vmem:[%s4148 + $0x10] sm:$0xff]
      %v4152 = vld [vmem:[%s4148 + $0x18] sm:$0xff]
      %v4154 = vsel %vm623, %v4149, 0
      %v4157 = vsel %vm623, %v4150, 0
      %v4160 = vsel %vm623, %v4151, 0
      %v4163 = vsel %vm623, %v4152, 0
      %4165 = vmatprep.subr.mxu0 0.0
      %4166 = vmatpush1.msra.mxu0 0.0
      %4167 = vmatprep.subr.mxu0 0.0
      %4168 = vmatpush1.msra.mxu0 0.0
      %4169 = vmatprep.subr.mxu0 0.0
      %4170 = vmatpush1.msra.mxu0 0.0
      %4171 = vmatprep.subr.mxu0 0.0
      %4172 = vmatpush1.msra.mxu0 0.0
      %4173 = vmatprep.subr.mxu0 0.0
      %4174 = vmatpush1.msra.mxu0 0.0
      %4175 = vmatprep.subr.mxu0 0.0
      %4176 = vmatpush1.msra.mxu0 0.0
      %4177 = vmatprep.subr.mxu0 0.0
      %4178 = vmatpush1.msra.mxu0 0.0
      %4179 = vmatprep.subr.mxu0 0.0
      %4180 = vmatpush1.msra.mxu0 0.0
      %4181 = vmatprep.subr.mxu0 0.0
      %4182 = vmatpush1.msra.mxu0 0.0
      %4183 = vmatprep.subr.mxu0 0.0
      %4184 = vmatpush1.msra.mxu0 0.0
      %4185 = vmatprep.subr.mxu0 0.0
      %4186 = vmatpush1.msra.mxu0 0.0
      %4187 = vmatprep.subr.mxu0 0.0
      %4188 = vmatpush1.msra.mxu0 0.0
      %4189 = vmatprep.subr.mxu0 0.0
      %4190 = vmatpush1.msra.mxu0 0.0
      %4191 = vmatprep.subr.mxu0 0.0
      %4192 = vmatpush1.msra.mxu0 0.0
      %4193 = vmatprep.subr.mxu0 0.0
      %4194 = vmatpush1.msra.mxu0 %v4145
      %4195 = vmatprep.subr.mxu0 0.0
      %4196 = vmatpush1.msra.mxu0 %v4140
      %4197 = vmatprep.subr.mxu0 0.0
      %4198 = vmatpush2.msra.mxu0 0.0
      %4199 = vmatprep.subr.mxu0 0.0
      %4200 = vmatpush2.msra.mxu0 0.0
      %4201 = vmatprep.subr.mxu0 0.0
      %4202 = vmatpush2.msra.mxu0 0.0
      %4203 = vmatprep.subr.mxu0 0.0
      %4204 = vmatpush2.msra.mxu0 0.0
      %4205 = vmatprep.subr.mxu0 0.0
      %4206 = vmatpush2.msra.mxu0 0.0
      %4207 = vmatprep.subr.mxu0 0.0
      %4208 = vmatpush2.msra.mxu0 0.0
      %4209 = vmatprep.subr.mxu0 0.0
      %4210 = vmatpush2.msra.mxu0 0.0
      %4211 = vmatprep.subr.mxu0 0.0
      %4212 = vmatpush2.msra.mxu0 0.0
      %4213 = vmatprep.subr.mxu0 0.0
      %4214 = vmatpush2.msra.mxu0 0.0
      %4215 = vmatprep.subr.mxu0 0.0
      %4216 = vmatpush2.msra.mxu0 0.0
      %4217 = vmatprep.subr.mxu0 0.0
      %4218 = vmatpush2.msra.mxu0 0.0
      %4219 = vmatprep.subr.mxu0 0.0
      %4220 = vmatpush2.msra.mxu0 0.0
      %4221 = vmatprep.subr.mxu0 0.0
      %4222 = vmatpush2.msra.mxu0 0.0
      %4223 = vmatprep.subr.mxu0 0.0
      %4224 = vmatpush2.msra.mxu0 0.0
      %4225 = vmatprep.subr.mxu0 0.0
      %4226 = vmatpush2.msra.mxu0 0.0
      %4227 = vmatprep.subr.mxu0 0.0
      %4228 = vmatpush2.msra.mxu0 0.0
      %4229 = vmatprep.mubr.f32.mxu0 0.0
      %4230 = vmatmul.mubr.f32.gmra.mxu0 %v4154
      %v4231 = vpop.f32.mrf.mxu0
      %v4232 = vadd.f32 0.0, %v4231
      %v4233 = vpop.f32.mrf.mxu0
      %4234 = vmatprep.mubr.f32.mxu0 0.0
      %4235 = vmatmul.mubr.f32.gmra.mxu0 %v4157
      %v4236 = vpop.f32.mrf.mxu0
      %v4237 = vadd.f32 0.0, %v4236
      %v4238 = vpop.f32.mrf.mxu0
      %4239 = vmatprep.mubr.f32.mxu0 0.0
      %4240 = vmatmul.mubr.f32.gmra.mxu0 %v4160
      %v4241 = vpop.f32.mrf.mxu0
      %v4242 = vadd.f32 0.0, %v4241
      %v4243 = vpop.f32.mrf.mxu0
      %4244 = vmatprep.mubr.f32.mxu0 0.0
      %4245 = vmatmul.mubr.f32.gmra.mxu0 %v4163
      %v4246 = vpop.f32.mrf.mxu0
      %v4247 = vadd.f32 0.0, %v4246
      %v4248 = vpop.f32.mrf.mxu0
      %4249 = vdwg.mxu0
      %v4250 = vadd.f32 %v3943, %v4232
      %v4251 = vadd.f32 %v3944, %v4237
      %v4252 = vadd.f32 %v3945, %v4242
      %v4253 = vadd.f32 %v3946, %v4247
      %s4254 = scalar_lea.vmem %s3, 4800
      %v4255 = vld [vmem:[%s4254] sm:$0xff]
      %v4256 = vld [vmem:[%s4254 + $0x8] sm:$0xff]
      %v4257 = vld [vmem:[%s4254 + $0x10] sm:$0xff]
      %v4258 = vld [vmem:[%s4254 + $0x18] sm:$0xff]
      %v4259 = vld [vmem:[%s4254 + $0x20] sm:$0xff]
      %v4260 = vld [vmem:[%s4254 + $0x28] sm:$0xff]
      %v4261 = vld [vmem:[%s4254 + $0x30] sm:$0xff]
      %v4262 = vld [vmem:[%s4254 + $0x38] sm:$0xff]
      %v4263 = vld [vmem:[%s4254 + $0x40] sm:$0xff]
      %v4264 = vld [vmem:[%s4254 + $0x48] sm:$0xff]
      %v4265 = vld [vmem:[%s4254 + $0x50] sm:$0xff]
      %v4266 = vld [vmem:[%s4254 + $0x58] sm:$0xff]
      %v4267 = vld [vmem:[%s4254 + $0x60] sm:$0xff]
      %v4268 = vld [vmem:[%s4254 + $0x68] sm:$0xff]
      %v4269 = vld [vmem:[%s4254 + $0x70] sm:$0xff]
      %v4270 = vld [vmem:[%s4254 + $0x78] sm:$0xff]
      %v4271 = vld [vmem:[%s4254 + $0x80] sm:$0xff]
      %v4272 = vld [vmem:[%s4254 + $0x88] sm:$0xff]
      %v4273 = vld [vmem:[%s4254 + $0x90] sm:$0xff]
      %v4274 = vld [vmem:[%s4254 + $0x98] sm:$0xff]
      %v4275 = vld [vmem:[%s4254 + $0xa0] sm:$0xff]
      %v4276 = vld [vmem:[%s4254 + $0xa8] sm:$0xff]
      %v4277 = vld [vmem:[%s4254 + $0xb0] sm:$0xff]
      %v4278 = vld [vmem:[%s4254 + $0xb8] sm:$0xff]
      %v4279 = vld [vmem:[%s4254 + $0xc0] sm:$0xff]
      %v4280 = vld [vmem:[%s4254 + $0xc8] sm:$0xff]
      %v4281 = vld [vmem:[%s4254 + $0xd0] sm:$0xff]
      %v4282 = vld [vmem:[%s4254 + $0xd8] sm:$0xff]
      %v4283 = vld [vmem:[%s4254 + $0xe0] sm:$0xff]
      %v4284 = vld [vmem:[%s4254 + $0xe8] sm:$0xff]
      %v4285 = vld [vmem:[%s4254 + $0xf0] sm:$0xff]
      %v4286 = vld [vmem:[%s4254 + $0xf8] sm:$0xff]
      %v4287 = vld [vmem:[%s4254 + $0x100] sm:$0xff]
      %v4288 = vld [vmem:[%s4254 + $0x108] sm:$0xff]
      %v4289 = vld [vmem:[%s4254 + $0x110] sm:$0xff]
      %v4290 = vld [vmem:[%s4254 + $0x118] sm:$0xff]
      %v4291 = vld [vmem:[%s4254 + $0x120] sm:$0xff]
      %v4292 = vld [vmem:[%s4254 + $0x128] sm:$0xff]
      %v4293 = vld [vmem:[%s4254 + $0x130] sm:$0xff]
      %v4294 = vld [vmem:[%s4254 + $0x138] sm:$0xff]
      %v4295 = vld [vmem:[%s4254 + $0x140] sm:$0xff]
      %v4296 = vld [vmem:[%s4254 + $0x148] sm:$0xff]
      %v4297 = vld [vmem:[%s4254 + $0x150] sm:$0xff]
      %v4298 = vld [vmem:[%s4254 + $0x158] sm:$0xff]
      %v4299 = vld [vmem:[%s4254 + $0x160] sm:$0xff]
      %v4300 = vld [vmem:[%s4254 + $0x168] sm:$0xff]
      %v4301 = vld [vmem:[%s4254 + $0x170] sm:$0xff]
      %v4302 = vld [vmem:[%s4254 + $0x178] sm:$0xff]
      %v4303 = vld [vmem:[%s4254 + $0x180] sm:$0xff]
      %v4304 = vld [vmem:[%s4254 + $0x188] sm:$0xff]
      %4305 = vmatprep.subr.mxu0 0.0
      %4306 = vmatpush1.msra.mxu0 %v4270
      %4307 = vmatprep.subr.mxu0 0.0
      %4308 = vmatpush1.msra.mxu0 %v4269
      %4309 = vmatprep.subr.mxu0 0.0
      %4310 = vmatpush1.msra.mxu0 %v4268
      %4311 = vmatprep.subr.mxu0 0.0
      %4312 = vmatpush1.msra.mxu0 %v4267
      %4313 = vmatprep.subr.mxu0 0.0
      %4314 = vmatpush1.msra.mxu0 %v4266
      %4315 = vmatprep.subr.mxu0 0.0
      %4316 = vmatpush1.msra.mxu0 %v4265
      %4317 = vmatprep.subr.mxu0 0.0
      %4318 = vmatpush1.msra.mxu0 %v4264
      %4319 = vmatprep.subr.mxu0 0.0
      %4320 = vmatpush1.msra.mxu0 %v4263
      %4321 = vmatprep.subr.mxu0 0.0
      %4322 = vmatpush1.msra.mxu0 %v4262
      %4323 = vmatprep.subr.mxu0 0.0
      %4324 = vmatpush1.msra.mxu0 %v4261
      %4325 = vmatprep.subr.mxu0 0.0
      %4326 = vmatpush1.msra.mxu0 %v4260
      %4327 = vmatprep.subr.mxu0 0.0
      %4328 = vmatpush1.msra.mxu0 %v4259
      %4329 = vmatprep.subr.mxu0 0.0
      %4330 = vmatpush1.msra.mxu0 %v4258
      %4331 = vmatprep.subr.mxu0 0.0
      %4332 = vmatpush1.msra.mxu0 %v4257
      %4333 = vmatprep.subr.mxu0 0.0
      %4334 = vmatpush1.msra.mxu0 %v4256
      %4335 = vmatprep.subr.mxu0 0.0
      %4336 = vmatpush1.msra.mxu0 %v4255
      %4337 = vmatprep.subr.mxu0 0.0
      %4338 = vmatpush2.msra.mxu0 %v4286
      %4339 = vmatprep.subr.mxu0 0.0
      %4340 = vmatpush2.msra.mxu0 %v4285
      %4341 = vmatprep.subr.mxu0 0.0
      %4342 = vmatpush2.msra.mxu0 %v4284
      %4343 = vmatprep.subr.mxu0 0.0
      %4344 = vmatpush2.msra.mxu0 %v4283
      %4345 = vmatprep.subr.mxu0 0.0
      %4346 = vmatpush2.msra.mxu0 %v4282
      %4347 = vmatprep.subr.mxu0 0.0
      %4348 = vmatpush2.msra.mxu0 %v4281
      %4349 = vmatprep.subr.mxu0 0.0
      %4350 = vmatpush2.msra.mxu0 %v4280
      %4351 = vmatprep.subr.mxu0 0.0
      %4352 = vmatpush2.msra.mxu0 %v4279
      %4353 = vmatprep.subr.mxu0 0.0
      %4354 = vmatpush2.msra.mxu0 %v4278
      %4355 = vmatprep.subr.mxu0 0.0
      %4356 = vmatpush2.msra.mxu0 %v4277
      %4357 = vmatprep.subr.mxu0 0.0
      %4358 = vmatpush2.msra.mxu0 %v4276
      %4359 = vmatprep.subr.mxu0 0.0
      %4360 = vmatpush2.msra.mxu0 %v4275
      %4361 = vmatprep.subr.mxu0 0.0
      %4362 = vmatpush2.msra.mxu0 %v4274
      %4363 = vmatprep.subr.mxu0 0.0
      %4364 = vmatpush2.msra.mxu0 %v4273
      %4365 = vmatprep.subr.mxu0 0.0
      %4366 = vmatpush2.msra.mxu0 %v4272
      %4367 = vmatprep.subr.mxu0 0.0
      %4368 = vmatpush2.msra.mxu0 %v4271
      %4369 = vmatprep.mubr.f32.mxu0 %v566
      %4370 = vmatmul.mubr.f32.gmra.mxu0 %v565
      %v4371 = vpop.f32.mrf.mxu0
      %v4372 = vadd.f32 0.0, %v4371
      %v4373 = vpop.f32.mrf.mxu0
      %4374 = vmatprep.mubr.f32.mxu0 %v570
      %4375 = vmatmul.mubr.f32.gmra.mxu0 %v569
      %v4376 = vpop.f32.mrf.mxu0
      %v4377 = vadd.f32 0.0, %v4376
      %v4378 = vpop.f32.mrf.mxu0
      %4379 = vdwg.mxu0
      %4380 = vmatprep.subr.mxu0 0.0
      %4381 = vmatpush1.msra.mxu0 %v4302
      %4382 = vmatprep.subr.mxu0 0.0
      %4383 = vmatpush1.msra.mxu0 %v4301
      %4384 = vmatprep.subr.mxu0 0.0
      %4385 = vmatpush1.msra.mxu0 %v4300
      %4386 = vmatprep.subr.mxu0 0.0
      %4387 = vmatpush1.msra.mxu0 %v4299
      %4388 = vmatprep.subr.mxu0 0.0
      %4389 = vmatpush1.msra.mxu0 %v4298
      %4390 = vmatprep.subr.mxu0 0.0
      %4391 = vmatpush1.msra.mxu0 %v4297
      %4392 = vmatprep.subr.mxu0 0.0
      %4393 = vmatpush1.msra.mxu0 %v4296
      %4394 = vmatprep.subr.mxu0 0.0
      %4395 = vmatpush1.msra.mxu0 %v4295
      %4396 = vmatprep.subr.mxu0 0.0
      %4397 = vmatpush1.msra.mxu0 %v4294
      %4398 = vmatprep.subr.mxu0 0.0
      %4399 = vmatpush1.msra.mxu0 %v4293
      %4400 = vmatprep.subr.mxu0 0.0
      %4401 = vmatpush1.msra.mxu0 %v4292
      %4402 = vmatprep.subr.mxu0 0.0
      %4403 = vmatpush1.msra.mxu0 %v4291
      %4404 = vmatprep.subr.mxu0 0.0
      %4405 = vmatpush1.msra.mxu0 %v4290
      %4406 = vmatprep.subr.mxu0 0.0
      %4407 = vmatpush1.msra.mxu0 %v4289
      %4408 = vmatprep.subr.mxu0 0.0
      %4409 = vmatpush1.msra.mxu0 %v4288
      %4410 = vmatprep.subr.mxu0 0.0
      %4411 = vmatpush1.msra.mxu0 %v4287
      %4412 = vmatprep.subr.mxu0 0.0
      %4413 = vmatpush2.msra.mxu0 0.0
      %4414 = vmatprep.subr.mxu0 0.0
      %4415 = vmatpush2.msra.mxu0 0.0
      %4416 = vmatprep.subr.mxu0 0.0
      %4417 = vmatpush2.msra.mxu0 0.0
      %4418 = vmatprep.subr.mxu0 0.0
      %4419 = vmatpush2.msra.mxu0 0.0
      %4420 = vmatprep.subr.mxu0 0.0
      %4421 = vmatpush2.msra.mxu0 0.0
      %4422 = vmatprep.subr.mxu0 0.0
      %4423 = vmatpush2.msra.mxu0 0.0
      %4424 = vmatprep.subr.mxu0 0.0
      %4425 = vmatpush2.msra.mxu0 0.0
      %4426 = vmatprep.subr.mxu0 0.0
      %4427 = vmatpush2.msra.mxu0 0.0
      %4428 = vmatprep.subr.mxu0 0.0
      %4429 = vmatpush2.msra.mxu0 0.0
      %4430 = vmatprep.subr.mxu0 0.0
      %4431 = vmatpush2.msra.mxu0 0.0
      %4432 = vmatprep.subr.mxu0 0.0
      %4433 = vmatpush2.msra.mxu0 0.0
      %4434 = vmatprep.subr.mxu0 0.0
      %4435 = vmatpush2.msra.mxu0 0.0
      %4436 = vmatprep.subr.mxu0 0.0
      %4437 = vmatpush2.msra.mxu0 0.0
      %4438 = vmatprep.subr.mxu0 0.0
      %4439 = vmatpush2.msra.mxu0 0.0
      %4440 = vmatprep.subr.mxu0 0.0
      %4441 = vmatpush2.msra.mxu0 %v4304
      %4442 = vmatprep.subr.mxu0 0.0
      %4443 = vmatpush2.msra.mxu0 %v4303
      %4444 = vmatprep.mubr.f32.mxu0 %v625
      %4445 = vmatmul.mubr.f32.gmra.mxu0 %v567
      %v4446 = vpop.f32.mrf.mxu0
      %v4447 = vadd.f32 %v4372, %v4446
      %v4448 = vpop.f32.mrf.mxu0
      %4449 = vmatprep.mubr.f32.mxu0 %v628
      %4450 = vmatmul.mubr.f32.gmra.mxu0 %v571
      %v4451 = vpop.f32.mrf.mxu0
      %v4452 = vadd.f32 %v4377, %v4451
      %v4453 = vpop.f32.mrf.mxu0
      %4454 = vdwg.mxu0
      %s4455 = scalar_lea.vmem %s4, 384
      %v4456 = vld [vmem:[%s4455] sm:$0xff]
      %v4457 = vld [vmem:[%s4455 + $0x8] sm:$0xff]
      %v4458 = vld [vmem:[%s4455 + $0x10] sm:$0xff]
      %v4459 = vld [vmem:[%s4455 + $0x18] sm:$0xff]
      %v4461 = vsel %vm623, %v4456, 0
      %v4464 = vsel %vm623, %v4457, 0
      %v4467 = vsel %vm623, %v4458, 0
      %v4470 = vsel %vm623, %v4459, 0
      %4472 = vmatprep.subr.mxu0 0.0
      %4473 = vmatpush1.msra.mxu0 0.0
      %4474 = vmatprep.subr.mxu0 0.0
      %4475 = vmatpush1.msra.mxu0 0.0
      %4476 = vmatprep.subr.mxu0 0.0
      %4477 = vmatpush1.msra.mxu0 0.0
      %4478 = vmatprep.subr.mxu0 0.0
      %4479 = vmatpush1.msra.mxu0 0.0
      %4480 = vmatprep.subr.mxu0 0.0
      %4481 = vmatpush1.msra.mxu0 0.0
      %4482 = vmatprep.subr.mxu0 0.0
      %4483 = vmatpush1.msra.mxu0 0.0
      %4484 = vmatprep.subr.mxu0 0.0
      %4485 = vmatpush1.msra.mxu0 0.0
      %4486 = vmatprep.subr.mxu0 0.0
      %4487 = vmatpush1.msra.mxu0 0.0
      %4488 = vmatprep.subr.mxu0 0.0
      %4489 = vmatpush1.msra.mxu0 0.0
      %4490 = vmatprep.subr.mxu0 0.0
      %4491 = vmatpush1.msra.mxu0 0.0
      %4492 = vmatprep.subr.mxu0 0.0
      %4493 = vmatpush1.msra.mxu0 0.0
      %4494 = vmatprep.subr.mxu0 0.0
      %4495 = vmatpush1.msra.mxu0 0.0
      %4496 = vmatprep.subr.mxu0 0.0
      %4497 = vmatpush1.msra.mxu0 0.0
      %4498 = vmatprep.subr.mxu0 0.0
      %4499 = vmatpush1.msra.mxu0 0.0
      %4500 = vmatprep.subr.mxu0 0.0
      %4501 = vmatpush1.msra.mxu0 %v4452
      %4502 = vmatprep.subr.mxu0 0.0
      %4503 = vmatpush1.msra.mxu0 %v4447
      %4504 = vmatprep.subr.mxu0 0.0
      %4505 = vmatpush2.msra.mxu0 0.0
      %4506 = vmatprep.subr.mxu0 0.0
      %4507 = vmatpush2.msra.mxu0 0.0
      %4508 = vmatprep.subr.mxu0 0.0
      %4509 = vmatpush2.msra.mxu0 0.0
      %4510 = vmatprep.subr.mxu0 0.0
      %4511 = vmatpush2.msra.mxu0 0.0
      %4512 = vmatprep.subr.mxu0 0.0
      %4513 = vmatpush2.msra.mxu0 0.0
      %4514 = vmatprep.subr.mxu0 0.0
      %4515 = vmatpush2.msra.mxu0 0.0
      %4516 = vmatprep.subr.mxu0 0.0
      %4517 = vmatpush2.msra.mxu0 0.0
      %4518 = vmatprep.subr.mxu0 0.0
      %4519 = vmatpush2.msra.mxu0 0.0
      %4520 = vmatprep.subr.mxu0 0.0
      %4521 = vmatpush2.msra.mxu0 0.0
      %4522 = vmatprep.subr.mxu0 0.0
      %4523 = vmatpush2.msra.mxu0 0.0
      %4524 = vmatprep.subr.mxu0 0.0
      %4525 = vmatpush2.msra.mxu0 0.0
      %4526 = vmatprep.subr.mxu0 0.0
      %4527 = vmatpush2.msra.mxu0 0.0
      %4528 = vmatprep.subr.mxu0 0.0
      %4529 = vmatpush2.msra.mxu0 0.0
      %4530 = vmatprep.subr.mxu0 0.0
      %4531 = vmatpush2.msra.mxu0 0.0
      %4532 = vmatprep.subr.mxu0 0.0
      %4533 = vmatpush2.msra.mxu0 0.0
      %4534 = vmatprep.subr.mxu0 0.0
      %4535 = vmatpush2.msra.mxu0 0.0
      %4536 = vmatprep.mubr.f32.mxu0 0.0
      %4537 = vmatmul.mubr.f32.gmra.mxu0 %v4461
      %v4538 = vpop.f32.mrf.mxu0
      %v4539 = vadd.f32 0.0, %v4538
      %v4540 = vpop.f32.mrf.mxu0
      %4541 = vmatprep.mubr.f32.mxu0 0.0
      %4542 = vmatmul.mubr.f32.gmra.mxu0 %v4464
      %v4543 = vpop.f32.mrf.mxu0
      %v4544 = vadd.f32 0.0, %v4543
      %v4545 = vpop.f32.mrf.mxu0
      %4546 = vmatprep.mubr.f32.mxu0 0.0
      %4547 = vmatmul.mubr.f32.gmra.mxu0 %v4467
      %v4548 = vpop.f32.mrf.mxu0
      %v4549 = vadd.f32 0.0, %v4548
      %v4550 = vpop.f32.mrf.mxu0
      %4551 = vmatprep.mubr.f32.mxu0 0.0
      %4552 = vmatmul.mubr.f32.gmra.mxu0 %v4470
      %v4553 = vpop.f32.mrf.mxu0
      %v4554 = vadd.f32 0.0, %v4553
      %v4555 = vpop.f32.mrf.mxu0
      %4556 = vdwg.mxu0
      %v4557 = vadd.f32 %v4250, %v4539
      %v4558 = vadd.f32 %v4251, %v4544
      %v4559 = vadd.f32 %v4252, %v4549
      %v4560 = vadd.f32 %v4253, %v4554
      %s4561 = scalar_lea.vmem %s3, 5200
      %v4562 = vld [vmem:[%s4561] sm:$0xff]
      %v4563 = vld [vmem:[%s4561 + $0x8] sm:$0xff]
      %v4564 = vld [vmem:[%s4561 + $0x10] sm:$0xff]
      %v4565 = vld [vmem:[%s4561 + $0x18] sm:$0xff]
      %v4566 = vld [vmem:[%s4561 + $0x20] sm:$0xff]
      %v4567 = vld [vmem:[%s4561 + $0x28] sm:$0xff]
      %v4568 = vld [vmem:[%s4561 + $0x30] sm:$0xff]
      %v4569 = vld [vmem:[%s4561 + $0x38] sm:$0xff]
      %v4570 = vld [vmem:[%s4561 + $0x40] sm:$0xff]
      %v4571 = vld [vmem:[%s4561 + $0x48] sm:$0xff]
      %v4572 = vld [vmem:[%s4561 + $0x50] sm:$0xff]
      %v4573 = vld [vmem:[%s4561 + $0x58] sm:$0xff]
      %v4574 = vld [vmem:[%s4561 + $0x60] sm:$0xff]
      %v4575 = vld [vmem:[%s4561 + $0x68] sm:$0xff]
      %v4576 = vld [vmem:[%s4561 + $0x70] sm:$0xff]
      %v4577 = vld [vmem:[%s4561 + $0x78] sm:$0xff]
      %v4578 = vld [vmem:[%s4561 + $0x80] sm:$0xff]
      %v4579 = vld [vmem:[%s4561 + $0x88] sm:$0xff]
      %v4580 = vld [vmem:[%s4561 + $0x90] sm:$0xff]
      %v4581 = vld [vmem:[%s4561 + $0x98] sm:$0xff]
      %v4582 = vld [vmem:[%s4561 + $0xa0] sm:$0xff]
      %v4583 = vld [vmem:[%s4561 + $0xa8] sm:$0xff]
      %v4584 = vld [vmem:[%s4561 + $0xb0] sm:$0xff]
      %v4585 = vld [vmem:[%s4561 + $0xb8] sm:$0xff]
      %v4586 = vld [vmem:[%s4561 + $0xc0] sm:$0xff]
      %v4587 = vld [vmem:[%s4561 + $0xc8] sm:$0xff]
      %v4588 = vld [vmem:[%s4561 + $0xd0] sm:$0xff]
      %v4589 = vld [vmem:[%s4561 + $0xd8] sm:$0xff]
      %v4590 = vld [vmem:[%s4561 + $0xe0] sm:$0xff]
      %v4591 = vld [vmem:[%s4561 + $0xe8] sm:$0xff]
      %v4592 = vld [vmem:[%s4561 + $0xf0] sm:$0xff]
      %v4593 = vld [vmem:[%s4561 + $0xf8] sm:$0xff]
      %v4594 = vld [vmem:[%s4561 + $0x100] sm:$0xff]
      %v4595 = vld [vmem:[%s4561 + $0x108] sm:$0xff]
      %v4596 = vld [vmem:[%s4561 + $0x110] sm:$0xff]
      %v4597 = vld [vmem:[%s4561 + $0x118] sm:$0xff]
      %v4598 = vld [vmem:[%s4561 + $0x120] sm:$0xff]
      %v4599 = vld [vmem:[%s4561 + $0x128] sm:$0xff]
      %v4600 = vld [vmem:[%s4561 + $0x130] sm:$0xff]
      %v4601 = vld [vmem:[%s4561 + $0x138] sm:$0xff]
      %v4602 = vld [vmem:[%s4561 + $0x140] sm:$0xff]
      %v4603 = vld [vmem:[%s4561 + $0x148] sm:$0xff]
      %v4604 = vld [vmem:[%s4561 + $0x150] sm:$0xff]
      %v4605 = vld [vmem:[%s4561 + $0x158] sm:$0xff]
      %v4606 = vld [vmem:[%s4561 + $0x160] sm:$0xff]
      %v4607 = vld [vmem:[%s4561 + $0x168] sm:$0xff]
      %v4608 = vld [vmem:[%s4561 + $0x170] sm:$0xff]
      %v4609 = vld [vmem:[%s4561 + $0x178] sm:$0xff]
      %v4610 = vld [vmem:[%s4561 + $0x180] sm:$0xff]
      %v4611 = vld [vmem:[%s4561 + $0x188] sm:$0xff]
      %4612 = vmatprep.subr.mxu0 0.0
      %4613 = vmatpush1.msra.mxu0 %v4577
      %4614 = vmatprep.subr.mxu0 0.0
      %4615 = vmatpush1.msra.mxu0 %v4576
      %4616 = vmatprep.subr.mxu0 0.0
      %4617 = vmatpush1.msra.mxu0 %v4575
      %4618 = vmatprep.subr.mxu0 0.0
      %4619 = vmatpush1.msra.mxu0 %v4574
      %4620 = vmatprep.subr.mxu0 0.0
      %4621 = vmatpush1.msra.mxu0 %v4573
      %4622 = vmatprep.subr.mxu0 0.0
      %4623 = vmatpush1.msra.mxu0 %v4572
      %4624 = vmatprep.subr.mxu0 0.0
      %4625 = vmatpush1.msra.mxu0 %v4571
      %4626 = vmatprep.subr.mxu0 0.0
      %4627 = vmatpush1.msra.mxu0 %v4570
      %4628 = vmatprep.subr.mxu0 0.0
      %4629 = vmatpush1.msra.mxu0 %v4569
      %4630 = vmatprep.subr.mxu0 0.0
      %4631 = vmatpush1.msra.mxu0 %v4568
      %4632 = vmatprep.subr.mxu0 0.0
      %4633 = vmatpush1.msra.mxu0 %v4567
      %4634 = vmatprep.subr.mxu0 0.0
      %4635 = vmatpush1.msra.mxu0 %v4566
      %4636 = vmatprep.subr.mxu0 0.0
      %4637 = vmatpush1.msra.mxu0 %v4565
      %4638 = vmatprep.subr.mxu0 0.0
      %4639 = vmatpush1.msra.mxu0 %v4564
      %4640 = vmatprep.subr.mxu0 0.0
      %4641 = vmatpush1.msra.mxu0 %v4563
      %4642 = vmatprep.subr.mxu0 0.0
      %4643 = vmatpush1.msra.mxu0 %v4562
      %4644 = vmatprep.subr.mxu0 0.0
      %4645 = vmatpush2.msra.mxu0 %v4593
      %4646 = vmatprep.subr.mxu0 0.0
      %4647 = vmatpush2.msra.mxu0 %v4592
      %4648 = vmatprep.subr.mxu0 0.0
      %4649 = vmatpush2.msra.mxu0 %v4591
      %4650 = vmatprep.subr.mxu0 0.0
      %4651 = vmatpush2.msra.mxu0 %v4590
      %4652 = vmatprep.subr.mxu0 0.0
      %4653 = vmatpush2.msra.mxu0 %v4589
      %4654 = vmatprep.subr.mxu0 0.0
      %4655 = vmatpush2.msra.mxu0 %v4588
      %4656 = vmatprep.subr.mxu0 0.0
      %4657 = vmatpush2.msra.mxu0 %v4587
      %4658 = vmatprep.subr.mxu0 0.0
      %4659 = vmatpush2.msra.mxu0 %v4586
      %4660 = vmatprep.subr.mxu0 0.0
      %4661 = vmatpush2.msra.mxu0 %v4585
      %4662 = vmatprep.subr.mxu0 0.0
      %4663 = vmatpush2.msra.mxu0 %v4584
      %4664 = vmatprep.subr.mxu0 0.0
      %4665 = vmatpush2.msra.mxu0 %v4583
      %4666 = vmatprep.subr.mxu0 0.0
      %4667 = vmatpush2.msra.mxu0 %v4582
      %4668 = vmatprep.subr.mxu0 0.0
      %4669 = vmatpush2.msra.mxu0 %v4581
      %4670 = vmatprep.subr.mxu0 0.0
      %4671 = vmatpush2.msra.mxu0 %v4580
      %4672 = vmatprep.subr.mxu0 0.0
      %4673 = vmatpush2.msra.mxu0 %v4579
      %4674 = vmatprep.subr.mxu0 0.0
      %4675 = vmatpush2.msra.mxu0 %v4578
      %4676 = vmatprep.mubr.f32.mxu0 %v566
      %4677 = vmatmul.mubr.f32.gmra.mxu0 %v565
      %v4678 = vpop.f32.mrf.mxu0
      %v4679 = vadd.f32 0.0, %v4678
      %v4680 = vpop.f32.mrf.mxu0
      %4681 = vmatprep.mubr.f32.mxu0 %v570
      %4682 = vmatmul.mubr.f32.gmra.mxu0 %v569
      %v4683 = vpop.f32.mrf.mxu0
      %v4684 = vadd.f32 0.0, %v4683
      %v4685 = vpop.f32.mrf.mxu0
      %4686 = vdwg.mxu0
      %4687 = vmatprep.subr.mxu0 0.0
      %4688 = vmatpush1.msra.mxu0 %v4609
      %4689 = vmatprep.subr.mxu0 0.0
      %4690 = vmatpush1.msra.mxu0 %v4608
      %4691 = vmatprep.subr.mxu0 0.0
      %4692 = vmatpush1.msra.mxu0 %v4607
      %4693 = vmatprep.subr.mxu0 0.0
      %4694 = vmatpush1.msra.mxu0 %v4606
      %4695 = vmatprep.subr.mxu0 0.0
      %4696 = vmatpush1.msra.mxu0 %v4605
      %4697 = vmatprep.subr.mxu0 0.0
      %4698 = vmatpush1.msra.mxu0 %v4604
      %4699 = vmatprep.subr.mxu0 0.0
      %4700 = vmatpush1.msra.mxu0 %v4603
      %4701 = vmatprep.subr.mxu0 0.0
      %4702 = vmatpush1.msra.mxu0 %v4602
      %4703 = vmatprep.subr.mxu0 0.0
      %4704 = vmatpush1.msra.mxu0 %v4601
      %4705 = vmatprep.subr.mxu0 0.0
      %4706 = vmatpush1.msra.mxu0 %v4600
      %4707 = vmatprep.subr.mxu0 0.0
      %4708 = vmatpush1.msra.mxu0 %v4599
      %4709 = vmatprep.subr.mxu0 0.0
      %4710 = vmatpush1.msra.mxu0 %v4598
      %4711 = vmatprep.subr.mxu0 0.0
      %4712 = vmatpush1.msra.mxu0 %v4597
      %4713 = vmatprep.subr.mxu0 0.0
      %4714 = vmatpush1.msra.mxu0 %v4596
      %4715 = vmatprep.subr.mxu0 0.0
      %4716 = vmatpush1.msra.mxu0 %v4595
      %4717 = vmatprep.subr.mxu0 0.0
      %4718 = vmatpush1.msra.mxu0 %v4594
      %4719 = vmatprep.subr.mxu0 0.0
      %4720 = vmatpush2.msra.mxu0 0.0
      %4721 = vmatprep.subr.mxu0 0.0
      %4722 = vmatpush2.msra.mxu0 0.0
      %4723 = vmatprep.subr.mxu0 0.0
      %4724 = vmatpush2.msra.mxu0 0.0
      %4725 = vmatprep.subr.mxu0 0.0
      %4726 = vmatpush2.msra.mxu0 0.0
      %4727 = vmatprep.subr.mxu0 0.0
      %4728 = vmatpush2.msra.mxu0 0.0
      %4729 = vmatprep.subr.mxu0 0.0
      %4730 = vmatpush2.msra.mxu0 0.0
      %4731 = vmatprep.subr.mxu0 0.0
      %4732 = vmatpush2.msra.mxu0 0.0
      %4733 = vmatprep.subr.mxu0 0.0
      %4734 = vmatpush2.msra.mxu0 0.0
      %4735 = vmatprep.subr.mxu0 0.0
      %4736 = vmatpush2.msra.mxu0 0.0
      %4737 = vmatprep.subr.mxu0 0.0
      %4738 = vmatpush2.msra.mxu0 0.0
      %4739 = vmatprep.subr.mxu0 0.0
      %4740 = vmatpush2.msra.mxu0 0.0
      %4741 = vmatprep.subr.mxu0 0.0
      %4742 = vmatpush2.msra.mxu0 0.0
      %4743 = vmatprep.subr.mxu0 0.0
      %4744 = vmatpush2.msra.mxu0 0.0
      %4745 = vmatprep.subr.mxu0 0.0
      %4746 = vmatpush2.msra.mxu0 0.0
      %4747 = vmatprep.subr.mxu0 0.0
      %4748 = vmatpush2.msra.mxu0 %v4611
      %4749 = vmatprep.subr.mxu0 0.0
      %4750 = vmatpush2.msra.mxu0 %v4610
      %4751 = vmatprep.mubr.f32.mxu0 %v625
      %4752 = vmatmul.mubr.f32.gmra.mxu0 %v567
      %v4753 = vpop.f32.mrf.mxu0
      %v4754 = vadd.f32 %v4679, %v4753
      %v4755 = vpop.f32.mrf.mxu0
      %4756 = vmatprep.mubr.f32.mxu0 %v628
      %4757 = vmatmul.mubr.f32.gmra.mxu0 %v571
      %v4758 = vpop.f32.mrf.mxu0
      %v4759 = vadd.f32 %v4684, %v4758
      %v4760 = vpop.f32.mrf.mxu0
      %4761 = vdwg.mxu0
      %s4762 = scalar_lea.vmem %s4, 416
      %v4763 = vld [vmem:[%s4762] sm:$0xff]
      %v4764 = vld [vmem:[%s4762 + $0x8] sm:$0xff]
      %v4765 = vld [vmem:[%s4762 + $0x10] sm:$0xff]
      %v4766 = vld [vmem:[%s4762 + $0x18] sm:$0xff]
      %v4768 = vsel %vm623, %v4763, 0
      %v4771 = vsel %vm623, %v4764, 0
      %v4774 = vsel %vm623, %v4765, 0
      %v4777 = vsel %vm623, %v4766, 0
      %4779 = vmatprep.subr.mxu0 0.0
      %4780 = vmatpush1.msra.mxu0 0.0
      %4781 = vmatprep.subr.mxu0 0.0
      %4782 = vmatpush1.msra.mxu0 0.0
      %4783 = vmatprep.subr.mxu0 0.0
      %4784 = vmatpush1.msra.mxu0 0.0
      %4785 = vmatprep.subr.mxu0 0.0
      %4786 = vmatpush1.msra.mxu0 0.0
      %4787 = vmatprep.subr.mxu0 0.0
      %4788 = vmatpush1.msra.mxu0 0.0
      %4789 = vmatprep.subr.mxu0 0.0
      %4790 = vmatpush1.msra.mxu0 0.0
      %4791 = vmatprep.subr.mxu0 0.0
      %4792 = vmatpush1.msra.mxu0 0.0
      %4793 = vmatprep.subr.mxu0 0.0
      %4794 = vmatpush1.msra.mxu0 0.0
      %4795 = vmatprep.subr.mxu0 0.0
      %4796 = vmatpush1.msra.mxu0 0.0
      %4797 = vmatprep.subr.mxu0 0.0
      %4798 = vmatpush1.msra.mxu0 0.0
      %4799 = vmatprep.subr.mxu0 0.0
      %4800 = vmatpush1.msra.mxu0 0.0
      %4801 = vmatprep.subr.mxu0 0.0
      %4802 = vmatpush1.msra.mxu0 0.0
      %4803 = vmatprep.subr.mxu0 0.0
      %4804 = vmatpush1.msra.mxu0 0.0
      %4805 = vmatprep.subr.mxu0 0.0
      %4806 = vmatpush1.msra.mxu0 0.0
      %4807 = vmatprep.subr.mxu0 0.0
      %4808 = vmatpush1.msra.mxu0 %v4759
      %4809 = vmatprep.subr.mxu0 0.0
      %4810 = vmatpush1.msra.mxu0 %v4754
      %4811 = vmatprep.subr.mxu0 0.0
      %4812 = vmatpush2.msra.mxu0 0.0
      %4813 = vmatprep.subr.mxu0 0.0
      %4814 = vmatpush2.msra.mxu0 0.0
      %4815 = vmatprep.subr.mxu0 0.0
      %4816 = vmatpush2.msra.mxu0 0.0
      %4817 = vmatprep.subr.mxu0 0.0
      %4818 = vmatpush2.msra.mxu0 0.0
      %4819 = vmatprep.subr.mxu0 0.0
      %4820 = vmatpush2.msra.mxu0 0.0
      %4821 = vmatprep.subr.mxu0 0.0
      %4822 = vmatpush2.msra.mxu0 0.0
      %4823 = vmatprep.subr.mxu0 0.0
      %4824 = vmatpush2.msra.mxu0 0.0
      %4825 = vmatprep.subr.mxu0 0.0
      %4826 = vmatpush2.msra.mxu0 0.0
      %4827 = vmatprep.subr.mxu0 0.0
      %4828 = vmatpush2.msra.mxu0 0.0
      %4829 = vmatprep.subr.mxu0 0.0
      %4830 = vmatpush2.msra.mxu0 0.0
      %4831 = vmatprep.subr.mxu0 0.0
      %4832 = vmatpush2.msra.mxu0 0.0
      %4833 = vmatprep.subr.mxu0 0.0
      %4834 = vmatpush2.msra.mxu0 0.0
      %4835 = vmatprep.subr.mxu0 0.0
      %4836 = vmatpush2.msra.mxu0 0.0
      %4837 = vmatprep.subr.mxu0 0.0
      %4838 = vmatpush2.msra.mxu0 0.0
      %4839 = vmatprep.subr.mxu0 0.0
      %4840 = vmatpush2.msra.mxu0 0.0
      %4841 = vmatprep.subr.mxu0 0.0
      %4842 = vmatpush2.msra.mxu0 0.0
      %4843 = vmatprep.mubr.f32.mxu0 0.0
      %4844 = vmatmul.mubr.f32.gmra.mxu0 %v4768
      %v4845 = vpop.f32.mrf.mxu0
      %v4846 = vadd.f32 0.0, %v4845
      %v4847 = vpop.f32.mrf.mxu0
      %4848 = vmatprep.mubr.f32.mxu0 0.0
      %4849 = vmatmul.mubr.f32.gmra.mxu0 %v4771
      %v4850 = vpop.f32.mrf.mxu0
      %v4851 = vadd.f32 0.0, %v4850
      %v4852 = vpop.f32.mrf.mxu0
      %4853 = vmatprep.mubr.f32.mxu0 0.0
      %4854 = vmatmul.mubr.f32.gmra.mxu0 %v4774
      %v4855 = vpop.f32.mrf.mxu0
      %v4856 = vadd.f32 0.0, %v4855
      %v4857 = vpop.f32.mrf.mxu0
      %4858 = vmatprep.mubr.f32.mxu0 0.0
      %4859 = vmatmul.mubr.f32.gmra.mxu0 %v4777
      %v4860 = vpop.f32.mrf.mxu0
      %v4861 = vadd.f32 0.0, %v4860
      %v4862 = vpop.f32.mrf.mxu0
      %4863 = vdwg.mxu0
      %v4864 = vadd.f32 %v4557, %v4846
      %v4865 = vadd.f32 %v4558, %v4851
      %v4866 = vadd.f32 %v4559, %v4856
      %v4867 = vadd.f32 %v4560, %v4861
      %s4868 = scalar_lea.vmem %s3, 5600
      %v4869 = vld [vmem:[%s4868] sm:$0xff]
      %v4870 = vld [vmem:[%s4868 + $0x8] sm:$0xff]
      %v4871 = vld [vmem:[%s4868 + $0x10] sm:$0xff]
      %v4872 = vld [vmem:[%s4868 + $0x18] sm:$0xff]
      %v4873 = vld [vmem:[%s4868 + $0x20] sm:$0xff]
      %v4874 = vld [vmem:[%s4868 + $0x28] sm:$0xff]
      %v4875 = vld [vmem:[%s4868 + $0x30] sm:$0xff]
      %v4876 = vld [vmem:[%s4868 + $0x38] sm:$0xff]
      %v4877 = vld [vmem:[%s4868 + $0x40] sm:$0xff]
      %v4878 = vld [vmem:[%s4868 + $0x48] sm:$0xff]
      %v4879 = vld [vmem:[%s4868 + $0x50] sm:$0xff]
      %v4880 = vld [vmem:[%s4868 + $0x58] sm:$0xff]
      %v4881 = vld [vmem:[%s4868 + $0x60] sm:$0xff]
      %v4882 = vld [vmem:[%s4868 + $0x68] sm:$0xff]
      %v4883 = vld [vmem:[%s4868 + $0x70] sm:$0xff]
      %v4884 = vld [vmem:[%s4868 + $0x78] sm:$0xff]
      %v4885 = vld [vmem:[%s4868 + $0x80] sm:$0xff]
      %v4886 = vld [vmem:[%s4868 + $0x88] sm:$0xff]
      %v4887 = vld [vmem:[%s4868 + $0x90] sm:$0xff]
      %v4888 = vld [vmem:[%s4868 + $0x98] sm:$0xff]
      %v4889 = vld [vmem:[%s4868 + $0xa0] sm:$0xff]
      %v4890 = vld [vmem:[%s4868 + $0xa8] sm:$0xff]
      %v4891 = vld [vmem:[%s4868 + $0xb0] sm:$0xff]
      %v4892 = vld [vmem:[%s4868 + $0xb8] sm:$0xff]
      %v4893 = vld [vmem:[%s4868 + $0xc0] sm:$0xff]
      %v4894 = vld [vmem:[%s4868 + $0xc8] sm:$0xff]
      %v4895 = vld [vmem:[%s4868 + $0xd0] sm:$0xff]
      %v4896 = vld [vmem:[%s4868 + $0xd8] sm:$0xff]
      %v4897 = vld [vmem:[%s4868 + $0xe0] sm:$0xff]
      %v4898 = vld [vmem:[%s4868 + $0xe8] sm:$0xff]
      %v4899 = vld [vmem:[%s4868 + $0xf0] sm:$0xff]
      %v4900 = vld [vmem:[%s4868 + $0xf8] sm:$0xff]
      %v4901 = vld [vmem:[%s4868 + $0x100] sm:$0xff]
      %v4902 = vld [vmem:[%s4868 + $0x108] sm:$0xff]
      %v4903 = vld [vmem:[%s4868 + $0x110] sm:$0xff]
      %v4904 = vld [vmem:[%s4868 + $0x118] sm:$0xff]
      %v4905 = vld [vmem:[%s4868 + $0x120] sm:$0xff]
      %v4906 = vld [vmem:[%s4868 + $0x128] sm:$0xff]
      %v4907 = vld [vmem:[%s4868 + $0x130] sm:$0xff]
      %v4908 = vld [vmem:[%s4868 + $0x138] sm:$0xff]
      %v4909 = vld [vmem:[%s4868 + $0x140] sm:$0xff]
      %v4910 = vld [vmem:[%s4868 + $0x148] sm:$0xff]
      %v4911 = vld [vmem:[%s4868 + $0x150] sm:$0xff]
      %v4912 = vld [vmem:[%s4868 + $0x158] sm:$0xff]
      %v4913 = vld [vmem:[%s4868 + $0x160] sm:$0xff]
      %v4914 = vld [vmem:[%s4868 + $0x168] sm:$0xff]
      %v4915 = vld [vmem:[%s4868 + $0x170] sm:$0xff]
      %v4916 = vld [vmem:[%s4868 + $0x178] sm:$0xff]
      %v4917 = vld [vmem:[%s4868 + $0x180] sm:$0xff]
      %v4918 = vld [vmem:[%s4868 + $0x188] sm:$0xff]
      %4919 = vmatprep.subr.mxu0 0.0
      %4920 = vmatpush1.msra.mxu0 %v4884
      %4921 = vmatprep.subr.mxu0 0.0
      %4922 = vmatpush1.msra.mxu0 %v4883
      %4923 = vmatprep.subr.mxu0 0.0
      %4924 = vmatpush1.msra.mxu0 %v4882
      %4925 = vmatprep.subr.mxu0 0.0
      %4926 = vmatpush1.msra.mxu0 %v4881
      %4927 = vmatprep.subr.mxu0 0.0
      %4928 = vmatpush1.msra.mxu0 %v4880
      %4929 = vmatprep.subr.mxu0 0.0
      %4930 = vmatpush1.msra.mxu0 %v4879
      %4931 = vmatprep.subr.mxu0 0.0
      %4932 = vmatpush1.msra.mxu0 %v4878
      %4933 = vmatprep.subr.mxu0 0.0
      %4934 = vmatpush1.msra.mxu0 %v4877
      %4935 = vmatprep.subr.mxu0 0.0
      %4936 = vmatpush1.msra.mxu0 %v4876
      %4937 = vmatprep.subr.mxu0 0.0
      %4938 = vmatpush1.msra.mxu0 %v4875
      %4939 = vmatprep.subr.mxu0 0.0
      %4940 = vmatpush1.msra.mxu0 %v4874
      %4941 = vmatprep.subr.mxu0 0.0
      %4942 = vmatpush1.msra.mxu0 %v4873
      %4943 = vmatprep.subr.mxu0 0.0
      %4944 = vmatpush1.msra.mxu0 %v4872
      %4945 = vmatprep.subr.mxu0 0.0
      %4946 = vmatpush1.msra.mxu0 %v4871
      %4947 = vmatprep.subr.mxu0 0.0
      %4948 = vmatpush1.msra.mxu0 %v4870
      %4949 = vmatprep.subr.mxu0 0.0
      %4950 = vmatpush1.msra.mxu0 %v4869
      %4951 = vmatprep.subr.mxu0 0.0
      %4952 = vmatpush2.msra.mxu0 %v4900
      %4953 = vmatprep.subr.mxu0 0.0
      %4954 = vmatpush2.msra.mxu0 %v4899
      %4955 = vmatprep.subr.mxu0 0.0
      %4956 = vmatpush2.msra.mxu0 %v4898
      %4957 = vmatprep.subr.mxu0 0.0
      %4958 = vmatpush2.msra.mxu0 %v4897
      %4959 = vmatprep.subr.mxu0 0.0
      %4960 = vmatpush2.msra.mxu0 %v4896
      %4961 = vmatprep.subr.mxu0 0.0
      %4962 = vmatpush2.msra.mxu0 %v4895
      %4963 = vmatprep.subr.mxu0 0.0
      %4964 = vmatpush2.msra.mxu0 %v4894
      %4965 = vmatprep.subr.mxu0 0.0
      %4966 = vmatpush2.msra.mxu0 %v4893
      %4967 = vmatprep.subr.mxu0 0.0
      %4968 = vmatpush2.msra.mxu0 %v4892
      %4969 = vmatprep.subr.mxu0 0.0
      %4970 = vmatpush2.msra.mxu0 %v4891
      %4971 = vmatprep.subr.mxu0 0.0
      %4972 = vmatpush2.msra.mxu0 %v4890
      %4973 = vmatprep.subr.mxu0 0.0
      %4974 = vmatpush2.msra.mxu0 %v4889
      %4975 = vmatprep.subr.mxu0 0.0
      %4976 = vmatpush2.msra.mxu0 %v4888
      %4977 = vmatprep.subr.mxu0 0.0
      %4978 = vmatpush2.msra.mxu0 %v4887
      %4979 = vmatprep.subr.mxu0 0.0
      %4980 = vmatpush2.msra.mxu0 %v4886
      %4981 = vmatprep.subr.mxu0 0.0
      %4982 = vmatpush2.msra.mxu0 %v4885
      %4983 = vmatprep.mubr.f32.mxu0 %v566
      %4984 = vmatmul.mubr.f32.gmra.mxu0 %v565
      %v4985 = vpop.f32.mrf.mxu0
      %v4986 = vadd.f32 0.0, %v4985
      %v4987 = vpop.f32.mrf.mxu0
      %4988 = vmatprep.mubr.f32.mxu0 %v570
      %4989 = vmatmul.mubr.f32.gmra.mxu0 %v569
      %v4990 = vpop.f32.mrf.mxu0
      %v4991 = vadd.f32 0.0, %v4990
      %v4992 = vpop.f32.mrf.mxu0
      %4993 = vdwg.mxu0
      %4994 = vmatprep.subr.mxu0 0.0
      %4995 = vmatpush1.msra.mxu0 %v4916
      %4996 = vmatprep.subr.mxu0 0.0
      %4997 = vmatpush1.msra.mxu0 %v4915
      %4998 = vmatprep.subr.mxu0 0.0
      %4999 = vmatpush1.msra.mxu0 %v4914
      %5000 = vmatprep.subr.mxu0 0.0
      %5001 = vmatpush1.msra.mxu0 %v4913
      %5002 = vmatprep.subr.mxu0 0.0
      %5003 = vmatpush1.msra.mxu0 %v4912
      %5004 = vmatprep.subr.mxu0 0.0
      %5005 = vmatpush1.msra.mxu0 %v4911
      %5006 = vmatprep.subr.mxu0 0.0
      %5007 = vmatpush1.msra.mxu0 %v4910
      %5008 = vmatprep.subr.mxu0 0.0
      %5009 = vmatpush1.msra.mxu0 %v4909
      %5010 = vmatprep.subr.mxu0 0.0
      %5011 = vmatpush1.msra.mxu0 %v4908
      %5012 = vmatprep.subr.mxu0 0.0
      %5013 = vmatpush1.msra.mxu0 %v4907
      %5014 = vmatprep.subr.mxu0 0.0
      %5015 = vmatpush1.msra.mxu0 %v4906
      %5016 = vmatprep.subr.mxu0 0.0
      %5017 = vmatpush1.msra.mxu0 %v4905
      %5018 = vmatprep.subr.mxu0 0.0
      %5019 = vmatpush1.msra.mxu0 %v4904
      %5020 = vmatprep.subr.mxu0 0.0
      %5021 = vmatpush1.msra.mxu0 %v4903
      %5022 = vmatprep.subr.mxu0 0.0
      %5023 = vmatpush1.msra.mxu0 %v4902
      %5024 = vmatprep.subr.mxu0 0.0
      %5025 = vmatpush1.msra.mxu0 %v4901
      %5026 = vmatprep.subr.mxu0 0.0
      %5027 = vmatpush2.msra.mxu0 0.0
      %5028 = vmatprep.subr.mxu0 0.0
      %5029 = vmatpush2.msra.mxu0 0.0
      %5030 = vmatprep.subr.mxu0 0.0
      %5031 = vmatpush2.msra.mxu0 0.0
      %5032 = vmatprep.subr.mxu0 0.0
      %5033 = vmatpush2.msra.mxu0 0.0
      %5034 = vmatprep.subr.mxu0 0.0
      %5035 = vmatpush2.msra.mxu0 0.0
      %5036 = vmatprep.subr.mxu0 0.0
      %5037 = vmatpush2.msra.mxu0 0.0
      %5038 = vmatprep.subr.mxu0 0.0
      %5039 = vmatpush2.msra.mxu0 0.0
      %5040 = vmatprep.subr.mxu0 0.0
      %5041 = vmatpush2.msra.mxu0 0.0
      %5042 = vmatprep.subr.mxu0 0.0
      %5043 = vmatpush2.msra.mxu0 0.0
      %5044 = vmatprep.subr.mxu0 0.0
      %5045 = vmatpush2.msra.mxu0 0.0
      %5046 = vmatprep.subr.mxu0 0.0
      %5047 = vmatpush2.msra.mxu0 0.0
      %5048 = vmatprep.subr.mxu0 0.0
      %5049 = vmatpush2.msra.mxu0 0.0
      %5050 = vmatprep.subr.mxu0 0.0
      %5051 = vmatpush2.msra.mxu0 0.0
      %5052 = vmatprep.subr.mxu0 0.0
      %5053 = vmatpush2.msra.mxu0 0.0
      %5054 = vmatprep.subr.mxu0 0.0
      %5055 = vmatpush2.msra.mxu0 %v4918
      %5056 = vmatprep.subr.mxu0 0.0
      %5057 = vmatpush2.msra.mxu0 %v4917
      %5058 = vmatprep.mubr.f32.mxu0 %v625
      %5059 = vmatmul.mubr.f32.gmra.mxu0 %v567
      %v5060 = vpop.f32.mrf.mxu0
      %v5061 = vadd.f32 %v4986, %v5060
      %v5062 = vpop.f32.mrf.mxu0
      %5063 = vmatprep.mubr.f32.mxu0 %v628
      %5064 = vmatmul.mubr.f32.gmra.mxu0 %v571
      %v5065 = vpop.f32.mrf.mxu0
      %v5066 = vadd.f32 %v4991, %v5065
      %v5067 = vpop.f32.mrf.mxu0
      %5068 = vdwg.mxu0
      %s5069 = scalar_lea.vmem %s4, 448
      %v5070 = vld [vmem:[%s5069] sm:$0xff]
      %v5071 = vld [vmem:[%s5069 + $0x8] sm:$0xff]
      %v5072 = vld [vmem:[%s5069 + $0x10] sm:$0xff]
      %v5073 = vld [vmem:[%s5069 + $0x18] sm:$0xff]
      %v5075 = vsel %vm623, %v5070, 0
      %v5078 = vsel %vm623, %v5071, 0
      %v5081 = vsel %vm623, %v5072, 0
      %v5084 = vsel %vm623, %v5073, 0
      %5086 = vmatprep.subr.mxu0 0.0
      %5087 = vmatpush1.msra.mxu0 0.0
      %5088 = vmatprep.subr.mxu0 0.0
      %5089 = vmatpush1.msra.mxu0 0.0
      %5090 = vmatprep.subr.mxu0 0.0
      %5091 = vmatpush1.msra.mxu0 0.0
      %5092 = vmatprep.subr.mxu0 0.0
      %5093 = vmatpush1.msra.mxu0 0.0
      %5094 = vmatprep.subr.mxu0 0.0
      %5095 = vmatpush1.msra.mxu0 0.0
      %5096 = vmatprep.subr.mxu0 0.0
      %5097 = vmatpush1.msra.mxu0 0.0
      %5098 = vmatprep.subr.mxu0 0.0
      %5099 = vmatpush1.msra.mxu0 0.0
      %5100 = vmatprep.subr.mxu0 0.0
      %5101 = vmatpush1.msra.mxu0 0.0
      %5102 = vmatprep.subr.mxu0 0.0
      %5103 = vmatpush1.msra.mxu0 0.0
      %5104 = vmatprep.subr.mxu0 0.0
      %5105 = vmatpush1.msra.mxu0 0.0
      %5106 = vmatprep.subr.mxu0 0.0
      %5107 = vmatpush1.msra.mxu0 0.0
      %5108 = vmatprep.subr.mxu0 0.0
      %5109 = vmatpush1.msra.mxu0 0.0
      %5110 = vmatprep.subr.mxu0 0.0
      %5111 = vmatpush1.msra.mxu0 0.0
      %5112 = vmatprep.subr.mxu0 0.0
      %5113 = vmatpush1.msra.mxu0 0.0
      %5114 = vmatprep.subr.mxu0 0.0
      %5115 = vmatpush1.msra.mxu0 %v5066
      %5116 = vmatprep.subr.mxu0 0.0
      %5117 = vmatpush1.msra.mxu0 %v5061
      %5118 = vmatprep.subr.mxu0 0.0
      %5119 = vmatpush2.msra.mxu0 0.0
      %5120 = vmatprep.subr.mxu0 0.0
      %5121 = vmatpush2.msra.mxu0 0.0
      %5122 = vmatprep.subr.mxu0 0.0
      %5123 = vmatpush2.msra.mxu0 0.0
      %5124 = vmatprep.subr.mxu0 0.0
      %5125 = vmatpush2.msra.mxu0 0.0
      %5126 = vmatprep.subr.mxu0 0.0
      %5127 = vmatpush2.msra.mxu0 0.0
      %5128 = vmatprep.subr.mxu0 0.0
      %5129 = vmatpush2.msra.mxu0 0.0
      %5130 = vmatprep.subr.mxu0 0.0
      %5131 = vmatpush2.msra.mxu0 0.0
      %5132 = vmatprep.subr.mxu0 0.0
      %5133 = vmatpush2.msra.mxu0 0.0
      %5134 = vmatprep.subr.mxu0 0.0
      %5135 = vmatpush2.msra.mxu0 0.0
      %5136 = vmatprep.subr.mxu0 0.0
      %5137 = vmatpush2.msra.mxu0 0.0
      %5138 = vmatprep.subr.mxu0 0.0
      %5139 = vmatpush2.msra.mxu0 0.0
      %5140 = vmatprep.subr.mxu0 0.0
      %5141 = vmatpush2.msra.mxu0 0.0
      %5142 = vmatprep.subr.mxu0 0.0
      %5143 = vmatpush2.msra.mxu0 0.0
      %5144 = vmatprep.subr.mxu0 0.0
      %5145 = vmatpush2.msra.mxu0 0.0
      %5146 = vmatprep.subr.mxu0 0.0
      %5147 = vmatpush2.msra.mxu0 0.0
      %5148 = vmatprep.subr.mxu0 0.0
      %5149 = vmatpush2.msra.mxu0 0.0
      %5150 = vmatprep.mubr.f32.mxu0 0.0
      %5151 = vmatmul.mubr.f32.gmra.mxu0 %v5075
      %v5152 = vpop.f32.mrf.mxu0
      %v5153 = vadd.f32 0.0, %v5152
      %v5154 = vpop.f32.mrf.mxu0
      %5155 = vmatprep.mubr.f32.mxu0 0.0
      %5156 = vmatmul.mubr.f32.gmra.mxu0 %v5078
      %v5157 = vpop.f32.mrf.mxu0
      %v5158 = vadd.f32 0.0, %v5157
      %v5159 = vpop.f32.mrf.mxu0
      %5160 = vmatprep.mubr.f32.mxu0 0.0
      %5161 = vmatmul.mubr.f32.gmra.mxu0 %v5081
      %v5162 = vpop.f32.mrf.mxu0
      %v5163 = vadd.f32 0.0, %v5162
      %v5164 = vpop.f32.mrf.mxu0
      %5165 = vmatprep.mubr.f32.mxu0 0.0
      %5166 = vmatmul.mubr.f32.gmra.mxu0 %v5084
      %v5167 = vpop.f32.mrf.mxu0
      %v5168 = vadd.f32 0.0, %v5167
      %v5169 = vpop.f32.mrf.mxu0
      %5170 = vdwg.mxu0
      %v5171 = vadd.f32 %v4864, %v5153
      %v5172 = vadd.f32 %v4865, %v5158
      %v5173 = vadd.f32 %v4866, %v5163
      %v5174 = vadd.f32 %v4867, %v5168
      %s5175 = scalar_lea.vmem %s3, 6000
      %v5176 = vld [vmem:[%s5175] sm:$0xff]
      %v5177 = vld [vmem:[%s5175 + $0x8] sm:$0xff]
      %v5178 = vld [vmem:[%s5175 + $0x10] sm:$0xff]
      %v5179 = vld [vmem:[%s5175 + $0x18] sm:$0xff]
      %v5180 = vld [vmem:[%s5175 + $0x20] sm:$0xff]
      %v5181 = vld [vmem:[%s5175 + $0x28] sm:$0xff]
      %v5182 = vld [vmem:[%s5175 + $0x30] sm:$0xff]
      %v5183 = vld [vmem:[%s5175 + $0x38] sm:$0xff]
      %v5184 = vld [vmem:[%s5175 + $0x40] sm:$0xff]
      %v5185 = vld [vmem:[%s5175 + $0x48] sm:$0xff]
      %v5186 = vld [vmem:[%s5175 + $0x50] sm:$0xff]
      %v5187 = vld [vmem:[%s5175 + $0x58] sm:$0xff]
      %v5188 = vld [vmem:[%s5175 + $0x60] sm:$0xff]
      %v5189 = vld [vmem:[%s5175 + $0x68] sm:$0xff]
      %v5190 = vld [vmem:[%s5175 + $0x70] sm:$0xff]
      %v5191 = vld [vmem:[%s5175 + $0x78] sm:$0xff]
      %v5192 = vld [vmem:[%s5175 + $0x80] sm:$0xff]
      %v5193 = vld [vmem:[%s5175 + $0x88] sm:$0xff]
      %v5194 = vld [vmem:[%s5175 + $0x90] sm:$0xff]
      %v5195 = vld [vmem:[%s5175 + $0x98] sm:$0xff]
      %v5196 = vld [vmem:[%s5175 + $0xa0] sm:$0xff]
      %v5197 = vld [vmem:[%s5175 + $0xa8] sm:$0xff]
      %v5198 = vld [vmem:[%s5175 + $0xb0] sm:$0xff]
      %v5199 = vld [vmem:[%s5175 + $0xb8] sm:$0xff]
      %v5200 = vld [vmem:[%s5175 + $0xc0] sm:$0xff]
      %v5201 = vld [vmem:[%s5175 + $0xc8] sm:$0xff]
      %v5202 = vld [vmem:[%s5175 + $0xd0] sm:$0xff]
      %v5203 = vld [vmem:[%s5175 + $0xd8] sm:$0xff]
      %v5204 = vld [vmem:[%s5175 + $0xe0] sm:$0xff]
      %v5205 = vld [vmem:[%s5175 + $0xe8] sm:$0xff]
      %v5206 = vld [vmem:[%s5175 + $0xf0] sm:$0xff]
      %v5207 = vld [vmem:[%s5175 + $0xf8] sm:$0xff]
      %v5208 = vld [vmem:[%s5175 + $0x100] sm:$0xff]
      %v5209 = vld [vmem:[%s5175 + $0x108] sm:$0xff]
      %v5210 = vld [vmem:[%s5175 + $0x110] sm:$0xff]
      %v5211 = vld [vmem:[%s5175 + $0x118] sm:$0xff]
      %v5212 = vld [vmem:[%s5175 + $0x120] sm:$0xff]
      %v5213 = vld [vmem:[%s5175 + $0x128] sm:$0xff]
      %v5214 = vld [vmem:[%s5175 + $0x130] sm:$0xff]
      %v5215 = vld [vmem:[%s5175 + $0x138] sm:$0xff]
      %v5216 = vld [vmem:[%s5175 + $0x140] sm:$0xff]
      %v5217 = vld [vmem:[%s5175 + $0x148] sm:$0xff]
      %v5218 = vld [vmem:[%s5175 + $0x150] sm:$0xff]
      %v5219 = vld [vmem:[%s5175 + $0x158] sm:$0xff]
      %v5220 = vld [vmem:[%s5175 + $0x160] sm:$0xff]
      %v5221 = vld [vmem:[%s5175 + $0x168] sm:$0xff]
      %v5222 = vld [vmem:[%s5175 + $0x170] sm:$0xff]
      %v5223 = vld [vmem:[%s5175 + $0x178] sm:$0xff]
      %v5224 = vld [vmem:[%s5175 + $0x180] sm:$0xff]
      %v5225 = vld [vmem:[%s5175 + $0x188] sm:$0xff]
      %5226 = vmatprep.subr.mxu0 0.0
      %5227 = vmatpush1.msra.mxu0 %v5191
      %5228 = vmatprep.subr.mxu0 0.0
      %5229 = vmatpush1.msra.mxu0 %v5190
      %5230 = vmatprep.subr.mxu0 0.0
      %5231 = vmatpush1.msra.mxu0 %v5189
      %5232 = vmatprep.subr.mxu0 0.0
      %5233 = vmatpush1.msra.mxu0 %v5188
      %5234 = vmatprep.subr.mxu0 0.0
      %5235 = vmatpush1.msra.mxu0 %v5187
      %5236 = vmatprep.subr.mxu0 0.0
      %5237 = vmatpush1.msra.mxu0 %v5186
      %5238 = vmatprep.subr.mxu0 0.0
      %5239 = vmatpush1.msra.mxu0 %v5185
      %5240 = vmatprep.subr.mxu0 0.0
      %5241 = vmatpush1.msra.mxu0 %v5184
      %5242 = vmatprep.subr.mxu0 0.0
      %5243 = vmatpush1.msra.mxu0 %v5183
      %5244 = vmatprep.subr.mxu0 0.0
      %5245 = vmatpush1.msra.mxu0 %v5182
      %5246 = vmatprep.subr.mxu0 0.0
      %5247 = vmatpush1.msra.mxu0 %v5181
      %5248 = vmatprep.subr.mxu0 0.0
      %5249 = vmatpush1.msra.mxu0 %v5180
      %5250 = vmatprep.subr.mxu0 0.0
      %5251 = vmatpush1.msra.mxu0 %v5179
      %5252 = vmatprep.subr.mxu0 0.0
      %5253 = vmatpush1.msra.mxu0 %v5178
      %5254 = vmatprep.subr.mxu0 0.0
      %5255 = vmatpush1.msra.mxu0 %v5177
      %5256 = vmatprep.subr.mxu0 0.0
      %5257 = vmatpush1.msra.mxu0 %v5176
      %5258 = vmatprep.subr.mxu0 0.0
      %5259 = vmatpush2.msra.mxu0 %v5207
      %5260 = vmatprep.subr.mxu0 0.0
      %5261 = vmatpush2.msra.mxu0 %v5206
      %5262 = vmatprep.subr.mxu0 0.0
      %5263 = vmatpush2.msra.mxu0 %v5205
      %5264 = vmatprep.subr.mxu0 0.0
      %5265 = vmatpush2.msra.mxu0 %v5204
      %5266 = vmatprep.subr.mxu0 0.0
      %5267 = vmatpush2.msra.mxu0 %v5203
      %5268 = vmatprep.subr.mxu0 0.0
      %5269 = vmatpush2.msra.mxu0 %v5202
      %5270 = vmatprep.subr.mxu0 0.0
      %5271 = vmatpush2.msra.mxu0 %v5201
      %5272 = vmatprep.subr.mxu0 0.0
      %5273 = vmatpush2.msra.mxu0 %v5200
      %5274 = vmatprep.subr.mxu0 0.0
      %5275 = vmatpush2.msra.mxu0 %v5199
      %5276 = vmatprep.subr.mxu0 0.0
      %5277 = vmatpush2.msra.mxu0 %v5198
      %5278 = vmatprep.subr.mxu0 0.0
      %5279 = vmatpush2.msra.mxu0 %v5197
      %5280 = vmatprep.subr.mxu0 0.0
      %5281 = vmatpush2.msra.mxu0 %v5196
      %5282 = vmatprep.subr.mxu0 0.0
      %5283 = vmatpush2.msra.mxu0 %v5195
      %5284 = vmatprep.subr.mxu0 0.0
      %5285 = vmatpush2.msra.mxu0 %v5194
      %5286 = vmatprep.subr.mxu0 0.0
      %5287 = vmatpush2.msra.mxu0 %v5193
      %5288 = vmatprep.subr.mxu0 0.0
      %5289 = vmatpush2.msra.mxu0 %v5192
      %5290 = vmatprep.mubr.f32.mxu0 %v566
      %5291 = vmatmul.mubr.f32.gmra.mxu0 %v565
      %v5292 = vpop.f32.mrf.mxu0
      %v5293 = vadd.f32 0.0, %v5292
      %v5294 = vpop.f32.mrf.mxu0
      %5295 = vmatprep.mubr.f32.mxu0 %v570
      %5296 = vmatmul.mubr.f32.gmra.mxu0 %v569
      %v5297 = vpop.f32.mrf.mxu0
      %v5298 = vadd.f32 0.0, %v5297
      %v5299 = vpop.f32.mrf.mxu0
      %5300 = vdwg.mxu0
      %5301 = vmatprep.subr.mxu0 0.0
      %5302 = vmatpush1.msra.mxu0 %v5223
      %5303 = vmatprep.subr.mxu0 0.0
      %5304 = vmatpush1.msra.mxu0 %v5222
      %5305 = vmatprep.subr.mxu0 0.0
      %5306 = vmatpush1.msra.mxu0 %v5221
      %5307 = vmatprep.subr.mxu0 0.0
      %5308 = vmatpush1.msra.mxu0 %v5220
      %5309 = vmatprep.subr.mxu0 0.0
      %5310 = vmatpush1.msra.mxu0 %v5219
      %5311 = vmatprep.subr.mxu0 0.0
      %5312 = vmatpush1.msra.mxu0 %v5218
      %5313 = vmatprep.subr.mxu0 0.0
      %5314 = vmatpush1.msra.mxu0 %v5217
      %5315 = vmatprep.subr.mxu0 0.0
      %5316 = vmatpush1.msra.mxu0 %v5216
      %5317 = vmatprep.subr.mxu0 0.0
      %5318 = vmatpush1.msra.mxu0 %v5215
      %5319 = vmatprep.subr.mxu0 0.0
      %5320 = vmatpush1.msra.mxu0 %v5214
      %5321 = vmatprep.subr.mxu0 0.0
      %5322 = vmatpush1.msra.mxu0 %v5213
      %5323 = vmatprep.subr.mxu0 0.0
      %5324 = vmatpush1.msra.mxu0 %v5212
      %5325 = vmatprep.subr.mxu0 0.0
      %5326 = vmatpush1.msra.mxu0 %v5211
      %5327 = vmatprep.subr.mxu0 0.0
      %5328 = vmatpush1.msra.mxu0 %v5210
      %5329 = vmatprep.subr.mxu0 0.0
      %5330 = vmatpush1.msra.mxu0 %v5209
      %5331 = vmatprep.subr.mxu0 0.0
      %5332 = vmatpush1.msra.mxu0 %v5208
      %5333 = vmatprep.subr.mxu0 0.0
      %5334 = vmatpush2.msra.mxu0 0.0
      %5335 = vmatprep.subr.mxu0 0.0
      %5336 = vmatpush2.msra.mxu0 0.0
      %5337 = vmatprep.subr.mxu0 0.0
      %5338 = vmatpush2.msra.mxu0 0.0
      %5339 = vmatprep.subr.mxu0 0.0
      %5340 = vmatpush2.msra.mxu0 0.0
      %5341 = vmatprep.subr.mxu0 0.0
      %5342 = vmatpush2.msra.mxu0 0.0
      %5343 = vmatprep.subr.mxu0 0.0
      %5344 = vmatpush2.msra.mxu0 0.0
      %5345 = vmatprep.subr.mxu0 0.0
      %5346 = vmatpush2.msra.mxu0 0.0
      %5347 = vmatprep.subr.mxu0 0.0
      %5348 = vmatpush2.msra.mxu0 0.0
      %5349 = vmatprep.subr.mxu0 0.0
      %5350 = vmatpush2.msra.mxu0 0.0
      %5351 = vmatprep.subr.mxu0 0.0
      %5352 = vmatpush2.msra.mxu0 0.0
      %5353 = vmatprep.subr.mxu0 0.0
      %5354 = vmatpush2.msra.mxu0 0.0
      %5355 = vmatprep.subr.mxu0 0.0
      %5356 = vmatpush2.msra.mxu0 0.0
      %5357 = vmatprep.subr.mxu0 0.0
      %5358 = vmatpush2.msra.mxu0 0.0
      %5359 = vmatprep.subr.mxu0 0.0
      %5360 = vmatpush2.msra.mxu0 0.0
      %5361 = vmatprep.subr.mxu0 0.0
      %5362 = vmatpush2.msra.mxu0 %v5225
      %5363 = vmatprep.subr.mxu0 0.0
      %5364 = vmatpush2.msra.mxu0 %v5224
      %5365 = vmatprep.mubr.f32.mxu0 %v625
      %5366 = vmatmul.mubr.f32.gmra.mxu0 %v567
      %v5367 = vpop.f32.mrf.mxu0
      %v5368 = vadd.f32 %v5293, %v5367
      %v5369 = vpop.f32.mrf.mxu0
      %5370 = vmatprep.mubr.f32.mxu0 %v628
      %5371 = vmatmul.mubr.f32.gmra.mxu0 %v571
      %v5372 = vpop.f32.mrf.mxu0
      %v5373 = vadd.f32 %v5298, %v5372
      %v5374 = vpop.f32.mrf.mxu0
      %5375 = vdwg.mxu0
      %s5376 = scalar_lea.vmem %s4, 480
      %v5377 = vld [vmem:[%s5376] sm:$0xff]
      %v5378 = vld [vmem:[%s5376 + $0x8] sm:$0xff]
      %v5379 = vld [vmem:[%s5376 + $0x10] sm:$0xff]
      %v5380 = vld [vmem:[%s5376 + $0x18] sm:$0xff]
      %v5382 = vsel %vm623, %v5377, 0
      %v5385 = vsel %vm623, %v5378, 0
      %v5388 = vsel %vm623, %v5379, 0
      %v5391 = vsel %vm623, %v5380, 0
      %5393 = vmatprep.subr.mxu0 0.0
      %5394 = vmatpush1.msra.mxu0 0.0
      %5395 = vmatprep.subr.mxu0 0.0
      %5396 = vmatpush1.msra.mxu0 0.0
      %5397 = vmatprep.subr.mxu0 0.0
      %5398 = vmatpush1.msra.mxu0 0.0
      %5399 = vmatprep.subr.mxu0 0.0
      %5400 = vmatpush1.msra.mxu0 0.0
      %5401 = vmatprep.subr.mxu0 0.0
      %5402 = vmatpush1.msra.mxu0 0.0
      %5403 = vmatprep.subr.mxu0 0.0
      %5404 = vmatpush1.msra.mxu0 0.0
      %5405 = vmatprep.subr.mxu0 0.0
      %5406 = vmatpush1.msra.mxu0 0.0
      %5407 = vmatprep.subr.mxu0 0.0
      %5408 = vmatpush1.msra.mxu0 0.0
      %5409 = vmatprep.subr.mxu0 0.0
      %5410 = vmatpush1.msra.mxu0 0.0
      %5411 = vmatprep.subr.mxu0 0.0
      %5412 = vmatpush1.msra.mxu0 0.0
      %5413 = vmatprep.subr.mxu0 0.0
      %5414 = vmatpush1.msra.mxu0 0.0
      %5415 = vmatprep.subr.mxu0 0.0
      %5416 = vmatpush1.msra.mxu0 0.0
      %5417 = vmatprep.subr.mxu0 0.0
      %5418 = vmatpush1.msra.mxu0 0.0
      %5419 = vmatprep.subr.mxu0 0.0
      %5420 = vmatpush1.msra.mxu0 0.0
      %5421 = vmatprep.subr.mxu0 0.0
      %5422 = vmatpush1.msra.mxu0 %v5373
      %5423 = vmatprep.subr.mxu0 0.0
      %5424 = vmatpush1.msra.mxu0 %v5368
      %5425 = vmatprep.subr.mxu0 0.0
      %5426 = vmatpush2.msra.mxu0 0.0
      %5427 = vmatprep.subr.mxu0 0.0
      %5428 = vmatpush2.msra.mxu0 0.0
      %5429 = vmatprep.subr.mxu0 0.0
      %5430 = vmatpush2.msra.mxu0 0.0
      %5431 = vmatprep.subr.mxu0 0.0
      %5432 = vmatpush2.msra.mxu0 0.0
      %5433 = vmatprep.subr.mxu0 0.0
      %5434 = vmatpush2.msra.mxu0 0.0
      %5435 = vmatprep.subr.mxu0 0.0
      %5436 = vmatpush2.msra.mxu0 0.0
      %5437 = vmatprep.subr.mxu0 0.0
      %5438 = vmatpush2.msra.mxu0 0.0
      %5439 = vmatprep.subr.mxu0 0.0
      %5440 = vmatpush2.msra.mxu0 0.0
      %5441 = vmatprep.subr.mxu0 0.0
      %5442 = vmatpush2.msra.mxu0 0.0
      %5443 = vmatprep.subr.mxu0 0.0
      %5444 = vmatpush2.msra.mxu0 0.0
      %5445 = vmatprep.subr.mxu0 0.0
      %5446 = vmatpush2.msra.mxu0 0.0
      %5447 = vmatprep.subr.mxu0 0.0
      %5448 = vmatpush2.msra.mxu0 0.0
      %5449 = vmatprep.subr.mxu0 0.0
      %5450 = vmatpush2.msra.mxu0 0.0
      %5451 = vmatprep.subr.mxu0 0.0
      %5452 = vmatpush2.msra.mxu0 0.0
      %5453 = vmatprep.subr.mxu0 0.0
      %5454 = vmatpush2.msra.mxu0 0.0
      %5455 = vmatprep.subr.mxu0 0.0
      %5456 = vmatpush2.msra.mxu0 0.0
      %5457 = vmatprep.mubr.f32.mxu0 0.0
      %5458 = vmatmul.mubr.f32.gmra.mxu0 %v5382
      %v5459 = vpop.f32.mrf.mxu0
      %v5460 = vadd.f32 0.0, %v5459
      %v5461 = vpop.f32.mrf.mxu0
      %5462 = vmatprep.mubr.f32.mxu0 0.0
      %5463 = vmatmul.mubr.f32.gmra.mxu0 %v5385
      %v5464 = vpop.f32.mrf.mxu0
      %v5465 = vadd.f32 0.0, %v5464
      %v5466 = vpop.f32.mrf.mxu0
      %5467 = vmatprep.mubr.f32.mxu0 0.0
      %5468 = vmatmul.mubr.f32.gmra.mxu0 %v5388
      %v5469 = vpop.f32.mrf.mxu0
      %v5470 = vadd.f32 0.0, %v5469
      %v5471 = vpop.f32.mrf.mxu0
      %5472 = vmatprep.mubr.f32.mxu0 0.0
      %5473 = vmatmul.mubr.f32.gmra.mxu0 %v5391
      %v5474 = vpop.f32.mrf.mxu0
      %v5475 = vadd.f32 0.0, %v5474
      %v5476 = vpop.f32.mrf.mxu0
      %5477 = vdwg.mxu0
      %v5478 = vadd.f32 %v5171, %v5460
      %v5479 = vadd.f32 %v5172, %v5465
      %v5480 = vadd.f32 %v5173, %v5470
      %v5481 = vadd.f32 %v5174, %v5475
      %v5482 = vld [vmem:[%s5] sm:$0xff]
      %v5483 = vld [vmem:[%s5 + $0x8] sm:$0xff]
      %v5484 = vld [vmem:[%s5 + $0x10] sm:$0xff]
      %v5485 = vld [vmem:[%s5 + $0x18] sm:$0xff]
      %5487 = vset.pattern.permute.xlu0 0
      %5488 = vperm.xlu0 %5487, %v5482
      %v5489 = vpop.permute.xlu0 %5488
      %5492 = vset.pattern.permute.xlu0 0
      %5493 = vperm.xlu0 %5492, %v5483
      %v5494 = vpop.permute.xlu0 %5493
      %5497 = vset.pattern.permute.xlu0 0
      %5498 = vperm.xlu0 %5497, %v5484
      %v5499 = vpop.permute.xlu0 %5498
      %5502 = vset.pattern.permute.xlu0 0
      %5503 = vperm.xlu0 %5502, %v5485
      %v5504 = vpop.permute.xlu0 %5503
      %v5506 = vadd.f32 %v5478, %v5489
      %v5507 = vadd.f32 %v5479, %v5494
      %v5508 = vadd.f32 %v5480, %v5499
      %v5509 = vadd.f32 %v5481, %v5504
      %v5510 = vmax.f32 %v5506, 0.0
      %v5511 = vmax.f32 %v5507, 0.0
      %v5512 = vmax.f32 %v5508, 0.0
      %v5513 = vmax.f32 %v5509, 0.0
      %v5514 = vld [vmem:[%s6] sm:$0xff]
      %v5515 = vld [vmem:[%s6 + $0x8] sm:$0xff]
      %v5516 = vld [vmem:[%s6 + $0x10] sm:$0xff]
      %v5517 = vld [vmem:[%s6 + $0x18] sm:$0xff]
      %v5518 = vld [vmem:[%s6 + $0x20] sm:$0xff]
      %v5519 = vld [vmem:[%s6 + $0x28] sm:$0xff]
      %v5520 = vld [vmem:[%s6 + $0x30] sm:$0xff]
      %v5521 = vld [vmem:[%s6 + $0x38] sm:$0xff]
      %v5522 = vld [vmem:[%s6 + $0x40] sm:$0xff]
      %v5523 = vld [vmem:[%s6 + $0x48] sm:$0xff]
      %v5524 = vld [vmem:[%s6 + $0x50] sm:$0xff]
      %v5525 = vld [vmem:[%s6 + $0x58] sm:$0xff]
      %v5526 = vld [vmem:[%s6 + $0x60] sm:$0xff]
      %v5527 = vld [vmem:[%s6 + $0x68] sm:$0xff]
      %v5528 = vld [vmem:[%s6 + $0x70] sm:$0xff]
      %v5529 = vld [vmem:[%s6 + $0x78] sm:$0xff]
      %v5530 = vld [vmem:[%s6 + $0x80] sm:$0xff]
      %v5531 = vld [vmem:[%s6 + $0x88] sm:$0xff]
      %v5532 = vld [vmem:[%s6 + $0x90] sm:$0xff]
      %v5533 = vld [vmem:[%s6 + $0x98] sm:$0xff]
      %v5534 = vld [vmem:[%s6 + $0xa0] sm:$0x1]
      %v5535 = vld [vmem:[%s6 + $0xa8] sm:$0x1]
      %s5536 = scalar_lea.vmem %s6, 176
      %v5537 = vld [vmem:[%s5536] sm:$0xff]
      %v5538 = vld [vmem:[%s5536 + $0x8] sm:$0xff]
      %v5539 = vld [vmem:[%s5536 + $0x10] sm:$0xff]
      %v5540 = vld [vmem:[%s5536 + $0x18] sm:$0xff]
      %v5541 = vld [vmem:[%s5536 + $0x20] sm:$0xff]
      %v5542 = vld [vmem:[%s5536 + $0x28] sm:$0xff]
      %v5543 = vld [vmem:[%s5536 + $0x30] sm:$0xff]
      %v5544 = vld [vmem:[%s5536 + $0x38] sm:$0xff]
      %v5545 = vld [vmem:[%s5536 + $0x40] sm:$0xff]
      %v5546 = vld [vmem:[%s5536 + $0x48] sm:$0xff]
      %v5547 = vld [vmem:[%s5536 + $0x50] sm:$0xff]
      %v5548 = vld [vmem:[%s5536 + $0x58] sm:$0xff]
      %v5549 = vld [vmem:[%s5536 + $0x60] sm:$0xff]
      %v5550 = vld [vmem:[%s5536 + $0x68] sm:$0xff]
      %v5551 = vld [vmem:[%s5536 + $0x70] sm:$0xff]
      %v5552 = vld [vmem:[%s5536 + $0x78] sm:$0xff]
      %v5553 = vld [vmem:[%s5536 + $0x80] sm:$0xff]
      %v5554 = vld [vmem:[%s5536 + $0x88] sm:$0xff]
      %v5555 = vld [vmem:[%s5536 + $0x90] sm:$0xff]
      %v5556 = vld [vmem:[%s5536 + $0x98] sm:$0xff]
      %v5557 = vld [vmem:[%s5536 + $0xa0] sm:$0x1]
      %v5558 = vld [vmem:[%s5536 + $0xa8] sm:$0x1]
      %v5560 = vrot.slane %v5510, 1
      %vm5561 = vcmask 662528
      %v5562 = vsel %vm5561, %v5560, 0
      %vm5564 = vcmask 1040384
      %v5566 = vsel %vm5564, %v5557, 0
      %v5569 = vsel %vm5564, %v5558, 0
      %5571 = vmatprep.subr.mxu0 0.0
      %5572 = vmatpush1.msra.mxu0 0.0
      %5573 = vmatprep.subr.mxu0 0.0
      %5574 = vmatpush1.msra.mxu0 0.0
      %5575 = vmatprep.subr.mxu0 0.0
      %5576 = vmatpush1.msra.mxu0 0.0
      %5577 = vmatprep.subr.mxu0 0.0
      %5578 = vmatpush1.msra.mxu0 0.0
      %5579 = vmatprep.subr.mxu0 0.0
      %5580 = vmatpush1.msra.mxu0 0.0
      %5581 = vmatprep.subr.mxu0 %v5569
      %5582 = vmatpush1.msra.mxu0 %v5566
      %5583 = vmatprep.subr.mxu0 %v5556
      %5584 = vmatpush1.msra.mxu0 %v5555
      %5585 = vmatprep.subr.mxu0 %v5554
      %5586 = vmatpush1.msra.mxu0 %v5553
      %5587 = vmatprep.subr.mxu0 %v5552
      %5588 = vmatpush1.msra.mxu0 %v5551
      %5589 = vmatprep.subr.mxu0 %v5550
      %5590 = vmatpush1.msra.mxu0 %v5549
      %5591 = vmatprep.subr.mxu0 %v5548
      %5592 = vmatpush1.msra.mxu0 %v5547
      %5593 = vmatprep.subr.mxu0 %v5546
      %5594 = vmatpush1.msra.mxu0 %v5545
      %5595 = vmatprep.subr.mxu0 %v5544
      %5596 = vmatpush1.msra.mxu0 %v5543
      %5597 = vmatprep.subr.mxu0 %v5542
      %5598 = vmatpush1.msra.mxu0 %v5541
      %5599 = vmatprep.subr.mxu0 %v5540
      %5600 = vmatpush1.msra.mxu0 %v5539
      %5601 = vmatprep.subr.mxu0 %v5538
      %5602 = vmatpush1.msra.mxu0 %v5537
      %5603 = vmatprep.subr.mxu0 0.0
      %5604 = vmatpush2.msra.mxu0 0.0
      %5605 = vmatprep.subr.mxu0 0.0
      %5606 = vmatpush2.msra.mxu0 0.0
      %5607 = vmatprep.subr.mxu0 0.0
      %5608 = vmatpush2.msra.mxu0 0.0
      %5609 = vmatprep.subr.mxu0 0.0
      %5610 = vmatpush2.msra.mxu0 0.0
      %5611 = vmatprep.subr.mxu0 0.0
      %5612 = vmatpush2.msra.mxu0 0.0
      %5613 = vmatprep.subr.mxu0 0.0
      %5614 = vmatpush2.msra.mxu0 0.0
      %5615 = vmatprep.subr.mxu0 0.0
      %5616 = vmatpush2.msra.mxu0 0.0
      %5617 = vmatprep.subr.mxu0 0.0
      %5618 = vmatpush2.msra.mxu0 0.0
      %5619 = vmatprep.subr.mxu0 0.0
      %5620 = vmatpush2.msra.mxu0 0.0
      %5621 = vmatprep.subr.mxu0 0.0
      %5622 = vmatpush2.msra.mxu0 0.0
      %5623 = vmatprep.subr.mxu0 0.0
      %5624 = vmatpush2.msra.mxu0 0.0
      %5625 = vmatprep.subr.mxu0 0.0
      %5626 = vmatpush2.msra.mxu0 0.0
      %5627 = vmatprep.subr.mxu0 0.0
      %5628 = vmatpush2.msra.mxu0 0.0
      %5629 = vmatprep.subr.mxu0 0.0
      %5630 = vmatpush2.msra.mxu0 0.0
      %5631 = vmatprep.subr.mxu0 0.0
      %5632 = vmatpush2.msra.mxu0 0.0
      %5633 = vmatprep.subr.mxu0 0.0
      %5634 = vmatpush2.msra.mxu0 0.0
      %5635 = vmatprep.mubr.f32.mxu0 0.0
      %5636 = vmatmul.mubr.f32.gmra.mxu0 %v5562
      %v5637 = vpop.f32.mrf.mxu0
      %v5638 = vadd.f32 0.0, %v5637
      %v5639 = vpop.f32.mrf.mxu0
      %v5640 = vadd.f32 0.0, %v5639
      %5641 = vdwg.mxu0
      %v5642 = vsel %vm5561, %v5510, 0
      %v5645 = vsel %vm5564, %v5534, 0
      %v5648 = vsel %vm5564, %v5535, 0
      %5650 = vmatprep.subr.mxu0 0.0
      %5651 = vmatpush1.msra.mxu0 0.0
      %5652 = vmatprep.subr.mxu0 0.0
      %5653 = vmatpush1.msra.mxu0 0.0
      %5654 = vmatprep.subr.mxu0 0.0
      %5655 = vmatpush1.msra.mxu0 0.0
      %5656 = vmatprep.subr.mxu0 0.0
      %5657 = vmatpush1.msra.mxu0 0.0
      %5658 = vmatprep.subr.mxu0 0.0
      %5659 = vmatpush1.msra.mxu0 0.0
      %5660 = vmatprep.subr.mxu0 %v5648
      %5661 = vmatpush1.msra.mxu0 %v5645
      %5662 = vmatprep.subr.mxu0 %v5533
      %5663 = vmatpush1.msra.mxu0 %v5532
      %5664 = vmatprep.subr.mxu0 %v5531
      %5665 = vmatpush1.msra.mxu0 %v5530
      %5666 = vmatprep.subr.mxu0 %v5529
      %5667 = vmatpush1.msra.mxu0 %v5528
      %5668 = vmatprep.subr.mxu0 %v5527
      %5669 = vmatpush1.msra.mxu0 %v5526
      %5670 = vmatprep.subr.mxu0 %v5525
      %5671 = vmatpush1.msra.mxu0 %v5524
      %5672 = vmatprep.subr.mxu0 %v5523
      %5673 = vmatpush1.msra.mxu0 %v5522
      %5674 = vmatprep.subr.mxu0 %v5521
      %5675 = vmatpush1.msra.mxu0 %v5520
      %5676 = vmatprep.subr.mxu0 %v5519
      %5677 = vmatpush1.msra.mxu0 %v5518
      %5678 = vmatprep.subr.mxu0 %v5517
      %5679 = vmatpush1.msra.mxu0 %v5516
      %5680 = vmatprep.subr.mxu0 %v5515
      %5681 = vmatpush1.msra.mxu0 %v5514
      %5682 = vmatprep.subr.mxu0 0.0
      %5683 = vmatpush2.msra.mxu0 0.0
      %5684 = vmatprep.subr.mxu0 0.0
      %5685 = vmatpush2.msra.mxu0 0.0
      %5686 = vmatprep.subr.mxu0 0.0
      %5687 = vmatpush2.msra.mxu0 0.0
      %5688 = vmatprep.subr.mxu0 0.0
      %5689 = vmatpush2.msra.mxu0 0.0
      %5690 = vmatprep.subr.mxu0 0.0
      %5691 = vmatpush2.msra.mxu0 0.0
      %5692 = vmatprep.subr.mxu0 0.0
      %5693 = vmatpush2.msra.mxu0 0.0
      %5694 = vmatprep.subr.mxu0 0.0
      %5695 = vmatpush2.msra.mxu0 0.0
      %5696 = vmatprep.subr.mxu0 0.0
      %5697 = vmatpush2.msra.mxu0 0.0
      %5698 = vmatprep.subr.mxu0 0.0
      %5699 = vmatpush2.msra.mxu0 0.0
      %5700 = vmatprep.subr.mxu0 0.0
      %5701 = vmatpush2.msra.mxu0 0.0
      %5702 = vmatprep.subr.mxu0 0.0
      %5703 = vmatpush2.msra.mxu0 0.0
      %5704 = vmatprep.subr.mxu0 0.0
      %5705 = vmatpush2.msra.mxu0 0.0
      %5706 = vmatprep.subr.mxu0 0.0
      %5707 = vmatpush2.msra.mxu0 0.0
      %5708 = vmatprep.subr.mxu0 0.0
      %5709 = vmatpush2.msra.mxu0 0.0
      %5710 = vmatprep.subr.mxu0 0.0
      %5711 = vmatpush2.msra.mxu0 0.0
      %5712 = vmatprep.subr.mxu0 0.0
      %5713 = vmatpush2.msra.mxu0 0.0
      %5714 = vmatprep.mubr.f32.mxu0 0.0
      %5715 = vmatmul.mubr.f32.gmra.mxu0 %v5642
      %v5716 = vpop.f32.mrf.mxu0
      %v5717 = vadd.f32 %v5638, %v5716
      %v5718 = vpop.f32.mrf.mxu0
      %v5719 = vadd.f32 %v5640, %v5718
      %5720 = vdwg.mxu0
      %s5721 = scalar_lea.vmem %s6, 352
      %v5722 = vld [vmem:[%s5721] sm:$0xff]
      %v5723 = vld [vmem:[%s5721 + $0x8] sm:$0xff]
      %v5724 = vld [vmem:[%s5721 + $0x10] sm:$0xff]
      %v5725 = vld [vmem:[%s5721 + $0x18] sm:$0xff]
      %v5726 = vld [vmem:[%s5721 + $0x20] sm:$0xff]
      %v5727 = vld [vmem:[%s5721 + $0x28] sm:$0xff]
      %v5728 = vld [vmem:[%s5721 + $0x30] sm:$0xff]
      %v5729 = vld [vmem:[%s5721 + $0x38] sm:$0xff]
      %v5730 = vld [vmem:[%s5721 + $0x40] sm:$0xff]
      %v5731 = vld [vmem:[%s5721 + $0x48] sm:$0xff]
      %v5732 = vld [vmem:[%s5721 + $0x50] sm:$0xff]
      %v5733 = vld [vmem:[%s5721 + $0x58] sm:$0xff]
      %v5734 = vld [vmem:[%s5721 + $0x60] sm:$0xff]
      %v5735 = vld [vmem:[%s5721 + $0x68] sm:$0xff]
      %v5736 = vld [vmem:[%s5721 + $0x70] sm:$0xff]
      %v5737 = vld [vmem:[%s5721 + $0x78] sm:$0xff]
      %v5738 = vld [vmem:[%s5721 + $0x80] sm:$0xff]
      %v5739 = vld [vmem:[%s5721 + $0x88] sm:$0xff]
      %v5740 = vld [vmem:[%s5721 + $0x90] sm:$0xff]
      %v5741 = vld [vmem:[%s5721 + $0x98] sm:$0xff]
      %v5742 = vld [vmem:[%s5721 + $0xa0] sm:$0x1]
      %v5743 = vld [vmem:[%s5721 + $0xa8] sm:$0x1]
      %v5744 = vrot.slane %v5510, 2
      %v5745 = vsel %vm5561, %v5744, 0
      %v5748 = vsel %vm5564, %v5742, 0
      %v5751 = vsel %vm5564, %v5743, 0
      %5753 = vmatprep.subr.mxu0 0.0
      %5754 = vmatpush1.msra.mxu0 0.0
      %5755 = vmatprep.subr.mxu0 0.0
      %5756 = vmatpush1.msra.mxu0 0.0
      %5757 = vmatprep.subr.mxu0 0.0
      %5758 = vmatpush1.msra.mxu0 0.0
      %5759 = vmatprep.subr.mxu0 0.0
      %5760 = vmatpush1.msra.mxu0 0.0
      %5761 = vmatprep.subr.mxu0 0.0
      %5762 = vmatpush1.msra.mxu0 0.0
      %5763 = vmatprep.subr.mxu0 %v5751
      %5764 = vmatpush1.msra.mxu0 %v5748
      %5765 = vmatprep.subr.mxu0 %v5741
      %5766 = vmatpush1.msra.mxu0 %v5740
      %5767 = vmatprep.subr.mxu0 %v5739
      %5768 = vmatpush1.msra.mxu0 %v5738
      %5769 = vmatprep.subr.mxu0 %v5737
      %5770 = vmatpush1.msra.mxu0 %v5736
      %5771 = vmatprep.subr.mxu0 %v5735
      %5772 = vmatpush1.msra.mxu0 %v5734
      %5773 = vmatprep.subr.mxu0 %v5733
      %5774 = vmatpush1.msra.mxu0 %v5732
      %5775 = vmatprep.subr.mxu0 %v5731
      %5776 = vmatpush1.msra.mxu0 %v5730
      %5777 = vmatprep.subr.mxu0 %v5729
      %5778 = vmatpush1.msra.mxu0 %v5728
      %5779 = vmatprep.subr.mxu0 %v5727
      %5780 = vmatpush1.msra.mxu0 %v5726
      %5781 = vmatprep.subr.mxu0 %v5725
      %5782 = vmatpush1.msra.mxu0 %v5724
      %5783 = vmatprep.subr.mxu0 %v5723
      %5784 = vmatpush1.msra.mxu0 %v5722
      %5785 = vmatprep.subr.mxu0 0.0
      %5786 = vmatpush2.msra.mxu0 0.0
      %5787 = vmatprep.subr.mxu0 0.0
      %5788 = vmatpush2.msra.mxu0 0.0
      %5789 = vmatprep.subr.mxu0 0.0
      %5790 = vmatpush2.msra.mxu0 0.0
      %5791 = vmatprep.subr.mxu0 0.0
      %5792 = vmatpush2.msra.mxu0 0.0
      %5793 = vmatprep.subr.mxu0 0.0
      %5794 = vmatpush2.msra.mxu0 0.0
      %5795 = vmatprep.subr.mxu0 0.0
      %5796 = vmatpush2.msra.mxu0 0.0
      %5797 = vmatprep.subr.mxu0 0.0
      %5798 = vmatpush2.msra.mxu0 0.0
      %5799 = vmatprep.subr.mxu0 0.0
      %5800 = vmatpush2.msra.mxu0 0.0
      %5801 = vmatprep.subr.mxu0 0.0
      %5802 = vmatpush2.msra.mxu0 0.0
      %5803 = vmatprep.subr.mxu0 0.0
      %5804 = vmatpush2.msra.mxu0 0.0
      %5805 = vmatprep.subr.mxu0 0.0
      %5806 = vmatpush2.msra.mxu0 0.0
      %5807 = vmatprep.subr.mxu0 0.0
      %5808 = vmatpush2.msra.mxu0 0.0
      %5809 = vmatprep.subr.mxu0 0.0
      %5810 = vmatpush2.msra.mxu0 0.0
      %5811 = vmatprep.subr.mxu0 0.0
      %5812 = vmatpush2.msra.mxu0 0.0
      %5813 = vmatprep.subr.mxu0 0.0
      %5814 = vmatpush2.msra.mxu0 0.0
      %5815 = vmatprep.subr.mxu0 0.0
      %5816 = vmatpush2.msra.mxu0 0.0
      %5817 = vmatprep.mubr.f32.mxu0 0.0
      %5818 = vmatmul.mubr.f32.gmra.mxu0 %v5745
      %v5819 = vpop.f32.mrf.mxu0
      %v5820 = vadd.f32 0.0, %v5819
      %v5821 = vpop.f32.mrf.mxu0
      %v5822 = vadd.f32 0.0, %v5821
      %5823 = vdwg.mxu0
      %v5824 = vadd.f32 %v5717, %v5820
      %v5825 = vadd.f32 %v5719, %v5822
      %s5826 = scalar_lea.vmem %s6, 528
      %v5827 = vld [vmem:[%s5826] sm:$0xff]
      %v5828 = vld [vmem:[%s5826 + $0x8] sm:$0xff]
      %v5829 = vld [vmem:[%s5826 + $0x10] sm:$0xff]
      %v5830 = vld [vmem:[%s5826 + $0x18] sm:$0xff]
      %v5831 = vld [vmem:[%s5826 + $0x20] sm:$0xff]
      %v5832 = vld [vmem:[%s5826 + $0x28] sm:$0xff]
      %v5833 = vld [vmem:[%s5826 + $0x30] sm:$0xff]
      %v5834 = vld [vmem:[%s5826 + $0x38] sm:$0xff]
      %v5835 = vld [vmem:[%s5826 + $0x40] sm:$0xff]
      %v5836 = vld [vmem:[%s5826 + $0x48] sm:$0xff]
      %v5837 = vld [vmem:[%s5826 + $0x50] sm:$0xff]
      %v5838 = vld [vmem:[%s5826 + $0x58] sm:$0xff]
      %v5839 = vld [vmem:[%s5826 + $0x60] sm:$0xff]
      %v5840 = vld [vmem:[%s5826 + $0x68] sm:$0xff]
      %v5841 = vld [vmem:[%s5826 + $0x70] sm:$0xff]
      %v5842 = vld [vmem:[%s5826 + $0x78] sm:$0xff]
      %v5843 = vld [vmem:[%s5826 + $0x80] sm:$0xff]
      %v5844 = vld [vmem:[%s5826 + $0x88] sm:$0xff]
      %v5845 = vld [vmem:[%s5826 + $0x90] sm:$0xff]
      %v5846 = vld [vmem:[%s5826 + $0x98] sm:$0xff]
      %v5847 = vld [vmem:[%s5826 + $0xa0] sm:$0x1]
      %v5848 = vld [vmem:[%s5826 + $0xa8] sm:$0x1]
      %v5849 = vrot.slane %v5510, 3
      %v5850 = vsel %vm5561, %v5849, 0
      %v5853 = vsel %vm5564, %v5847, 0
      %v5856 = vsel %vm5564, %v5848, 0
      %5858 = vmatprep.subr.mxu0 0.0
      %5859 = vmatpush1.msra.mxu0 0.0
      %5860 = vmatprep.subr.mxu0 0.0
      %5861 = vmatpush1.msra.mxu0 0.0
      %5862 = vmatprep.subr.mxu0 0.0
      %5863 = vmatpush1.msra.mxu0 0.0
      %5864 = vmatprep.subr.mxu0 0.0
      %5865 = vmatpush1.msra.mxu0 0.0
      %5866 = vmatprep.subr.mxu0 0.0
      %5867 = vmatpush1.msra.mxu0 0.0
      %5868 = vmatprep.subr.mxu0 %v5856
      %5869 = vmatpush1.msra.mxu0 %v5853
      %5870 = vmatprep.subr.mxu0 %v5846
      %5871 = vmatpush1.msra.mxu0 %v5845
      %5872 = vmatprep.subr.mxu0 %v5844
      %5873 = vmatpush1.msra.mxu0 %v5843
      %5874 = vmatprep.subr.mxu0 %v5842
      %5875 = vmatpush1.msra.mxu0 %v5841
      %5876 = vmatprep.subr.mxu0 %v5840
      %5877 = vmatpush1.msra.mxu0 %v5839
      %5878 = vmatprep.subr.mxu0 %v5838
      %5879 = vmatpush1.msra.mxu0 %v5837
      %5880 = vmatprep.subr.mxu0 %v5836
      %5881 = vmatpush1.msra.mxu0 %v5835
      %5882 = vmatprep.subr.mxu0 %v5834
      %5883 = vmatpush1.msra.mxu0 %v5833
      %5884 = vmatprep.subr.mxu0 %v5832
      %5885 = vmatpush1.msra.mxu0 %v5831
      %5886 = vmatprep.subr.mxu0 %v5830
      %5887 = vmatpush1.msra.mxu0 %v5829
      %5888 = vmatprep.subr.mxu0 %v5828
      %5889 = vmatpush1.msra.mxu0 %v5827
      %5890 = vmatprep.subr.mxu0 0.0
      %5891 = vmatpush2.msra.mxu0 0.0
      %5892 = vmatprep.subr.mxu0 0.0
      %5893 = vmatpush2.msra.mxu0 0.0
      %5894 = vmatprep.subr.mxu0 0.0
      %5895 = vmatpush2.msra.mxu0 0.0
      %5896 = vmatprep.subr.mxu0 0.0
      %5897 = vmatpush2.msra.mxu0 0.0
      %5898 = vmatprep.subr.mxu0 0.0
      %5899 = vmatpush2.msra.mxu0 0.0
      %5900 = vmatprep.subr.mxu0 0.0
      %5901 = vmatpush2.msra.mxu0 0.0
      %5902 = vmatprep.subr.mxu0 0.0
      %5903 = vmatpush2.msra.mxu0 0.0
      %5904 = vmatprep.subr.mxu0 0.0
      %5905 = vmatpush2.msra.mxu0 0.0
      %5906 = vmatprep.subr.mxu0 0.0
      %5907 = vmatpush2.msra.mxu0 0.0
      %5908 = vmatprep.subr.mxu0 0.0
      %5909 = vmatpush2.msra.mxu0 0.0
      %5910 = vmatprep.subr.mxu0 0.0
      %5911 = vmatpush2.msra.mxu0 0.0
      %5912 = vmatprep.subr.mxu0 0.0
      %5913 = vmatpush2.msra.mxu0 0.0
      %5914 = vmatprep.subr.mxu0 0.0
      %5915 = vmatpush2.msra.mxu0 0.0
      %5916 = vmatprep.subr.mxu0 0.0
      %5917 = vmatpush2.msra.mxu0 0.0
      %5918 = vmatprep.subr.mxu0 0.0
      %5919 = vmatpush2.msra.mxu0 0.0
      %5920 = vmatprep.subr.mxu0 0.0
      %5921 = vmatpush2.msra.mxu0 0.0
      %5922 = vmatprep.mubr.f32.mxu0 0.0
      %5923 = vmatmul.mubr.f32.gmra.mxu0 %v5850
      %v5924 = vpop.f32.mrf.mxu0
      %v5925 = vadd.f32 0.0, %v5924
      %v5926 = vpop.f32.mrf.mxu0
      %v5927 = vadd.f32 0.0, %v5926
      %5928 = vdwg.mxu0
      %v5929 = vadd.f32 %v5824, %v5925
      %v5930 = vadd.f32 %v5825, %v5927
      %s5931 = scalar_lea.vmem %s6, 704
      %v5932 = vld [vmem:[%s5931] sm:$0xff]
      %v5933 = vld [vmem:[%s5931 + $0x8] sm:$0xff]
      %v5934 = vld [vmem:[%s5931 + $0x10] sm:$0xff]
      %v5935 = vld [vmem:[%s5931 + $0x18] sm:$0xff]
      %v5936 = vld [vmem:[%s5931 + $0x20] sm:$0xff]
      %v5937 = vld [vmem:[%s5931 + $0x28] sm:$0xff]
      %v5938 = vld [vmem:[%s5931 + $0x30] sm:$0xff]
      %v5939 = vld [vmem:[%s5931 + $0x38] sm:$0xff]
      %v5940 = vld [vmem:[%s5931 + $0x40] sm:$0xff]
      %v5941 = vld [vmem:[%s5931 + $0x48] sm:$0xff]
      %v5942 = vld [vmem:[%s5931 + $0x50] sm:$0xff]
      %v5943 = vld [vmem:[%s5931 + $0x58] sm:$0xff]
      %v5944 = vld [vmem:[%s5931 + $0x60] sm:$0xff]
      %v5945 = vld [vmem:[%s5931 + $0x68] sm:$0xff]
      %v5946 = vld [vmem:[%s5931 + $0x70] sm:$0xff]
      %v5947 = vld [vmem:[%s5931 + $0x78] sm:$0xff]
      %v5948 = vld [vmem:[%s5931 + $0x80] sm:$0xff]
      %v5949 = vld [vmem:[%s5931 + $0x88] sm:$0xff]
      %v5950 = vld [vmem:[%s5931 + $0x90] sm:$0xff]
      %v5951 = vld [vmem:[%s5931 + $0x98] sm:$0xff]
      %v5952 = vld [vmem:[%s5931 + $0xa0] sm:$0x1]
      %v5953 = vld [vmem:[%s5931 + $0xa8] sm:$0x1]
      %v5954 = vrot.slane %v5510, 4
      %v5955 = vsel %vm5561, %v5954, 0
      %v5958 = vsel %vm5564, %v5952, 0
      %v5961 = vsel %vm5564, %v5953, 0
      %5963 = vmatprep.subr.mxu0 0.0
      %5964 = vmatpush1.msra.mxu0 0.0
      %5965 = vmatprep.subr.mxu0 0.0
      %5966 = vmatpush1.msra.mxu0 0.0
      %5967 = vmatprep.subr.mxu0 0.0
      %5968 = vmatpush1.msra.mxu0 0.0
      %5969 = vmatprep.subr.mxu0 0.0
      %5970 = vmatpush1.msra.mxu0 0.0
      %5971 = vmatprep.subr.mxu0 0.0
      %5972 = vmatpush1.msra.mxu0 0.0
      %5973 = vmatprep.subr.mxu0 %v5961
      %5974 = vmatpush1.msra.mxu0 %v5958
      %5975 = vmatprep.subr.mxu0 %v5951
      %5976 = vmatpush1.msra.mxu0 %v5950
      %5977 = vmatprep.subr.mxu0 %v5949
      %5978 = vmatpush1.msra.mxu0 %v5948
      %5979 = vmatprep.subr.mxu0 %v5947
      %5980 = vmatpush1.msra.mxu0 %v5946
      %5981 = vmatprep.subr.mxu0 %v5945
      %5982 = vmatpush1.msra.mxu0 %v5944
      %5983 = vmatprep.subr.mxu0 %v5943
      %5984 = vmatpush1.msra.mxu0 %v5942
      %5985 = vmatprep.subr.mxu0 %v5941
      %5986 = vmatpush1.msra.mxu0 %v5940
      %5987 = vmatprep.subr.mxu0 %v5939
      %5988 = vmatpush1.msra.mxu0 %v5938
      %5989 = vmatprep.subr.mxu0 %v5937
      %5990 = vmatpush1.msra.mxu0 %v5936
      %5991 = vmatprep.subr.mxu0 %v5935
      %5992 = vmatpush1.msra.mxu0 %v5934
      %5993 = vmatprep.subr.mxu0 %v5933
      %5994 = vmatpush1.msra.mxu0 %v5932
      %5995 = vmatprep.subr.mxu0 0.0
      %5996 = vmatpush2.msra.mxu0 0.0
      %5997 = vmatprep.subr.mxu0 0.0
      %5998 = vmatpush2.msra.mxu0 0.0
      %5999 = vmatprep.subr.mxu0 0.0
      %6000 = vmatpush2.msra.mxu0 0.0
      %6001 = vmatprep.subr.mxu0 0.0
      %6002 = vmatpush2.msra.mxu0 0.0
      %6003 = vmatprep.subr.mxu0 0.0
      %6004 = vmatpush2.msra.mxu0 0.0
      %6005 = vmatprep.subr.mxu0 0.0
      %6006 = vmatpush2.msra.mxu0 0.0
      %6007 = vmatprep.subr.mxu0 0.0
      %6008 = vmatpush2.msra.mxu0 0.0
      %6009 = vmatprep.subr.mxu0 0.0
      %6010 = vmatpush2.msra.mxu0 0.0
      %6011 = vmatprep.subr.mxu0 0.0
      %6012 = vmatpush2.msra.mxu0 0.0
      %6013 = vmatprep.subr.mxu0 0.0
      %6014 = vmatpush2.msra.mxu0 0.0
      %6015 = vmatprep.subr.mxu0 0.0
      %6016 = vmatpush2.msra.mxu0 0.0
      %6017 = vmatprep.subr.mxu0 0.0
      %6018 = vmatpush2.msra.mxu0 0.0
      %6019 = vmatprep.subr.mxu0 0.0
      %6020 = vmatpush2.msra.mxu0 0.0
      %6021 = vmatprep.subr.mxu0 0.0
      %6022 = vmatpush2.msra.mxu0 0.0
      %6023 = vmatprep.subr.mxu0 0.0
      %6024 = vmatpush2.msra.mxu0 0.0
      %6025 = vmatprep.subr.mxu0 0.0
      %6026 = vmatpush2.msra.mxu0 0.0
      %6027 = vmatprep.mubr.f32.mxu0 0.0
      %6028 = vmatmul.mubr.f32.gmra.mxu0 %v5955
      %v6029 = vpop.f32.mrf.mxu0
      %v6030 = vadd.f32 0.0, %v6029
      %v6031 = vpop.f32.mrf.mxu0
      %v6032 = vadd.f32 0.0, %v6031
      %6033 = vdwg.mxu0
      %v6034 = vadd.f32 %v5929, %v6030
      %v6035 = vadd.f32 %v5930, %v6032
      %s6036 = scalar_lea.vmem %s6, 880
      %v6037 = vld [vmem:[%s6036] sm:$0xff]
      %v6038 = vld [vmem:[%s6036 + $0x8] sm:$0xff]
      %v6039 = vld [vmem:[%s6036 + $0x10] sm:$0xff]
      %v6040 = vld [vmem:[%s6036 + $0x18] sm:$0xff]
      %v6041 = vld [vmem:[%s6036 + $0x20] sm:$0xff]
      %v6042 = vld [vmem:[%s6036 + $0x28] sm:$0xff]
      %v6043 = vld [vmem:[%s6036 + $0x30] sm:$0xff]
      %v6044 = vld [vmem:[%s6036 + $0x38] sm:$0xff]
      %v6045 = vld [vmem:[%s6036 + $0x40] sm:$0xff]
      %v6046 = vld [vmem:[%s6036 + $0x48] sm:$0xff]
      %v6047 = vld [vmem:[%s6036 + $0x50] sm:$0xff]
      %v6048 = vld [vmem:[%s6036 + $0x58] sm:$0xff]
      %v6049 = vld [vmem:[%s6036 + $0x60] sm:$0xff]
      %v6050 = vld [vmem:[%s6036 + $0x68] sm:$0xff]
      %v6051 = vld [vmem:[%s6036 + $0x70] sm:$0xff]
      %v6052 = vld [vmem:[%s6036 + $0x78] sm:$0xff]
      %v6053 = vld [vmem:[%s6036 + $0x80] sm:$0xff]
      %v6054 = vld [vmem:[%s6036 + $0x88] sm:$0xff]
      %v6055 = vld [vmem:[%s6036 + $0x90] sm:$0xff]
      %v6056 = vld [vmem:[%s6036 + $0x98] sm:$0xff]
      %v6057 = vld [vmem:[%s6036 + $0xa0] sm:$0x1]
      %v6058 = vld [vmem:[%s6036 + $0xa8] sm:$0x1]
      %v6059 = vrot.slane %v5510, 5
      %v6060 = vsel %vm5561, %v6059, 0
      %v6063 = vsel %vm5564, %v6057, 0
      %v6066 = vsel %vm5564, %v6058, 0
      %6068 = vmatprep.subr.mxu0 0.0
      %6069 = vmatpush1.msra.mxu0 0.0
      %6070 = vmatprep.subr.mxu0 0.0
      %6071 = vmatpush1.msra.mxu0 0.0
      %6072 = vmatprep.subr.mxu0 0.0
      %6073 = vmatpush1.msra.mxu0 0.0
      %6074 = vmatprep.subr.mxu0 0.0
      %6075 = vmatpush1.msra.mxu0 0.0
      %6076 = vmatprep.subr.mxu0 0.0
      %6077 = vmatpush1.msra.mxu0 0.0
      %6078 = vmatprep.subr.mxu0 %v6066
      %6079 = vmatpush1.msra.mxu0 %v6063
      %6080 = vmatprep.subr.mxu0 %v6056
      %6081 = vmatpush1.msra.mxu0 %v6055
      %6082 = vmatprep.subr.mxu0 %v6054
      %6083 = vmatpush1.msra.mxu0 %v6053
      %6084 = vmatprep.subr.mxu0 %v6052
      %6085 = vmatpush1.msra.mxu0 %v6051
      %6086 = vmatprep.subr.mxu0 %v6050
      %6087 = vmatpush1.msra.mxu0 %v6049
      %6088 = vmatprep.subr.mxu0 %v6048
      %6089 = vmatpush1.msra.mxu0 %v6047
      %6090 = vmatprep.subr.mxu0 %v6046
      %6091 = vmatpush1.msra.mxu0 %v6045
      %6092 = vmatprep.subr.mxu0 %v6044
      %6093 = vmatpush1.msra.mxu0 %v6043
      %6094 = vmatprep.subr.mxu0 %v6042
      %6095 = vmatpush1.msra.mxu0 %v6041
      %6096 = vmatprep.subr.mxu0 %v6040
      %6097 = vmatpush1.msra.mxu0 %v6039
      %6098 = vmatprep.subr.mxu0 %v6038
      %6099 = vmatpush1.msra.mxu0 %v6037
      %6100 = vmatprep.subr.mxu0 0.0
      %6101 = vmatpush2.msra.mxu0 0.0
      %6102 = vmatprep.subr.mxu0 0.0
      %6103 = vmatpush2.msra.mxu0 0.0
      %6104 = vmatprep.subr.mxu0 0.0
      %6105 = vmatpush2.msra.mxu0 0.0
      %6106 = vmatprep.subr.mxu0 0.0
      %6107 = vmatpush2.msra.mxu0 0.0
      %6108 = vmatprep.subr.mxu0 0.0
      %6109 = vmatpush2.msra.mxu0 0.0
      %6110 = vmatprep.subr.mxu0 0.0
      %6111 = vmatpush2.msra.mxu0 0.0
      %6112 = vmatprep.subr.mxu0 0.0
      %6113 = vmatpush2.msra.mxu0 0.0
      %6114 = vmatprep.subr.mxu0 0.0
      %6115 = vmatpush2.msra.mxu0 0.0
      %6116 = vmatprep.subr.mxu0 0.0
      %6117 = vmatpush2.msra.mxu0 0.0
      %6118 = vmatprep.subr.mxu0 0.0
      %6119 = vmatpush2.msra.mxu0 0.0
      %6120 = vmatprep.subr.mxu0 0.0
      %6121 = vmatpush2.msra.mxu0 0.0
      %6122 = vmatprep.subr.mxu0 0.0
      %6123 = vmatpush2.msra.mxu0 0.0
      %6124 = vmatprep.subr.mxu0 0.0
      %6125 = vmatpush2.msra.mxu0 0.0
      %6126 = vmatprep.subr.mxu0 0.0
      %6127 = vmatpush2.msra.mxu0 0.0
      %6128 = vmatprep.subr.mxu0 0.0
      %6129 = vmatpush2.msra.mxu0 0.0
      %6130 = vmatprep.subr.mxu0 0.0
      %6131 = vmatpush2.msra.mxu0 0.0
      %6132 = vmatprep.mubr.f32.mxu0 0.0
      %6133 = vmatmul.mubr.f32.gmra.mxu0 %v6060
      %v6134 = vpop.f32.mrf.mxu0
      %v6135 = vadd.f32 0.0, %v6134
      %v6136 = vpop.f32.mrf.mxu0
      %v6137 = vadd.f32 0.0, %v6136
      %6138 = vdwg.mxu0
      %v6139 = vadd.f32 %v6034, %v6135
      %v6140 = vadd.f32 %v6035, %v6137
      %s6141 = scalar_lea.vmem %s6, 1056
      %v6142 = vld [vmem:[%s6141] sm:$0xff]
      %v6143 = vld [vmem:[%s6141 + $0x8] sm:$0xff]
      %v6144 = vld [vmem:[%s6141 + $0x10] sm:$0xff]
      %v6145 = vld [vmem:[%s6141 + $0x18] sm:$0xff]
      %v6146 = vld [vmem:[%s6141 + $0x20] sm:$0xff]
      %v6147 = vld [vmem:[%s6141 + $0x28] sm:$0xff]
      %v6148 = vld [vmem:[%s6141 + $0x30] sm:$0xff]
      %v6149 = vld [vmem:[%s6141 + $0x38] sm:$0xff]
      %v6150 = vld [vmem:[%s6141 + $0x40] sm:$0xff]
      %v6151 = vld [vmem:[%s6141 + $0x48] sm:$0xff]
      %v6152 = vld [vmem:[%s6141 + $0x50] sm:$0xff]
      %v6153 = vld [vmem:[%s6141 + $0x58] sm:$0xff]
      %v6154 = vld [vmem:[%s6141 + $0x60] sm:$0xff]
      %v6155 = vld [vmem:[%s6141 + $0x68] sm:$0xff]
      %v6156 = vld [vmem:[%s6141 + $0x70] sm:$0xff]
      %v6157 = vld [vmem:[%s6141 + $0x78] sm:$0xff]
      %v6158 = vld [vmem:[%s6141 + $0x80] sm:$0xff]
      %v6159 = vld [vmem:[%s6141 + $0x88] sm:$0xff]
      %v6160 = vld [vmem:[%s6141 + $0x90] sm:$0xff]
      %v6161 = vld [vmem:[%s6141 + $0x98] sm:$0xff]
      %v6162 = vld [vmem:[%s6141 + $0xa0] sm:$0x1]
      %v6163 = vld [vmem:[%s6141 + $0xa8] sm:$0x1]
      %v6164 = vrot.slane %v5510, 6
      %v6165 = vsel %vm5561, %v6164, 0
      %v6168 = vsel %vm5564, %v6162, 0
      %v6171 = vsel %vm5564, %v6163, 0
      %6173 = vmatprep.subr.mxu0 0.0
      %6174 = vmatpush1.msra.mxu0 0.0
      %6175 = vmatprep.subr.mxu0 0.0
      %6176 = vmatpush1.msra.mxu0 0.0
      %6177 = vmatprep.subr.mxu0 0.0
      %6178 = vmatpush1.msra.mxu0 0.0
      %6179 = vmatprep.subr.mxu0 0.0
      %6180 = vmatpush1.msra.mxu0 0.0
      %6181 = vmatprep.subr.mxu0 0.0
      %6182 = vmatpush1.msra.mxu0 0.0
      %6183 = vmatprep.subr.mxu0 %v6171
      %6184 = vmatpush1.msra.mxu0 %v6168
      %6185 = vmatprep.subr.mxu0 %v6161
      %6186 = vmatpush1.msra.mxu0 %v6160
      %6187 = vmatprep.subr.mxu0 %v6159
      %6188 = vmatpush1.msra.mxu0 %v6158
      %6189 = vmatprep.subr.mxu0 %v6157
      %6190 = vmatpush1.msra.mxu0 %v6156
      %6191 = vmatprep.subr.mxu0 %v6155
      %6192 = vmatpush1.msra.mxu0 %v6154
      %6193 = vmatprep.subr.mxu0 %v6153
      %6194 = vmatpush1.msra.mxu0 %v6152
      %6195 = vmatprep.subr.mxu0 %v6151
      %6196 = vmatpush1.msra.mxu0 %v6150
      %6197 = vmatprep.subr.mxu0 %v6149
      %6198 = vmatpush1.msra.mxu0 %v6148
      %6199 = vmatprep.subr.mxu0 %v6147
      %6200 = vmatpush1.msra.mxu0 %v6146
      %6201 = vmatprep.subr.mxu0 %v6145
      %6202 = vmatpush1.msra.mxu0 %v6144
      %6203 = vmatprep.subr.mxu0 %v6143
      %6204 = vmatpush1.msra.mxu0 %v6142
      %6205 = vmatprep.subr.mxu0 0.0
      %6206 = vmatpush2.msra.mxu0 0.0
      %6207 = vmatprep.subr.mxu0 0.0
      %6208 = vmatpush2.msra.mxu0 0.0
      %6209 = vmatprep.subr.mxu0 0.0
      %6210 = vmatpush2.msra.mxu0 0.0
      %6211 = vmatprep.subr.mxu0 0.0
      %6212 = vmatpush2.msra.mxu0 0.0
      %6213 = vmatprep.subr.mxu0 0.0
      %6214 = vmatpush2.msra.mxu0 0.0
      %6215 = vmatprep.subr.mxu0 0.0
      %6216 = vmatpush2.msra.mxu0 0.0
      %6217 = vmatprep.subr.mxu0 0.0
      %6218 = vmatpush2.msra.mxu0 0.0
      %6219 = vmatprep.subr.mxu0 0.0
      %6220 = vmatpush2.msra.mxu0 0.0
      %6221 = vmatprep.subr.mxu0 0.0
      %6222 = vmatpush2.msra.mxu0 0.0
      %6223 = vmatprep.subr.mxu0 0.0
      %6224 = vmatpush2.msra.mxu0 0.0
      %6225 = vmatprep.subr.mxu0 0.0
      %6226 = vmatpush2.msra.mxu0 0.0
      %6227 = vmatprep.subr.mxu0 0.0
      %6228 = vmatpush2.msra.mxu0 0.0
      %6229 = vmatprep.subr.mxu0 0.0
      %6230 = vmatpush2.msra.mxu0 0.0
      %6231 = vmatprep.subr.mxu0 0.0
      %6232 = vmatpush2.msra.mxu0 0.0
      %6233 = vmatprep.subr.mxu0 0.0
      %6234 = vmatpush2.msra.mxu0 0.0
      %6235 = vmatprep.subr.mxu0 0.0
      %6236 = vmatpush2.msra.mxu0 0.0
      %6237 = vmatprep.mubr.f32.mxu0 0.0
      %6238 = vmatmul.mubr.f32.gmra.mxu0 %v6165
      %v6239 = vpop.f32.mrf.mxu0
      %v6240 = vadd.f32 0.0, %v6239
      %v6241 = vpop.f32.mrf.mxu0
      %v6242 = vadd.f32 0.0, %v6241
      %6243 = vdwg.mxu0
      %v6244 = vadd.f32 %v6139, %v6240
      %v6245 = vadd.f32 %v6140, %v6242
      %s6246 = scalar_lea.vmem %s6, 1232
      %v6247 = vld [vmem:[%s6246] sm:$0xff]
      %v6248 = vld [vmem:[%s6246 + $0x8] sm:$0xff]
      %v6249 = vld [vmem:[%s6246 + $0x10] sm:$0xff]
      %v6250 = vld [vmem:[%s6246 + $0x18] sm:$0xff]
      %v6251 = vld [vmem:[%s6246 + $0x20] sm:$0xff]
      %v6252 = vld [vmem:[%s6246 + $0x28] sm:$0xff]
      %v6253 = vld [vmem:[%s6246 + $0x30] sm:$0xff]
      %v6254 = vld [vmem:[%s6246 + $0x38] sm:$0xff]
      %v6255 = vld [vmem:[%s6246 + $0x40] sm:$0xff]
      %v6256 = vld [vmem:[%s6246 + $0x48] sm:$0xff]
      %v6257 = vld [vmem:[%s6246 + $0x50] sm:$0xff]
      %v6258 = vld [vmem:[%s6246 + $0x58] sm:$0xff]
      %v6259 = vld [vmem:[%s6246 + $0x60] sm:$0xff]
      %v6260 = vld [vmem:[%s6246 + $0x68] sm:$0xff]
      %v6261 = vld [vmem:[%s6246 + $0x70] sm:$0xff]
      %v6262 = vld [vmem:[%s6246 + $0x78] sm:$0xff]
      %v6263 = vld [vmem:[%s6246 + $0x80] sm:$0xff]
      %v6264 = vld [vmem:[%s6246 + $0x88] sm:$0xff]
      %v6265 = vld [vmem:[%s6246 + $0x90] sm:$0xff]
      %v6266 = vld [vmem:[%s6246 + $0x98] sm:$0xff]
      %v6267 = vld [vmem:[%s6246 + $0xa0] sm:$0x1]
      %v6268 = vld [vmem:[%s6246 + $0xa8] sm:$0x1]
      %v6269 = vrot.slane %v5510, 7
      %v6270 = vsel %vm5561, %v6269, 0
      %v6273 = vsel %vm5564, %v6267, 0
      %v6276 = vsel %vm5564, %v6268, 0
      %6278 = vmatprep.subr.mxu0 0.0
      %6279 = vmatpush1.msra.mxu0 0.0
      %6280 = vmatprep.subr.mxu0 0.0
      %6281 = vmatpush1.msra.mxu0 0.0
      %6282 = vmatprep.subr.mxu0 0.0
      %6283 = vmatpush1.msra.mxu0 0.0
      %6284 = vmatprep.subr.mxu0 0.0
      %6285 = vmatpush1.msra.mxu0 0.0
      %6286 = vmatprep.subr.mxu0 0.0
      %6287 = vmatpush1.msra.mxu0 0.0
      %6288 = vmatprep.subr.mxu0 %v6276
      %6289 = vmatpush1.msra.mxu0 %v6273
      %6290 = vmatprep.subr.mxu0 %v6266
      %6291 = vmatpush1.msra.mxu0 %v6265
      %6292 = vmatprep.subr.mxu0 %v6264
      %6293 = vmatpush1.msra.mxu0 %v6263
      %6294 = vmatprep.subr.mxu0 %v6262
      %6295 = vmatpush1.msra.mxu0 %v6261
      %6296 = vmatprep.subr.mxu0 %v6260
      %6297 = vmatpush1.msra.mxu0 %v6259
      %6298 = vmatprep.subr.mxu0 %v6258
      %6299 = vmatpush1.msra.mxu0 %v6257
      %6300 = vmatprep.subr.mxu0 %v6256
      %6301 = vmatpush1.msra.mxu0 %v6255
      %6302 = vmatprep.subr.mxu0 %v6254
      %6303 = vmatpush1.msra.mxu0 %v6253
      %6304 = vmatprep.subr.mxu0 %v6252
      %6305 = vmatpush1.msra.mxu0 %v6251
      %6306 = vmatprep.subr.mxu0 %v6250
      %6307 = vmatpush1.msra.mxu0 %v6249
      %6308 = vmatprep.subr.mxu0 %v6248
      %6309 = vmatpush1.msra.mxu0 %v6247
      %6310 = vmatprep.subr.mxu0 0.0
      %6311 = vmatpush2.msra.mxu0 0.0
      %6312 = vmatprep.subr.mxu0 0.0
      %6313 = vmatpush2.msra.mxu0 0.0
      %6314 = vmatprep.subr.mxu0 0.0
      %6315 = vmatpush2.msra.mxu0 0.0
      %6316 = vmatprep.subr.mxu0 0.0
      %6317 = vmatpush2.msra.mxu0 0.0
      %6318 = vmatprep.subr.mxu0 0.0
      %6319 = vmatpush2.msra.mxu0 0.0
      %6320 = vmatprep.subr.mxu0 0.0
      %6321 = vmatpush2.msra.mxu0 0.0
      %6322 = vmatprep.subr.mxu0 0.0
      %6323 = vmatpush2.msra.mxu0 0.0
      %6324 = vmatprep.subr.mxu0 0.0
      %6325 = vmatpush2.msra.mxu0 0.0
      %6326 = vmatprep.subr.mxu0 0.0
      %6327 = vmatpush2.msra.mxu0 0.0
      %6328 = vmatprep.subr.mxu0 0.0
      %6329 = vmatpush2.msra.mxu0 0.0
      %6330 = vmatprep.subr.mxu0 0.0
      %6331 = vmatpush2.msra.mxu0 0.0
      %6332 = vmatprep.subr.mxu0 0.0
      %6333 = vmatpush2.msra.mxu0 0.0
      %6334 = vmatprep.subr.mxu0 0.0
      %6335 = vmatpush2.msra.mxu0 0.0
      %6336 = vmatprep.subr.mxu0 0.0
      %6337 = vmatpush2.msra.mxu0 0.0
      %6338 = vmatprep.subr.mxu0 0.0
      %6339 = vmatpush2.msra.mxu0 0.0
      %6340 = vmatprep.subr.mxu0 0.0
      %6341 = vmatpush2.msra.mxu0 0.0
      %6342 = vmatprep.mubr.f32.mxu0 0.0
      %6343 = vmatmul.mubr.f32.gmra.mxu0 %v6270
      %v6344 = vpop.f32.mrf.mxu0
      %v6345 = vadd.f32 0.0, %v6344
      %v6346 = vpop.f32.mrf.mxu0
      %v6347 = vadd.f32 0.0, %v6346
      %6348 = vdwg.mxu0
      %v6349 = vadd.f32 %v6244, %v6345
      %v6350 = vadd.f32 %v6245, %v6347
      %s6351 = scalar_lea.vmem %s6, 1408
      %v6352 = vld [vmem:[%s6351] sm:$0xff]
      %v6353 = vld [vmem:[%s6351 + $0x8] sm:$0xff]
      %v6354 = vld [vmem:[%s6351 + $0x10] sm:$0xff]
      %v6355 = vld [vmem:[%s6351 + $0x18] sm:$0xff]
      %v6356 = vld [vmem:[%s6351 + $0x20] sm:$0xff]
      %v6357 = vld [vmem:[%s6351 + $0x28] sm:$0xff]
      %v6358 = vld [vmem:[%s6351 + $0x30] sm:$0xff]
      %v6359 = vld [vmem:[%s6351 + $0x38] sm:$0xff]
      %v6360 = vld [vmem:[%s6351 + $0x40] sm:$0xff]
      %v6361 = vld [vmem:[%s6351 + $0x48] sm:$0xff]
      %v6362 = vld [vmem:[%s6351 + $0x50] sm:$0xff]
      %v6363 = vld [vmem:[%s6351 + $0x58] sm:$0xff]
      %v6364 = vld [vmem:[%s6351 + $0x60] sm:$0xff]
      %v6365 = vld [vmem:[%s6351 + $0x68] sm:$0xff]
      %v6366 = vld [vmem:[%s6351 + $0x70] sm:$0xff]
      %v6367 = vld [vmem:[%s6351 + $0x78] sm:$0xff]
      %v6368 = vld [vmem:[%s6351 + $0x80] sm:$0xff]
      %v6369 = vld [vmem:[%s6351 + $0x88] sm:$0xff]
      %v6370 = vld [vmem:[%s6351 + $0x90] sm:$0xff]
      %v6371 = vld [vmem:[%s6351 + $0x98] sm:$0xff]
      %v6372 = vld [vmem:[%s6351 + $0xa0] sm:$0x1]
      %v6373 = vld [vmem:[%s6351 + $0xa8] sm:$0x1]
      %v6375 = vsel %vm5561, %v5511, 0
      %v6378 = vsel %vm5564, %v6372, 0
      %v6381 = vsel %vm5564, %v6373, 0
      %6383 = vmatprep.subr.mxu0 0.0
      %6384 = vmatpush1.msra.mxu0 0.0
      %6385 = vmatprep.subr.mxu0 0.0
      %6386 = vmatpush1.msra.mxu0 0.0
      %6387 = vmatprep.subr.mxu0 0.0
      %6388 = vmatpush1.msra.mxu0 0.0
      %6389 = vmatprep.subr.mxu0 0.0
      %6390 = vmatpush1.msra.mxu0 0.0
      %6391 = vmatprep.subr.mxu0 0.0
      %6392 = vmatpush1.msra.mxu0 0.0
      %6393 = vmatprep.subr.mxu0 %v6381
      %6394 = vmatpush1.msra.mxu0 %v6378
      %6395 = vmatprep.subr.mxu0 %v6371
      %6396 = vmatpush1.msra.mxu0 %v6370
      %6397 = vmatprep.subr.mxu0 %v6369
      %6398 = vmatpush1.msra.mxu0 %v6368
      %6399 = vmatprep.subr.mxu0 %v6367
      %6400 = vmatpush1.msra.mxu0 %v6366
      %6401 = vmatprep.subr.mxu0 %v6365
      %6402 = vmatpush1.msra.mxu0 %v6364
      %6403 = vmatprep.subr.mxu0 %v6363
      %6404 = vmatpush1.msra.mxu0 %v6362
      %6405 = vmatprep.subr.mxu0 %v6361
      %6406 = vmatpush1.msra.mxu0 %v6360
      %6407 = vmatprep.subr.mxu0 %v6359
      %6408 = vmatpush1.msra.mxu0 %v6358
      %6409 = vmatprep.subr.mxu0 %v6357
      %6410 = vmatpush1.msra.mxu0 %v6356
      %6411 = vmatprep.subr.mxu0 %v6355
      %6412 = vmatpush1.msra.mxu0 %v6354
      %6413 = vmatprep.subr.mxu0 %v6353
      %6414 = vmatpush1.msra.mxu0 %v6352
      %6415 = vmatprep.subr.mxu0 0.0
      %6416 = vmatpush2.msra.mxu0 0.0
      %6417 = vmatprep.subr.mxu0 0.0
      %6418 = vmatpush2.msra.mxu0 0.0
      %6419 = vmatprep.subr.mxu0 0.0
      %6420 = vmatpush2.msra.mxu0 0.0
      %6421 = vmatprep.subr.mxu0 0.0
      %6422 = vmatpush2.msra.mxu0 0.0
      %6423 = vmatprep.subr.mxu0 0.0
      %6424 = vmatpush2.msra.mxu0 0.0
      %6425 = vmatprep.subr.mxu0 0.0
      %6426 = vmatpush2.msra.mxu0 0.0
      %6427 = vmatprep.subr.mxu0 0.0
      %6428 = vmatpush2.msra.mxu0 0.0
      %6429 = vmatprep.subr.mxu0 0.0
      %6430 = vmatpush2.msra.mxu0 0.0
      %6431 = vmatprep.subr.mxu0 0.0
      %6432 = vmatpush2.msra.mxu0 0.0
      %6433 = vmatprep.subr.mxu0 0.0
      %6434 = vmatpush2.msra.mxu0 0.0
      %6435 = vmatprep.subr.mxu0 0.0
      %6436 = vmatpush2.msra.mxu0 0.0
      %6437 = vmatprep.subr.mxu0 0.0
      %6438 = vmatpush2.msra.mxu0 0.0
      %6439 = vmatprep.subr.mxu0 0.0
      %6440 = vmatpush2.msra.mxu0 0.0
      %6441 = vmatprep.subr.mxu0 0.0
      %6442 = vmatpush2.msra.mxu0 0.0
      %6443 = vmatprep.subr.mxu0 0.0
      %6444 = vmatpush2.msra.mxu0 0.0
      %6445 = vmatprep.subr.mxu0 0.0
      %6446 = vmatpush2.msra.mxu0 0.0
      %6447 = vmatprep.mubr.f32.mxu0 0.0
      %6448 = vmatmul.mubr.f32.gmra.mxu0 %v6375
      %v6449 = vpop.f32.mrf.mxu0
      %v6450 = vadd.f32 0.0, %v6449
      %v6451 = vpop.f32.mrf.mxu0
      %v6452 = vadd.f32 0.0, %v6451
      %6453 = vdwg.mxu0
      %v6454 = vadd.f32 %v6349, %v6450
      %v6455 = vadd.f32 %v6350, %v6452
      %s6456 = scalar_lea.vmem %s6, 1584
      %v6457 = vld [vmem:[%s6456] sm:$0xff]
      %v6458 = vld [vmem:[%s6456 + $0x8] sm:$0xff]
      %v6459 = vld [vmem:[%s6456 + $0x10] sm:$0xff]
      %v6460 = vld [vmem:[%s6456 + $0x18] sm:$0xff]
      %v6461 = vld [vmem:[%s6456 + $0x20] sm:$0xff]
      %v6462 = vld [vmem:[%s6456 + $0x28] sm:$0xff]
      %v6463 = vld [vmem:[%s6456 + $0x30] sm:$0xff]
      %v6464 = vld [vmem:[%s6456 + $0x38] sm:$0xff]
      %v6465 = vld [vmem:[%s6456 + $0x40] sm:$0xff]
      %v6466 = vld [vmem:[%s6456 + $0x48] sm:$0xff]
      %v6467 = vld [vmem:[%s6456 + $0x50] sm:$0xff]
      %v6468 = vld [vmem:[%s6456 + $0x58] sm:$0xff]
      %v6469 = vld [vmem:[%s6456 + $0x60] sm:$0xff]
      %v6470 = vld [vmem:[%s6456 + $0x68] sm:$0xff]
      %v6471 = vld [vmem:[%s6456 + $0x70] sm:$0xff]
      %v6472 = vld [vmem:[%s6456 + $0x78] sm:$0xff]
      %v6473 = vld [vmem:[%s6456 + $0x80] sm:$0xff]
      %v6474 = vld [vmem:[%s6456 + $0x88] sm:$0xff]
      %v6475 = vld [vmem:[%s6456 + $0x90] sm:$0xff]
      %v6476 = vld [vmem:[%s6456 + $0x98] sm:$0xff]
      %v6477 = vld [vmem:[%s6456 + $0xa0] sm:$0x1]
      %v6478 = vld [vmem:[%s6456 + $0xa8] sm:$0x1]
      %v6479 = vrot.slane %v5511, 1
      %v6480 = vsel %vm5561, %v6479, 0
      %v6483 = vsel %vm5564, %v6477, 0
      %v6486 = vsel %vm5564, %v6478, 0
      %6488 = vmatprep.subr.mxu0 0.0
      %6489 = vmatpush1.msra.mxu0 0.0
      %6490 = vmatprep.subr.mxu0 0.0
      %6491 = vmatpush1.msra.mxu0 0.0
      %6492 = vmatprep.subr.mxu0 0.0
      %6493 = vmatpush1.msra.mxu0 0.0
      %6494 = vmatprep.subr.mxu0 0.0
      %6495 = vmatpush1.msra.mxu0 0.0
      %6496 = vmatprep.subr.mxu0 0.0
      %6497 = vmatpush1.msra.mxu0 0.0
      %6498 = vmatprep.subr.mxu0 %v6486
      %6499 = vmatpush1.msra.mxu0 %v6483
      %6500 = vmatprep.subr.mxu0 %v6476
      %6501 = vmatpush1.msra.mxu0 %v6475
      %6502 = vmatprep.subr.mxu0 %v6474
      %6503 = vmatpush1.msra.mxu0 %v6473
      %6504 = vmatprep.subr.mxu0 %v6472
      %6505 = vmatpush1.msra.mxu0 %v6471
      %6506 = vmatprep.subr.mxu0 %v6470
      %6507 = vmatpush1.msra.mxu0 %v6469
      %6508 = vmatprep.subr.mxu0 %v6468
      %6509 = vmatpush1.msra.mxu0 %v6467
      %6510 = vmatprep.subr.mxu0 %v6466
      %6511 = vmatpush1.msra.mxu0 %v6465
      %6512 = vmatprep.subr.mxu0 %v6464
      %6513 = vmatpush1.msra.mxu0 %v6463
      %6514 = vmatprep.subr.mxu0 %v6462
      %6515 = vmatpush1.msra.mxu0 %v6461
      %6516 = vmatprep.subr.mxu0 %v6460
      %6517 = vmatpush1.msra.mxu0 %v6459
      %6518 = vmatprep.subr.mxu0 %v6458
      %6519 = vmatpush1.msra.mxu0 %v6457
      %6520 = vmatprep.subr.mxu0 0.0
      %6521 = vmatpush2.msra.mxu0 0.0
      %6522 = vmatprep.subr.mxu0 0.0
      %6523 = vmatpush2.msra.mxu0 0.0
      %6524 = vmatprep.subr.mxu0 0.0
      %6525 = vmatpush2.msra.mxu0 0.0
      %6526 = vmatprep.subr.mxu0 0.0
      %6527 = vmatpush2.msra.mxu0 0.0
      %6528 = vmatprep.subr.mxu0 0.0
      %6529 = vmatpush2.msra.mxu0 0.0
      %6530 = vmatprep.subr.mxu0 0.0
      %6531 = vmatpush2.msra.mxu0 0.0
      %6532 = vmatprep.subr.mxu0 0.0
      %6533 = vmatpush2.msra.mxu0 0.0
      %6534 = vmatprep.subr.mxu0 0.0
      %6535 = vmatpush2.msra.mxu0 0.0
      %6536 = vmatprep.subr.mxu0 0.0
      %6537 = vmatpush2.msra.mxu0 0.0
      %6538 = vmatprep.subr.mxu0 0.0
      %6539 = vmatpush2.msra.mxu0 0.0
      %6540 = vmatprep.subr.mxu0 0.0
      %6541 = vmatpush2.msra.mxu0 0.0
      %6542 = vmatprep.subr.mxu0 0.0
      %6543 = vmatpush2.msra.mxu0 0.0
      %6544 = vmatprep.subr.mxu0 0.0
      %6545 = vmatpush2.msra.mxu0 0.0
      %6546 = vmatprep.subr.mxu0 0.0
      %6547 = vmatpush2.msra.mxu0 0.0
      %6548 = vmatprep.subr.mxu0 0.0
      %6549 = vmatpush2.msra.mxu0 0.0
      %6550 = vmatprep.subr.mxu0 0.0
      %6551 = vmatpush2.msra.mxu0 0.0
      %6552 = vmatprep.mubr.f32.mxu0 0.0
      %6553 = vmatmul.mubr.f32.gmra.mxu0 %v6480
      %v6554 = vpop.f32.mrf.mxu0
      %v6555 = vadd.f32 0.0, %v6554
      %v6556 = vpop.f32.mrf.mxu0
      %v6557 = vadd.f32 0.0, %v6556
      %6558 = vdwg.mxu0
      %v6559 = vadd.f32 %v6454, %v6555
      %v6560 = vadd.f32 %v6455, %v6557
      %s6561 = scalar_lea.vmem %s6, 1760
      %v6562 = vld [vmem:[%s6561] sm:$0xff]
      %v6563 = vld [vmem:[%s6561 + $0x8] sm:$0xff]
      %v6564 = vld [vmem:[%s6561 + $0x10] sm:$0xff]
      %v6565 = vld [vmem:[%s6561 + $0x18] sm:$0xff]
      %v6566 = vld [vmem:[%s6561 + $0x20] sm:$0xff]
      %v6567 = vld [vmem:[%s6561 + $0x28] sm:$0xff]
      %v6568 = vld [vmem:[%s6561 + $0x30] sm:$0xff]
      %v6569 = vld [vmem:[%s6561 + $0x38] sm:$0xff]
      %v6570 = vld [vmem:[%s6561 + $0x40] sm:$0xff]
      %v6571 = vld [vmem:[%s6561 + $0x48] sm:$0xff]
      %v6572 = vld [vmem:[%s6561 + $0x50] sm:$0xff]
      %v6573 = vld [vmem:[%s6561 + $0x58] sm:$0xff]
      %v6574 = vld [vmem:[%s6561 + $0x60] sm:$0xff]
      %v6575 = vld [vmem:[%s6561 + $0x68] sm:$0xff]
      %v6576 = vld [vmem:[%s6561 + $0x70] sm:$0xff]
      %v6577 = vld [vmem:[%s6561 + $0x78] sm:$0xff]
      %v6578 = vld [vmem:[%s6561 + $0x80] sm:$0xff]
      %v6579 = vld [vmem:[%s6561 + $0x88] sm:$0xff]
      %v6580 = vld [vmem:[%s6561 + $0x90] sm:$0xff]
      %v6581 = vld [vmem:[%s6561 + $0x98] sm:$0xff]
      %v6582 = vld [vmem:[%s6561 + $0xa0] sm:$0x1]
      %v6583 = vld [vmem:[%s6561 + $0xa8] sm:$0x1]
      %v6584 = vrot.slane %v5511, 2
      %v6585 = vsel %vm5561, %v6584, 0
      %v6588 = vsel %vm5564, %v6582, 0
      %v6591 = vsel %vm5564, %v6583, 0
      %6593 = vmatprep.subr.mxu0 0.0
      %6594 = vmatpush1.msra.mxu0 0.0
      %6595 = vmatprep.subr.mxu0 0.0
      %6596 = vmatpush1.msra.mxu0 0.0
      %6597 = vmatprep.subr.mxu0 0.0
      %6598 = vmatpush1.msra.mxu0 0.0
      %6599 = vmatprep.subr.mxu0 0.0
      %6600 = vmatpush1.msra.mxu0 0.0
      %6601 = vmatprep.subr.mxu0 0.0
      %6602 = vmatpush1.msra.mxu0 0.0
      %6603 = vmatprep.subr.mxu0 %v6591
      %6604 = vmatpush1.msra.mxu0 %v6588
      %6605 = vmatprep.subr.mxu0 %v6581
      %6606 = vmatpush1.msra.mxu0 %v6580
      %6607 = vmatprep.subr.mxu0 %v6579
      %6608 = vmatpush1.msra.mxu0 %v6578
      %6609 = vmatprep.subr.mxu0 %v6577
      %6610 = vmatpush1.msra.mxu0 %v6576
      %6611 = vmatprep.subr.mxu0 %v6575
      %6612 = vmatpush1.msra.mxu0 %v6574
      %6613 = vmatprep.subr.mxu0 %v6573
      %6614 = vmatpush1.msra.mxu0 %v6572
      %6615 = vmatprep.subr.mxu0 %v6571
      %6616 = vmatpush1.msra.mxu0 %v6570
      %6617 = vmatprep.subr.mxu0 %v6569
      %6618 = vmatpush1.msra.mxu0 %v6568
      %6619 = vmatprep.subr.mxu0 %v6567
      %6620 = vmatpush1.msra.mxu0 %v6566
      %6621 = vmatprep.subr.mxu0 %v6565
      %6622 = vmatpush1.msra.mxu0 %v6564
      %6623 = vmatprep.subr.mxu0 %v6563
      %6624 = vmatpush1.msra.mxu0 %v6562
      %6625 = vmatprep.subr.mxu0 0.0
      %6626 = vmatpush2.msra.mxu0 0.0
      %6627 = vmatprep.subr.mxu0 0.0
      %6628 = vmatpush2.msra.mxu0 0.0
      %6629 = vmatprep.subr.mxu0 0.0
      %6630 = vmatpush2.msra.mxu0 0.0
      %6631 = vmatprep.subr.mxu0 0.0
      %6632 = vmatpush2.msra.mxu0 0.0
      %6633 = vmatprep.subr.mxu0 0.0
      %6634 = vmatpush2.msra.mxu0 0.0
      %6635 = vmatprep.subr.mxu0 0.0
      %6636 = vmatpush2.msra.mxu0 0.0
      %6637 = vmatprep.subr.mxu0 0.0
      %6638 = vmatpush2.msra.mxu0 0.0
      %6639 = vmatprep.subr.mxu0 0.0
      %6640 = vmatpush2.msra.mxu0 0.0
      %6641 = vmatprep.subr.mxu0 0.0
      %6642 = vmatpush2.msra.mxu0 0.0
      %6643 = vmatprep.subr.mxu0 0.0
      %6644 = vmatpush2.msra.mxu0 0.0
      %6645 = vmatprep.subr.mxu0 0.0
      %6646 = vmatpush2.msra.mxu0 0.0
      %6647 = vmatprep.subr.mxu0 0.0
      %6648 = vmatpush2.msra.mxu0 0.0
      %6649 = vmatprep.subr.mxu0 0.0
      %6650 = vmatpush2.msra.mxu0 0.0
      %6651 = vmatprep.subr.mxu0 0.0
      %6652 = vmatpush2.msra.mxu0 0.0
      %6653 = vmatprep.subr.mxu0 0.0
      %6654 = vmatpush2.msra.mxu0 0.0
      %6655 = vmatprep.subr.mxu0 0.0
      %6656 = vmatpush2.msra.mxu0 0.0
      %6657 = vmatprep.mubr.f32.mxu0 0.0
      %6658 = vmatmul.mubr.f32.gmra.mxu0 %v6585
      %v6659 = vpop.f32.mrf.mxu0
      %v6660 = vadd.f32 0.0, %v6659
      %v6661 = vpop.f32.mrf.mxu0
      %v6662 = vadd.f32 0.0, %v6661
      %6663 = vdwg.mxu0
      %v6664 = vadd.f32 %v6559, %v6660
      %v6665 = vadd.f32 %v6560, %v6662
      %s6666 = scalar_lea.vmem %s6, 1936
      %v6667 = vld [vmem:[%s6666] sm:$0xff]
      %v6668 = vld [vmem:[%s6666 + $0x8] sm:$0xff]
      %v6669 = vld [vmem:[%s6666 + $0x10] sm:$0xff]
      %v6670 = vld [vmem:[%s6666 + $0x18] sm:$0xff]
      %v6671 = vld [vmem:[%s6666 + $0x20] sm:$0xff]
      %v6672 = vld [vmem:[%s6666 + $0x28] sm:$0xff]
      %v6673 = vld [vmem:[%s6666 + $0x30] sm:$0xff]
      %v6674 = vld [vmem:[%s6666 + $0x38] sm:$0xff]
      %v6675 = vld [vmem:[%s6666 + $0x40] sm:$0xff]
      %v6676 = vld [vmem:[%s6666 + $0x48] sm:$0xff]
      %v6677 = vld [vmem:[%s6666 + $0x50] sm:$0xff]
      %v6678 = vld [vmem:[%s6666 + $0x58] sm:$0xff]
      %v6679 = vld [vmem:[%s6666 + $0x60] sm:$0xff]
      %v6680 = vld [vmem:[%s6666 + $0x68] sm:$0xff]
      %v6681 = vld [vmem:[%s6666 + $0x70] sm:$0xff]
      %v6682 = vld [vmem:[%s6666 + $0x78] sm:$0xff]
      %v6683 = vld [vmem:[%s6666 + $0x80] sm:$0xff]
      %v6684 = vld [vmem:[%s6666 + $0x88] sm:$0xff]
      %v6685 = vld [vmem:[%s6666 + $0x90] sm:$0xff]
      %v6686 = vld [vmem:[%s6666 + $0x98] sm:$0xff]
      %v6687 = vld [vmem:[%s6666 + $0xa0] sm:$0x1]
      %v6688 = vld [vmem:[%s6666 + $0xa8] sm:$0x1]
      %v6689 = vrot.slane %v5511, 3
      %v6690 = vsel %vm5561, %v6689, 0
      %v6693 = vsel %vm5564, %v6687, 0
      %v6696 = vsel %vm5564, %v6688, 0
      %6698 = vmatprep.subr.mxu0 0.0
      %6699 = vmatpush1.msra.mxu0 0.0
      %6700 = vmatprep.subr.mxu0 0.0
      %6701 = vmatpush1.msra.mxu0 0.0
      %6702 = vmatprep.subr.mxu0 0.0
      %6703 = vmatpush1.msra.mxu0 0.0
      %6704 = vmatprep.subr.mxu0 0.0
      %6705 = vmatpush1.msra.mxu0 0.0
      %6706 = vmatprep.subr.mxu0 0.0
      %6707 = vmatpush1.msra.mxu0 0.0
      %6708 = vmatprep.subr.mxu0 %v6696
      %6709 = vmatpush1.msra.mxu0 %v6693
      %6710 = vmatprep.subr.mxu0 %v6686
      %6711 = vmatpush1.msra.mxu0 %v6685
      %6712 = vmatprep.subr.mxu0 %v6684
      %6713 = vmatpush1.msra.mxu0 %v6683
      %6714 = vmatprep.subr.mxu0 %v6682
      %6715 = vmatpush1.msra.mxu0 %v6681
      %6716 = vmatprep.subr.mxu0 %v6680
      %6717 = vmatpush1.msra.mxu0 %v6679
      %6718 = vmatprep.subr.mxu0 %v6678
      %6719 = vmatpush1.msra.mxu0 %v6677
      %6720 = vmatprep.subr.mxu0 %v6676
      %6721 = vmatpush1.msra.mxu0 %v6675
      %6722 = vmatprep.subr.mxu0 %v6674
      %6723 = vmatpush1.msra.mxu0 %v6673
      %6724 = vmatprep.subr.mxu0 %v6672
      %6725 = vmatpush1.msra.mxu0 %v6671
      %6726 = vmatprep.subr.mxu0 %v6670
      %6727 = vmatpush1.msra.mxu0 %v6669
      %6728 = vmatprep.subr.mxu0 %v6668
      %6729 = vmatpush1.msra.mxu0 %v6667
      %6730 = vmatprep.subr.mxu0 0.0
      %6731 = vmatpush2.msra.mxu0 0.0
      %6732 = vmatprep.subr.mxu0 0.0
      %6733 = vmatpush2.msra.mxu0 0.0
      %6734 = vmatprep.subr.mxu0 0.0
      %6735 = vmatpush2.msra.mxu0 0.0
      %6736 = vmatprep.subr.mxu0 0.0
      %6737 = vmatpush2.msra.mxu0 0.0
      %6738 = vmatprep.subr.mxu0 0.0
      %6739 = vmatpush2.msra.mxu0 0.0
      %6740 = vmatprep.subr.mxu0 0.0
      %6741 = vmatpush2.msra.mxu0 0.0
      %6742 = vmatprep.subr.mxu0 0.0
      %6743 = vmatpush2.msra.mxu0 0.0
      %6744 = vmatprep.subr.mxu0 0.0
      %6745 = vmatpush2.msra.mxu0 0.0
      %6746 = vmatprep.subr.mxu0 0.0
      %6747 = vmatpush2.msra.mxu0 0.0
      %6748 = vmatprep.subr.mxu0 0.0
      %6749 = vmatpush2.msra.mxu0 0.0
      %6750 = vmatprep.subr.mxu0 0.0
      %6751 = vmatpush2.msra.mxu0 0.0
      %6752 = vmatprep.subr.mxu0 0.0
      %6753 = vmatpush2.msra.mxu0 0.0
      %6754 = vmatprep.subr.mxu0 0.0
      %6755 = vmatpush2.msra.mxu0 0.0
      %6756 = vmatprep.subr.mxu0 0.0
      %6757 = vmatpush2.msra.mxu0 0.0
      %6758 = vmatprep.subr.mxu0 0.0
      %6759 = vmatpush2.msra.mxu0 0.0
      %6760 = vmatprep.subr.mxu0 0.0
      %6761 = vmatpush2.msra.mxu0 0.0
      %6762 = vmatprep.mubr.f32.mxu0 0.0
      %6763 = vmatmul.mubr.f32.gmra.mxu0 %v6690
      %v6764 = vpop.f32.mrf.mxu0
      %v6765 = vadd.f32 0.0, %v6764
      %v6766 = vpop.f32.mrf.mxu0
      %v6767 = vadd.f32 0.0, %v6766
      %6768 = vdwg.mxu0
      %v6769 = vadd.f32 %v6664, %v6765
      %v6770 = vadd.f32 %v6665, %v6767
      %s6771 = scalar_lea.vmem %s6, 2112
      %v6772 = vld [vmem:[%s6771] sm:$0xff]
      %v6773 = vld [vmem:[%s6771 + $0x8] sm:$0xff]
      %v6774 = vld [vmem:[%s6771 + $0x10] sm:$0xff]
      %v6775 = vld [vmem:[%s6771 + $0x18] sm:$0xff]
      %v6776 = vld [vmem:[%s6771 + $0x20] sm:$0xff]
      %v6777 = vld [vmem:[%s6771 + $0x28] sm:$0xff]
      %v6778 = vld [vmem:[%s6771 + $0x30] sm:$0xff]
      %v6779 = vld [vmem:[%s6771 + $0x38] sm:$0xff]
      %v6780 = vld [vmem:[%s6771 + $0x40] sm:$0xff]
      %v6781 = vld [vmem:[%s6771 + $0x48] sm:$0xff]
      %v6782 = vld [vmem:[%s6771 + $0x50] sm:$0xff]
      %v6783 = vld [vmem:[%s6771 + $0x58] sm:$0xff]
      %v6784 = vld [vmem:[%s6771 + $0x60] sm:$0xff]
      %v6785 = vld [vmem:[%s6771 + $0x68] sm:$0xff]
      %v6786 = vld [vmem:[%s6771 + $0x70] sm:$0xff]
      %v6787 = vld [vmem:[%s6771 + $0x78] sm:$0xff]
      %v6788 = vld [vmem:[%s6771 + $0x80] sm:$0xff]
      %v6789 = vld [vmem:[%s6771 + $0x88] sm:$0xff]
      %v6790 = vld [vmem:[%s6771 + $0x90] sm:$0xff]
      %v6791 = vld [vmem:[%s6771 + $0x98] sm:$0xff]
      %v6792 = vld [vmem:[%s6771 + $0xa0] sm:$0x1]
      %v6793 = vld [vmem:[%s6771 + $0xa8] sm:$0x1]
      %v6794 = vrot.slane %v5511, 4
      %v6795 = vsel %vm5561, %v6794, 0
      %v6798 = vsel %vm5564, %v6792, 0
      %v6801 = vsel %vm5564, %v6793, 0
      %6803 = vmatprep.subr.mxu0 0.0
      %6804 = vmatpush1.msra.mxu0 0.0
      %6805 = vmatprep.subr.mxu0 0.0
      %6806 = vmatpush1.msra.mxu0 0.0
      %6807 = vmatprep.subr.mxu0 0.0
      %6808 = vmatpush1.msra.mxu0 0.0
      %6809 = vmatprep.subr.mxu0 0.0
      %6810 = vmatpush1.msra.mxu0 0.0
      %6811 = vmatprep.subr.mxu0 0.0
      %6812 = vmatpush1.msra.mxu0 0.0
      %6813 = vmatprep.subr.mxu0 %v6801
      %6814 = vmatpush1.msra.mxu0 %v6798
      %6815 = vmatprep.subr.mxu0 %v6791
      %6816 = vmatpush1.msra.mxu0 %v6790
      %6817 = vmatprep.subr.mxu0 %v6789
      %6818 = vmatpush1.msra.mxu0 %v6788
      %6819 = vmatprep.subr.mxu0 %v6787
      %6820 = vmatpush1.msra.mxu0 %v6786
      %6821 = vmatprep.subr.mxu0 %v6785
      %6822 = vmatpush1.msra.mxu0 %v6784
      %6823 = vmatprep.subr.mxu0 %v6783
      %6824 = vmatpush1.msra.mxu0 %v6782
      %6825 = vmatprep.subr.mxu0 %v6781
      %6826 = vmatpush1.msra.mxu0 %v6780
      %6827 = vmatprep.subr.mxu0 %v6779
      %6828 = vmatpush1.msra.mxu0 %v6778
      %6829 = vmatprep.subr.mxu0 %v6777
      %6830 = vmatpush1.msra.mxu0 %v6776
      %6831 = vmatprep.subr.mxu0 %v6775
      %6832 = vmatpush1.msra.mxu0 %v6774
      %6833 = vmatprep.subr.mxu0 %v6773
      %6834 = vmatpush1.msra.mxu0 %v6772
      %6835 = vmatprep.subr.mxu0 0.0
      %6836 = vmatpush2.msra.mxu0 0.0
      %6837 = vmatprep.subr.mxu0 0.0
      %6838 = vmatpush2.msra.mxu0 0.0
      %6839 = vmatprep.subr.mxu0 0.0
      %6840 = vmatpush2.msra.mxu0 0.0
      %6841 = vmatprep.subr.mxu0 0.0
      %6842 = vmatpush2.msra.mxu0 0.0
      %6843 = vmatprep.subr.mxu0 0.0
      %6844 = vmatpush2.msra.mxu0 0.0
      %6845 = vmatprep.subr.mxu0 0.0
      %6846 = vmatpush2.msra.mxu0 0.0
      %6847 = vmatprep.subr.mxu0 0.0
      %6848 = vmatpush2.msra.mxu0 0.0
      %6849 = vmatprep.subr.mxu0 0.0
      %6850 = vmatpush2.msra.mxu0 0.0
      %6851 = vmatprep.subr.mxu0 0.0
      %6852 = vmatpush2.msra.mxu0 0.0
      %6853 = vmatprep.subr.mxu0 0.0
      %6854 = vmatpush2.msra.mxu0 0.0
      %6855 = vmatprep.subr.mxu0 0.0
      %6856 = vmatpush2.msra.mxu0 0.0
      %6857 = vmatprep.subr.mxu0 0.0
      %6858 = vmatpush2.msra.mxu0 0.0
      %6859 = vmatprep.subr.mxu0 0.0
      %6860 = vmatpush2.msra.mxu0 0.0
      %6861 = vmatprep.subr.mxu0 0.0
      %6862 = vmatpush2.msra.mxu0 0.0
      %6863 = vmatprep.subr.mxu0 0.0
      %6864 = vmatpush2.msra.mxu0 0.0
      %6865 = vmatprep.subr.mxu0 0.0
      %6866 = vmatpush2.msra.mxu0 0.0
      %6867 = vmatprep.mubr.f32.mxu0 0.0
      %6868 = vmatmul.mubr.f32.gmra.mxu0 %v6795
      %v6869 = vpop.f32.mrf.mxu0
      %v6870 = vadd.f32 0.0, %v6869
      %v6871 = vpop.f32.mrf.mxu0
      %v6872 = vadd.f32 0.0, %v6871
      %6873 = vdwg.mxu0
      %v6874 = vadd.f32 %v6769, %v6870
      %v6875 = vadd.f32 %v6770, %v6872
      %s6876 = scalar_lea.vmem %s6, 2288
      %v6877 = vld [vmem:[%s6876] sm:$0xff]
      %v6878 = vld [vmem:[%s6876 + $0x8] sm:$0xff]
      %v6879 = vld [vmem:[%s6876 + $0x10] sm:$0xff]
      %v6880 = vld [vmem:[%s6876 + $0x18] sm:$0xff]
      %v6881 = vld [vmem:[%s6876 + $0x20] sm:$0xff]
      %v6882 = vld [vmem:[%s6876 + $0x28] sm:$0xff]
      %v6883 = vld [vmem:[%s6876 + $0x30] sm:$0xff]
      %v6884 = vld [vmem:[%s6876 + $0x38] sm:$0xff]
      %v6885 = vld [vmem:[%s6876 + $0x40] sm:$0xff]
      %v6886 = vld [vmem:[%s6876 + $0x48] sm:$0xff]
      %v6887 = vld [vmem:[%s6876 + $0x50] sm:$0xff]
      %v6888 = vld [vmem:[%s6876 + $0x58] sm:$0xff]
      %v6889 = vld [vmem:[%s6876 + $0x60] sm:$0xff]
      %v6890 = vld [vmem:[%s6876 + $0x68] sm:$0xff]
      %v6891 = vld [vmem:[%s6876 + $0x70] sm:$0xff]
      %v6892 = vld [vmem:[%s6876 + $0x78] sm:$0xff]
      %v6893 = vld [vmem:[%s6876 + $0x80] sm:$0xff]
      %v6894 = vld [vmem:[%s6876 + $0x88] sm:$0xff]
      %v6895 = vld [vmem:[%s6876 + $0x90] sm:$0xff]
      %v6896 = vld [vmem:[%s6876 + $0x98] sm:$0xff]
      %v6897 = vld [vmem:[%s6876 + $0xa0] sm:$0x1]
      %v6898 = vld [vmem:[%s6876 + $0xa8] sm:$0x1]
      %v6899 = vrot.slane %v5511, 5
      %v6900 = vsel %vm5561, %v6899, 0
      %v6903 = vsel %vm5564, %v6897, 0
      %v6906 = vsel %vm5564, %v6898, 0
      %6908 = vmatprep.subr.mxu0 0.0
      %6909 = vmatpush1.msra.mxu0 0.0
      %6910 = vmatprep.subr.mxu0 0.0
      %6911 = vmatpush1.msra.mxu0 0.0
      %6912 = vmatprep.subr.mxu0 0.0
      %6913 = vmatpush1.msra.mxu0 0.0
      %6914 = vmatprep.subr.mxu0 0.0
      %6915 = vmatpush1.msra.mxu0 0.0
      %6916 = vmatprep.subr.mxu0 0.0
      %6917 = vmatpush1.msra.mxu0 0.0
      %6918 = vmatprep.subr.mxu0 %v6906
      %6919 = vmatpush1.msra.mxu0 %v6903
      %6920 = vmatprep.subr.mxu0 %v6896
      %6921 = vmatpush1.msra.mxu0 %v6895
      %6922 = vmatprep.subr.mxu0 %v6894
      %6923 = vmatpush1.msra.mxu0 %v6893
      %6924 = vmatprep.subr.mxu0 %v6892
      %6925 = vmatpush1.msra.mxu0 %v6891
      %6926 = vmatprep.subr.mxu0 %v6890
      %6927 = vmatpush1.msra.mxu0 %v6889
      %6928 = vmatprep.subr.mxu0 %v6888
      %6929 = vmatpush1.msra.mxu0 %v6887
      %6930 = vmatprep.subr.mxu0 %v6886
      %6931 = vmatpush1.msra.mxu0 %v6885
      %6932 = vmatprep.subr.mxu0 %v6884
      %6933 = vmatpush1.msra.mxu0 %v6883
      %6934 = vmatprep.subr.mxu0 %v6882
      %6935 = vmatpush1.msra.mxu0 %v6881
      %6936 = vmatprep.subr.mxu0 %v6880
      %6937 = vmatpush1.msra.mxu0 %v6879
      %6938 = vmatprep.subr.mxu0 %v6878
      %6939 = vmatpush1.msra.mxu0 %v6877
      %6940 = vmatprep.subr.mxu0 0.0
      %6941 = vmatpush2.msra.mxu0 0.0
      %6942 = vmatprep.subr.mxu0 0.0
      %6943 = vmatpush2.msra.mxu0 0.0
      %6944 = vmatprep.subr.mxu0 0.0
      %6945 = vmatpush2.msra.mxu0 0.0
      %6946 = vmatprep.subr.mxu0 0.0
      %6947 = vmatpush2.msra.mxu0 0.0
      %6948 = vmatprep.subr.mxu0 0.0
      %6949 = vmatpush2.msra.mxu0 0.0
      %6950 = vmatprep.subr.mxu0 0.0
      %6951 = vmatpush2.msra.mxu0 0.0
      %6952 = vmatprep.subr.mxu0 0.0
      %6953 = vmatpush2.msra.mxu0 0.0
      %6954 = vmatprep.subr.mxu0 0.0
      %6955 = vmatpush2.msra.mxu0 0.0
      %6956 = vmatprep.subr.mxu0 0.0
      %6957 = vmatpush2.msra.mxu0 0.0
      %6958 = vmatprep.subr.mxu0 0.0
      %6959 = vmatpush2.msra.mxu0 0.0
      %6960 = vmatprep.subr.mxu0 0.0
      %6961 = vmatpush2.msra.mxu0 0.0
      %6962 = vmatprep.subr.mxu0 0.0
      %6963 = vmatpush2.msra.mxu0 0.0
      %6964 = vmatprep.subr.mxu0 0.0
      %6965 = vmatpush2.msra.mxu0 0.0
      %6966 = vmatprep.subr.mxu0 0.0
      %6967 = vmatpush2.msra.mxu0 0.0
      %6968 = vmatprep.subr.mxu0 0.0
      %6969 = vmatpush2.msra.mxu0 0.0
      %6970 = vmatprep.subr.mxu0 0.0
      %6971 = vmatpush2.msra.mxu0 0.0
      %6972 = vmatprep.mubr.f32.mxu0 0.0
      %6973 = vmatmul.mubr.f32.gmra.mxu0 %v6900
      %v6974 = vpop.f32.mrf.mxu0
      %v6975 = vadd.f32 0.0, %v6974
      %v6976 = vpop.f32.mrf.mxu0
      %v6977 = vadd.f32 0.0, %v6976
      %6978 = vdwg.mxu0
      %v6979 = vadd.f32 %v6874, %v6975
      %v6980 = vadd.f32 %v6875, %v6977
      %s6981 = scalar_lea.vmem %s6, 2464
      %v6982 = vld [vmem:[%s6981] sm:$0xff]
      %v6983 = vld [vmem:[%s6981 + $0x8] sm:$0xff]
      %v6984 = vld [vmem:[%s6981 + $0x10] sm:$0xff]
      %v6985 = vld [vmem:[%s6981 + $0x18] sm:$0xff]
      %v6986 = vld [vmem:[%s6981 + $0x20] sm:$0xff]
      %v6987 = vld [vmem:[%s6981 + $0x28] sm:$0xff]
      %v6988 = vld [vmem:[%s6981 + $0x30] sm:$0xff]
      %v6989 = vld [vmem:[%s6981 + $0x38] sm:$0xff]
      %v6990 = vld [vmem:[%s6981 + $0x40] sm:$0xff]
      %v6991 = vld [vmem:[%s6981 + $0x48] sm:$0xff]
      %v6992 = vld [vmem:[%s6981 + $0x50] sm:$0xff]
      %v6993 = vld [vmem:[%s6981 + $0x58] sm:$0xff]
      %v6994 = vld [vmem:[%s6981 + $0x60] sm:$0xff]
      %v6995 = vld [vmem:[%s6981 + $0x68] sm:$0xff]
      %v6996 = vld [vmem:[%s6981 + $0x70] sm:$0xff]
      %v6997 = vld [vmem:[%s6981 + $0x78] sm:$0xff]
      %v6998 = vld [vmem:[%s6981 + $0x80] sm:$0xff]
      %v6999 = vld [vmem:[%s6981 + $0x88] sm:$0xff]
      %v7000 = vld [vmem:[%s6981 + $0x90] sm:$0xff]
      %v7001 = vld [vmem:[%s6981 + $0x98] sm:$0xff]
      %v7002 = vld [vmem:[%s6981 + $0xa0] sm:$0x1]
      %v7003 = vld [vmem:[%s6981 + $0xa8] sm:$0x1]
      %v7004 = vrot.slane %v5511, 6
      %v7005 = vsel %vm5561, %v7004, 0
      %v7008 = vsel %vm5564, %v7002, 0
      %v7011 = vsel %vm5564, %v7003, 0
      %7013 = vmatprep.subr.mxu0 0.0
      %7014 = vmatpush1.msra.mxu0 0.0
      %7015 = vmatprep.subr.mxu0 0.0
      %7016 = vmatpush1.msra.mxu0 0.0
      %7017 = vmatprep.subr.mxu0 0.0
      %7018 = vmatpush1.msra.mxu0 0.0
      %7019 = vmatprep.subr.mxu0 0.0
      %7020 = vmatpush1.msra.mxu0 0.0
      %7021 = vmatprep.subr.mxu0 0.0
      %7022 = vmatpush1.msra.mxu0 0.0
      %7023 = vmatprep.subr.mxu0 %v7011
      %7024 = vmatpush1.msra.mxu0 %v7008
      %7025 = vmatprep.subr.mxu0 %v7001
      %7026 = vmatpush1.msra.mxu0 %v7000
      %7027 = vmatprep.subr.mxu0 %v6999
      %7028 = vmatpush1.msra.mxu0 %v6998
      %7029 = vmatprep.subr.mxu0 %v6997
      %7030 = vmatpush1.msra.mxu0 %v6996
      %7031 = vmatprep.subr.mxu0 %v6995
      %7032 = vmatpush1.msra.mxu0 %v6994
      %7033 = vmatprep.subr.mxu0 %v6993
      %7034 = vmatpush1.msra.mxu0 %v6992
      %7035 = vmatprep.subr.mxu0 %v6991
      %7036 = vmatpush1.msra.mxu0 %v6990
      %7037 = vmatprep.subr.mxu0 %v6989
      %7038 = vmatpush1.msra.mxu0 %v6988
      %7039 = vmatprep.subr.mxu0 %v6987
      %7040 = vmatpush1.msra.mxu0 %v6986
      %7041 = vmatprep.subr.mxu0 %v6985
      %7042 = vmatpush1.msra.mxu0 %v6984
      %7043 = vmatprep.subr.mxu0 %v6983
      %7044 = vmatpush1.msra.mxu0 %v6982
      %7045 = vmatprep.subr.mxu0 0.0
      %7046 = vmatpush2.msra.mxu0 0.0
      %7047 = vmatprep.subr.mxu0 0.0
      %7048 = vmatpush2.msra.mxu0 0.0
      %7049 = vmatprep.subr.mxu0 0.0
      %7050 = vmatpush2.msra.mxu0 0.0
      %7051 = vmatprep.subr.mxu0 0.0
      %7052 = vmatpush2.msra.mxu0 0.0
      %7053 = vmatprep.subr.mxu0 0.0
      %7054 = vmatpush2.msra.mxu0 0.0
      %7055 = vmatprep.subr.mxu0 0.0
      %7056 = vmatpush2.msra.mxu0 0.0
      %7057 = vmatprep.subr.mxu0 0.0
      %7058 = vmatpush2.msra.mxu0 0.0
      %7059 = vmatprep.subr.mxu0 0.0
      %7060 = vmatpush2.msra.mxu0 0.0
      %7061 = vmatprep.subr.mxu0 0.0
      %7062 = vmatpush2.msra.mxu0 0.0
      %7063 = vmatprep.subr.mxu0 0.0
      %7064 = vmatpush2.msra.mxu0 0.0
      %7065 = vmatprep.subr.mxu0 0.0
      %7066 = vmatpush2.msra.mxu0 0.0
      %7067 = vmatprep.subr.mxu0 0.0
      %7068 = vmatpush2.msra.mxu0 0.0
      %7069 = vmatprep.subr.mxu0 0.0
      %7070 = vmatpush2.msra.mxu0 0.0
      %7071 = vmatprep.subr.mxu0 0.0
      %7072 = vmatpush2.msra.mxu0 0.0
      %7073 = vmatprep.subr.mxu0 0.0
      %7074 = vmatpush2.msra.mxu0 0.0
      %7075 = vmatprep.subr.mxu0 0.0
      %7076 = vmatpush2.msra.mxu0 0.0
      %7077 = vmatprep.mubr.f32.mxu0 0.0
      %7078 = vmatmul.mubr.f32.gmra.mxu0 %v7005
      %v7079 = vpop.f32.mrf.mxu0
      %v7080 = vadd.f32 0.0, %v7079
      %v7081 = vpop.f32.mrf.mxu0
      %v7082 = vadd.f32 0.0, %v7081
      %7083 = vdwg.mxu0
      %v7084 = vadd.f32 %v6979, %v7080
      %v7085 = vadd.f32 %v6980, %v7082
      %s7086 = scalar_lea.vmem %s6, 2640
      %v7087 = vld [vmem:[%s7086] sm:$0xff]
      %v7088 = vld [vmem:[%s7086 + $0x8] sm:$0xff]
      %v7089 = vld [vmem:[%s7086 + $0x10] sm:$0xff]
      %v7090 = vld [vmem:[%s7086 + $0x18] sm:$0xff]
      %v7091 = vld [vmem:[%s7086 + $0x20] sm:$0xff]
      %v7092 = vld [vmem:[%s7086 + $0x28] sm:$0xff]
      %v7093 = vld [vmem:[%s7086 + $0x30] sm:$0xff]
      %v7094 = vld [vmem:[%s7086 + $0x38] sm:$0xff]
      %v7095 = vld [vmem:[%s7086 + $0x40] sm:$0xff]
      %v7096 = vld [vmem:[%s7086 + $0x48] sm:$0xff]
      %v7097 = vld [vmem:[%s7086 + $0x50] sm:$0xff]
      %v7098 = vld [vmem:[%s7086 + $0x58] sm:$0xff]
      %v7099 = vld [vmem:[%s7086 + $0x60] sm:$0xff]
      %v7100 = vld [vmem:[%s7086 + $0x68] sm:$0xff]
      %v7101 = vld [vmem:[%s7086 + $0x70] sm:$0xff]
      %v7102 = vld [vmem:[%s7086 + $0x78] sm:$0xff]
      %v7103 = vld [vmem:[%s7086 + $0x80] sm:$0xff]
      %v7104 = vld [vmem:[%s7086 + $0x88] sm:$0xff]
      %v7105 = vld [vmem:[%s7086 + $0x90] sm:$0xff]
      %v7106 = vld [vmem:[%s7086 + $0x98] sm:$0xff]
      %v7107 = vld [vmem:[%s7086 + $0xa0] sm:$0x1]
      %v7108 = vld [vmem:[%s7086 + $0xa8] sm:$0x1]
      %v7109 = vrot.slane %v5511, 7
      %v7110 = vsel %vm5561, %v7109, 0
      %v7113 = vsel %vm5564, %v7107, 0
      %v7116 = vsel %vm5564, %v7108, 0
      %7118 = vmatprep.subr.mxu0 0.0
      %7119 = vmatpush1.msra.mxu0 0.0
      %7120 = vmatprep.subr.mxu0 0.0
      %7121 = vmatpush1.msra.mxu0 0.0
      %7122 = vmatprep.subr.mxu0 0.0
      %7123 = vmatpush1.msra.mxu0 0.0
      %7124 = vmatprep.subr.mxu0 0.0
      %7125 = vmatpush1.msra.mxu0 0.0
      %7126 = vmatprep.subr.mxu0 0.0
      %7127 = vmatpush1.msra.mxu0 0.0
      %7128 = vmatprep.subr.mxu0 %v7116
      %7129 = vmatpush1.msra.mxu0 %v7113
      %7130 = vmatprep.subr.mxu0 %v7106
      %7131 = vmatpush1.msra.mxu0 %v7105
      %7132 = vmatprep.subr.mxu0 %v7104
      %7133 = vmatpush1.msra.mxu0 %v7103
      %7134 = vmatprep.subr.mxu0 %v7102
      %7135 = vmatpush1.msra.mxu0 %v7101
      %7136 = vmatprep.subr.mxu0 %v7100
      %7137 = vmatpush1.msra.mxu0 %v7099
      %7138 = vmatprep.subr.mxu0 %v7098
      %7139 = vmatpush1.msra.mxu0 %v7097
      %7140 = vmatprep.subr.mxu0 %v7096
      %7141 = vmatpush1.msra.mxu0 %v7095
      %7142 = vmatprep.subr.mxu0 %v7094
      %7143 = vmatpush1.msra.mxu0 %v7093
      %7144 = vmatprep.subr.mxu0 %v7092
      %7145 = vmatpush1.msra.mxu0 %v7091
      %7146 = vmatprep.subr.mxu0 %v7090
      %7147 = vmatpush1.msra.mxu0 %v7089
      %7148 = vmatprep.subr.mxu0 %v7088
      %7149 = vmatpush1.msra.mxu0 %v7087
      %7150 = vmatprep.subr.mxu0 0.0
      %7151 = vmatpush2.msra.mxu0 0.0
      %7152 = vmatprep.subr.mxu0 0.0
      %7153 = vmatpush2.msra.mxu0 0.0
      %7154 = vmatprep.subr.mxu0 0.0
      %7155 = vmatpush2.msra.mxu0 0.0
      %7156 = vmatprep.subr.mxu0 0.0
      %7157 = vmatpush2.msra.mxu0 0.0
      %7158 = vmatprep.subr.mxu0 0.0
      %7159 = vmatpush2.msra.mxu0 0.0
      %7160 = vmatprep.subr.mxu0 0.0
      %7161 = vmatpush2.msra.mxu0 0.0
      %7162 = vmatprep.subr.mxu0 0.0
      %7163 = vmatpush2.msra.mxu0 0.0
      %7164 = vmatprep.subr.mxu0 0.0
      %7165 = vmatpush2.msra.mxu0 0.0
      %7166 = vmatprep.subr.mxu0 0.0
      %7167 = vmatpush2.msra.mxu0 0.0
      %7168 = vmatprep.subr.mxu0 0.0
      %7169 = vmatpush2.msra.mxu0 0.0
      %7170 = vmatprep.subr.mxu0 0.0
      %7171 = vmatpush2.msra.mxu0 0.0
      %7172 = vmatprep.subr.mxu0 0.0
      %7173 = vmatpush2.msra.mxu0 0.0
      %7174 = vmatprep.subr.mxu0 0.0
      %7175 = vmatpush2.msra.mxu0 0.0
      %7176 = vmatprep.subr.mxu0 0.0
      %7177 = vmatpush2.msra.mxu0 0.0
      %7178 = vmatprep.subr.mxu0 0.0
      %7179 = vmatpush2.msra.mxu0 0.0
      %7180 = vmatprep.subr.mxu0 0.0
      %7181 = vmatpush2.msra.mxu0 0.0
      %7182 = vmatprep.mubr.f32.mxu0 0.0
      %7183 = vmatmul.mubr.f32.gmra.mxu0 %v7110
      %v7184 = vpop.f32.mrf.mxu0
      %v7185 = vadd.f32 0.0, %v7184
      %v7186 = vpop.f32.mrf.mxu0
      %v7187 = vadd.f32 0.0, %v7186
      %7188 = vdwg.mxu0
      %v7189 = vadd.f32 %v7084, %v7185
      %v7190 = vadd.f32 %v7085, %v7187
      %s7191 = scalar_lea.vmem %s6, 2816
      %v7192 = vld [vmem:[%s7191] sm:$0xff]
      %v7193 = vld [vmem:[%s7191 + $0x8] sm:$0xff]
      %v7194 = vld [vmem:[%s7191 + $0x10] sm:$0xff]
      %v7195 = vld [vmem:[%s7191 + $0x18] sm:$0xff]
      %v7196 = vld [vmem:[%s7191 + $0x20] sm:$0xff]
      %v7197 = vld [vmem:[%s7191 + $0x28] sm:$0xff]
      %v7198 = vld [vmem:[%s7191 + $0x30] sm:$0xff]
      %v7199 = vld [vmem:[%s7191 + $0x38] sm:$0xff]
      %v7200 = vld [vmem:[%s7191 + $0x40] sm:$0xff]
      %v7201 = vld [vmem:[%s7191 + $0x48] sm:$0xff]
      %v7202 = vld [vmem:[%s7191 + $0x50] sm:$0xff]
      %v7203 = vld [vmem:[%s7191 + $0x58] sm:$0xff]
      %v7204 = vld [vmem:[%s7191 + $0x60] sm:$0xff]
      %v7205 = vld [vmem:[%s7191 + $0x68] sm:$0xff]
      %v7206 = vld [vmem:[%s7191 + $0x70] sm:$0xff]
      %v7207 = vld [vmem:[%s7191 + $0x78] sm:$0xff]
      %v7208 = vld [vmem:[%s7191 + $0x80] sm:$0xff]
      %v7209 = vld [vmem:[%s7191 + $0x88] sm:$0xff]
      %v7210 = vld [vmem:[%s7191 + $0x90] sm:$0xff]
      %v7211 = vld [vmem:[%s7191 + $0x98] sm:$0xff]
      %v7212 = vld [vmem:[%s7191 + $0xa0] sm:$0x1]
      %v7213 = vld [vmem:[%s7191 + $0xa8] sm:$0x1]
      %v7215 = vsel %vm5561, %v5512, 0
      %v7218 = vsel %vm5564, %v7212, 0
      %v7221 = vsel %vm5564, %v7213, 0
      %7223 = vmatprep.subr.mxu0 0.0
      %7224 = vmatpush1.msra.mxu0 0.0
      %7225 = vmatprep.subr.mxu0 0.0
      %7226 = vmatpush1.msra.mxu0 0.0
      %7227 = vmatprep.subr.mxu0 0.0
      %7228 = vmatpush1.msra.mxu0 0.0
      %7229 = vmatprep.subr.mxu0 0.0
      %7230 = vmatpush1.msra.mxu0 0.0
      %7231 = vmatprep.subr.mxu0 0.0
      %7232 = vmatpush1.msra.mxu0 0.0
      %7233 = vmatprep.subr.mxu0 %v7221
      %7234 = vmatpush1.msra.mxu0 %v7218
      %7235 = vmatprep.subr.mxu0 %v7211
      %7236 = vmatpush1.msra.mxu0 %v7210
      %7237 = vmatprep.subr.mxu0 %v7209
      %7238 = vmatpush1.msra.mxu0 %v7208
      %7239 = vmatprep.subr.mxu0 %v7207
      %7240 = vmatpush1.msra.mxu0 %v7206
      %7241 = vmatprep.subr.mxu0 %v7205
      %7242 = vmatpush1.msra.mxu0 %v7204
      %7243 = vmatprep.subr.mxu0 %v7203
      %7244 = vmatpush1.msra.mxu0 %v7202
      %7245 = vmatprep.subr.mxu0 %v7201
      %7246 = vmatpush1.msra.mxu0 %v7200
      %7247 = vmatprep.subr.mxu0 %v7199
      %7248 = vmatpush1.msra.mxu0 %v7198
      %7249 = vmatprep.subr.mxu0 %v7197
      %7250 = vmatpush1.msra.mxu0 %v7196
      %7251 = vmatprep.subr.mxu0 %v7195
      %7252 = vmatpush1.msra.mxu0 %v7194
      %7253 = vmatprep.subr.mxu0 %v7193
      %7254 = vmatpush1.msra.mxu0 %v7192
      %7255 = vmatprep.subr.mxu0 0.0
      %7256 = vmatpush2.msra.mxu0 0.0
      %7257 = vmatprep.subr.mxu0 0.0
      %7258 = vmatpush2.msra.mxu0 0.0
      %7259 = vmatprep.subr.mxu0 0.0
      %7260 = vmatpush2.msra.mxu0 0.0
      %7261 = vmatprep.subr.mxu0 0.0
      %7262 = vmatpush2.msra.mxu0 0.0
      %7263 = vmatprep.subr.mxu0 0.0
      %7264 = vmatpush2.msra.mxu0 0.0
      %7265 = vmatprep.subr.mxu0 0.0
      %7266 = vmatpush2.msra.mxu0 0.0
      %7267 = vmatprep.subr.mxu0 0.0
      %7268 = vmatpush2.msra.mxu0 0.0
      %7269 = vmatprep.subr.mxu0 0.0
      %7270 = vmatpush2.msra.mxu0 0.0
      %7271 = vmatprep.subr.mxu0 0.0
      %7272 = vmatpush2.msra.mxu0 0.0
      %7273 = vmatprep.subr.mxu0 0.0
      %7274 = vmatpush2.msra.mxu0 0.0
      %7275 = vmatprep.subr.mxu0 0.0
      %7276 = vmatpush2.msra.mxu0 0.0
      %7277 = vmatprep.subr.mxu0 0.0
      %7278 = vmatpush2.msra.mxu0 0.0
      %7279 = vmatprep.subr.mxu0 0.0
      %7280 = vmatpush2.msra.mxu0 0.0
      %7281 = vmatprep.subr.mxu0 0.0
      %7282 = vmatpush2.msra.mxu0 0.0
      %7283 = vmatprep.subr.mxu0 0.0
      %7284 = vmatpush2.msra.mxu0 0.0
      %7285 = vmatprep.subr.mxu0 0.0
      %7286 = vmatpush2.msra.mxu0 0.0
      %7287 = vmatprep.mubr.f32.mxu0 0.0
      %7288 = vmatmul.mubr.f32.gmra.mxu0 %v7215
      %v7289 = vpop.f32.mrf.mxu0
      %v7290 = vadd.f32 0.0, %v7289
      %v7291 = vpop.f32.mrf.mxu0
      %v7292 = vadd.f32 0.0, %v7291
      %7293 = vdwg.mxu0
      %v7294 = vadd.f32 %v7189, %v7290
      %v7295 = vadd.f32 %v7190, %v7292
      %s7296 = scalar_lea.vmem %s6, 2992
      %v7297 = vld [vmem:[%s7296] sm:$0xff]
      %v7298 = vld [vmem:[%s7296 + $0x8] sm:$0xff]
      %v7299 = vld [vmem:[%s7296 + $0x10] sm:$0xff]
      %v7300 = vld [vmem:[%s7296 + $0x18] sm:$0xff]
      %v7301 = vld [vmem:[%s7296 + $0x20] sm:$0xff]
      %v7302 = vld [vmem:[%s7296 + $0x28] sm:$0xff]
      %v7303 = vld [vmem:[%s7296 + $0x30] sm:$0xff]
      %v7304 = vld [vmem:[%s7296 + $0x38] sm:$0xff]
      %v7305 = vld [vmem:[%s7296 + $0x40] sm:$0xff]
      %v7306 = vld [vmem:[%s7296 + $0x48] sm:$0xff]
      %v7307 = vld [vmem:[%s7296 + $0x50] sm:$0xff]
      %v7308 = vld [vmem:[%s7296 + $0x58] sm:$0xff]
      %v7309 = vld [vmem:[%s7296 + $0x60] sm:$0xff]
      %v7310 = vld [vmem:[%s7296 + $0x68] sm:$0xff]
      %v7311 = vld [vmem:[%s7296 + $0x70] sm:$0xff]
      %v7312 = vld [vmem:[%s7296 + $0x78] sm:$0xff]
      %v7313 = vld [vmem:[%s7296 + $0x80] sm:$0xff]
      %v7314 = vld [vmem:[%s7296 + $0x88] sm:$0xff]
      %v7315 = vld [vmem:[%s7296 + $0x90] sm:$0xff]
      %v7316 = vld [vmem:[%s7296 + $0x98] sm:$0xff]
      %v7317 = vld [vmem:[%s7296 + $0xa0] sm:$0x1]
      %v7318 = vld [vmem:[%s7296 + $0xa8] sm:$0x1]
      %v7319 = vrot.slane %v5512, 1
      %v7320 = vsel %vm5561, %v7319, 0
      %v7323 = vsel %vm5564, %v7317, 0
      %v7326 = vsel %vm5564, %v7318, 0
      %7328 = vmatprep.subr.mxu0 0.0
      %7329 = vmatpush1.msra.mxu0 0.0
      %7330 = vmatprep.subr.mxu0 0.0
      %7331 = vmatpush1.msra.mxu0 0.0
      %7332 = vmatprep.subr.mxu0 0.0
      %7333 = vmatpush1.msra.mxu0 0.0
      %7334 = vmatprep.subr.mxu0 0.0
      %7335 = vmatpush1.msra.mxu0 0.0
      %7336 = vmatprep.subr.mxu0 0.0
      %7337 = vmatpush1.msra.mxu0 0.0
      %7338 = vmatprep.subr.mxu0 %v7326
      %7339 = vmatpush1.msra.mxu0 %v7323
      %7340 = vmatprep.subr.mxu0 %v7316
      %7341 = vmatpush1.msra.mxu0 %v7315
      %7342 = vmatprep.subr.mxu0 %v7314
      %7343 = vmatpush1.msra.mxu0 %v7313
      %7344 = vmatprep.subr.mxu0 %v7312
      %7345 = vmatpush1.msra.mxu0 %v7311
      %7346 = vmatprep.subr.mxu0 %v7310
      %7347 = vmatpush1.msra.mxu0 %v7309
      %7348 = vmatprep.subr.mxu0 %v7308
      %7349 = vmatpush1.msra.mxu0 %v7307
      %7350 = vmatprep.subr.mxu0 %v7306
      %7351 = vmatpush1.msra.mxu0 %v7305
      %7352 = vmatprep.subr.mxu0 %v7304
      %7353 = vmatpush1.msra.mxu0 %v7303
      %7354 = vmatprep.subr.mxu0 %v7302
      %7355 = vmatpush1.msra.mxu0 %v7301
      %7356 = vmatprep.subr.mxu0 %v7300
      %7357 = vmatpush1.msra.mxu0 %v7299
      %7358 = vmatprep.subr.mxu0 %v7298
      %7359 = vmatpush1.msra.mxu0 %v7297
      %7360 = vmatprep.subr.mxu0 0.0
      %7361 = vmatpush2.msra.mxu0 0.0
      %7362 = vmatprep.subr.mxu0 0.0
      %7363 = vmatpush2.msra.mxu0 0.0
      %7364 = vmatprep.subr.mxu0 0.0
      %7365 = vmatpush2.msra.mxu0 0.0
      %7366 = vmatprep.subr.mxu0 0.0
      %7367 = vmatpush2.msra.mxu0 0.0
      %7368 = vmatprep.subr.mxu0 0.0
      %7369 = vmatpush2.msra.mxu0 0.0
      %7370 = vmatprep.subr.mxu0 0.0
      %7371 = vmatpush2.msra.mxu0 0.0
      %7372 = vmatprep.subr.mxu0 0.0
      %7373 = vmatpush2.msra.mxu0 0.0
      %7374 = vmatprep.subr.mxu0 0.0
      %7375 = vmatpush2.msra.mxu0 0.0
      %7376 = vmatprep.subr.mxu0 0.0
      %7377 = vmatpush2.msra.mxu0 0.0
      %7378 = vmatprep.subr.mxu0 0.0
      %7379 = vmatpush2.msra.mxu0 0.0
      %7380 = vmatprep.subr.mxu0 0.0
      %7381 = vmatpush2.msra.mxu0 0.0
      %7382 = vmatprep.subr.mxu0 0.0
      %7383 = vmatpush2.msra.mxu0 0.0
      %7384 = vmatprep.subr.mxu0 0.0
      %7385 = vmatpush2.msra.mxu0 0.0
      %7386 = vmatprep.subr.mxu0 0.0
      %7387 = vmatpush2.msra.mxu0 0.0
      %7388 = vmatprep.subr.mxu0 0.0
      %7389 = vmatpush2.msra.mxu0 0.0
      %7390 = vmatprep.subr.mxu0 0.0
      %7391 = vmatpush2.msra.mxu0 0.0
      %7392 = vmatprep.mubr.f32.mxu0 0.0
      %7393 = vmatmul.mubr.f32.gmra.mxu0 %v7320
      %v7394 = vpop.f32.mrf.mxu0
      %v7395 = vadd.f32 0.0, %v7394
      %v7396 = vpop.f32.mrf.mxu0
      %v7397 = vadd.f32 0.0, %v7396
      %7398 = vdwg.mxu0
      %v7399 = vadd.f32 %v7294, %v7395
      %v7400 = vadd.f32 %v7295, %v7397
      %s7401 = scalar_lea.vmem %s6, 3168
      %v7402 = vld [vmem:[%s7401] sm:$0xff]
      %v7403 = vld [vmem:[%s7401 + $0x8] sm:$0xff]
      %v7404 = vld [vmem:[%s7401 + $0x10] sm:$0xff]
      %v7405 = vld [vmem:[%s7401 + $0x18] sm:$0xff]
      %v7406 = vld [vmem:[%s7401 + $0x20] sm:$0xff]
      %v7407 = vld [vmem:[%s7401 + $0x28] sm:$0xff]
      %v7408 = vld [vmem:[%s7401 + $0x30] sm:$0xff]
      %v7409 = vld [vmem:[%s7401 + $0x38] sm:$0xff]
      %v7410 = vld [vmem:[%s7401 + $0x40] sm:$0xff]
      %v7411 = vld [vmem:[%s7401 + $0x48] sm:$0xff]
      %v7412 = vld [vmem:[%s7401 + $0x50] sm:$0xff]
      %v7413 = vld [vmem:[%s7401 + $0x58] sm:$0xff]
      %v7414 = vld [vmem:[%s7401 + $0x60] sm:$0xff]
      %v7415 = vld [vmem:[%s7401 + $0x68] sm:$0xff]
      %v7416 = vld [vmem:[%s7401 + $0x70] sm:$0xff]
      %v7417 = vld [vmem:[%s7401 + $0x78] sm:$0xff]
      %v7418 = vld [vmem:[%s7401 + $0x80] sm:$0xff]
      %v7419 = vld [vmem:[%s7401 + $0x88] sm:$0xff]
      %v7420 = vld [vmem:[%s7401 + $0x90] sm:$0xff]
      %v7421 = vld [vmem:[%s7401 + $0x98] sm:$0xff]
      %v7422 = vld [vmem:[%s7401 + $0xa0] sm:$0x1]
      %v7423 = vld [vmem:[%s7401 + $0xa8] sm:$0x1]
      %v7424 = vrot.slane %v5512, 2
      %v7425 = vsel %vm5561, %v7424, 0
      %v7428 = vsel %vm5564, %v7422, 0
      %v7431 = vsel %vm5564, %v7423, 0
      %7433 = vmatprep.subr.mxu0 0.0
      %7434 = vmatpush1.msra.mxu0 0.0
      %7435 = vmatprep.subr.mxu0 0.0
      %7436 = vmatpush1.msra.mxu0 0.0
      %7437 = vmatprep.subr.mxu0 0.0
      %7438 = vmatpush1.msra.mxu0 0.0
      %7439 = vmatprep.subr.mxu0 0.0
      %7440 = vmatpush1.msra.mxu0 0.0
      %7441 = vmatprep.subr.mxu0 0.0
      %7442 = vmatpush1.msra.mxu0 0.0
      %7443 = vmatprep.subr.mxu0 %v7431
      %7444 = vmatpush1.msra.mxu0 %v7428
      %7445 = vmatprep.subr.mxu0 %v7421
      %7446 = vmatpush1.msra.mxu0 %v7420
      %7447 = vmatprep.subr.mxu0 %v7419
      %7448 = vmatpush1.msra.mxu0 %v7418
      %7449 = vmatprep.subr.mxu0 %v7417
      %7450 = vmatpush1.msra.mxu0 %v7416
      %7451 = vmatprep.subr.mxu0 %v7415
      %7452 = vmatpush1.msra.mxu0 %v7414
      %7453 = vmatprep.subr.mxu0 %v7413
      %7454 = vmatpush1.msra.mxu0 %v7412
      %7455 = vmatprep.subr.mxu0 %v7411
      %7456 = vmatpush1.msra.mxu0 %v7410
      %7457 = vmatprep.subr.mxu0 %v7409
      %7458 = vmatpush1.msra.mxu0 %v7408
      %7459 = vmatprep.subr.mxu0 %v7407
      %7460 = vmatpush1.msra.mxu0 %v7406
      %7461 = vmatprep.subr.mxu0 %v7405
      %7462 = vmatpush1.msra.mxu0 %v7404
      %7463 = vmatprep.subr.mxu0 %v7403
      %7464 = vmatpush1.msra.mxu0 %v7402
      %7465 = vmatprep.subr.mxu0 0.0
      %7466 = vmatpush2.msra.mxu0 0.0
      %7467 = vmatprep.subr.mxu0 0.0
      %7468 = vmatpush2.msra.mxu0 0.0
      %7469 = vmatprep.subr.mxu0 0.0
      %7470 = vmatpush2.msra.mxu0 0.0
      %7471 = vmatprep.subr.mxu0 0.0
      %7472 = vmatpush2.msra.mxu0 0.0
      %7473 = vmatprep.subr.mxu0 0.0
      %7474 = vmatpush2.msra.mxu0 0.0
      %7475 = vmatprep.subr.mxu0 0.0
      %7476 = vmatpush2.msra.mxu0 0.0
      %7477 = vmatprep.subr.mxu0 0.0
      %7478 = vmatpush2.msra.mxu0 0.0
      %7479 = vmatprep.subr.mxu0 0.0
      %7480 = vmatpush2.msra.mxu0 0.0
      %7481 = vmatprep.subr.mxu0 0.0
      %7482 = vmatpush2.msra.mxu0 0.0
      %7483 = vmatprep.subr.mxu0 0.0
      %7484 = vmatpush2.msra.mxu0 0.0
      %7485 = vmatprep.subr.mxu0 0.0
      %7486 = vmatpush2.msra.mxu0 0.0
      %7487 = vmatprep.subr.mxu0 0.0
      %7488 = vmatpush2.msra.mxu0 0.0
      %7489 = vmatprep.subr.mxu0 0.0
      %7490 = vmatpush2.msra.mxu0 0.0
      %7491 = vmatprep.subr.mxu0 0.0
      %7492 = vmatpush2.msra.mxu0 0.0
      %7493 = vmatprep.subr.mxu0 0.0
      %7494 = vmatpush2.msra.mxu0 0.0
      %7495 = vmatprep.subr.mxu0 0.0
      %7496 = vmatpush2.msra.mxu0 0.0
      %7497 = vmatprep.mubr.f32.mxu0 0.0
      %7498 = vmatmul.mubr.f32.gmra.mxu0 %v7425
      %v7499 = vpop.f32.mrf.mxu0
      %v7500 = vadd.f32 0.0, %v7499
      %v7501 = vpop.f32.mrf.mxu0
      %v7502 = vadd.f32 0.0, %v7501
      %7503 = vdwg.mxu0
      %v7504 = vadd.f32 %v7399, %v7500
      %v7505 = vadd.f32 %v7400, %v7502
      %s7506 = scalar_lea.vmem %s6, 3344
      %v7507 = vld [vmem:[%s7506] sm:$0xff]
      %v7508 = vld [vmem:[%s7506 + $0x8] sm:$0xff]
      %v7509 = vld [vmem:[%s7506 + $0x10] sm:$0xff]
      %v7510 = vld [vmem:[%s7506 + $0x18] sm:$0xff]
      %v7511 = vld [vmem:[%s7506 + $0x20] sm:$0xff]
      %v7512 = vld [vmem:[%s7506 + $0x28] sm:$0xff]
      %v7513 = vld [vmem:[%s7506 + $0x30] sm:$0xff]
      %v7514 = vld [vmem:[%s7506 + $0x38] sm:$0xff]
      %v7515 = vld [vmem:[%s7506 + $0x40] sm:$0xff]
      %v7516 = vld [vmem:[%s7506 + $0x48] sm:$0xff]
      %v7517 = vld [vmem:[%s7506 + $0x50] sm:$0xff]
      %v7518 = vld [vmem:[%s7506 + $0x58] sm:$0xff]
      %v7519 = vld [vmem:[%s7506 + $0x60] sm:$0xff]
      %v7520 = vld [vmem:[%s7506 + $0x68] sm:$0xff]
      %v7521 = vld [vmem:[%s7506 + $0x70] sm:$0xff]
      %v7522 = vld [vmem:[%s7506 + $0x78] sm:$0xff]
      %v7523 = vld [vmem:[%s7506 + $0x80] sm:$0xff]
      %v7524 = vld [vmem:[%s7506 + $0x88] sm:$0xff]
      %v7525 = vld [vmem:[%s7506 + $0x90] sm:$0xff]
      %v7526 = vld [vmem:[%s7506 + $0x98] sm:$0xff]
      %v7527 = vld [vmem:[%s7506 + $0xa0] sm:$0x1]
      %v7528 = vld [vmem:[%s7506 + $0xa8] sm:$0x1]
      %v7529 = vrot.slane %v5512, 3
      %v7530 = vsel %vm5561, %v7529, 0
      %v7533 = vsel %vm5564, %v7527, 0
      %v7536 = vsel %vm5564, %v7528, 0
      %7538 = vmatprep.subr.mxu0 0.0
      %7539 = vmatpush1.msra.mxu0 0.0
      %7540 = vmatprep.subr.mxu0 0.0
      %7541 = vmatpush1.msra.mxu0 0.0
      %7542 = vmatprep.subr.mxu0 0.0
      %7543 = vmatpush1.msra.mxu0 0.0
      %7544 = vmatprep.subr.mxu0 0.0
      %7545 = vmatpush1.msra.mxu0 0.0
      %7546 = vmatprep.subr.mxu0 0.0
      %7547 = vmatpush1.msra.mxu0 0.0
      %7548 = vmatprep.subr.mxu0 %v7536
      %7549 = vmatpush1.msra.mxu0 %v7533
      %7550 = vmatprep.subr.mxu0 %v7526
      %7551 = vmatpush1.msra.mxu0 %v7525
      %7552 = vmatprep.subr.mxu0 %v7524
      %7553 = vmatpush1.msra.mxu0 %v7523
      %7554 = vmatprep.subr.mxu0 %v7522
      %7555 = vmatpush1.msra.mxu0 %v7521
      %7556 = vmatprep.subr.mxu0 %v7520
      %7557 = vmatpush1.msra.mxu0 %v7519
      %7558 = vmatprep.subr.mxu0 %v7518
      %7559 = vmatpush1.msra.mxu0 %v7517
      %7560 = vmatprep.subr.mxu0 %v7516
      %7561 = vmatpush1.msra.mxu0 %v7515
      %7562 = vmatprep.subr.mxu0 %v7514
      %7563 = vmatpush1.msra.mxu0 %v7513
      %7564 = vmatprep.subr.mxu0 %v7512
      %7565 = vmatpush1.msra.mxu0 %v7511
      %7566 = vmatprep.subr.mxu0 %v7510
      %7567 = vmatpush1.msra.mxu0 %v7509
      %7568 = vmatprep.subr.mxu0 %v7508
      %7569 = vmatpush1.msra.mxu0 %v7507
      %7570 = vmatprep.subr.mxu0 0.0
      %7571 = vmatpush2.msra.mxu0 0.0
      %7572 = vmatprep.subr.mxu0 0.0
      %7573 = vmatpush2.msra.mxu0 0.0
      %7574 = vmatprep.subr.mxu0 0.0
      %7575 = vmatpush2.msra.mxu0 0.0
      %7576 = vmatprep.subr.mxu0 0.0
      %7577 = vmatpush2.msra.mxu0 0.0
      %7578 = vmatprep.subr.mxu0 0.0
      %7579 = vmatpush2.msra.mxu0 0.0
      %7580 = vmatprep.subr.mxu0 0.0
      %7581 = vmatpush2.msra.mxu0 0.0
      %7582 = vmatprep.subr.mxu0 0.0
      %7583 = vmatpush2.msra.mxu0 0.0
      %7584 = vmatprep.subr.mxu0 0.0
      %7585 = vmatpush2.msra.mxu0 0.0
      %7586 = vmatprep.subr.mxu0 0.0
      %7587 = vmatpush2.msra.mxu0 0.0
      %7588 = vmatprep.subr.mxu0 0.0
      %7589 = vmatpush2.msra.mxu0 0.0
      %7590 = vmatprep.subr.mxu0 0.0
      %7591 = vmatpush2.msra.mxu0 0.0
      %7592 = vmatprep.subr.mxu0 0.0
      %7593 = vmatpush2.msra.mxu0 0.0
      %7594 = vmatprep.subr.mxu0 0.0
      %7595 = vmatpush2.msra.mxu0 0.0
      %7596 = vmatprep.subr.mxu0 0.0
      %7597 = vmatpush2.msra.mxu0 0.0
      %7598 = vmatprep.subr.mxu0 0.0
      %7599 = vmatpush2.msra.mxu0 0.0
      %7600 = vmatprep.subr.mxu0 0.0
      %7601 = vmatpush2.msra.mxu0 0.0
      %7602 = vmatprep.mubr.f32.mxu0 0.0
      %7603 = vmatmul.mubr.f32.gmra.mxu0 %v7530
      %v7604 = vpop.f32.mrf.mxu0
      %v7605 = vadd.f32 0.0, %v7604
      %v7606 = vpop.f32.mrf.mxu0
      %v7607 = vadd.f32 0.0, %v7606
      %7608 = vdwg.mxu0
      %v7609 = vadd.f32 %v7504, %v7605
      %v7610 = vadd.f32 %v7505, %v7607
      %s7611 = scalar_lea.vmem %s6, 3520
      %v7612 = vld [vmem:[%s7611] sm:$0xff]
      %v7613 = vld [vmem:[%s7611 + $0x8] sm:$0xff]
      %v7614 = vld [vmem:[%s7611 + $0x10] sm:$0xff]
      %v7615 = vld [vmem:[%s7611 + $0x18] sm:$0xff]
      %v7616 = vld [vmem:[%s7611 + $0x20] sm:$0xff]
      %v7617 = vld [vmem:[%s7611 + $0x28] sm:$0xff]
      %v7618 = vld [vmem:[%s7611 + $0x30] sm:$0xff]
      %v7619 = vld [vmem:[%s7611 + $0x38] sm:$0xff]
      %v7620 = vld [vmem:[%s7611 + $0x40] sm:$0xff]
      %v7621 = vld [vmem:[%s7611 + $0x48] sm:$0xff]
      %v7622 = vld [vmem:[%s7611 + $0x50] sm:$0xff]
      %v7623 = vld [vmem:[%s7611 + $0x58] sm:$0xff]
      %v7624 = vld [vmem:[%s7611 + $0x60] sm:$0xff]
      %v7625 = vld [vmem:[%s7611 + $0x68] sm:$0xff]
      %v7626 = vld [vmem:[%s7611 + $0x70] sm:$0xff]
      %v7627 = vld [vmem:[%s7611 + $0x78] sm:$0xff]
      %v7628 = vld [vmem:[%s7611 + $0x80] sm:$0xff]
      %v7629 = vld [vmem:[%s7611 + $0x88] sm:$0xff]
      %v7630 = vld [vmem:[%s7611 + $0x90] sm:$0xff]
      %v7631 = vld [vmem:[%s7611 + $0x98] sm:$0xff]
      %v7632 = vld [vmem:[%s7611 + $0xa0] sm:$0x1]
      %v7633 = vld [vmem:[%s7611 + $0xa8] sm:$0x1]
      %v7634 = vrot.slane %v5512, 4
      %v7635 = vsel %vm5561, %v7634, 0
      %v7638 = vsel %vm5564, %v7632, 0
      %v7641 = vsel %vm5564, %v7633, 0
      %7643 = vmatprep.subr.mxu0 0.0
      %7644 = vmatpush1.msra.mxu0 0.0
      %7645 = vmatprep.subr.mxu0 0.0
      %7646 = vmatpush1.msra.mxu0 0.0
      %7647 = vmatprep.subr.mxu0 0.0
      %7648 = vmatpush1.msra.mxu0 0.0
      %7649 = vmatprep.subr.mxu0 0.0
      %7650 = vmatpush1.msra.mxu0 0.0
      %7651 = vmatprep.subr.mxu0 0.0
      %7652 = vmatpush1.msra.mxu0 0.0
      %7653 = vmatprep.subr.mxu0 %v7641
      %7654 = vmatpush1.msra.mxu0 %v7638
      %7655 = vmatprep.subr.mxu0 %v7631
      %7656 = vmatpush1.msra.mxu0 %v7630
      %7657 = vmatprep.subr.mxu0 %v7629
      %7658 = vmatpush1.msra.mxu0 %v7628
      %7659 = vmatprep.subr.mxu0 %v7627
      %7660 = vmatpush1.msra.mxu0 %v7626
      %7661 = vmatprep.subr.mxu0 %v7625
      %7662 = vmatpush1.msra.mxu0 %v7624
      %7663 = vmatprep.subr.mxu0 %v7623
      %7664 = vmatpush1.msra.mxu0 %v7622
      %7665 = vmatprep.subr.mxu0 %v7621
      %7666 = vmatpush1.msra.mxu0 %v7620
      %7667 = vmatprep.subr.mxu0 %v7619
      %7668 = vmatpush1.msra.mxu0 %v7618
      %7669 = vmatprep.subr.mxu0 %v7617
      %7670 = vmatpush1.msra.mxu0 %v7616
      %7671 = vmatprep.subr.mxu0 %v7615
      %7672 = vmatpush1.msra.mxu0 %v7614
      %7673 = vmatprep.subr.mxu0 %v7613
      %7674 = vmatpush1.msra.mxu0 %v7612
      %7675 = vmatprep.subr.mxu0 0.0
      %7676 = vmatpush2.msra.mxu0 0.0
      %7677 = vmatprep.subr.mxu0 0.0
      %7678 = vmatpush2.msra.mxu0 0.0
      %7679 = vmatprep.subr.mxu0 0.0
      %7680 = vmatpush2.msra.mxu0 0.0
      %7681 = vmatprep.subr.mxu0 0.0
      %7682 = vmatpush2.msra.mxu0 0.0
      %7683 = vmatprep.subr.mxu0 0.0
      %7684 = vmatpush2.msra.mxu0 0.0
      %7685 = vmatprep.subr.mxu0 0.0
      %7686 = vmatpush2.msra.mxu0 0.0
      %7687 = vmatprep.subr.mxu0 0.0
      %7688 = vmatpush2.msra.mxu0 0.0
      %7689 = vmatprep.subr.mxu0 0.0
      %7690 = vmatpush2.msra.mxu0 0.0
      %7691 = vmatprep.subr.mxu0 0.0
      %7692 = vmatpush2.msra.mxu0 0.0
      %7693 = vmatprep.subr.mxu0 0.0
      %7694 = vmatpush2.msra.mxu0 0.0
      %7695 = vmatprep.subr.mxu0 0.0
      %7696 = vmatpush2.msra.mxu0 0.0
      %7697 = vmatprep.subr.mxu0 0.0
      %7698 = vmatpush2.msra.mxu0 0.0
      %7699 = vmatprep.subr.mxu0 0.0
      %7700 = vmatpush2.msra.mxu0 0.0
      %7701 = vmatprep.subr.mxu0 0.0
      %7702 = vmatpush2.msra.mxu0 0.0
      %7703 = vmatprep.subr.mxu0 0.0
      %7704 = vmatpush2.msra.mxu0 0.0
      %7705 = vmatprep.subr.mxu0 0.0
      %7706 = vmatpush2.msra.mxu0 0.0
      %7707 = vmatprep.mubr.f32.mxu0 0.0
      %7708 = vmatmul.mubr.f32.gmra.mxu0 %v7635
      %v7709 = vpop.f32.mrf.mxu0
      %v7710 = vadd.f32 0.0, %v7709
      %v7711 = vpop.f32.mrf.mxu0
      %v7712 = vadd.f32 0.0, %v7711
      %7713 = vdwg.mxu0
      %v7714 = vadd.f32 %v7609, %v7710
      %v7715 = vadd.f32 %v7610, %v7712
      %s7716 = scalar_lea.vmem %s6, 3696
      %v7717 = vld [vmem:[%s7716] sm:$0xff]
      %v7718 = vld [vmem:[%s7716 + $0x8] sm:$0xff]
      %v7719 = vld [vmem:[%s7716 + $0x10] sm:$0xff]
      %v7720 = vld [vmem:[%s7716 + $0x18] sm:$0xff]
      %v7721 = vld [vmem:[%s7716 + $0x20] sm:$0xff]
      %v7722 = vld [vmem:[%s7716 + $0x28] sm:$0xff]
      %v7723 = vld [vmem:[%s7716 + $0x30] sm:$0xff]
      %v7724 = vld [vmem:[%s7716 + $0x38] sm:$0xff]
      %v7725 = vld [vmem:[%s7716 + $0x40] sm:$0xff]
      %v7726 = vld [vmem:[%s7716 + $0x48] sm:$0xff]
      %v7727 = vld [vmem:[%s7716 + $0x50] sm:$0xff]
      %v7728 = vld [vmem:[%s7716 + $0x58] sm:$0xff]
      %v7729 = vld [vmem:[%s7716 + $0x60] sm:$0xff]
      %v7730 = vld [vmem:[%s7716 + $0x68] sm:$0xff]
      %v7731 = vld [vmem:[%s7716 + $0x70] sm:$0xff]
      %v7732 = vld [vmem:[%s7716 + $0x78] sm:$0xff]
      %v7733 = vld [vmem:[%s7716 + $0x80] sm:$0xff]
      %v7734 = vld [vmem:[%s7716 + $0x88] sm:$0xff]
      %v7735 = vld [vmem:[%s7716 + $0x90] sm:$0xff]
      %v7736 = vld [vmem:[%s7716 + $0x98] sm:$0xff]
      %v7737 = vld [vmem:[%s7716 + $0xa0] sm:$0x1]
      %v7738 = vld [vmem:[%s7716 + $0xa8] sm:$0x1]
      %v7739 = vrot.slane %v5512, 5
      %v7740 = vsel %vm5561, %v7739, 0
      %v7743 = vsel %vm5564, %v7737, 0
      %v7746 = vsel %vm5564, %v7738, 0
      %7748 = vmatprep.subr.mxu0 0.0
      %7749 = vmatpush1.msra.mxu0 0.0
      %7750 = vmatprep.subr.mxu0 0.0
      %7751 = vmatpush1.msra.mxu0 0.0
      %7752 = vmatprep.subr.mxu0 0.0
      %7753 = vmatpush1.msra.mxu0 0.0
      %7754 = vmatprep.subr.mxu0 0.0
      %7755 = vmatpush1.msra.mxu0 0.0
      %7756 = vmatprep.subr.mxu0 0.0
      %7757 = vmatpush1.msra.mxu0 0.0
      %7758 = vmatprep.subr.mxu0 %v7746
      %7759 = vmatpush1.msra.mxu0 %v7743
      %7760 = vmatprep.subr.mxu0 %v7736
      %7761 = vmatpush1.msra.mxu0 %v7735
      %7762 = vmatprep.subr.mxu0 %v7734
      %7763 = vmatpush1.msra.mxu0 %v7733
      %7764 = vmatprep.subr.mxu0 %v7732
      %7765 = vmatpush1.msra.mxu0 %v7731
      %7766 = vmatprep.subr.mxu0 %v7730
      %7767 = vmatpush1.msra.mxu0 %v7729
      %7768 = vmatprep.subr.mxu0 %v7728
      %7769 = vmatpush1.msra.mxu0 %v7727
      %7770 = vmatprep.subr.mxu0 %v7726
      %7771 = vmatpush1.msra.mxu0 %v7725
      %7772 = vmatprep.subr.mxu0 %v7724
      %7773 = vmatpush1.msra.mxu0 %v7723
      %7774 = vmatprep.subr.mxu0 %v7722
      %7775 = vmatpush1.msra.mxu0 %v7721
      %7776 = vmatprep.subr.mxu0 %v7720
      %7777 = vmatpush1.msra.mxu0 %v7719
      %7778 = vmatprep.subr.mxu0 %v7718
      %7779 = vmatpush1.msra.mxu0 %v7717
      %7780 = vmatprep.subr.mxu0 0.0
      %7781 = vmatpush2.msra.mxu0 0.0
      %7782 = vmatprep.subr.mxu0 0.0
      %7783 = vmatpush2.msra.mxu0 0.0
      %7784 = vmatprep.subr.mxu0 0.0
      %7785 = vmatpush2.msra.mxu0 0.0
      %7786 = vmatprep.subr.mxu0 0.0
      %7787 = vmatpush2.msra.mxu0 0.0
      %7788 = vmatprep.subr.mxu0 0.0
      %7789 = vmatpush2.msra.mxu0 0.0
      %7790 = vmatprep.subr.mxu0 0.0
      %7791 = vmatpush2.msra.mxu0 0.0
      %7792 = vmatprep.subr.mxu0 0.0
      %7793 = vmatpush2.msra.mxu0 0.0
      %7794 = vmatprep.subr.mxu0 0.0
      %7795 = vmatpush2.msra.mxu0 0.0
      %7796 = vmatprep.subr.mxu0 0.0
      %7797 = vmatpush2.msra.mxu0 0.0
      %7798 = vmatprep.subr.mxu0 0.0
      %7799 = vmatpush2.msra.mxu0 0.0
      %7800 = vmatprep.subr.mxu0 0.0
      %7801 = vmatpush2.msra.mxu0 0.0
      %7802 = vmatprep.subr.mxu0 0.0
      %7803 = vmatpush2.msra.mxu0 0.0
      %7804 = vmatprep.subr.mxu0 0.0
      %7805 = vmatpush2.msra.mxu0 0.0
      %7806 = vmatprep.subr.mxu0 0.0
      %7807 = vmatpush2.msra.mxu0 0.0
      %7808 = vmatprep.subr.mxu0 0.0
      %7809 = vmatpush2.msra.mxu0 0.0
      %7810 = vmatprep.subr.mxu0 0.0
      %7811 = vmatpush2.msra.mxu0 0.0
      %7812 = vmatprep.mubr.f32.mxu0 0.0
      %7813 = vmatmul.mubr.f32.gmra.mxu0 %v7740
      %v7814 = vpop.f32.mrf.mxu0
      %v7815 = vadd.f32 0.0, %v7814
      %v7816 = vpop.f32.mrf.mxu0
      %v7817 = vadd.f32 0.0, %v7816
      %7818 = vdwg.mxu0
      %v7819 = vadd.f32 %v7714, %v7815
      %v7820 = vadd.f32 %v7715, %v7817
      %s7821 = scalar_lea.vmem %s6, 3872
      %v7822 = vld [vmem:[%s7821] sm:$0xff]
      %v7823 = vld [vmem:[%s7821 + $0x8] sm:$0xff]
      %v7824 = vld [vmem:[%s7821 + $0x10] sm:$0xff]
      %v7825 = vld [vmem:[%s7821 + $0x18] sm:$0xff]
      %v7826 = vld [vmem:[%s7821 + $0x20] sm:$0xff]
      %v7827 = vld [vmem:[%s7821 + $0x28] sm:$0xff]
      %v7828 = vld [vmem:[%s7821 + $0x30] sm:$0xff]
      %v7829 = vld [vmem:[%s7821 + $0x38] sm:$0xff]
      %v7830 = vld [vmem:[%s7821 + $0x40] sm:$0xff]
      %v7831 = vld [vmem:[%s7821 + $0x48] sm:$0xff]
      %v7832 = vld [vmem:[%s7821 + $0x50] sm:$0xff]
      %v7833 = vld [vmem:[%s7821 + $0x58] sm:$0xff]
      %v7834 = vld [vmem:[%s7821 + $0x60] sm:$0xff]
      %v7835 = vld [vmem:[%s7821 + $0x68] sm:$0xff]
      %v7836 = vld [vmem:[%s7821 + $0x70] sm:$0xff]
      %v7837 = vld [vmem:[%s7821 + $0x78] sm:$0xff]
      %v7838 = vld [vmem:[%s7821 + $0x80] sm:$0xff]
      %v7839 = vld [vmem:[%s7821 + $0x88] sm:$0xff]
      %v7840 = vld [vmem:[%s7821 + $0x90] sm:$0xff]
      %v7841 = vld [vmem:[%s7821 + $0x98] sm:$0xff]
      %v7842 = vld [vmem:[%s7821 + $0xa0] sm:$0x1]
      %v7843 = vld [vmem:[%s7821 + $0xa8] sm:$0x1]
      %v7844 = vrot.slane %v5512, 6
      %v7845 = vsel %vm5561, %v7844, 0
      %v7848 = vsel %vm5564, %v7842, 0
      %v7851 = vsel %vm5564, %v7843, 0
      %7853 = vmatprep.subr.mxu0 0.0
      %7854 = vmatpush1.msra.mxu0 0.0
      %7855 = vmatprep.subr.mxu0 0.0
      %7856 = vmatpush1.msra.mxu0 0.0
      %7857 = vmatprep.subr.mxu0 0.0
      %7858 = vmatpush1.msra.mxu0 0.0
      %7859 = vmatprep.subr.mxu0 0.0
      %7860 = vmatpush1.msra.mxu0 0.0
      %7861 = vmatprep.subr.mxu0 0.0
      %7862 = vmatpush1.msra.mxu0 0.0
      %7863 = vmatprep.subr.mxu0 %v7851
      %7864 = vmatpush1.msra.mxu0 %v7848
      %7865 = vmatprep.subr.mxu0 %v7841
      %7866 = vmatpush1.msra.mxu0 %v7840
      %7867 = vmatprep.subr.mxu0 %v7839
      %7868 = vmatpush1.msra.mxu0 %v7838
      %7869 = vmatprep.subr.mxu0 %v7837
      %7870 = vmatpush1.msra.mxu0 %v7836
      %7871 = vmatprep.subr.mxu0 %v7835
      %7872 = vmatpush1.msra.mxu0 %v7834
      %7873 = vmatprep.subr.mxu0 %v7833
      %7874 = vmatpush1.msra.mxu0 %v7832
      %7875 = vmatprep.subr.mxu0 %v7831
      %7876 = vmatpush1.msra.mxu0 %v7830
      %7877 = vmatprep.subr.mxu0 %v7829
      %7878 = vmatpush1.msra.mxu0 %v7828
      %7879 = vmatprep.subr.mxu0 %v7827
      %7880 = vmatpush1.msra.mxu0 %v7826
      %7881 = vmatprep.subr.mxu0 %v7825
      %7882 = vmatpush1.msra.mxu0 %v7824
      %7883 = vmatprep.subr.mxu0 %v7823
      %7884 = vmatpush1.msra.mxu0 %v7822
      %7885 = vmatprep.subr.mxu0 0.0
      %7886 = vmatpush2.msra.mxu0 0.0
      %7887 = vmatprep.subr.mxu0 0.0
      %7888 = vmatpush2.msra.mxu0 0.0
      %7889 = vmatprep.subr.mxu0 0.0
      %7890 = vmatpush2.msra.mxu0 0.0
      %7891 = vmatprep.subr.mxu0 0.0
      %7892 = vmatpush2.msra.mxu0 0.0
      %7893 = vmatprep.subr.mxu0 0.0
      %7894 = vmatpush2.msra.mxu0 0.0
      %7895 = vmatprep.subr.mxu0 0.0
      %7896 = vmatpush2.msra.mxu0 0.0
      %7897 = vmatprep.subr.mxu0 0.0
      %7898 = vmatpush2.msra.mxu0 0.0
      %7899 = vmatprep.subr.mxu0 0.0
      %7900 = vmatpush2.msra.mxu0 0.0
      %7901 = vmatprep.subr.mxu0 0.0
      %7902 = vmatpush2.msra.mxu0 0.0
      %7903 = vmatprep.subr.mxu0 0.0
      %7904 = vmatpush2.msra.mxu0 0.0
      %7905 = vmatprep.subr.mxu0 0.0
      %7906 = vmatpush2.msra.mxu0 0.0
      %7907 = vmatprep.subr.mxu0 0.0
      %7908 = vmatpush2.msra.mxu0 0.0
      %7909 = vmatprep.subr.mxu0 0.0
      %7910 = vmatpush2.msra.mxu0 0.0
      %7911 = vmatprep.subr.mxu0 0.0
      %7912 = vmatpush2.msra.mxu0 0.0
      %7913 = vmatprep.subr.mxu0 0.0
      %7914 = vmatpush2.msra.mxu0 0.0
      %7915 = vmatprep.subr.mxu0 0.0
      %7916 = vmatpush2.msra.mxu0 0.0
      %7917 = vmatprep.mubr.f32.mxu0 0.0
      %7918 = vmatmul.mubr.f32.gmra.mxu0 %v7845
      %v7919 = vpop.f32.mrf.mxu0
      %v7920 = vadd.f32 0.0, %v7919
      %v7921 = vpop.f32.mrf.mxu0
      %v7922 = vadd.f32 0.0, %v7921
      %7923 = vdwg.mxu0
      %v7924 = vadd.f32 %v7819, %v7920
      %v7925 = vadd.f32 %v7820, %v7922
      %s7926 = scalar_lea.vmem %s6, 4048
      %v7927 = vld [vmem:[%s7926] sm:$0xff]
      %v7928 = vld [vmem:[%s7926 + $0x8] sm:$0xff]
      %v7929 = vld [vmem:[%s7926 + $0x10] sm:$0xff]
      %v7930 = vld [vmem:[%s7926 + $0x18] sm:$0xff]
      %v7931 = vld [vmem:[%s7926 + $0x20] sm:$0xff]
      %v7932 = vld [vmem:[%s7926 + $0x28] sm:$0xff]
      %v7933 = vld [vmem:[%s7926 + $0x30] sm:$0xff]
      %v7934 = vld [vmem:[%s7926 + $0x38] sm:$0xff]
      %v7935 = vld [vmem:[%s7926 + $0x40] sm:$0xff]
      %v7936 = vld [vmem:[%s7926 + $0x48] sm:$0xff]
      %v7937 = vld [vmem:[%s7926 + $0x50] sm:$0xff]
      %v7938 = vld [vmem:[%s7926 + $0x58] sm:$0xff]
      %v7939 = vld [vmem:[%s7926 + $0x60] sm:$0xff]
      %v7940 = vld [vmem:[%s7926 + $0x68] sm:$0xff]
      %v7941 = vld [vmem:[%s7926 + $0x70] sm:$0xff]
      %v7942 = vld [vmem:[%s7926 + $0x78] sm:$0xff]
      %v7943 = vld [vmem:[%s7926 + $0x80] sm:$0xff]
      %v7944 = vld [vmem:[%s7926 + $0x88] sm:$0xff]
      %v7945 = vld [vmem:[%s7926 + $0x90] sm:$0xff]
      %v7946 = vld [vmem:[%s7926 + $0x98] sm:$0xff]
      %v7947 = vld [vmem:[%s7926 + $0xa0] sm:$0x1]
      %v7948 = vld [vmem:[%s7926 + $0xa8] sm:$0x1]
      %v7949 = vrot.slane %v5512, 7
      %v7950 = vsel %vm5561, %v7949, 0
      %v7953 = vsel %vm5564, %v7947, 0
      %v7956 = vsel %vm5564, %v7948, 0
      %7958 = vmatprep.subr.mxu0 0.0
      %7959 = vmatpush1.msra.mxu0 0.0
      %7960 = vmatprep.subr.mxu0 0.0
      %7961 = vmatpush1.msra.mxu0 0.0
      %7962 = vmatprep.subr.mxu0 0.0
      %7963 = vmatpush1.msra.mxu0 0.0
      %7964 = vmatprep.subr.mxu0 0.0
      %7965 = vmatpush1.msra.mxu0 0.0
      %7966 = vmatprep.subr.mxu0 0.0
      %7967 = vmatpush1.msra.mxu0 0.0
      %7968 = vmatprep.subr.mxu0 %v7956
      %7969 = vmatpush1.msra.mxu0 %v7953
      %7970 = vmatprep.subr.mxu0 %v7946
      %7971 = vmatpush1.msra.mxu0 %v7945
      %7972 = vmatprep.subr.mxu0 %v7944
      %7973 = vmatpush1.msra.mxu0 %v7943
      %7974 = vmatprep.subr.mxu0 %v7942
      %7975 = vmatpush1.msra.mxu0 %v7941
      %7976 = vmatprep.subr.mxu0 %v7940
      %7977 = vmatpush1.msra.mxu0 %v7939
      %7978 = vmatprep.subr.mxu0 %v7938
      %7979 = vmatpush1.msra.mxu0 %v7937
      %7980 = vmatprep.subr.mxu0 %v7936
      %7981 = vmatpush1.msra.mxu0 %v7935
      %7982 = vmatprep.subr.mxu0 %v7934
      %7983 = vmatpush1.msra.mxu0 %v7933
      %7984 = vmatprep.subr.mxu0 %v7932
      %7985 = vmatpush1.msra.mxu0 %v7931
      %7986 = vmatprep.subr.mxu0 %v7930
      %7987 = vmatpush1.msra.mxu0 %v7929
      %7988 = vmatprep.subr.mxu0 %v7928
      %7989 = vmatpush1.msra.mxu0 %v7927
      %7990 = vmatprep.subr.mxu0 0.0
      %7991 = vmatpush2.msra.mxu0 0.0
      %7992 = vmatprep.subr.mxu0 0.0
      %7993 = vmatpush2.msra.mxu0 0.0
      %7994 = vmatprep.subr.mxu0 0.0
      %7995 = vmatpush2.msra.mxu0 0.0
      %7996 = vmatprep.subr.mxu0 0.0
      %7997 = vmatpush2.msra.mxu0 0.0
      %7998 = vmatprep.subr.mxu0 0.0
      %7999 = vmatpush2.msra.mxu0 0.0
      %8000 = vmatprep.subr.mxu0 0.0
      %8001 = vmatpush2.msra.mxu0 0.0
      %8002 = vmatprep.subr.mxu0 0.0
      %8003 = vmatpush2.msra.mxu0 0.0
      %8004 = vmatprep.subr.mxu0 0.0
      %8005 = vmatpush2.msra.mxu0 0.0
      %8006 = vmatprep.subr.mxu0 0.0
      %8007 = vmatpush2.msra.mxu0 0.0
      %8008 = vmatprep.subr.mxu0 0.0
      %8009 = vmatpush2.msra.mxu0 0.0
      %8010 = vmatprep.subr.mxu0 0.0
      %8011 = vmatpush2.msra.mxu0 0.0
      %8012 = vmatprep.subr.mxu0 0.0
      %8013 = vmatpush2.msra.mxu0 0.0
      %8014 = vmatprep.subr.mxu0 0.0
      %8015 = vmatpush2.msra.mxu0 0.0
      %8016 = vmatprep.subr.mxu0 0.0
      %8017 = vmatpush2.msra.mxu0 0.0
      %8018 = vmatprep.subr.mxu0 0.0
      %8019 = vmatpush2.msra.mxu0 0.0
      %8020 = vmatprep.subr.mxu0 0.0
      %8021 = vmatpush2.msra.mxu0 0.0
      %8022 = vmatprep.mubr.f32.mxu0 0.0
      %8023 = vmatmul.mubr.f32.gmra.mxu0 %v7950
      %v8024 = vpop.f32.mrf.mxu0
      %v8025 = vadd.f32 0.0, %v8024
      %v8026 = vpop.f32.mrf.mxu0
      %v8027 = vadd.f32 0.0, %v8026
      %8028 = vdwg.mxu0
      %v8029 = vadd.f32 %v7924, %v8025
      %v8030 = vadd.f32 %v7925, %v8027
      %s8031 = scalar_lea.vmem %s6, 4224
      %v8032 = vld [vmem:[%s8031] sm:$0xff]
      %v8033 = vld [vmem:[%s8031 + $0x8] sm:$0xff]
      %v8034 = vld [vmem:[%s8031 + $0x10] sm:$0xff]
      %v8035 = vld [vmem:[%s8031 + $0x18] sm:$0xff]
      %v8036 = vld [vmem:[%s8031 + $0x20] sm:$0xff]
      %v8037 = vld [vmem:[%s8031 + $0x28] sm:$0xff]
      %v8038 = vld [vmem:[%s8031 + $0x30] sm:$0xff]
      %v8039 = vld [vmem:[%s8031 + $0x38] sm:$0xff]
      %v8040 = vld [vmem:[%s8031 + $0x40] sm:$0xff]
      %v8041 = vld [vmem:[%s8031 + $0x48] sm:$0xff]
      %v8042 = vld [vmem:[%s8031 + $0x50] sm:$0xff]
      %v8043 = vld [vmem:[%s8031 + $0x58] sm:$0xff]
      %v8044 = vld [vmem:[%s8031 + $0x60] sm:$0xff]
      %v8045 = vld [vmem:[%s8031 + $0x68] sm:$0xff]
      %v8046 = vld [vmem:[%s8031 + $0x70] sm:$0xff]
      %v8047 = vld [vmem:[%s8031 + $0x78] sm:$0xff]
      %v8048 = vld [vmem:[%s8031 + $0x80] sm:$0xff]
      %v8049 = vld [vmem:[%s8031 + $0x88] sm:$0xff]
      %v8050 = vld [vmem:[%s8031 + $0x90] sm:$0xff]
      %v8051 = vld [vmem:[%s8031 + $0x98] sm:$0xff]
      %v8052 = vld [vmem:[%s8031 + $0xa0] sm:$0x1]
      %v8053 = vld [vmem:[%s8031 + $0xa8] sm:$0x1]
      %v8055 = vsel %vm5561, %v5513, 0
      %v8058 = vsel %vm5564, %v8052, 0
      %v8061 = vsel %vm5564, %v8053, 0
      %8063 = vmatprep.subr.mxu0 0.0
      %8064 = vmatpush1.msra.mxu0 0.0
      %8065 = vmatprep.subr.mxu0 0.0
      %8066 = vmatpush1.msra.mxu0 0.0
      %8067 = vmatprep.subr.mxu0 0.0
      %8068 = vmatpush1.msra.mxu0 0.0
      %8069 = vmatprep.subr.mxu0 0.0
      %8070 = vmatpush1.msra.mxu0 0.0
      %8071 = vmatprep.subr.mxu0 0.0
      %8072 = vmatpush1.msra.mxu0 0.0
      %8073 = vmatprep.subr.mxu0 %v8061
      %8074 = vmatpush1.msra.mxu0 %v8058
      %8075 = vmatprep.subr.mxu0 %v8051
      %8076 = vmatpush1.msra.mxu0 %v8050
      %8077 = vmatprep.subr.mxu0 %v8049
      %8078 = vmatpush1.msra.mxu0 %v8048
      %8079 = vmatprep.subr.mxu0 %v8047
      %8080 = vmatpush1.msra.mxu0 %v8046
      %8081 = vmatprep.subr.mxu0 %v8045
      %8082 = vmatpush1.msra.mxu0 %v8044
      %8083 = vmatprep.subr.mxu0 %v8043
      %8084 = vmatpush1.msra.mxu0 %v8042
      %8085 = vmatprep.subr.mxu0 %v8041
      %8086 = vmatpush1.msra.mxu0 %v8040
      %8087 = vmatprep.subr.mxu0 %v8039
      %8088 = vmatpush1.msra.mxu0 %v8038
      %8089 = vmatprep.subr.mxu0 %v8037
      %8090 = vmatpush1.msra.mxu0 %v8036
      %8091 = vmatprep.subr.mxu0 %v8035
      %8092 = vmatpush1.msra.mxu0 %v8034
      %8093 = vmatprep.subr.mxu0 %v8033
      %8094 = vmatpush1.msra.mxu0 %v8032
      %8095 = vmatprep.subr.mxu0 0.0
      %8096 = vmatpush2.msra.mxu0 0.0
      %8097 = vmatprep.subr.mxu0 0.0
      %8098 = vmatpush2.msra.mxu0 0.0
      %8099 = vmatprep.subr.mxu0 0.0
      %8100 = vmatpush2.msra.mxu0 0.0
      %8101 = vmatprep.subr.mxu0 0.0
      %8102 = vmatpush2.msra.mxu0 0.0
      %8103 = vmatprep.subr.mxu0 0.0
      %8104 = vmatpush2.msra.mxu0 0.0
      %8105 = vmatprep.subr.mxu0 0.0
      %8106 = vmatpush2.msra.mxu0 0.0
      %8107 = vmatprep.subr.mxu0 0.0
      %8108 = vmatpush2.msra.mxu0 0.0
      %8109 = vmatprep.subr.mxu0 0.0
      %8110 = vmatpush2.msra.mxu0 0.0
      %8111 = vmatprep.subr.mxu0 0.0
      %8112 = vmatpush2.msra.mxu0 0.0
      %8113 = vmatprep.subr.mxu0 0.0
      %8114 = vmatpush2.msra.mxu0 0.0
      %8115 = vmatprep.subr.mxu0 0.0
      %8116 = vmatpush2.msra.mxu0 0.0
      %8117 = vmatprep.subr.mxu0 0.0
      %8118 = vmatpush2.msra.mxu0 0.0
      %8119 = vmatprep.subr.mxu0 0.0
      %8120 = vmatpush2.msra.mxu0 0.0
      %8121 = vmatprep.subr.mxu0 0.0
      %8122 = vmatpush2.msra.mxu0 0.0
      %8123 = vmatprep.subr.mxu0 0.0
      %8124 = vmatpush2.msra.mxu0 0.0
      %8125 = vmatprep.subr.mxu0 0.0
      %8126 = vmatpush2.msra.mxu0 0.0
      %8127 = vmatprep.mubr.f32.mxu0 0.0
      %8128 = vmatmul.mubr.f32.gmra.mxu0 %v8055
      %v8129 = vpop.f32.mrf.mxu0
      %v8130 = vadd.f32 0.0, %v8129
      %v8131 = vpop.f32.mrf.mxu0
      %v8132 = vadd.f32 0.0, %v8131
      %8133 = vdwg.mxu0
      %v8134 = vadd.f32 %v8029, %v8130
      %v8135 = vadd.f32 %v8030, %v8132
      %s8136 = scalar_lea.vmem %s6, 4400
      %v8137 = vld [vmem:[%s8136] sm:$0xff]
      %v8138 = vld [vmem:[%s8136 + $0x8] sm:$0xff]
      %v8139 = vld [vmem:[%s8136 + $0x10] sm:$0xff]
      %v8140 = vld [vmem:[%s8136 + $0x18] sm:$0xff]
      %v8141 = vld [vmem:[%s8136 + $0x20] sm:$0xff]
      %v8142 = vld [vmem:[%s8136 + $0x28] sm:$0xff]
      %v8143 = vld [vmem:[%s8136 + $0x30] sm:$0xff]
      %v8144 = vld [vmem:[%s8136 + $0x38] sm:$0xff]
      %v8145 = vld [vmem:[%s8136 + $0x40] sm:$0xff]
      %v8146 = vld [vmem:[%s8136 + $0x48] sm:$0xff]
      %v8147 = vld [vmem:[%s8136 + $0x50] sm:$0xff]
      %v8148 = vld [vmem:[%s8136 + $0x58] sm:$0xff]
      %v8149 = vld [vmem:[%s8136 + $0x60] sm:$0xff]
      %v8150 = vld [vmem:[%s8136 + $0x68] sm:$0xff]
      %v8151 = vld [vmem:[%s8136 + $0x70] sm:$0xff]
      %v8152 = vld [vmem:[%s8136 + $0x78] sm:$0xff]
      %v8153 = vld [vmem:[%s8136 + $0x80] sm:$0xff]
      %v8154 = vld [vmem:[%s8136 + $0x88] sm:$0xff]
      %v8155 = vld [vmem:[%s8136 + $0x90] sm:$0xff]
      %v8156 = vld [vmem:[%s8136 + $0x98] sm:$0xff]
      %v8157 = vld [vmem:[%s8136 + $0xa0] sm:$0x1]
      %v8158 = vld [vmem:[%s8136 + $0xa8] sm:$0x1]
      %v8159 = vrot.slane %v5513, 1
      %v8160 = vsel %vm5561, %v8159, 0
      %v8163 = vsel %vm5564, %v8157, 0
      %v8166 = vsel %vm5564, %v8158, 0
      %8168 = vmatprep.subr.mxu0 0.0
      %8169 = vmatpush1.msra.mxu0 0.0
      %8170 = vmatprep.subr.mxu0 0.0
      %8171 = vmatpush1.msra.mxu0 0.0
      %8172 = vmatprep.subr.mxu0 0.0
      %8173 = vmatpush1.msra.mxu0 0.0
      %8174 = vmatprep.subr.mxu0 0.0
      %8175 = vmatpush1.msra.mxu0 0.0
      %8176 = vmatprep.subr.mxu0 0.0
      %8177 = vmatpush1.msra.mxu0 0.0
      %8178 = vmatprep.subr.mxu0 %v8166
      %8179 = vmatpush1.msra.mxu0 %v8163
      %8180 = vmatprep.subr.mxu0 %v8156
      %8181 = vmatpush1.msra.mxu0 %v8155
      %8182 = vmatprep.subr.mxu0 %v8154
      %8183 = vmatpush1.msra.mxu0 %v8153
      %8184 = vmatprep.subr.mxu0 %v8152
      %8185 = vmatpush1.msra.mxu0 %v8151
      %8186 = vmatprep.subr.mxu0 %v8150
      %8187 = vmatpush1.msra.mxu0 %v8149
      %8188 = vmatprep.subr.mxu0 %v8148
      %8189 = vmatpush1.msra.mxu0 %v8147
      %8190 = vmatprep.subr.mxu0 %v8146
      %8191 = vmatpush1.msra.mxu0 %v8145
      %8192 = vmatprep.subr.mxu0 %v8144
      %8193 = vmatpush1.msra.mxu0 %v8143
      %8194 = vmatprep.subr.mxu0 %v8142
      %8195 = vmatpush1.msra.mxu0 %v8141
      %8196 = vmatprep.subr.mxu0 %v8140
      %8197 = vmatpush1.msra.mxu0 %v8139
      %8198 = vmatprep.subr.mxu0 %v8138
      %8199 = vmatpush1.msra.mxu0 %v8137
      %8200 = vmatprep.subr.mxu0 0.0
      %8201 = vmatpush2.msra.mxu0 0.0
      %8202 = vmatprep.subr.mxu0 0.0
      %8203 = vmatpush2.msra.mxu0 0.0
      %8204 = vmatprep.subr.mxu0 0.0
      %8205 = vmatpush2.msra.mxu0 0.0
      %8206 = vmatprep.subr.mxu0 0.0
      %8207 = vmatpush2.msra.mxu0 0.0
      %8208 = vmatprep.subr.mxu0 0.0
      %8209 = vmatpush2.msra.mxu0 0.0
      %8210 = vmatprep.subr.mxu0 0.0
      %8211 = vmatpush2.msra.mxu0 0.0
      %8212 = vmatprep.subr.mxu0 0.0
      %8213 = vmatpush2.msra.mxu0 0.0
      %8214 = vmatprep.subr.mxu0 0.0
      %8215 = vmatpush2.msra.mxu0 0.0
      %8216 = vmatprep.subr.mxu0 0.0
      %8217 = vmatpush2.msra.mxu0 0.0
      %8218 = vmatprep.subr.mxu0 0.0
      %8219 = vmatpush2.msra.mxu0 0.0
      %8220 = vmatprep.subr.mxu0 0.0
      %8221 = vmatpush2.msra.mxu0 0.0
      %8222 = vmatprep.subr.mxu0 0.0
      %8223 = vmatpush2.msra.mxu0 0.0
      %8224 = vmatprep.subr.mxu0 0.0
      %8225 = vmatpush2.msra.mxu0 0.0
      %8226 = vmatprep.subr.mxu0 0.0
      %8227 = vmatpush2.msra.mxu0 0.0
      %8228 = vmatprep.subr.mxu0 0.0
      %8229 = vmatpush2.msra.mxu0 0.0
      %8230 = vmatprep.subr.mxu0 0.0
      %8231 = vmatpush2.msra.mxu0 0.0
      %8232 = vmatprep.mubr.f32.mxu0 0.0
      %8233 = vmatmul.mubr.f32.gmra.mxu0 %v8160
      %v8234 = vpop.f32.mrf.mxu0
      %v8235 = vadd.f32 0.0, %v8234
      %v8236 = vpop.f32.mrf.mxu0
      %v8237 = vadd.f32 0.0, %v8236
      %8238 = vdwg.mxu0
      %v8239 = vadd.f32 %v8134, %v8235
      %v8240 = vadd.f32 %v8135, %v8237
      %s8241 = scalar_lea.vmem %s6, 4576
      %v8242 = vld [vmem:[%s8241] sm:$0xff]
      %v8243 = vld [vmem:[%s8241 + $0x8] sm:$0xff]
      %v8244 = vld [vmem:[%s8241 + $0x10] sm:$0xff]
      %v8245 = vld [vmem:[%s8241 + $0x18] sm:$0xff]
      %v8246 = vld [vmem:[%s8241 + $0x20] sm:$0xff]
      %v8247 = vld [vmem:[%s8241 + $0x28] sm:$0xff]
      %v8248 = vld [vmem:[%s8241 + $0x30] sm:$0xff]
      %v8249 = vld [vmem:[%s8241 + $0x38] sm:$0xff]
      %v8250 = vld [vmem:[%s8241 + $0x40] sm:$0xff]
      %v8251 = vld [vmem:[%s8241 + $0x48] sm:$0xff]
      %v8252 = vld [vmem:[%s8241 + $0x50] sm:$0xff]
      %v8253 = vld [vmem:[%s8241 + $0x58] sm:$0xff]
      %v8254 = vld [vmem:[%s8241 + $0x60] sm:$0xff]
      %v8255 = vld [vmem:[%s8241 + $0x68] sm:$0xff]
      %v8256 = vld [vmem:[%s8241 + $0x70] sm:$0xff]
      %v8257 = vld [vmem:[%s8241 + $0x78] sm:$0xff]
      %v8258 = vld [vmem:[%s8241 + $0x80] sm:$0xff]
      %v8259 = vld [vmem:[%s8241 + $0x88] sm:$0xff]
      %v8260 = vld [vmem:[%s8241 + $0x90] sm:$0xff]
      %v8261 = vld [vmem:[%s8241 + $0x98] sm:$0xff]
      %v8262 = vld [vmem:[%s8241 + $0xa0] sm:$0x1]
      %v8263 = vld [vmem:[%s8241 + $0xa8] sm:$0x1]
      %v8264 = vrot.slane %v5513, 2
      %v8265 = vsel %vm5561, %v8264, 0
      %v8268 = vsel %vm5564, %v8262, 0
      %v8271 = vsel %vm5564, %v8263, 0
      %8273 = vmatprep.subr.mxu0 0.0
      %8274 = vmatpush1.msra.mxu0 0.0
      %8275 = vmatprep.subr.mxu0 0.0
      %8276 = vmatpush1.msra.mxu0 0.0
      %8277 = vmatprep.subr.mxu0 0.0
      %8278 = vmatpush1.msra.mxu0 0.0
      %8279 = vmatprep.subr.mxu0 0.0
      %8280 = vmatpush1.msra.mxu0 0.0
      %8281 = vmatprep.subr.mxu0 0.0
      %8282 = vmatpush1.msra.mxu0 0.0
      %8283 = vmatprep.subr.mxu0 %v8271
      %8284 = vmatpush1.msra.mxu0 %v8268
      %8285 = vmatprep.subr.mxu0 %v8261
      %8286 = vmatpush1.msra.mxu0 %v8260
      %8287 = vmatprep.subr.mxu0 %v8259
      %8288 = vmatpush1.msra.mxu0 %v8258
      %8289 = vmatprep.subr.mxu0 %v8257
      %8290 = vmatpush1.msra.mxu0 %v8256
      %8291 = vmatprep.subr.mxu0 %v8255
      %8292 = vmatpush1.msra.mxu0 %v8254
      %8293 = vmatprep.subr.mxu0 %v8253
      %8294 = vmatpush1.msra.mxu0 %v8252
      %8295 = vmatprep.subr.mxu0 %v8251
      %8296 = vmatpush1.msra.mxu0 %v8250
      %8297 = vmatprep.subr.mxu0 %v8249
      %8298 = vmatpush1.msra.mxu0 %v8248
      %8299 = vmatprep.subr.mxu0 %v8247
      %8300 = vmatpush1.msra.mxu0 %v8246
      %8301 = vmatprep.subr.mxu0 %v8245
      %8302 = vmatpush1.msra.mxu0 %v8244
      %8303 = vmatprep.subr.mxu0 %v8243
      %8304 = vmatpush1.msra.mxu0 %v8242
      %8305 = vmatprep.subr.mxu0 0.0
      %8306 = vmatpush2.msra.mxu0 0.0
      %8307 = vmatprep.subr.mxu0 0.0
      %8308 = vmatpush2.msra.mxu0 0.0
      %8309 = vmatprep.subr.mxu0 0.0
      %8310 = vmatpush2.msra.mxu0 0.0
      %8311 = vmatprep.subr.mxu0 0.0
      %8312 = vmatpush2.msra.mxu0 0.0
      %8313 = vmatprep.subr.mxu0 0.0
      %8314 = vmatpush2.msra.mxu0 0.0
      %8315 = vmatprep.subr.mxu0 0.0
      %8316 = vmatpush2.msra.mxu0 0.0
      %8317 = vmatprep.subr.mxu0 0.0
      %8318 = vmatpush2.msra.mxu0 0.0
      %8319 = vmatprep.subr.mxu0 0.0
      %8320 = vmatpush2.msra.mxu0 0.0
      %8321 = vmatprep.subr.mxu0 0.0
      %8322 = vmatpush2.msra.mxu0 0.0
      %8323 = vmatprep.subr.mxu0 0.0
      %8324 = vmatpush2.msra.mxu0 0.0
      %8325 = vmatprep.subr.mxu0 0.0
      %8326 = vmatpush2.msra.mxu0 0.0
      %8327 = vmatprep.subr.mxu0 0.0
      %8328 = vmatpush2.msra.mxu0 0.0
      %8329 = vmatprep.subr.mxu0 0.0
      %8330 = vmatpush2.msra.mxu0 0.0
      %8331 = vmatprep.subr.mxu0 0.0
      %8332 = vmatpush2.msra.mxu0 0.0
      %8333 = vmatprep.subr.mxu0 0.0
      %8334 = vmatpush2.msra.mxu0 0.0
      %8335 = vmatprep.subr.mxu0 0.0
      %8336 = vmatpush2.msra.mxu0 0.0
      %8337 = vmatprep.mubr.f32.mxu0 0.0
      %8338 = vmatmul.mubr.f32.gmra.mxu0 %v8265
      %v8339 = vpop.f32.mrf.mxu0
      %v8340 = vadd.f32 0.0, %v8339
      %v8341 = vpop.f32.mrf.mxu0
      %v8342 = vadd.f32 0.0, %v8341
      %8343 = vdwg.mxu0
      %v8344 = vadd.f32 %v8239, %v8340
      %v8345 = vadd.f32 %v8240, %v8342
      %s8346 = scalar_lea.vmem %s6, 4752
      %v8347 = vld [vmem:[%s8346] sm:$0xff]
      %v8348 = vld [vmem:[%s8346 + $0x8] sm:$0xff]
      %v8349 = vld [vmem:[%s8346 + $0x10] sm:$0xff]
      %v8350 = vld [vmem:[%s8346 + $0x18] sm:$0xff]
      %v8351 = vld [vmem:[%s8346 + $0x20] sm:$0xff]
      %v8352 = vld [vmem:[%s8346 + $0x28] sm:$0xff]
      %v8353 = vld [vmem:[%s8346 + $0x30] sm:$0xff]
      %v8354 = vld [vmem:[%s8346 + $0x38] sm:$0xff]
      %v8355 = vld [vmem:[%s8346 + $0x40] sm:$0xff]
      %v8356 = vld [vmem:[%s8346 + $0x48] sm:$0xff]
      %v8357 = vld [vmem:[%s8346 + $0x50] sm:$0xff]
      %v8358 = vld [vmem:[%s8346 + $0x58] sm:$0xff]
      %v8359 = vld [vmem:[%s8346 + $0x60] sm:$0xff]
      %v8360 = vld [vmem:[%s8346 + $0x68] sm:$0xff]
      %v8361 = vld [vmem:[%s8346 + $0x70] sm:$0xff]
      %v8362 = vld [vmem:[%s8346 + $0x78] sm:$0xff]
      %v8363 = vld [vmem:[%s8346 + $0x80] sm:$0xff]
      %v8364 = vld [vmem:[%s8346 + $0x88] sm:$0xff]
      %v8365 = vld [vmem:[%s8346 + $0x90] sm:$0xff]
      %v8366 = vld [vmem:[%s8346 + $0x98] sm:$0xff]
      %v8367 = vld [vmem:[%s8346 + $0xa0] sm:$0x1]
      %v8368 = vld [vmem:[%s8346 + $0xa8] sm:$0x1]
      %v8369 = vrot.slane %v5513, 3
      %v8370 = vsel %vm5561, %v8369, 0
      %v8373 = vsel %vm5564, %v8367, 0
      %v8376 = vsel %vm5564, %v8368, 0
      %8378 = vmatprep.subr.mxu0 0.0
      %8379 = vmatpush1.msra.mxu0 0.0
      %8380 = vmatprep.subr.mxu0 0.0
      %8381 = vmatpush1.msra.mxu0 0.0
      %8382 = vmatprep.subr.mxu0 0.0
      %8383 = vmatpush1.msra.mxu0 0.0
      %8384 = vmatprep.subr.mxu0 0.0
      %8385 = vmatpush1.msra.mxu0 0.0
      %8386 = vmatprep.subr.mxu0 0.0
      %8387 = vmatpush1.msra.mxu0 0.0
      %8388 = vmatprep.subr.mxu0 %v8376
      %8389 = vmatpush1.msra.mxu0 %v8373
      %8390 = vmatprep.subr.mxu0 %v8366
      %8391 = vmatpush1.msra.mxu0 %v8365
      %8392 = vmatprep.subr.mxu0 %v8364
      %8393 = vmatpush1.msra.mxu0 %v8363
      %8394 = vmatprep.subr.mxu0 %v8362
      %8395 = vmatpush1.msra.mxu0 %v8361
      %8396 = vmatprep.subr.mxu0 %v8360
      %8397 = vmatpush1.msra.mxu0 %v8359
      %8398 = vmatprep.subr.mxu0 %v8358
      %8399 = vmatpush1.msra.mxu0 %v8357
      %8400 = vmatprep.subr.mxu0 %v8356
      %8401 = vmatpush1.msra.mxu0 %v8355
      %8402 = vmatprep.subr.mxu0 %v8354
      %8403 = vmatpush1.msra.mxu0 %v8353
      %8404 = vmatprep.subr.mxu0 %v8352
      %8405 = vmatpush1.msra.mxu0 %v8351
      %8406 = vmatprep.subr.mxu0 %v8350
      %8407 = vmatpush1.msra.mxu0 %v8349
      %8408 = vmatprep.subr.mxu0 %v8348
      %8409 = vmatpush1.msra.mxu0 %v8347
      %8410 = vmatprep.subr.mxu0 0.0
      %8411 = vmatpush2.msra.mxu0 0.0
      %8412 = vmatprep.subr.mxu0 0.0
      %8413 = vmatpush2.msra.mxu0 0.0
      %8414 = vmatprep.subr.mxu0 0.0
      %8415 = vmatpush2.msra.mxu0 0.0
      %8416 = vmatprep.subr.mxu0 0.0
      %8417 = vmatpush2.msra.mxu0 0.0
      %8418 = vmatprep.subr.mxu0 0.0
      %8419 = vmatpush2.msra.mxu0 0.0
      %8420 = vmatprep.subr.mxu0 0.0
      %8421 = vmatpush2.msra.mxu0 0.0
      %8422 = vmatprep.subr.mxu0 0.0
      %8423 = vmatpush2.msra.mxu0 0.0
      %8424 = vmatprep.subr.mxu0 0.0
      %8425 = vmatpush2.msra.mxu0 0.0
      %8426 = vmatprep.subr.mxu0 0.0
      %8427 = vmatpush2.msra.mxu0 0.0
      %8428 = vmatprep.subr.mxu0 0.0
      %8429 = vmatpush2.msra.mxu0 0.0
      %8430 = vmatprep.subr.mxu0 0.0
      %8431 = vmatpush2.msra.mxu0 0.0
      %8432 = vmatprep.subr.mxu0 0.0
      %8433 = vmatpush2.msra.mxu0 0.0
      %8434 = vmatprep.subr.mxu0 0.0
      %8435 = vmatpush2.msra.mxu0 0.0
      %8436 = vmatprep.subr.mxu0 0.0
      %8437 = vmatpush2.msra.mxu0 0.0
      %8438 = vmatprep.subr.mxu0 0.0
      %8439 = vmatpush2.msra.mxu0 0.0
      %8440 = vmatprep.subr.mxu0 0.0
      %8441 = vmatpush2.msra.mxu0 0.0
      %8442 = vmatprep.mubr.f32.mxu0 0.0
      %8443 = vmatmul.mubr.f32.gmra.mxu0 %v8370
      %v8444 = vpop.f32.mrf.mxu0
      %v8445 = vadd.f32 0.0, %v8444
      %v8446 = vpop.f32.mrf.mxu0
      %v8447 = vadd.f32 0.0, %v8446
      %8448 = vdwg.mxu0
      %v8449 = vadd.f32 %v8344, %v8445
      %v8450 = vadd.f32 %v8345, %v8447
      %s8451 = scalar_lea.vmem %s6, 4928
      %v8452 = vld [vmem:[%s8451] sm:$0xff]
      %v8453 = vld [vmem:[%s8451 + $0x8] sm:$0xff]
      %v8454 = vld [vmem:[%s8451 + $0x10] sm:$0xff]
      %v8455 = vld [vmem:[%s8451 + $0x18] sm:$0xff]
      %v8456 = vld [vmem:[%s8451 + $0x20] sm:$0xff]
      %v8457 = vld [vmem:[%s8451 + $0x28] sm:$0xff]
      %v8458 = vld [vmem:[%s8451 + $0x30] sm:$0xff]
      %v8459 = vld [vmem:[%s8451 + $0x38] sm:$0xff]
      %v8460 = vld [vmem:[%s8451 + $0x40] sm:$0xff]
      %v8461 = vld [vmem:[%s8451 + $0x48] sm:$0xff]
      %v8462 = vld [vmem:[%s8451 + $0x50] sm:$0xff]
      %v8463 = vld [vmem:[%s8451 + $0x58] sm:$0xff]
      %v8464 = vld [vmem:[%s8451 + $0x60] sm:$0xff]
      %v8465 = vld [vmem:[%s8451 + $0x68] sm:$0xff]
      %v8466 = vld [vmem:[%s8451 + $0x70] sm:$0xff]
      %v8467 = vld [vmem:[%s8451 + $0x78] sm:$0xff]
      %v8468 = vld [vmem:[%s8451 + $0x80] sm:$0xff]
      %v8469 = vld [vmem:[%s8451 + $0x88] sm:$0xff]
      %v8470 = vld [vmem:[%s8451 + $0x90] sm:$0xff]
      %v8471 = vld [vmem:[%s8451 + $0x98] sm:$0xff]
      %v8472 = vld [vmem:[%s8451 + $0xa0] sm:$0x1]
      %v8473 = vld [vmem:[%s8451 + $0xa8] sm:$0x1]
      %v8474 = vrot.slane %v5513, 4
      %v8475 = vsel %vm5561, %v8474, 0
      %v8478 = vsel %vm5564, %v8472, 0
      %v8481 = vsel %vm5564, %v8473, 0
      %8483 = vmatprep.subr.mxu0 0.0
      %8484 = vmatpush1.msra.mxu0 0.0
      %8485 = vmatprep.subr.mxu0 0.0
      %8486 = vmatpush1.msra.mxu0 0.0
      %8487 = vmatprep.subr.mxu0 0.0
      %8488 = vmatpush1.msra.mxu0 0.0
      %8489 = vmatprep.subr.mxu0 0.0
      %8490 = vmatpush1.msra.mxu0 0.0
      %8491 = vmatprep.subr.mxu0 0.0
      %8492 = vmatpush1.msra.mxu0 0.0
      %8493 = vmatprep.subr.mxu0 %v8481
      %8494 = vmatpush1.msra.mxu0 %v8478
      %8495 = vmatprep.subr.mxu0 %v8471
      %8496 = vmatpush1.msra.mxu0 %v8470
      %8497 = vmatprep.subr.mxu0 %v8469
      %8498 = vmatpush1.msra.mxu0 %v8468
      %8499 = vmatprep.subr.mxu0 %v8467
      %8500 = vmatpush1.msra.mxu0 %v8466
      %8501 = vmatprep.subr.mxu0 %v8465
      %8502 = vmatpush1.msra.mxu0 %v8464
      %8503 = vmatprep.subr.mxu0 %v8463
      %8504 = vmatpush1.msra.mxu0 %v8462
      %8505 = vmatprep.subr.mxu0 %v8461
      %8506 = vmatpush1.msra.mxu0 %v8460
      %8507 = vmatprep.subr.mxu0 %v8459
      %8508 = vmatpush1.msra.mxu0 %v8458
      %8509 = vmatprep.subr.mxu0 %v8457
      %8510 = vmatpush1.msra.mxu0 %v8456
      %8511 = vmatprep.subr.mxu0 %v8455
      %8512 = vmatpush1.msra.mxu0 %v8454
      %8513 = vmatprep.subr.mxu0 %v8453
      %8514 = vmatpush1.msra.mxu0 %v8452
      %8515 = vmatprep.subr.mxu0 0.0
      %8516 = vmatpush2.msra.mxu0 0.0
      %8517 = vmatprep.subr.mxu0 0.0
      %8518 = vmatpush2.msra.mxu0 0.0
      %8519 = vmatprep.subr.mxu0 0.0
      %8520 = vmatpush2.msra.mxu0 0.0
      %8521 = vmatprep.subr.mxu0 0.0
      %8522 = vmatpush2.msra.mxu0 0.0
      %8523 = vmatprep.subr.mxu0 0.0
      %8524 = vmatpush2.msra.mxu0 0.0
      %8525 = vmatprep.subr.mxu0 0.0
      %8526 = vmatpush2.msra.mxu0 0.0
      %8527 = vmatprep.subr.mxu0 0.0
      %8528 = vmatpush2.msra.mxu0 0.0
      %8529 = vmatprep.subr.mxu0 0.0
      %8530 = vmatpush2.msra.mxu0 0.0
      %8531 = vmatprep.subr.mxu0 0.0
      %8532 = vmatpush2.msra.mxu0 0.0
      %8533 = vmatprep.subr.mxu0 0.0
      %8534 = vmatpush2.msra.mxu0 0.0
      %8535 = vmatprep.subr.mxu0 0.0
      %8536 = vmatpush2.msra.mxu0 0.0
      %8537 = vmatprep.subr.mxu0 0.0
      %8538 = vmatpush2.msra.mxu0 0.0
      %8539 = vmatprep.subr.mxu0 0.0
      %8540 = vmatpush2.msra.mxu0 0.0
      %8541 = vmatprep.subr.mxu0 0.0
      %8542 = vmatpush2.msra.mxu0 0.0
      %8543 = vmatprep.subr.mxu0 0.0
      %8544 = vmatpush2.msra.mxu0 0.0
      %8545 = vmatprep.subr.mxu0 0.0
      %8546 = vmatpush2.msra.mxu0 0.0
      %8547 = vmatprep.mubr.f32.mxu0 0.0
      %8548 = vmatmul.mubr.f32.gmra.mxu0 %v8475
      %v8549 = vpop.f32.mrf.mxu0
      %v8550 = vadd.f32 0.0, %v8549
      %v8551 = vpop.f32.mrf.mxu0
      %v8552 = vadd.f32 0.0, %v8551
      %8553 = vdwg.mxu0
      %v8554 = vadd.f32 %v8449, %v8550
      %v8555 = vadd.f32 %v8450, %v8552
      %s8556 = scalar_lea.vmem %s6, 5104
      %v8557 = vld [vmem:[%s8556] sm:$0xff]
      %v8558 = vld [vmem:[%s8556 + $0x8] sm:$0xff]
      %v8559 = vld [vmem:[%s8556 + $0x10] sm:$0xff]
      %v8560 = vld [vmem:[%s8556 + $0x18] sm:$0xff]
      %v8561 = vld [vmem:[%s8556 + $0x20] sm:$0xff]
      %v8562 = vld [vmem:[%s8556 + $0x28] sm:$0xff]
      %v8563 = vld [vmem:[%s8556 + $0x30] sm:$0xff]
      %v8564 = vld [vmem:[%s8556 + $0x38] sm:$0xff]
      %v8565 = vld [vmem:[%s8556 + $0x40] sm:$0xff]
      %v8566 = vld [vmem:[%s8556 + $0x48] sm:$0xff]
      %v8567 = vld [vmem:[%s8556 + $0x50] sm:$0xff]
      %v8568 = vld [vmem:[%s8556 + $0x58] sm:$0xff]
      %v8569 = vld [vmem:[%s8556 + $0x60] sm:$0xff]
      %v8570 = vld [vmem:[%s8556 + $0x68] sm:$0xff]
      %v8571 = vld [vmem:[%s8556 + $0x70] sm:$0xff]
      %v8572 = vld [vmem:[%s8556 + $0x78] sm:$0xff]
      %v8573 = vld [vmem:[%s8556 + $0x80] sm:$0xff]
      %v8574 = vld [vmem:[%s8556 + $0x88] sm:$0xff]
      %v8575 = vld [vmem:[%s8556 + $0x90] sm:$0xff]
      %v8576 = vld [vmem:[%s8556 + $0x98] sm:$0xff]
      %v8577 = vld [vmem:[%s8556 + $0xa0] sm:$0x1]
      %v8578 = vld [vmem:[%s8556 + $0xa8] sm:$0x1]
      %v8579 = vrot.slane %v5513, 5
      %v8580 = vsel %vm5561, %v8579, 0
      %v8583 = vsel %vm5564, %v8577, 0
      %v8586 = vsel %vm5564, %v8578, 0
      %8588 = vmatprep.subr.mxu0 0.0
      %8589 = vmatpush1.msra.mxu0 0.0
      %8590 = vmatprep.subr.mxu0 0.0
      %8591 = vmatpush1.msra.mxu0 0.0
      %8592 = vmatprep.subr.mxu0 0.0
      %8593 = vmatpush1.msra.mxu0 0.0
      %8594 = vmatprep.subr.mxu0 0.0
      %8595 = vmatpush1.msra.mxu0 0.0
      %8596 = vmatprep.subr.mxu0 0.0
      %8597 = vmatpush1.msra.mxu0 0.0
      %8598 = vmatprep.subr.mxu0 %v8586
      %8599 = vmatpush1.msra.mxu0 %v8583
      %8600 = vmatprep.subr.mxu0 %v8576
      %8601 = vmatpush1.msra.mxu0 %v8575
      %8602 = vmatprep.subr.mxu0 %v8574
      %8603 = vmatpush1.msra.mxu0 %v8573
      %8604 = vmatprep.subr.mxu0 %v8572
      %8605 = vmatpush1.msra.mxu0 %v8571
      %8606 = vmatprep.subr.mxu0 %v8570
      %8607 = vmatpush1.msra.mxu0 %v8569
      %8608 = vmatprep.subr.mxu0 %v8568
      %8609 = vmatpush1.msra.mxu0 %v8567
      %8610 = vmatprep.subr.mxu0 %v8566
      %8611 = vmatpush1.msra.mxu0 %v8565
      %8612 = vmatprep.subr.mxu0 %v8564
      %8613 = vmatpush1.msra.mxu0 %v8563
      %8614 = vmatprep.subr.mxu0 %v8562
      %8615 = vmatpush1.msra.mxu0 %v8561
      %8616 = vmatprep.subr.mxu0 %v8560
      %8617 = vmatpush1.msra.mxu0 %v8559
      %8618 = vmatprep.subr.mxu0 %v8558
      %8619 = vmatpush1.msra.mxu0 %v8557
      %8620 = vmatprep.subr.mxu0 0.0
      %8621 = vmatpush2.msra.mxu0 0.0
      %8622 = vmatprep.subr.mxu0 0.0
      %8623 = vmatpush2.msra.mxu0 0.0
      %8624 = vmatprep.subr.mxu0 0.0
      %8625 = vmatpush2.msra.mxu0 0.0
      %8626 = vmatprep.subr.mxu0 0.0
      %8627 = vmatpush2.msra.mxu0 0.0
      %8628 = vmatprep.subr.mxu0 0.0
      %8629 = vmatpush2.msra.mxu0 0.0
      %8630 = vmatprep.subr.mxu0 0.0
      %8631 = vmatpush2.msra.mxu0 0.0
      %8632 = vmatprep.subr.mxu0 0.0
      %8633 = vmatpush2.msra.mxu0 0.0
      %8634 = vmatprep.subr.mxu0 0.0
      %8635 = vmatpush2.msra.mxu0 0.0
      %8636 = vmatprep.subr.mxu0 0.0
      %8637 = vmatpush2.msra.mxu0 0.0
      %8638 = vmatprep.subr.mxu0 0.0
      %8639 = vmatpush2.msra.mxu0 0.0
      %8640 = vmatprep.subr.mxu0 0.0
      %8641 = vmatpush2.msra.mxu0 0.0
      %8642 = vmatprep.subr.mxu0 0.0
      %8643 = vmatpush2.msra.mxu0 0.0
      %8644 = vmatprep.subr.mxu0 0.0
      %8645 = vmatpush2.msra.mxu0 0.0
      %8646 = vmatprep.subr.mxu0 0.0
      %8647 = vmatpush2.msra.mxu0 0.0
      %8648 = vmatprep.subr.mxu0 0.0
      %8649 = vmatpush2.msra.mxu0 0.0
      %8650 = vmatprep.subr.mxu0 0.0
      %8651 = vmatpush2.msra.mxu0 0.0
      %8652 = vmatprep.mubr.f32.mxu0 0.0
      %8653 = vmatmul.mubr.f32.gmra.mxu0 %v8580
      %v8654 = vpop.f32.mrf.mxu0
      %v8655 = vadd.f32 0.0, %v8654
      %v8656 = vpop.f32.mrf.mxu0
      %v8657 = vadd.f32 0.0, %v8656
      %8658 = vdwg.mxu0
      %v8659 = vadd.f32 %v8554, %v8655
      %v8660 = vadd.f32 %v8555, %v8657
      %s8661 = scalar_lea.vmem %s6, 5280
      %v8662 = vld [vmem:[%s8661] sm:$0xff]
      %v8663 = vld [vmem:[%s8661 + $0x8] sm:$0xff]
      %v8664 = vld [vmem:[%s8661 + $0x10] sm:$0xff]
      %v8665 = vld [vmem:[%s8661 + $0x18] sm:$0xff]
      %v8666 = vld [vmem:[%s8661 + $0x20] sm:$0xff]
      %v8667 = vld [vmem:[%s8661 + $0x28] sm:$0xff]
      %v8668 = vld [vmem:[%s8661 + $0x30] sm:$0xff]
      %v8669 = vld [vmem:[%s8661 + $0x38] sm:$0xff]
      %v8670 = vld [vmem:[%s8661 + $0x40] sm:$0xff]
      %v8671 = vld [vmem:[%s8661 + $0x48] sm:$0xff]
      %v8672 = vld [vmem:[%s8661 + $0x50] sm:$0xff]
      %v8673 = vld [vmem:[%s8661 + $0x58] sm:$0xff]
      %v8674 = vld [vmem:[%s8661 + $0x60] sm:$0xff]
      %v8675 = vld [vmem:[%s8661 + $0x68] sm:$0xff]
      %v8676 = vld [vmem:[%s8661 + $0x70] sm:$0xff]
      %v8677 = vld [vmem:[%s8661 + $0x78] sm:$0xff]
      %v8678 = vld [vmem:[%s8661 + $0x80] sm:$0xff]
      %v8679 = vld [vmem:[%s8661 + $0x88] sm:$0xff]
      %v8680 = vld [vmem:[%s8661 + $0x90] sm:$0xff]
      %v8681 = vld [vmem:[%s8661 + $0x98] sm:$0xff]
      %v8682 = vld [vmem:[%s8661 + $0xa0] sm:$0x1]
      %v8683 = vld [vmem:[%s8661 + $0xa8] sm:$0x1]
      %v8684 = vrot.slane %v5513, 6
      %v8685 = vsel %vm5561, %v8684, 0
      %v8688 = vsel %vm5564, %v8682, 0
      %v8691 = vsel %vm5564, %v8683, 0
      %8693 = vmatprep.subr.mxu0 0.0
      %8694 = vmatpush1.msra.mxu0 0.0
      %8695 = vmatprep.subr.mxu0 0.0
      %8696 = vmatpush1.msra.mxu0 0.0
      %8697 = vmatprep.subr.mxu0 0.0
      %8698 = vmatpush1.msra.mxu0 0.0
      %8699 = vmatprep.subr.mxu0 0.0
      %8700 = vmatpush1.msra.mxu0 0.0
      %8701 = vmatprep.subr.mxu0 0.0
      %8702 = vmatpush1.msra.mxu0 0.0
      %8703 = vmatprep.subr.mxu0 %v8691
      %8704 = vmatpush1.msra.mxu0 %v8688
      %8705 = vmatprep.subr.mxu0 %v8681
      %8706 = vmatpush1.msra.mxu0 %v8680
      %8707 = vmatprep.subr.mxu0 %v8679
      %8708 = vmatpush1.msra.mxu0 %v8678
      %8709 = vmatprep.subr.mxu0 %v8677
      %8710 = vmatpush1.msra.mxu0 %v8676
      %8711 = vmatprep.subr.mxu0 %v8675
      %8712 = vmatpush1.msra.mxu0 %v8674
      %8713 = vmatprep.subr.mxu0 %v8673
      %8714 = vmatpush1.msra.mxu0 %v8672
      %8715 = vmatprep.subr.mxu0 %v8671
      %8716 = vmatpush1.msra.mxu0 %v8670
      %8717 = vmatprep.subr.mxu0 %v8669
      %8718 = vmatpush1.msra.mxu0 %v8668
      %8719 = vmatprep.subr.mxu0 %v8667
      %8720 = vmatpush1.msra.mxu0 %v8666
      %8721 = vmatprep.subr.mxu0 %v8665
      %8722 = vmatpush1.msra.mxu0 %v8664
      %8723 = vmatprep.subr.mxu0 %v8663
      %8724 = vmatpush1.msra.mxu0 %v8662
      %8725 = vmatprep.subr.mxu0 0.0
      %8726 = vmatpush2.msra.mxu0 0.0
      %8727 = vmatprep.subr.mxu0 0.0
      %8728 = vmatpush2.msra.mxu0 0.0
      %8729 = vmatprep.subr.mxu0 0.0
      %8730 = vmatpush2.msra.mxu0 0.0
      %8731 = vmatprep.subr.mxu0 0.0
      %8732 = vmatpush2.msra.mxu0 0.0
      %8733 = vmatprep.subr.mxu0 0.0
      %8734 = vmatpush2.msra.mxu0 0.0
      %8735 = vmatprep.subr.mxu0 0.0
      %8736 = vmatpush2.msra.mxu0 0.0
      %8737 = vmatprep.subr.mxu0 0.0
      %8738 = vmatpush2.msra.mxu0 0.0
      %8739 = vmatprep.subr.mxu0 0.0
      %8740 = vmatpush2.msra.mxu0 0.0
      %8741 = vmatprep.subr.mxu0 0.0
      %8742 = vmatpush2.msra.mxu0 0.0
      %8743 = vmatprep.subr.mxu0 0.0
      %8744 = vmatpush2.msra.mxu0 0.0
      %8745 = vmatprep.subr.mxu0 0.0
      %8746 = vmatpush2.msra.mxu0 0.0
      %8747 = vmatprep.subr.mxu0 0.0
      %8748 = vmatpush2.msra.mxu0 0.0
      %8749 = vmatprep.subr.mxu0 0.0
      %8750 = vmatpush2.msra.mxu0 0.0
      %8751 = vmatprep.subr.mxu0 0.0
      %8752 = vmatpush2.msra.mxu0 0.0
      %8753 = vmatprep.subr.mxu0 0.0
      %8754 = vmatpush2.msra.mxu0 0.0
      %8755 = vmatprep.subr.mxu0 0.0
      %8756 = vmatpush2.msra.mxu0 0.0
      %8757 = vmatprep.mubr.f32.mxu0 0.0
      %8758 = vmatmul.mubr.f32.gmra.mxu0 %v8685
      %v8759 = vpop.f32.mrf.mxu0
      %v8760 = vadd.f32 0.0, %v8759
      %v8761 = vpop.f32.mrf.mxu0
      %v8762 = vadd.f32 0.0, %v8761
      %8763 = vdwg.mxu0
      %v8764 = vadd.f32 %v8659, %v8760
      %v8765 = vadd.f32 %v8660, %v8762
      %s8766 = scalar_lea.vmem %s6, 5456
      %v8767 = vld [vmem:[%s8766] sm:$0xff]
      %v8768 = vld [vmem:[%s8766 + $0x8] sm:$0xff]
      %v8769 = vld [vmem:[%s8766 + $0x10] sm:$0xff]
      %v8770 = vld [vmem:[%s8766 + $0x18] sm:$0xff]
      %v8771 = vld [vmem:[%s8766 + $0x20] sm:$0xff]
      %v8772 = vld [vmem:[%s8766 + $0x28] sm:$0xff]
      %v8773 = vld [vmem:[%s8766 + $0x30] sm:$0xff]
      %v8774 = vld [vmem:[%s8766 + $0x38] sm:$0xff]
      %v8775 = vld [vmem:[%s8766 + $0x40] sm:$0xff]
      %v8776 = vld [vmem:[%s8766 + $0x48] sm:$0xff]
      %v8777 = vld [vmem:[%s8766 + $0x50] sm:$0xff]
      %v8778 = vld [vmem:[%s8766 + $0x58] sm:$0xff]
      %v8779 = vld [vmem:[%s8766 + $0x60] sm:$0xff]
      %v8780 = vld [vmem:[%s8766 + $0x68] sm:$0xff]
      %v8781 = vld [vmem:[%s8766 + $0x70] sm:$0xff]
      %v8782 = vld [vmem:[%s8766 + $0x78] sm:$0xff]
      %v8783 = vld [vmem:[%s8766 + $0x80] sm:$0xff]
      %v8784 = vld [vmem:[%s8766 + $0x88] sm:$0xff]
      %v8785 = vld [vmem:[%s8766 + $0x90] sm:$0xff]
      %v8786 = vld [vmem:[%s8766 + $0x98] sm:$0xff]
      %v8787 = vld [vmem:[%s8766 + $0xa0] sm:$0x1]
      %v8788 = vld [vmem:[%s8766 + $0xa8] sm:$0x1]
      %v8789 = vrot.slane %v5513, 7
      %v8790 = vsel %vm5561, %v8789, 0
      %v8793 = vsel %vm5564, %v8787, 0
      %v8796 = vsel %vm5564, %v8788, 0
      %8798 = vmatprep.subr.mxu0 0.0
      %8799 = vmatpush1.msra.mxu0 0.0
      %8800 = vmatprep.subr.mxu0 0.0
      %8801 = vmatpush1.msra.mxu0 0.0
      %8802 = vmatprep.subr.mxu0 0.0
      %8803 = vmatpush1.msra.mxu0 0.0
      %8804 = vmatprep.subr.mxu0 0.0
      %8805 = vmatpush1.msra.mxu0 0.0
      %8806 = vmatprep.subr.mxu0 0.0
      %8807 = vmatpush1.msra.mxu0 0.0
      %8808 = vmatprep.subr.mxu0 %v8796
      %8809 = vmatpush1.msra.mxu0 %v8793
      %8810 = vmatprep.subr.mxu0 %v8786
      %8811 = vmatpush1.msra.mxu0 %v8785
      %8812 = vmatprep.subr.mxu0 %v8784
      %8813 = vmatpush1.msra.mxu0 %v8783
      %8814 = vmatprep.subr.mxu0 %v8782
      %8815 = vmatpush1.msra.mxu0 %v8781
      %8816 = vmatprep.subr.mxu0 %v8780
      %8817 = vmatpush1.msra.mxu0 %v8779
      %8818 = vmatprep.subr.mxu0 %v8778
      %8819 = vmatpush1.msra.mxu0 %v8777
      %8820 = vmatprep.subr.mxu0 %v8776
      %8821 = vmatpush1.msra.mxu0 %v8775
      %8822 = vmatprep.subr.mxu0 %v8774
      %8823 = vmatpush1.msra.mxu0 %v8773
      %8824 = vmatprep.subr.mxu0 %v8772
      %8825 = vmatpush1.msra.mxu0 %v8771
      %8826 = vmatprep.subr.mxu0 %v8770
      %8827 = vmatpush1.msra.mxu0 %v8769
      %8828 = vmatprep.subr.mxu0 %v8768
      %8829 = vmatpush1.msra.mxu0 %v8767
      %8830 = vmatprep.subr.mxu0 0.0
      %8831 = vmatpush2.msra.mxu0 0.0
      %8832 = vmatprep.subr.mxu0 0.0
      %8833 = vmatpush2.msra.mxu0 0.0
      %8834 = vmatprep.subr.mxu0 0.0
      %8835 = vmatpush2.msra.mxu0 0.0
      %8836 = vmatprep.subr.mxu0 0.0
      %8837 = vmatpush2.msra.mxu0 0.0
      %8838 = vmatprep.subr.mxu0 0.0
      %8839 = vmatpush2.msra.mxu0 0.0
      %8840 = vmatprep.subr.mxu0 0.0
      %8841 = vmatpush2.msra.mxu0 0.0
      %8842 = vmatprep.subr.mxu0 0.0
      %8843 = vmatpush2.msra.mxu0 0.0
      %8844 = vmatprep.subr.mxu0 0.0
      %8845 = vmatpush2.msra.mxu0 0.0
      %8846 = vmatprep.subr.mxu0 0.0
      %8847 = vmatpush2.msra.mxu0 0.0
      %8848 = vmatprep.subr.mxu0 0.0
      %8849 = vmatpush2.msra.mxu0 0.0
      %8850 = vmatprep.subr.mxu0 0.0
      %8851 = vmatpush2.msra.mxu0 0.0
      %8852 = vmatprep.subr.mxu0 0.0
      %8853 = vmatpush2.msra.mxu0 0.0
      %8854 = vmatprep.subr.mxu0 0.0
      %8855 = vmatpush2.msra.mxu0 0.0
      %8856 = vmatprep.subr.mxu0 0.0
      %8857 = vmatpush2.msra.mxu0 0.0
      %8858 = vmatprep.subr.mxu0 0.0
      %8859 = vmatpush2.msra.mxu0 0.0
      %8860 = vmatprep.subr.mxu0 0.0
      %8861 = vmatpush2.msra.mxu0 0.0
      %8862 = vmatprep.mubr.f32.mxu0 0.0
      %8863 = vmatmul.mubr.f32.gmra.mxu0 %v8790
      %v8864 = vpop.f32.mrf.mxu0
      %v8865 = vadd.f32 0.0, %v8864
      %v8866 = vpop.f32.mrf.mxu0
      %v8867 = vadd.f32 0.0, %v8866
      %8868 = vdwg.mxu0
      %v8869 = vadd.f32 %v8764, %v8865
      %v8870 = vadd.f32 %v8765, %v8867
      %v8871 = vld [vmem:[%s7] sm:$0x3]
      %v8873 = vlaneseq
      %v8874 = vshrl.u32 %v8873, 7
      %v8875 = vsub.s32 0, %v8874
      %v8876 = vrot.slane %v8871, %v8875
      %v8877 = vlaneseq
      %v8878 = vshrl.u32 %v8877, 7
      %v8879 = vsub.s32 1, %v8878
      %v8880 = vrot.slane %v8871, %v8879
      %v8883 = vadd.f32 %v8869, %v8876
      %v8884 = vadd.f32 %v8870, %v8880
      %v8885 = vmax.f32 %v8883, 0.0
      %v8886 = vmax.f32 %v8884, 0.0
      %v8887 = vld [vmem:[%s8] sm:$0x3]
      %v8889 = vlaneseq
      %v8890 = vshrl.u32 %v8889, 7
      %v8891 = vsub.s32 0, %v8890
      %v8892 = vrot.slane %v8887, %v8891
      %v8893 = vlaneseq
      %v8894 = vshrl.u32 %v8893, 7
      %v8895 = vsub.s32 1, %v8894
      %v8896 = vrot.slane %v8887, %v8895
      %v8899 = vmul.f32 %v8885, %v8892
      %v8900 = vmul.f32 %v8886, %v8896
      %v8901 = vsel %vm5564, %v8899, 0.0
      %v8902 = vsel %vm5564, %v8900, 0.0
      %v8903 = vadd.f32 %v8901, %v8902
      %8904 = vadd.xlane.f32.xlu0 %v8903
      %v8905 = vpop.xlane.xlu0 %8904
      %v8906 = vld [vmem:[#allocation2] sm:$0x1]
      %v8907 = vadd.f32 %v8905, %v8906
      %vm8908 = vcmask 0
      %8909 = vst.msk [vmem:[%s357] sm:$0x1] %vm8908, %v8907
      %p8910 = scmp.lt.s32.totalorder %s23, 1
      %s8911 = scalar_select %p8910, %s23, 1
      %s8912 = scalar_lea.vmem %s10, %s8911
      // Predicated region
      $region61: #{dqn_regressor_forward.1} parent=59 // pred_check
        %p8913 = pneg %p256
      $region62: #{dqn_regressor_forward.1} parent=59 // pred_check_branch
        %8915 = sbr.rel (%p8913) target = $region64
      $region63: #{dqn_regressor_forward.1} parent=59 // pred_region
        _
      $region64: #{dqn_regressor_forward.1} parent=59 // pred_fallthru
        _
    $region60: #{dqn_regressor_forward.1} parent=5 // pred_fallthru
      _
    %p8916 = scmp.le.s32.totalorder 2, %s18
    // Predicated region
    $region65: #{dqn_regressor_forward.1} parent=5 // pred_check
      %p8917 = pneg %p8916
    $region66: #{dqn_regressor_forward.1} parent=5 // pred_check_branch
      %8919 = sbr.rel (%p8917) target = $region68
    $region67: #{dqn_regressor_forward.1} parent=5 // pred_region
      %s8920 = ssub.s32 %s18, 2
      // Predicated region
      $region69: #{dqn_regressor_forward.1} parent=67 // pred_check
        %p8921 = pneg %p262
      $region70: #{dqn_regressor_forward.1} parent=67 // pred_check_branch
        %8923 = sbr.rel (%p8921) target = $region72
      $region71: #{dqn_regressor_forward.1} parent=67 // pred_region
        %p8924 = scmp.lt.s32.totalorder %s24, 1
        %s8925 = scalar_select %p8924, %s24, 1
        %s8926 = scalar_lea.vmem %s10, %s8925
      $region72: #{dqn_regressor_forward.1} parent=67 // pred_fallthru
        _
    $region68: #{dqn_regressor_forward.1} parent=5 // pred_fallthru
      _
  $region6: #{dqn_regressor_forward.1} parent=0 // loop_footer
    %s22 = sadd.s32 1, %s18
  $region7: #{dqn_regressor_forward.1} parent=0 // loop_footer_branch
    %17 = sbr.rel target = $region3
  $region8: #{dqn_regressor_forward.1} parent=0 // loop_exit
    _

</llo_original>
